<compile_context>
chip_gen: v7x
topology: tpu7x:2x2x1
jax: 0.10.0
libtpu: 0.0.40
codegen_flags: <defaults>
</compile_context>

<pallas_src>
import functools

import jax
import jax.numpy as jnp
from jax.experimental import pallas as pl
from jax.experimental.pallas import tpu as pltpu


def _round_up(x, m):
    return ((x + m - 1) // m) * m


@functools.lru_cache(maxsize=None)
def _default_vmem_limit_bytes():
    """Per-chip VMEM budget: ~3/4 of physical capacity, capped at 100 MiB."""
    cap = None
    try:
        cap = getattr(pltpu.get_tpu_info(), "vmem_capacity_bytes", None)
    except Exception:  # non-TPU backend / older jax: fall through to default
        cap = None
    if not cap:
        cap = 64 * 1024 * 1024  # v7x per-TensorCore size; safe everywhere
    return int(min(cap * 3 // 4, 100 * 1024 * 1024))


def _siglip_mlp_kernel(x_ref, w1_ref, b1_ref, w2_ref, b2_ref, o_ref):
    # fc1: [tm, H] @ [H, I] on the MXU, f32 accumulation.
    h = jnp.dot(x_ref[...], w1_ref[...], preferred_element_type=jnp.float32)
    h = h + b1_ref[...].astype(jnp.float32)

    # GELU, tanh approximation (matches torch gelu(approximate='tanh')), f32:
    #   0.5 * x * (1 + tanh(sqrt(2/pi) * (x + 0.044715 * x^3)))
    c = 0.7978845608028654  # sqrt(2/pi)
    g = 0.5 * h * (1.0 + jnp.tanh(c * (h + 0.044715 * (h * h * h))))

    # fc2: [tm, I] @ [I, H] on the MXU.  The full I reduction happens in one
    # matmul, so bias + cast go straight to the output tile (no scratch).
    out = jnp.dot(g.astype(w2_ref.dtype), w2_ref[...],
                  preferred_element_type=jnp.float32)
    o_ref[...] = (out + b2_ref[...].astype(jnp.float32)).astype(o_ref.dtype)


def prepare_siglip_mlp_params(w1, b1, w2, b2, *, compute_dtype=jnp.bfloat16):
    """One-time weight preparation (hoisted out of the per-call hot path).

    w1: [H, I], b1: [I], w2: [I, H], b2: [H]  (transposed w.r.t. nn.Linear,
    i.e. w1 = fc1.weight.T, w2 = fc2.weight.T).

    Casts weights to the matmul compute dtype and zero-pads the intermediate
    dim to a multiple of 128 lanes.  Padding is numerically benign: zero w1
    columns + zero b1 -> gelu(0) = 0 -> zero contribution through zero w2 rows.
    """
    H, I = w1.shape
    assert w2.shape == (I, H) and b1.shape == (I,) and b2.shape == (H,)
    cd = jnp.dtype(compute_dtype)
    I_pad = _round_up(I, 128)

    w1c = jnp.asarray(w1, dtype=cd)
    w2c = jnp.asarray(w2, dtype=cd)
    b1_2d = jnp.asarray(b1, dtype=jnp.float32).reshape(1, I)
    b2_2d = jnp.asarray(b2, dtype=jnp.float32).reshape(1, H)
    if I_pad != I:
        w1c = jnp.pad(w1c, ((0, 0), (0, I_pad - I)))
        b1_2d = jnp.pad(b1_2d, ((0, 0), (0, I_pad - I)))
        w2c = jnp.pad(w2c, ((0, I_pad - I), (0, 0)))
    return w1c, b1_2d, w2c, b2_2d


@functools.partial(
    jax.jit, static_argnames=("tm", "weight_buffers", "vmem_limit_bytes"))
def _siglip_mlp_fwd(x, w1c, b1_2d, w2c, b2_2d, *, tm, weight_buffers,
                    vmem_limit_bytes):
    B, S, H = x.shape
    I_pad = w1c.shape[1]
    M = B * S
    out_dtype = x.dtype
    cd = w1c.dtype
    # Sublane packing: 16-bit matmul operands want row tiles % 16, f32 % 8.
    row_pack = 16 if cd.itemsize == 2 else 8

    x2d = x.reshape(M, H).astype(cd)

    m_rows = _round_up(M, row_pack)
    tm_eff = min(tm, m_rows)
    # Dual-TensorCore chips (v7x) shard the "parallel" row axis across cores:
    # keep at least two row tiles whenever there are enough rows to split.
    if tm_eff == m_rows and m_rows >= 2 * row_pack:
        tm_eff = _round_up(m_rows // 2, row_pack)
    M_pad = _round_up(M, tm_eff)
    if M_pad != M:
        x2d = jnp.pad(x2d, ((0, M_pad - M), (0, 0)))
    grid = (M_pad // tm_eff,)

    # Weights / biases use a constant index map (same block every grid step):
    # single-buffer them so resident weights cost ~1x, not 2x, VMEM.
    resident = {}
    if weight_buffers is not None:
        resident["pipeline_mode"] = pl.Buffered(weight_buffers)

    bytes_accessed = (
        x2d.size * x2d.dtype.itemsize
        + w1c.size * w1c.dtype.itemsize
        + w2c.size * w2c.dtype.itemsize
        + b1_2d.size * 4
        + b2_2d.size * 4
        + M_pad * H * jnp.dtype(out_dtype).itemsize
    )
    cost = pl.CostEstimate(
        flops=4 * M_pad * H * I_pad,     # two matmuls, 2*M*H*I each
        transcendentals=M_pad * I_pad,   # tanh
        bytes_accessed=bytes_accessed,
    )

    out2d = pl.pallas_call(
        _siglip_mlp_kernel,
        out_shape=jax.ShapeDtypeStruct((M_pad, H), out_dtype),
        grid_spec=pltpu.PrefetchScalarGridSpec(
            num_scalar_prefetch=0,
            grid=grid,
            in_specs=[
                pl.BlockSpec((tm_eff, H), lambda i: (i, 0)),             # x rows
                pl.BlockSpec((H, I_pad), lambda i: (0, 0), **resident),  # fc1 W
                pl.BlockSpec((1, I_pad), lambda i: (0, 0), **resident),  # fc1 b
                pl.BlockSpec((I_pad, H), lambda i: (0, 0), **resident),  # fc2 W
                pl.BlockSpec((1, H), lambda i: (0, 0), **resident),      # fc2 b
            ],
            out_specs=pl.BlockSpec((tm_eff, H), lambda i: (i, 0)),
        ),
        compiler_params=pltpu.CompilerParams(
            dimension_semantics=("parallel",),
            vmem_limit_bytes=vmem_limit_bytes,
        ),
        cost_estimate=cost,
    )(x2d, w1c, b1_2d, w2c, b2_2d)

    if M_pad != M:
        out2d = out2d[:M]
    return out2d.reshape(B, S, H)


def siglip_mlp(hidden_states, params, *, tm=256, weight_buffers=1,
               vmem_limit_bytes=None):
    """SiglipMLP forward.  `params` comes from prepare_siglip_mlp_params()."""
    if vmem_limit_bytes is None:
        vmem_limit_bytes = _default_vmem_limit_bytes()
    try:
        return _siglip_mlp_fwd(hidden_states, *params, tm=tm,
                               weight_buffers=weight_buffers,
                               vmem_limit_bytes=vmem_limit_bytes)
    except Exception:
        if weight_buffers is None:
            raise
        # Fallback for Pallas builds that reject single-buffered BlockSpecs:
        # default double-buffering is harmless on v5e/v6e (128 MiB VMEM).
        return _siglip_mlp_fwd(hidden_states, *params, tm=tm,
                               weight_buffers=None,
                               vmem_limit_bytes=vmem_limit_bytes)


def _reference_mlp(x2d, w1, b1, w2, b2):
    h = x2d @ w1 + b1
    h = 0.5 * h * (1.0 + jnp.tanh(0.7978845608028654 * (h + 0.044715 * h ** 3)))
    return h @ w2 + b2


if __name__ == "__main__":
    # Small SiglipVisionConfig-consistent shapes.  seq=144 exercises the row
    # padding path (288 rows -> two 256-row tiles) and intermediate=600
    # exercises the lane padding of the intermediate dimension (600 -> 640).
    batch, seq = 2, 144
    hidden_size = 256        # config.hidden_size
    intermediate_size = 600  # config.intermediate_size

    key = jax.random.PRNGKey(0)
    kx, kw1, kb1, kw2, kb2 = jax.random.split(key, 5)

    x = jax.random.normal(kx, (batch, seq, hidden_size), dtype=jnp.float32)
    # nn.Linear weights (fc1: [I,H], fc2: [H,I]) stored transposed here.
    w1 = jax.random.normal(kw1, (hidden_size, intermediate_size), jnp.float32) * 0.02
    b1 = jax.random.normal(kb1, (intermediate_size,), jnp.float32) * 0.02
    w2 = jax.random.normal(kw2, (intermediate_size, hidden_size), jnp.float32) * 0.02
    b2 = jax.random.normal(kb2, (hidden_size,), jnp.float32) * 0.02

    ref = _reference_mlp(x.reshape(-1, hidden_size), w1, b1, w2, b2).reshape(
        batch, seq, hidden_size)

    # f32 compute path: tight tolerance (validates tiling / padding / fusion).
    params_f32 = prepare_siglip_mlp_params(w1, b1, w2, b2,
                                           compute_dtype=jnp.float32)
    out_f32 = jax.block_until_ready(siglip_mlp(x, params_f32))
    assert out_f32.shape == (batch, seq, hidden_size)
    assert jnp.allclose(out_f32, ref, atol=1e-4, rtol=1e-4), "f32 path mismatch"

    # Default bf16 compute path (weights pre-cast/pre-padded once, hoisted out
    # of the per-call hot path): looser tolerance for bf16 matmul rounding.
    params_bf16 = prepare_siglip_mlp_params(w1, b1, w2, b2)
    out_bf16 = jax.block_until_ready(siglip_mlp(x, params_bf16))
    assert out_bf16.shape == (batch, seq, hidden_size)
    assert jnp.allclose(out_bf16, ref, atol=5e-3, rtol=5e-2), "bf16 path mismatch"

    print("KERNEL_OK")
</pallas_src>

<mosaic_0001>
module attributes {stable_mosaic.version = 11 : i64} {
  func.func @_siglip_mlp_kernel(%arg0: i32, %arg1: memref<256x256xf32, #tpu.memory_space<vmem>>, %arg2: memref<256x640xf32, #tpu.memory_space<vmem>>, %arg3: memref<1x640xf32, #tpu.memory_space<vmem>>, %arg4: memref<640x256xf32, #tpu.memory_space<vmem>>, %arg5: memref<1x256xf32, #tpu.memory_space<vmem>>, %arg6: memref<256x256xf32, #tpu.memory_space<vmem>>) attributes {dimension_semantics = [#tpu.dimension_semantics<parallel>], iteration_bounds = array<i64: 2>, scalar_prefetch = 0 : i64, scratch_operands = 0 : i64, tpu.core_type = #tpu.core_type<tc>, window_params = [{transform_indices = @transform_0, window_bounds = array<i64: 256, 256>}, {pipeline_mode = #tpu.pipeline_mode<synchronous>, transform_indices = @transform_1, window_bounds = array<i64: 256, 640>}, {pipeline_mode = #tpu.pipeline_mode<synchronous>, transform_indices = @transform_2, window_bounds = array<i64: 1, 640>}, {pipeline_mode = #tpu.pipeline_mode<synchronous>, transform_indices = @transform_3, window_bounds = array<i64: 640, 256>}, {pipeline_mode = #tpu.pipeline_mode<synchronous>, transform_indices = @transform_4, window_bounds = array<i64: 1, 256>}, {transform_indices = @transform_5, window_bounds = array<i64: 256, 256>}]} {
    %c0 = arith.constant 0 : index
    %c0_0 = arith.constant 0 : index
    %0 = vector.load %arg1[%c0, %c0_0] : memref<256x256xf32, #tpu.memory_space<vmem>>, vector<256x256xf32>
    %c0_1 = arith.constant 0 : index
    %c0_2 = arith.constant 0 : index
    %1 = vector.load %arg2[%c0_1, %c0_2] : memref<256x640xf32, #tpu.memory_space<vmem>>, vector<256x640xf32>
    %cst = arith.constant dense<0.000000e+00> : vector<256x640xf32>
    %2 = tpu.matmul %0, %1, %cst {dimension_numbers = #tpu.dot_dimension_numbers<[1], [0], [0], [1], [0, 0, 1, 1], [], []>} : vector<256x256xf32>, vector<256x640xf32>, vector<256x640xf32> -> vector<256x640xf32>
    %c0_3 = arith.constant 0 : index
    %c0_4 = arith.constant 0 : index
    %3 = vector.load %arg3[%c0_3, %c0_4] : memref<1x640xf32, #tpu.memory_space<vmem>>, vector<1x640xf32>
    %4 = vector.broadcast %3 : vector<1x640xf32> to vector<256x640xf32>
    %5 = arith.addf %2, %4 : vector<256x640xf32>
    %cst_5 = arith.constant 5.000000e-01 : f32
    %6 = vector.broadcast %cst_5 : f32 to vector<256x640xf32>
    %7 = arith.mulf %6, %5 : vector<256x640xf32>
    %8 = arith.mulf %5, %5 : vector<256x640xf32>
    %9 = arith.mulf %8, %5 : vector<256x640xf32>
    %cst_6 = arith.constant 4.471500e-02 : f32
    %10 = vector.broadcast %cst_6 : f32 to vector<256x640xf32>
    %11 = arith.mulf %10, %9 : vector<256x640xf32>
    %12 = arith.addf %5, %11 : vector<256x640xf32>
    %cst_7 = arith.constant 0.797884583 : f32
    %13 = vector.broadcast %cst_7 : f32 to vector<256x640xf32>
    %14 = arith.mulf %13, %12 : vector<256x640xf32>
    %15 = math.tanh %14 : vector<256x640xf32>
    %cst_8 = arith.constant 1.000000e+00 : f32
    %16 = vector.broadcast %cst_8 : f32 to vector<256x640xf32>
    %17 = arith.addf %16, %15 : vector<256x640xf32>
    %18 = arith.mulf %7, %17 : vector<256x640xf32>
    %c0_9 = arith.constant 0 : index
    %c0_10 = arith.constant 0 : index
    %19 = vector.load %arg4[%c0_9, %c0_10] : memref<640x256xf32, #tpu.memory_space<vmem>>, vector<640x256xf32>
    %cst_11 = arith.constant dense<0.000000e+00> : vector<256x256xf32>
    %20 = tpu.matmul %18, %19, %cst_11 {dimension_numbers = #tpu.dot_dimension_numbers<[1], [0], [0], [1], [0, 0, 1, 1], [], []>} : vector<256x640xf32>, vector<640x256xf32>, vector<256x256xf32> -> vector<256x256xf32>
    %c0_12 = arith.constant 0 : index
    %c0_13 = arith.constant 0 : index
    %21 = vector.load %arg5[%c0_12, %c0_13] : memref<1x256xf32, #tpu.memory_space<vmem>>, vector<1x256xf32>
    %22 = vector.broadcast %21 : vector<1x256xf32> to vector<256x256xf32>
    %23 = arith.addf %20, %22 : vector<256x256xf32>
    %c0_14 = arith.constant 0 : index
    %c0_15 = arith.constant 0 : index
    %24 = vector.load %arg6[%c0_14, %c0_15] : memref<256x256xf32, #tpu.memory_space<vmem>>, vector<256x256xf32>
    tpu.vector_store %arg6[%c0_14, %c0_15], %23 {strides = array<i32>} : memref<256x256xf32, #tpu.memory_space<vmem>>, vector<256x256xf32>,
    return
  }
  func.func @transform_0(%arg0: i32) -> (i32, i32) {
    %c0_i32 = arith.constant 0 : i32
    %c0_i32_0 = arith.constant 0 : i32
    return %arg0, %c0_i32 : i32, i32
  }
  func.func @transform_1(%arg0: i32) -> (i32, i32) {
    %c0_i32 = arith.constant 0 : i32
    %c0_i32_0 = arith.constant 0 : i32
    %c0_i32_1 = arith.constant 0 : i32
    return %c0_i32, %c0_i32_0 : i32, i32
  }
  func.func @transform_2(%arg0: i32) -> (i32, i32) {
    %c0_i32 = arith.constant 0 : i32
    %c0_i32_0 = arith.constant 0 : i32
    %c0_i32_1 = arith.constant 0 : i32
    return %c0_i32, %c0_i32_0 : i32, i32
  }
  func.func @transform_3(%arg0: i32) -> (i32, i32) {
    %c0_i32 = arith.constant 0 : i32
    %c0_i32_0 = arith.constant 0 : i32
    %c0_i32_1 = arith.constant 0 : i32
    return %c0_i32, %c0_i32_0 : i32, i32
  }
  func.func @transform_4(%arg0: i32) -> (i32, i32) {
    %c0_i32 = arith.constant 0 : i32
    %c0_i32_0 = arith.constant 0 : i32
    %c0_i32_1 = arith.constant 0 : i32
    return %c0_i32, %c0_i32_0 : i32, i32
  }
  func.func @transform_5(%arg0: i32) -> (i32, i32) {
    %c0_i32 = arith.constant 0 : i32
    %c0_i32_0 = arith.constant 0 : i32
    return %arg0, %c0_i32 : i32, i32
  }
}

module attributes {stable_mosaic.version = 11 : i64} {
  func.func @_siglip_mlp_kernel(%arg0: i32, %arg1: memref<256x256xf32, #tpu.memory_space<vmem>>, %arg2: memref<256x640xf32, #tpu.memory_space<vmem>>, %arg3: memref<1x640xf32, #tpu.memory_space<vmem>>, %arg4: memref<640x256xf32, #tpu.memory_space<vmem>>, %arg5: memref<1x256xf32, #tpu.memory_space<vmem>>, %arg6: memref<256x256xf32, #tpu.memory_space<vmem>>) attributes {dimension_semantics = [#tpu.dimension_semantics<parallel>], iteration_bounds = array<i64: 2>, scalar_prefetch = 0 : i64, scratch_operands = 0 : i64, tpu.core_type = #tpu.core_type<tc>, window_params = [{transform_indices = @transform_0, window_bounds = array<i64: 256, 256>}, {pipeline_mode = #tpu.pipeline_mode<synchronous>, transform_indices = @transform_1, window_bounds = array<i64: 256, 640>}, {pipeline_mode = #tpu.pipeline_mode<synchronous>, transform_indices = @transform_2, window_bounds = array<i64: 1, 640>}, {pipeline_mode = #tpu.pipeline_mode<synchronous>, transform_indices = @transform_3, window_bounds = array<i64: 640, 256>}, {pipeline_mode = #tpu.pipeline_mode<synchronous>, transform_indices = @transform_4, window_bounds = array<i64: 1, 256>}, {transform_indices = @transform_5, window_bounds = array<i64: 256, 256>}]} {
    %c0 = arith.constant 0 : index
    %c0_0 = arith.constant 0 : index
    %0 = vector.load %arg1[%c0, %c0_0] : memref<256x256xf32, #tpu.memory_space<vmem>>, vector<256x256xf32>
    %c0_1 = arith.constant 0 : index
    %c0_2 = arith.constant 0 : index
    %1 = vector.load %arg2[%c0_1, %c0_2] : memref<256x640xf32, #tpu.memory_space<vmem>>, vector<256x640xf32>
    %cst = arith.constant dense<0.000000e+00> : vector<256x640xf32>
    %2 = tpu.matmul %0, %1, %cst {dimension_numbers = #tpu.dot_dimension_numbers<[1], [0], [0], [1], [0, 0, 1, 1], [], []>} : vector<256x256xf32>, vector<256x640xf32>, vector<256x640xf32> -> vector<256x640xf32>
    %c0_3 = arith.constant 0 : index
    %c0_4 = arith.constant 0 : index
    %3 = vector.load %arg3[%c0_3, %c0_4] : memref<1x640xf32, #tpu.memory_space<vmem>>, vector<1x640xf32>
    %4 = vector.broadcast %3 : vector<1x640xf32> to vector<256x640xf32>
    %5 = arith.addf %2, %4 : vector<256x640xf32>
    %cst_5 = arith.constant 5.000000e-01 : f32
    %6 = vector.broadcast %cst_5 : f32 to vector<256x640xf32>
    %7 = arith.mulf %6, %5 : vector<256x640xf32>
    %8 = arith.mulf %5, %5 : vector<256x640xf32>
    %9 = arith.mulf %8, %5 : vector<256x640xf32>
    %cst_6 = arith.constant 4.471500e-02 : f32
    %10 = vector.broadcast %cst_6 : f32 to vector<256x640xf32>
    %11 = arith.mulf %10, %9 : vector<256x640xf32>
    %12 = arith.addf %5, %11 : vector<256x640xf32>
    %cst_7 = arith.constant 0.797884583 : f32
    %13 = vector.broadcast %cst_7 : f32 to vector<256x640xf32>
    %14 = arith.mulf %13, %12 : vector<256x640xf32>
    %15 = math.tanh %14 : vector<256x640xf32>
    %cst_8 = arith.constant 1.000000e+00 : f32
    %16 = vector.broadcast %cst_8 : f32 to vector<256x640xf32>
    %17 = arith.addf %16, %15 : vector<256x640xf32>
    %18 = arith.mulf %7, %17 : vector<256x640xf32>
    %c0_9 = arith.constant 0 : index
    %c0_10 = arith.constant 0 : index
    %19 = vector.load %arg4[%c0_9, %c0_10] : memref<640x256xf32, #tpu.memory_space<vmem>>, vector<640x256xf32>
    %cst_11 = arith.constant dense<0.000000e+00> : vector<256x256xf32>
    %20 = tpu.matmul %18, %19, %cst_11 {dimension_numbers = #tpu.dot_dimension_numbers<[1], [0], [0], [1], [0, 0, 1, 1], [], []>} : vector<256x640xf32>, vector<640x256xf32>, vector<256x256xf32> -> vector<256x256xf32>
    %c0_12 = arith.constant 0 : index
    %c0_13 = arith.constant 0 : index
    %21 = vector.load %arg5[%c0_12, %c0_13] : memref<1x256xf32, #tpu.memory_space<vmem>>, vector<1x256xf32>
    %22 = vector.broadcast %21 : vector<1x256xf32> to vector<256x256xf32>
    %23 = arith.addf %20, %22 : vector<256x256xf32>
    %c0_14 = arith.constant 0 : index
    %c0_15 = arith.constant 0 : index
    %24 = vector.load %arg6[%c0_14, %c0_15] : memref<256x256xf32, #tpu.memory_space<vmem>>, vector<256x256xf32>
    tpu.vector_store %arg6[%c0_14, %c0_15], %23 {strides = array<i32>} : memref<256x256xf32, #tpu.memory_space<vmem>>, vector<256x256xf32>,
    return
  }
  func.func @transform_0(%arg0: i32) -> (i32, i32) {
    %c0_i32 = arith.constant 0 : i32
    %c0_i32_0 = arith.constant 0 : i32
    return %arg0, %c0_i32 : i32, i32
  }
  func.func @transform_1(%arg0: i32) -> (i32, i32) {
    %c0_i32 = arith.constant 0 : i32
    %c0_i32_0 = arith.constant 0 : i32
    %c0_i32_1 = arith.constant 0 : i32
    return %c0_i32, %c0_i32_0 : i32, i32
  }
  func.func @transform_2(%arg0: i32) -> (i32, i32) {
    %c0_i32 = arith.constant 0 : i32
    %c0_i32_0 = arith.constant 0 : i32
    %c0_i32_1 = arith.constant 0 : i32
    return %c0_i32, %c0_i32_0 : i32, i32
  }
  func.func @transform_3(%arg0: i32) -> (i32, i32) {
    %c0_i32 = arith.constant 0 : i32
    %c0_i32_0 = arith.constant 0 : i32
    %c0_i32_1 = arith.constant 0 : i32
    return %c0_i32, %c0_i32_0 : i32, i32
  }
  func.func @transform_4(%arg0: i32) -> (i32, i32) {
    %c0_i32 = arith.constant 0 : i32
    %c0_i32_0 = arith.constant 0 : i32
    %c0_i32_1 = arith.constant 0 : i32
    return %c0_i32, %c0_i32_0 : i32, i32
  }
  func.func @transform_5(%arg0: i32) -> (i32, i32) {
    %c0_i32 = arith.constant 0 : i32
    %c0_i32_0 = arith.constant 0 : i32
    return %arg0, %c0_i32 : i32, i32
  }
}

</mosaic_0001>

<llo_original>
// kernel: _siglip_mlp_fwd.1
$region0: #{_siglip_mlp_fwd.1}
  #allocation0 [shape = 'u32[]', space=smem, size = 0x4, offset = 0x4, fixed_abs, tag = 'smem constant byte address 0x4 - core index']
  #allocation1 [shape = 'u32[144,128]{1,0:T(1,128)}', space=vmem, size = 0x12000, scoped, tag = 'internal scratch']
  %s0 = inlined_call_operand.vmem [shape: f32[512,256], index: 0, kind: input, shape index: {}]
  %s1 = inlined_call_operand.vmem [shape: f32[256,640], index: 1, kind: input, shape index: {}]
  %s2 = inlined_call_operand.vmem [shape: f32[1,640], index: 2, kind: input, shape index: {}]
  %s3 = inlined_call_operand.hbm [shape: f32[640,256], index: 3, kind: input, shape index: {}]
  %s4 = inlined_call_operand.vmem [shape: f32[1,256], index: 4, kind: input, shape index: {}]
  %s5 = inlined_call_operand.vmem [shape: f32[512,256], index: 5, kind: output, shape index: {}]
  %s6 = sld [smem:[#allocation0]]
  $region57: #{_siglip_mlp_fwd.1} parent=0
    _
  %s8 = ssub.s32 1, %s6
  %s9 = scalar_select 0, %s8, %s6
  $region1: #{_siglip_mlp_fwd.1} parent=0
    #allocation2 [shape = 'u8[655360]{0}', space=vmem, size = 0xa0000, scoped, tag = 'input window, operand 3, single buffered']
    #allocation3 [shape = 's32[2]{0}', space=sflag, size = 0x8, scoped, tag = 'scoped memory for _siglip_mlp_fwd.1']
    %10 = vsyncpa [#allocation3], 0
    loop: start=0, step=1, limit=4
    $region2: #{_siglip_mlp_fwd.1} parent=1 // loop_pre_header
      _
    $region3: #{_siglip_mlp_fwd.1} parent=1 // loop_header
      %s12 = sphi 0, %s16
      %p13 = scmp.ge.s32.totalorder %s12, 4
      %s22 = sphi 0, %s24
      %s25 = sphi 0, %s22
      %s26 = sphi 0, %s25
      %s42 = sphi 0, %s26
      %s46 = sphi 0, %s46
      %s48 = sphi 0, %s46
      %s49 = sphi 0, %s48
      %s63 = sphi 0, %s49
      %s67 = sphi 0, %s67
      %s69 = sphi 0, %s67
      %s70 = sphi 0, %s69
      %s84 = sphi 0, %s70
      %s88 = sphi 0, %s88
      %s90 = sphi 0, %s88
      %s91 = sphi 0, %s90
      %s105 = sphi 0, %s91
      %s109 = sphi 0, %s109
      %s111 = sphi 0, %s109
      %s112 = sphi 0, %s111
      %s126 = sphi 0, %s112
      %s132 = sphi 0, %s134
      %s135 = sphi 0, %s132
      %s136 = sphi 0, %s135
      %s152 = sphi 0, %s136
    $region4: #{_siglip_mlp_fwd.1} parent=1 // loop_header_branch
      %15 = sbr.rel (%p13) target = $region8
    $region5: #{_siglip_mlp_fwd.1} parent=1 // loop_body
      %s17 = ssub.s32 %s12, 1
      %s18 = ssub.s32 %s12, 2
      %s19 = sadd.s32 %s12, 1
      %s20 = ssub.s32 %s12, %s19
      %p21 = scmp.eq.s32.totalorder %s20, 0
      %s23 = sadd.s32 %s22, 1
      %s24 = scalar_select %p21, %s22, %s23
      %p27 = pneg %p21
      %p28 = scmp.eq.s32.totalorder %s12, 1
      %p29 = por %p27, %p28
      %p30 = scmp.ne.s32.totalorder %s22, %s25
      %p31 = scmp.eq.s32.totalorder %s12, 0
      %p32 = por %p30, %p31
      %p33 = scmp.ne.s32.totalorder %s22, %s25
      %p34 = scmp.eq.s32.totalorder %s17, 1
      %p35 = por %p33, %p34
      %p36 = scmp.ne.s32.totalorder %s25, %s26
      %p37 = scmp.eq.s32.totalorder %s17, 0
      %p38 = por %p36, %p37
      %p39 = scmp.ne.s32.totalorder %s25, %s26
      %p40 = scmp.eq.s32.totalorder %s18, 1
      %p41 = por %p39, %p40
      %p43 = scmp.ne.s32.totalorder %s26, %s42
      %p44 = scmp.eq.s32.totalorder %s18, 0
      %p45 = por %p43, %p44
      %s47 = sadd.s32 %s46, 1
      %p50 = scmp.eq.s32.totalorder %s12, 1
      %p51 = scmp.ne.s32.totalorder %s46, %s48
      %p52 = scmp.eq.s32.totalorder %s12, 0
      %p53 = por %p51, %p52
      %p54 = scmp.ne.s32.totalorder %s46, %s48
      %p55 = scmp.eq.s32.totalorder %s17, 1
      %p56 = por %p54, %p55
      %p57 = scmp.ne.s32.totalorder %s48, %s49
      %p58 = scmp.eq.s32.totalorder %s17, 0
      %p59 = por %p57, %p58
      %p60 = scmp.ne.s32.totalorder %s48, %s49
      %p61 = scmp.eq.s32.totalorder %s18, 1
      %p62 = por %p60, %p61
      %p64 = scmp.ne.s32.totalorder %s49, %s63
      %p65 = scmp.eq.s32.totalorder %s18, 0
      %p66 = por %p64, %p65
      %s68 = sadd.s32 %s67, 1
      %p71 = scmp.eq.s32.totalorder %s12, 1
      %p72 = scmp.ne.s32.totalorder %s67, %s69
      %p73 = scmp.eq.s32.totalorder %s12, 0
      %p74 = por %p72, %p73
      %p75 = scmp.ne.s32.totalorder %s67, %s69
      %p76 = scmp.eq.s32.totalorder %s17, 1
      %p77 = por %p75, %p76
      %p78 = scmp.ne.s32.totalorder %s69, %s70
      %p79 = scmp.eq.s32.totalorder %s17, 0
      %p80 = por %p78, %p79
      %p81 = scmp.ne.s32.totalorder %s69, %s70
      %p82 = scmp.eq.s32.totalorder %s18, 1
      %p83 = por %p81, %p82
      %p85 = scmp.ne.s32.totalorder %s70, %s84
      %p86 = scmp.eq.s32.totalorder %s18, 0
      %p87 = por %p85, %p86
      %s89 = sadd.s32 %s88, 1
      %p92 = scmp.eq.s32.totalorder %s12, 1
      %p93 = scmp.ne.s32.totalorder %s88, %s90
      %p94 = scmp.eq.s32.totalorder %s12, 0
      %p95 = por %p93, %p94
      %p96 = scmp.ne.s32.totalorder %s88, %s90
      %p97 = scmp.eq.s32.totalorder %s17, 1
      %p98 = por %p96, %p97
      %p99 = scmp.ne.s32.totalorder %s90, %s91
      %p100 = scmp.eq.s32.totalorder %s17, 0
      %p101 = por %p99, %p100
      %p102 = scmp.ne.s32.totalorder %s90, %s91
      %p103 = scmp.eq.s32.totalorder %s18, 1
      %p104 = por %p102, %p103
      %p106 = scmp.ne.s32.totalorder %s91, %s105
      %p107 = scmp.eq.s32.totalorder %s18, 0
      %p108 = por %p106, %p107
      %s110 = sadd.s32 %s109, 1
      %p113 = scmp.eq.s32.totalorder %s12, 1
      %p114 = scmp.ne.s32.totalorder %s109, %s111
      %p115 = scmp.eq.s32.totalorder %s12, 0
      %p116 = por %p114, %p115
      %p117 = scmp.ne.s32.totalorder %s109, %s111
      %p118 = scmp.eq.s32.totalorder %s17, 1
      %p119 = por %p117, %p118
      %p120 = scmp.ne.s32.totalorder %s111, %s112
      %p121 = scmp.eq.s32.totalorder %s17, 0
      %p122 = por %p120, %p121
      %p123 = scmp.ne.s32.totalorder %s111, %s112
      %p124 = scmp.eq.s32.totalorder %s18, 1
      %p125 = por %p123, %p124
      %p127 = scmp.ne.s32.totalorder %s112, %s126
      %p128 = scmp.eq.s32.totalorder %s18, 0
      %p129 = por %p127, %p128
      %s130 = ssub.s32 %s12, %s19
      %p131 = scmp.eq.s32.totalorder %s130, 0
      %s133 = sadd.s32 %s132, 1
      %s134 = scalar_select %p131, %s132, %s133
      %p137 = pneg %p131
      %p138 = scmp.eq.s32.totalorder %s12, 1
      %p139 = por %p137, %p138
      %p140 = scmp.ne.s32.totalorder %s132, %s135
      %p141 = scmp.eq.s32.totalorder %s12, 0
      %p142 = por %p140, %p141
      %p143 = scmp.ne.s32.totalorder %s132, %s135
      %p144 = scmp.eq.s32.totalorder %s17, 1
      %p145 = por %p143, %p144
      %p146 = scmp.ne.s32.totalorder %s135, %s136
      %p147 = scmp.eq.s32.totalorder %s17, 0
      %p148 = por %p146, %p147
      %p149 = scmp.ne.s32.totalorder %s135, %s136
      %p150 = scmp.eq.s32.totalorder %s18, 1
      %p151 = por %p149, %p150
      %p153 = scmp.ne.s32.totalorder %s136, %s152
      %p154 = scmp.eq.s32.totalorder %s18, 0
      %p155 = por %p153, %p154
      %p156 = scmp.le.s32.totalorder 1, %s12
      %p157 = scmp.lt.s32.totalorder %s12, 3
      %p158 = pnand %p156, %p157
      %p159 = pneg %p158
      // Predicated region
      $region9: #{_siglip_mlp_fwd.1} parent=5 // pred_check
        _
      $region10: #{_siglip_mlp_fwd.1} parent=5 // pred_check_branch
        %161 = sbr.rel (%p158) target = $region12
      $region11: #{_siglip_mlp_fwd.1} parent=5 // pred_region
        %s162 = ssub.s32 %s12, 1
        // Predicated region
        $region13: #{_siglip_mlp_fwd.1} parent=11 // pred_check
          %p163 = pneg %p59
        $region14: #{_siglip_mlp_fwd.1} parent=11 // pred_check_branch
          %165 = sbr.rel (%p163) target = $region16
        $region15: #{_siglip_mlp_fwd.1} parent=11 // pred_region
          _
        $region16: #{_siglip_mlp_fwd.1} parent=11 // pred_fallthru
          _
        // Predicated region
        $region17: #{_siglip_mlp_fwd.1} parent=11 // pred_check
          %p166 = pneg %p80
        $region18: #{_siglip_mlp_fwd.1} parent=11 // pred_check_branch
          %168 = sbr.rel (%p166) target = $region20
        $region19: #{_siglip_mlp_fwd.1} parent=11 // pred_region
          _
        $region20: #{_siglip_mlp_fwd.1} parent=11 // pred_fallthru
          _
        // Predicated region
        $region21: #{_siglip_mlp_fwd.1} parent=11 // pred_check
          %p169 = pneg %p101
        $region22: #{_siglip_mlp_fwd.1} parent=11 // pred_check_branch
          %171 = sbr.rel (%p169) target = $region24
        $region23: #{_siglip_mlp_fwd.1} parent=11 // pred_region
          %s173 = ssub.s32 20480, 20480
          %174 = vsyncadd [#allocation3], %s173
          %s175 = sshll.u32 [#allocation2], 4
          %s176 = int_to_ptr.vmem [resolvable:$true] %s175
          %181 = dma.hbm_to_vmem [thread:$0]  %s3, 20480, %s176, [#allocation3], 256, 256, 16
        $region24: #{_siglip_mlp_fwd.1} parent=11 // pred_fallthru
          _
        // Predicated region
        $region25: #{_siglip_mlp_fwd.1} parent=11 // pred_check
          %p182 = pneg %p122
        $region26: #{_siglip_mlp_fwd.1} parent=11 // pred_check_branch
          %184 = sbr.rel (%p182) target = $region28
        $region27: #{_siglip_mlp_fwd.1} parent=11 // pred_region
          _
        $region28: #{_siglip_mlp_fwd.1} parent=11 // pred_fallthru
          _
      $region12: #{_siglip_mlp_fwd.1} parent=5 // pred_fallthru
        _
      %p185 = scmp.lt.s32.totalorder %s12, 2
      // Predicated region
      $region29: #{_siglip_mlp_fwd.1} parent=5 // pred_check
        %p186 = pneg %p185
      $region30: #{_siglip_mlp_fwd.1} parent=5 // pred_check_branch
        %188 = sbr.rel (%p186) target = $region32
      $region31: #{_siglip_mlp_fwd.1} parent=5 // pred_region
        // Predicated region
        $region33: #{_siglip_mlp_fwd.1} parent=31 // pred_check
          %p189 = pneg %p32
        $region34: #{_siglip_mlp_fwd.1} parent=31 // pred_check_branch
          %191 = sbr.rel (%p189) target = $region36
        $region35: #{_siglip_mlp_fwd.1} parent=31 // pred_region
          %s192 = smul.u32 32, %s12
          %p193 = scmp.lt.s32.totalorder %s192, 63
          %s194 = scalar_select %p193, %s192, 63
          %s195 = smul.addr %s194, 2
          %s196 = smul.addr %s195, 8
          %s197 = scalar_lea.vmem %s0, %s196
          %s198 = smul.u32 32, %s12
        $region36: #{_siglip_mlp_fwd.1} parent=31 // pred_fallthru
          _
      $region32: #{_siglip_mlp_fwd.1} parent=5 // pred_fallthru
        _
      %p199 = scmp.le.s32.totalorder 1, %s12
      %p200 = scmp.lt.s32.totalorder %s12, 3
      %p201 = pnand %p199, %p200
      %p202 = pneg %p201
      // Predicated region
      $region37: #{_siglip_mlp_fwd.1} parent=5 // pred_check
        _
      $region38: #{_siglip_mlp_fwd.1} parent=5 // pred_check_branch
        %204 = sbr.rel (%p201) target = $region40
      $region39: #{_siglip_mlp_fwd.1} parent=5 // pred_region
        %s205 = ssub.s32 %s12, 1
        // Predicated region
        $region41: #{_siglip_mlp_fwd.1} parent=39 // pred_check
          %p206 = pneg %p101
        $region42: #{_siglip_mlp_fwd.1} parent=39 // pred_check_branch
          %208 = sbr.rel (%p206) target = $region44
        $region43: #{_siglip_mlp_fwd.1} parent=39 // pred_region
          %209 = dma.done [#allocation3], 20480
        $region44: #{_siglip_mlp_fwd.1} parent=39 // pred_fallthru
          _
        %s210 = smul.u32 32, %s17
        %p211 = scmp.lt.s32.totalorder %s210, 63
        %s212 = scalar_select %p211, %s210, 63
        %s213 = smul.addr %s212, 2
        %s214 = smul.addr %s213, 8
        %s215 = scalar_lea.vmem %s0, %s214
        %p216 = pneg %p38
        %p217 = pneg %p35
        %p218 = pneg %p59
        %p219 = pneg %p56
        %p220 = pneg %p80
        %p221 = pneg %p77
        %p222 = pneg %p101
        %p223 = pneg %p98
        %p224 = pneg %p122
        %p225 = pneg %p119
        %p226 = pneg %p148
        %p227 = pneg %p145
        %s228 = smul.u32 32, %s17
        %p229 = scmp.lt.s32.totalorder %s228, 63
        %s230 = scalar_select %p229, %s228, 63
        %s231 = smul.addr %s230, 2
        %s232 = smul.addr %s231, 8
        %s233 = scalar_lea.vmem %s5, %s232
        %s234 = smul.u32 32, %s17
        %p235 = scmp.lt.s32.totalorder %s234, 63
        %s236 = scalar_select %p235, %s234, 63
        %s237 = smul.addr %s236, 2
        %s238 = smul.addr %s237, 8
        %s239 = scalar_lea.vmem %s0, %s238
        %s240 = smul.u32 32, %s17
        %s241 = smul.u32 32, %s17
        %p242 = scmp.lt.s32.totalorder %s241, 63
        %s243 = scalar_select %p242, %s241, 63
        %s244 = smul.addr %s243, 2
        %s245 = smul.addr %s244, 8
        %s246 = scalar_lea.vmem %s5, %s245
        %s247 = smul.u32 32, %s17
        %v248 = vld [vmem:[%s239] sm:$0xff]
        %v249 = vld [vmem:[%s239 + $0x8] sm:$0xff]
        %v250 = vld [vmem:[%s239 + $0x10] sm:$0xff]
        %v251 = vld [vmem:[%s239 + $0x18] sm:$0xff]
        %v252 = vld [vmem:[%s239 + $0x20] sm:$0xff]
        %v253 = vld [vmem:[%s239 + $0x28] sm:$0xff]
        %v254 = vld [vmem:[%s239 + $0x30] sm:$0xff]
        %v255 = vld [vmem:[%s239 + $0x38] sm:$0xff]
        %v256 = vld [vmem:[%s239 + $0x40] sm:$0xff]
        %v257 = vld [vmem:[%s239 + $0x48] sm:$0xff]
        %v258 = vld [vmem:[%s239 + $0x50] sm:$0xff]
        %v259 = vld [vmem:[%s239 + $0x58] sm:$0xff]
        %v260 = vld [vmem:[%s239 + $0x60] sm:$0xff]
        %v261 = vld [vmem:[%s239 + $0x68] sm:$0xff]
        %v262 = vld [vmem:[%s239 + $0x70] sm:$0xff]
        %v263 = vld [vmem:[%s239 + $0x78] sm:$0xff]
        %v264 = vld [vmem:[%s239 + $0x80] sm:$0xff]
        %v265 = vld [vmem:[%s239 + $0x88] sm:$0xff]
        %v266 = vld [vmem:[%s239 + $0x90] sm:$0xff]
        %v267 = vld [vmem:[%s239 + $0x98] sm:$0xff]
        %v268 = vld [vmem:[%s239 + $0xa0] sm:$0xff]
        %v269 = vld [vmem:[%s239 + $0xa8] sm:$0xff]
        %v270 = vld [vmem:[%s239 + $0xb0] sm:$0xff]
        %v271 = vld [vmem:[%s239 + $0xb8] sm:$0xff]
        %v272 = vld [vmem:[%s239 + $0xc0] sm:$0xff]
        %v273 = vld [vmem:[%s239 + $0xc8] sm:$0xff]
        %v274 = vld [vmem:[%s239 + $0xd0] sm:$0xff]
        %v275 = vld [vmem:[%s239 + $0xd8] sm:$0xff]
        %v276 = vld [vmem:[%s239 + $0xe0] sm:$0xff]
        %v277 = vld [vmem:[%s239 + $0xe8] sm:$0xff]
        %v278 = vld [vmem:[%s239 + $0xf0] sm:$0xff]
        %v279 = vld [vmem:[%s239 + $0xf8] sm:$0xff]
        %v280 = vld [vmem:[%s239 + $0x100] sm:$0xff]
        %v281 = vld [vmem:[%s239 + $0x108] sm:$0xff]
        %v282 = vld [vmem:[%s239 + $0x110] sm:$0xff]
        %v283 = vld [vmem:[%s239 + $0x118] sm:$0xff]
        %v284 = vld [vmem:[%s239 + $0x120] sm:$0xff]
        %v285 = vld [vmem:[%s239 + $0x128] sm:$0xff]
        %v286 = vld [vmem:[%s239 + $0x130] sm:$0xff]
        %v287 = vld [vmem:[%s239 + $0x138] sm:$0xff]
        %v288 = vld [vmem:[%s239 + $0x140] sm:$0xff]
        %v289 = vld [vmem:[%s239 + $0x148] sm:$0xff]
        %v290 = vld [vmem:[%s239 + $0x150] sm:$0xff]
        %v291 = vld [vmem:[%s239 + $0x158] sm:$0xff]
        %v292 = vld [vmem:[%s239 + $0x160] sm:$0xff]
        %v293 = vld [vmem:[%s239 + $0x168] sm:$0xff]
        %v294 = vld [vmem:[%s239 + $0x170] sm:$0xff]
        %v295 = vld [vmem:[%s239 + $0x178] sm:$0xff]
        %v296 = vld [vmem:[%s239 + $0x180] sm:$0xff]
        %v297 = vld [vmem:[%s239 + $0x188] sm:$0xff]
        %v298 = vld [vmem:[%s239 + $0x190] sm:$0xff]
        %v299 = vld [vmem:[%s239 + $0x198] sm:$0xff]
        %v300 = vld [vmem:[%s239 + $0x1a0] sm:$0xff]
        %v301 = vld [vmem:[%s239 + $0x1a8] sm:$0xff]
        %v302 = vld [vmem:[%s239 + $0x1b0] sm:$0xff]
        %v303 = vld [vmem:[%s239 + $0x1b8] sm:$0xff]
        %v304 = vld [vmem:[%s239 + $0x1c0] sm:$0xff]
        %v305 = vld [vmem:[%s239 + $0x1c8] sm:$0xff]
        %v306 = vld [vmem:[%s239 + $0x1d0] sm:$0xff]
        %v307 = vld [vmem:[%s239 + $0x1d8] sm:$0xff]
        %v308 = vld [vmem:[%s239 + $0x1e0] sm:$0xff]
        %v309 = vld [vmem:[%s239 + $0x1e8] sm:$0xff]
        %v310 = vld [vmem:[%s239 + $0x1f0] sm:$0xff]
        %v311 = vld [vmem:[%s239 + $0x1f8] sm:$0xff]
        %v312 = vld [vmem:[%s1] sm:$0xff]
        %v313 = vld [vmem:[%s1 + $0x8] sm:$0xff]
        %v314 = vld [vmem:[%s1 + $0x10] sm:$0xff]
        %v315 = vld [vmem:[%s1 + $0x18] sm:$0xff]
        %v316 = vld [vmem:[%s1 + $0x20] sm:$0xff]
        %v317 = vld [vmem:[%s1 + $0x28] sm:$0xff]
        %v318 = vld [vmem:[%s1 + $0x30] sm:$0xff]
        %v319 = vld [vmem:[%s1 + $0x38] sm:$0xff]
        %v320 = vld [vmem:[%s1 + $0x40] sm:$0xff]
        %v321 = vld [vmem:[%s1 + $0x48] sm:$0xff]
        %v322 = vld [vmem:[%s1 + $0x50] sm:$0xff]
        %v323 = vld [vmem:[%s1 + $0x58] sm:$0xff]
        %v324 = vld [vmem:[%s1 + $0x60] sm:$0xff]
        %v325 = vld [vmem:[%s1 + $0x68] sm:$0xff]
        %v326 = vld [vmem:[%s1 + $0x70] sm:$0xff]
        %v327 = vld [vmem:[%s1 + $0x78] sm:$0xff]
        %v328 = vld [vmem:[%s1 + $0x80] sm:$0xff]
        %v329 = vld [vmem:[%s1 + $0x88] sm:$0xff]
        %v330 = vld [vmem:[%s1 + $0x90] sm:$0xff]
        %v331 = vld [vmem:[%s1 + $0x98] sm:$0xff]
        %v332 = vld [vmem:[%s1 + $0xa0] sm:$0xff]
        %v333 = vld [vmem:[%s1 + $0xa8] sm:$0xff]
        %v334 = vld [vmem:[%s1 + $0xb0] sm:$0xff]
        %v335 = vld [vmem:[%s1 + $0xb8] sm:$0xff]
        %v336 = vld [vmem:[%s1 + $0xc0] sm:$0xff]
        %v337 = vld [vmem:[%s1 + $0xc8] sm:$0xff]
        %v338 = vld [vmem:[%s1 + $0xd0] sm:$0xff]
        %v339 = vld [vmem:[%s1 + $0xd8] sm:$0xff]
        %v340 = vld [vmem:[%s1 + $0xe0] sm:$0xff]
        %v341 = vld [vmem:[%s1 + $0xe8] sm:$0xff]
        %v342 = vld [vmem:[%s1 + $0xf0] sm:$0xff]
        %v343 = vld [vmem:[%s1 + $0xf8] sm:$0xff]
        %v344 = vld [vmem:[%s1 + $0x100] sm:$0xff]
        %v345 = vld [vmem:[%s1 + $0x108] sm:$0xff]
        %v346 = vld [vmem:[%s1 + $0x110] sm:$0xff]
        %v347 = vld [vmem:[%s1 + $0x118] sm:$0xff]
        %v348 = vld [vmem:[%s1 + $0x120] sm:$0xff]
        %v349 = vld [vmem:[%s1 + $0x128] sm:$0xff]
        %v350 = vld [vmem:[%s1 + $0x130] sm:$0xff]
        %v351 = vld [vmem:[%s1 + $0x138] sm:$0xff]
        %v352 = vld [vmem:[%s1 + $0x140] sm:$0xff]
        %v353 = vld [vmem:[%s1 + $0x148] sm:$0xff]
        %v354 = vld [vmem:[%s1 + $0x150] sm:$0xff]
        %v355 = vld [vmem:[%s1 + $0x158] sm:$0xff]
        %v356 = vld [vmem:[%s1 + $0x160] sm:$0xff]
        %v357 = vld [vmem:[%s1 + $0x168] sm:$0xff]
        %v358 = vld [vmem:[%s1 + $0x170] sm:$0xff]
        %v359 = vld [vmem:[%s1 + $0x178] sm:$0xff]
        %v360 = vld [vmem:[%s1 + $0x180] sm:$0xff]
        %v361 = vld [vmem:[%s1 + $0x188] sm:$0xff]
        %v362 = vld [vmem:[%s1 + $0x190] sm:$0xff]
        %v363 = vld [vmem:[%s1 + $0x198] sm:$0xff]
        %v364 = vld [vmem:[%s1 + $0x1a0] sm:$0xff]
        %v365 = vld [vmem:[%s1 + $0x1a8] sm:$0xff]
        %v366 = vld [vmem:[%s1 + $0x1b0] sm:$0xff]
        %v367 = vld [vmem:[%s1 + $0x1b8] sm:$0xff]
        %v368 = vld [vmem:[%s1 + $0x1c0] sm:$0xff]
        %v369 = vld [vmem:[%s1 + $0x1c8] sm:$0xff]
        %v370 = vld [vmem:[%s1 + $0x1d0] sm:$0xff]
        %v371 = vld [vmem:[%s1 + $0x1d8] sm:$0xff]
        %v372 = vld [vmem:[%s1 + $0x1e0] sm:$0xff]
        %v373 = vld [vmem:[%s1 + $0x1e8] sm:$0xff]
        %v374 = vld [vmem:[%s1 + $0x1f0] sm:$0xff]
        %v375 = vld [vmem:[%s1 + $0x1f8] sm:$0xff]
        %v376 = vld [vmem:[%s1 + $0x200] sm:$0xff]
        %v377 = vld [vmem:[%s1 + $0x208] sm:$0xff]
        %v378 = vld [vmem:[%s1 + $0x210] sm:$0xff]
        %v379 = vld [vmem:[%s1 + $0x218] sm:$0xff]
        %v380 = vld [vmem:[%s1 + $0x220] sm:$0xff]
        %v381 = vld [vmem:[%s1 + $0x228] sm:$0xff]
        %v382 = vld [vmem:[%s1 + $0x230] sm:$0xff]
        %v383 = vld [vmem:[%s1 + $0x238] sm:$0xff]
        %v384 = vld [vmem:[%s1 + $0x240] sm:$0xff]
        %v385 = vld [vmem:[%s1 + $0x248] sm:$0xff]
        %v386 = vld [vmem:[%s1 + $0x250] sm:$0xff]
        %v387 = vld [vmem:[%s1 + $0x258] sm:$0xff]
        %v388 = vld [vmem:[%s1 + $0x260] sm:$0xff]
        %v389 = vld [vmem:[%s1 + $0x268] sm:$0xff]
        %v390 = vld [vmem:[%s1 + $0x270] sm:$0xff]
        %v391 = vld [vmem:[%s1 + $0x278] sm:$0xff]
        %v392 = vld [vmem:[%s1 + $0x280] sm:$0xff]
        %v393 = vld [vmem:[%s1 + $0x288] sm:$0xff]
        %v394 = vld [vmem:[%s1 + $0x290] sm:$0xff]
        %v395 = vld [vmem:[%s1 + $0x298] sm:$0xff]
        %v396 = vld [vmem:[%s1 + $0x2a0] sm:$0xff]
        %v397 = vld [vmem:[%s1 + $0x2a8] sm:$0xff]
        %v398 = vld [vmem:[%s1 + $0x2b0] sm:$0xff]
        %v399 = vld [vmem:[%s1 + $0x2b8] sm:$0xff]
        %v400 = vld [vmem:[%s1 + $0x2c0] sm:$0xff]
        %v401 = vld [vmem:[%s1 + $0x2c8] sm:$0xff]
        %v402 = vld [vmem:[%s1 + $0x2d0] sm:$0xff]
        %v403 = vld [vmem:[%s1 + $0x2d8] sm:$0xff]
        %v404 = vld [vmem:[%s1 + $0x2e0] sm:$0xff]
        %v405 = vld [vmem:[%s1 + $0x2e8] sm:$0xff]
        %v406 = vld [vmem:[%s1 + $0x2f0] sm:$0xff]
        %v407 = vld [vmem:[%s1 + $0x2f8] sm:$0xff]
        %v408 = vld [vmem:[%s1 + $0x300] sm:$0xff]
        %v409 = vld [vmem:[%s1 + $0x308] sm:$0xff]
        %v410 = vld [vmem:[%s1 + $0x310] sm:$0xff]
        %v411 = vld [vmem:[%s1 + $0x318] sm:$0xff]
        %v412 = vld [vmem:[%s1 + $0x320] sm:$0xff]
        %v413 = vld [vmem:[%s1 + $0x328] sm:$0xff]
        %v414 = vld [vmem:[%s1 + $0x330] sm:$0xff]
        %v415 = vld [vmem:[%s1 + $0x338] sm:$0xff]
        %v416 = vld [vmem:[%s1 + $0x340] sm:$0xff]
        %v417 = vld [vmem:[%s1 + $0x348] sm:$0xff]
        %v418 = vld [vmem:[%s1 + $0x350] sm:$0xff]
        %v419 = vld [vmem:[%s1 + $0x358] sm:$0xff]
        %v420 = vld [vmem:[%s1 + $0x360] sm:$0xff]
        %v421 = vld [vmem:[%s1 + $0x368] sm:$0xff]
        %v422 = vld [vmem:[%s1 + $0x370] sm:$0xff]
        %v423 = vld [vmem:[%s1 + $0x378] sm:$0xff]
        %v424 = vld [vmem:[%s1 + $0x380] sm:$0xff]
        %v425 = vld [vmem:[%s1 + $0x388] sm:$0xff]
        %v426 = vld [vmem:[%s1 + $0x390] sm:$0xff]
        %v427 = vld [vmem:[%s1 + $0x398] sm:$0xff]
        %v428 = vld [vmem:[%s1 + $0x3a0] sm:$0xff]
        %v429 = vld [vmem:[%s1 + $0x3a8] sm:$0xff]
        %v430 = vld [vmem:[%s1 + $0x3b0] sm:$0xff]
        %v431 = vld [vmem:[%s1 + $0x3b8] sm:$0xff]
        %v432 = vld [vmem:[%s1 + $0x3c0] sm:$0xff]
        %v433 = vld [vmem:[%s1 + $0x3c8] sm:$0xff]
        %v434 = vld [vmem:[%s1 + $0x3d0] sm:$0xff]
        %v435 = vld [vmem:[%s1 + $0x3d8] sm:$0xff]
        %v436 = vld [vmem:[%s1 + $0x3e0] sm:$0xff]
        %v437 = vld [vmem:[%s1 + $0x3e8] sm:$0xff]
        %v438 = vld [vmem:[%s1 + $0x3f0] sm:$0xff]
        %v439 = vld [vmem:[%s1 + $0x3f8] sm:$0xff]
        %v440 = vld [vmem:[%s1 + $0x400] sm:$0xff]
        %v441 = vld [vmem:[%s1 + $0x408] sm:$0xff]
        %v442 = vld [vmem:[%s1 + $0x410] sm:$0xff]
        %v443 = vld [vmem:[%s1 + $0x418] sm:$0xff]
        %v444 = vld [vmem:[%s1 + $0x420] sm:$0xff]
        %v445 = vld [vmem:[%s1 + $0x428] sm:$0xff]
        %v446 = vld [vmem:[%s1 + $0x430] sm:$0xff]
        %v447 = vld [vmem:[%s1 + $0x438] sm:$0xff]
        %v448 = vld [vmem:[%s1 + $0x440] sm:$0xff]
        %v449 = vld [vmem:[%s1 + $0x448] sm:$0xff]
        %v450 = vld [vmem:[%s1 + $0x450] sm:$0xff]
        %v451 = vld [vmem:[%s1 + $0x458] sm:$0xff]
        %v452 = vld [vmem:[%s1 + $0x460] sm:$0xff]
        %v453 = vld [vmem:[%s1 + $0x468] sm:$0xff]
        %v454 = vld [vmem:[%s1 + $0x470] sm:$0xff]
        %v455 = vld [vmem:[%s1 + $0x478] sm:$0xff]
        %v456 = vld [vmem:[%s1 + $0x480] sm:$0xff]
        %v457 = vld [vmem:[%s1 + $0x488] sm:$0xff]
        %v458 = vld [vmem:[%s1 + $0x490] sm:$0xff]
        %v459 = vld [vmem:[%s1 + $0x498] sm:$0xff]
        %v460 = vld [vmem:[%s1 + $0x4a0] sm:$0xff]
        %v461 = vld [vmem:[%s1 + $0x4a8] sm:$0xff]
        %v462 = vld [vmem:[%s1 + $0x4b0] sm:$0xff]
        %v463 = vld [vmem:[%s1 + $0x4b8] sm:$0xff]
        %v464 = vld [vmem:[%s1 + $0x4c0] sm:$0xff]
        %v465 = vld [vmem:[%s1 + $0x4c8] sm:$0xff]
        %v466 = vld [vmem:[%s1 + $0x4d0] sm:$0xff]
        %v467 = vld [vmem:[%s1 + $0x4d8] sm:$0xff]
        %v468 = vld [vmem:[%s1 + $0x4e0] sm:$0xff]
        %v469 = vld [vmem:[%s1 + $0x4e8] sm:$0xff]
        %v470 = vld [vmem:[%s1 + $0x4f0] sm:$0xff]
        %v471 = vld [vmem:[%s1 + $0x4f8] sm:$0xff]
        %v472 = vld [vmem:[%s2] sm:$0x1f]
        %v474 = vlaneseq
        %v475 = vshrl.u32 %v474, 7
        %v476 = vsub.s32 0, %v475
        %v477 = vrot.slane %v472, %v476
        %v478 = vlaneseq
        %v479 = vshrl.u32 %v478, 7
        %v480 = vsub.s32 1, %v479
        %v481 = vrot.slane %v472, %v480
        %v482 = vlaneseq
        %v483 = vshrl.u32 %v482, 7
        %v484 = vsub.s32 2, %v483
        %v485 = vrot.slane %v472, %v484
        %v486 = vlaneseq
        %v487 = vshrl.u32 %v486, 7
        %v488 = vsub.s32 3, %v487
        %v489 = vrot.slane %v472, %v488
        %v490 = vlaneseq
        %v491 = vshrl.u32 %v490, 7
        %v492 = vsub.s32 4, %v491
        %v493 = vrot.slane %v472, %v492
        %499 = vmatprep.subr.mxu0 %v313
        %500 = vmatpush1.msra.mxu0 %v312
        %501 = vmatprep.subr.mxu0 %v318
        %502 = vmatpush1.msra.mxu0 %v317
        %503 = vmatprep.subr.mxu0 %v323
        %504 = vmatpush1.msra.mxu0 %v322
        %505 = vmatprep.subr.mxu0 %v328
        %506 = vmatpush1.msra.mxu0 %v327
        %507 = vmatprep.subr.mxu0 %v333
        %508 = vmatpush1.msra.mxu0 %v332
        %509 = vmatprep.subr.mxu0 %v338
        %510 = vmatpush1.msra.mxu0 %v337
        %511 = vmatprep.subr.mxu0 %v343
        %512 = vmatpush1.msra.mxu0 %v342
        %513 = vmatprep.subr.mxu0 %v348
        %514 = vmatpush1.msra.mxu0 %v347
        %515 = vmatprep.subr.mxu0 %v353
        %516 = vmatpush1.msra.mxu0 %v352
        %517 = vmatprep.subr.mxu0 %v358
        %518 = vmatpush1.msra.mxu0 %v357
        %519 = vmatprep.subr.mxu0 %v363
        %520 = vmatpush1.msra.mxu0 %v362
        %521 = vmatprep.subr.mxu0 %v368
        %522 = vmatpush1.msra.mxu0 %v367
        %523 = vmatprep.subr.mxu0 %v373
        %524 = vmatpush1.msra.mxu0 %v372
        %525 = vmatprep.subr.mxu0 %v378
        %526 = vmatpush1.msra.mxu0 %v377
        %527 = vmatprep.subr.mxu0 %v383
        %528 = vmatpush1.msra.mxu0 %v382
        %529 = vmatprep.subr.mxu0 %v388
        %530 = vmatpush1.msra.mxu0 %v387
        %531 = vmatprep.subr.mxu0 %v393
        %532 = vmatpush1.msra.mxu0 %v392
        %533 = vmatprep.subr.mxu0 %v398
        %534 = vmatpush1.msra.mxu0 %v397
        %535 = vmatprep.subr.mxu0 %v403
        %536 = vmatpush1.msra.mxu0 %v402
        %537 = vmatprep.subr.mxu0 %v408
        %538 = vmatpush1.msra.mxu0 %v407
        %539 = vmatprep.subr.mxu0 %v413
        %540 = vmatpush1.msra.mxu0 %v412
        %541 = vmatprep.subr.mxu0 %v418
        %542 = vmatpush1.msra.mxu0 %v417
        %543 = vmatprep.subr.mxu0 %v423
        %544 = vmatpush1.msra.mxu0 %v422
        %545 = vmatprep.subr.mxu0 %v428
        %546 = vmatpush1.msra.mxu0 %v427
        %547 = vmatprep.subr.mxu0 %v433
        %548 = vmatpush1.msra.mxu0 %v432
        %549 = vmatprep.subr.mxu0 %v438
        %550 = vmatpush1.msra.mxu0 %v437
        %551 = vmatprep.subr.mxu0 %v443
        %552 = vmatpush1.msra.mxu0 %v442
        %553 = vmatprep.subr.mxu0 %v448
        %554 = vmatpush1.msra.mxu0 %v447
        %555 = vmatprep.subr.mxu0 %v453
        %556 = vmatpush1.msra.mxu0 %v452
        %557 = vmatprep.subr.mxu0 %v458
        %558 = vmatpush1.msra.mxu0 %v457
        %559 = vmatprep.subr.mxu0 %v463
        %560 = vmatpush1.msra.mxu0 %v462
        %561 = vmatprep.subr.mxu0 %v468
        %562 = vmatpush1.msra.mxu0 %v467
        %563 = vmatprep.mubr.f32.mxu0 %v249
        %564 = vmatmul.mubr.f32.gmra.mrb[0].mxu0 %v248
        %v565 = vpop.f32.mrb[0].mxu0
        %v566 = vadd.f32 %v477, %v565
        %v567 = vpop.f32.mrb[0].mxu0
        %v568 = vadd.f32 %v481, %v567
        %569 = vmatprep.mubr.f32.mxu0 %v251
        %570 = vmatmul.mubr.f32.gmra.mrb[0].mxu0 %v250
        %v571 = vpop.f32.mrb[0].mxu0
        %v572 = vadd.f32 %v477, %v571
        %v573 = vpop.f32.mrb[0].mxu0
        %v574 = vadd.f32 %v481, %v573
        %575 = vmatprep.mubr.f32.mxu0 %v253
        %576 = vmatmul.mubr.f32.gmra.mrb[0].mxu0 %v252
        %v577 = vpop.f32.mrb[0].mxu0
        %v578 = vadd.f32 %v477, %v577
        %v579 = vpop.f32.mrb[0].mxu0
        %v580 = vadd.f32 %v481, %v579
        %581 = vmatprep.mubr.f32.mxu0 %v255
        %582 = vmatmul.mubr.f32.gmra.mrb[0].mxu0 %v254
        %v583 = vpop.f32.mrb[0].mxu0
        %v584 = vadd.f32 %v477, %v583
        %v585 = vpop.f32.mrb[0].mxu0
        %v586 = vadd.f32 %v481, %v585
        %587 = vmatprep.mubr.f32.mxu0 %v257
        %588 = vmatmul.mubr.f32.gmra.mrb[0].mxu0 %v256
        %v589 = vpop.f32.mrb[0].mxu0
        %v590 = vadd.f32 %v477, %v589
        %v591 = vpop.f32.mrb[0].mxu0
        %v592 = vadd.f32 %v481, %v591
        %593 = vmatprep.mubr.f32.mxu0 %v259
        %594 = vmatmul.mubr.f32.gmra.mrb[0].mxu0 %v258
        %v595 = vpop.f32.mrb[0].mxu0
        %v596 = vadd.f32 %v477, %v595
        %v597 = vpop.f32.mrb[0].mxu0
        %v598 = vadd.f32 %v481, %v597
        %599 = vmatprep.mubr.f32.mxu0 %v261
        %600 = vmatmul.mubr.f32.gmra.mrb[0].mxu0 %v260
        %v601 = vpop.f32.mrb[0].mxu0
        %v602 = vadd.f32 %v477, %v601
        %v603 = vpop.f32.mrb[0].mxu0
        %v604 = vadd.f32 %v481, %v603
        %605 = vmatprep.mubr.f32.mxu0 %v263
        %606 = vmatmul.mubr.f32.gmra.mrb[0].mxu0 %v262
        %v607 = vpop.f32.mrb[0].mxu0
        %v608 = vadd.f32 %v477, %v607
        %v609 = vpop.f32.mrb[0].mxu0
        %v610 = vadd.f32 %v481, %v609
        %611 = vmatprep.mubr.f32.mxu0 %v265
        %612 = vmatmul.mubr.f32.gmra.mrb[0].mxu0 %v264
        %v613 = vpop.f32.mrb[0].mxu0
        %v614 = vadd.f32 %v477, %v613
        %v615 = vpop.f32.mrb[0].mxu0
        %v616 = vadd.f32 %v481, %v615
        %617 = vmatprep.mubr.f32.mxu0 %v267
        %618 = vmatmul.mubr.f32.gmra.mrb[0].mxu0 %v266
        %v619 = vpop.f32.mrb[0].mxu0
        %v620 = vadd.f32 %v477, %v619
        %v621 = vpop.f32.mrb[0].mxu0
        %v622 = vadd.f32 %v481, %v621
        %623 = vmatprep.mubr.f32.mxu0 %v269
        %624 = vmatmul.mubr.f32.gmra.mrb[0].mxu0 %v268
        %v625 = vpop.f32.mrb[0].mxu0
        %v626 = vadd.f32 %v477, %v625
        %v627 = vpop.f32.mrb[0].mxu0
        %v628 = vadd.f32 %v481, %v627
        %629 = vmatprep.mubr.f32.mxu0 %v271
        %630 = vmatmul.mubr.f32.gmra.mrb[0].mxu0 %v270
        %v631 = vpop.f32.mrb[0].mxu0
        %v632 = vadd.f32 %v477, %v631
        %v633 = vpop.f32.mrb[0].mxu0
        %v634 = vadd.f32 %v481, %v633
        %635 = vmatprep.mubr.f32.mxu0 %v273
        %636 = vmatmul.mubr.f32.gmra.mrb[0].mxu0 %v272
        %v637 = vpop.f32.mrb[0].mxu0
        %v638 = vadd.f32 %v477, %v637
        %v639 = vpop.f32.mrb[0].mxu0
        %v640 = vadd.f32 %v481, %v639
        %641 = vmatprep.mubr.f32.mxu0 %v275
        %642 = vmatmul.mubr.f32.gmra.mrb[0].mxu0 %v274
        %v643 = vpop.f32.mrb[0].mxu0
        %v644 = vadd.f32 %v477, %v643
        %v645 = vpop.f32.mrb[0].mxu0
        %v646 = vadd.f32 %v481, %v645
        %647 = vmatprep.mubr.f32.mxu0 %v277
        %648 = vmatmul.mubr.f32.gmra.mrb[0].mxu0 %v276
        %v649 = vpop.f32.mrb[0].mxu0
        %v650 = vadd.f32 %v477, %v649
        %v651 = vpop.f32.mrb[0].mxu0
        %v652 = vadd.f32 %v481, %v651
        %653 = vmatprep.mubr.f32.mxu0 %v279
        %654 = vmatmul.mubr.f32.gmra.mrb[0].mxu0 %v278
        %v655 = vpop.f32.mrb[0].mxu0
        %v656 = vadd.f32 %v477, %v655
        %v657 = vpop.f32.mrb[0].mxu0
        %v658 = vadd.f32 %v481, %v657
        %659 = vmatprep.mubr.f32.mxu0 %v281
        %660 = vmatmul.mubr.f32.gmra.mrb[0].mxu0 %v280
        %v661 = vpop.f32.mrb[0].mxu0
        %v662 = vadd.f32 %v477, %v661
        %v663 = vpop.f32.mrb[0].mxu0
        %v664 = vadd.f32 %v481, %v663
        %665 = vmatprep.mubr.f32.mxu0 %v283
        %666 = vmatmul.mubr.f32.gmra.mrb[0].mxu0 %v282
        %v667 = vpop.f32.mrb[0].mxu0
        %v668 = vadd.f32 %v477, %v667
        %v669 = vpop.f32.mrb[0].mxu0
        %v670 = vadd.f32 %v481, %v669
        %671 = vmatprep.mubr.f32.mxu0 %v285
        %672 = vmatmul.mubr.f32.gmra.mrb[0].mxu0 %v284
        %v673 = vpop.f32.mrb[0].mxu0
        %v674 = vadd.f32 %v477, %v673
        %v675 = vpop.f32.mrb[0].mxu0
        %v676 = vadd.f32 %v481, %v675
        %677 = vmatprep.mubr.f32.mxu0 %v287
        %678 = vmatmul.mubr.f32.gmra.mrb[0].mxu0 %v286
        %v679 = vpop.f32.mrb[0].mxu0
        %v680 = vadd.f32 %v477, %v679
        %v681 = vpop.f32.mrb[0].mxu0
        %v682 = vadd.f32 %v481, %v681
        %683 = vmatprep.mubr.f32.mxu0 %v289
        %684 = vmatmul.mubr.f32.gmra.mrb[0].mxu0 %v288
        %v685 = vpop.f32.mrb[0].mxu0
        %v686 = vadd.f32 %v477, %v685
        %v687 = vpop.f32.mrb[0].mxu0
        %v688 = vadd.f32 %v481, %v687
        %689 = vmatprep.mubr.f32.mxu0 %v291
        %690 = vmatmul.mubr.f32.gmra.mrb[0].mxu0 %v290
        %v691 = vpop.f32.mrb[0].mxu0
        %v692 = vadd.f32 %v477, %v691
        %v693 = vpop.f32.mrb[0].mxu0
        %v694 = vadd.f32 %v481, %v693
        %695 = vmatprep.mubr.f32.mxu0 %v293
        %696 = vmatmul.mubr.f32.gmra.mrb[0].mxu0 %v292
        %v697 = vpop.f32.mrb[0].mxu0
        %v698 = vadd.f32 %v477, %v697
        %v699 = vpop.f32.mrb[0].mxu0
        %v700 = vadd.f32 %v481, %v699
        %701 = vmatprep.mubr.f32.mxu0 %v295
        %702 = vmatmul.mubr.f32.gmra.mrb[0].mxu0 %v294
        %v703 = vpop.f32.mrb[0].mxu0
        %v704 = vadd.f32 %v477, %v703
        %v705 = vpop.f32.mrb[0].mxu0
        %v706 = vadd.f32 %v481, %v705
        %707 = vmatprep.mubr.f32.mxu0 %v297
        %708 = vmatmul.mubr.f32.gmra.mrb[0].mxu0 %v296
        %v709 = vpop.f32.mrb[0].mxu0
        %v710 = vadd.f32 %v477, %v709
        %v711 = vpop.f32.mrb[0].mxu0
        %v712 = vadd.f32 %v481, %v711
        %713 = vmatprep.mubr.f32.mxu0 %v299
        %714 = vmatmul.mubr.f32.gmra.mrb[0].mxu0 %v298
        %v715 = vpop.f32.mrb[0].mxu0
        %v716 = vadd.f32 %v477, %v715
        %v717 = vpop.f32.mrb[0].mxu0
        %v718 = vadd.f32 %v481, %v717
        %719 = vmatprep.mubr.f32.mxu0 %v301
        %720 = vmatmul.mubr.f32.gmra.mrb[0].mxu0 %v300
        %v721 = vpop.f32.mrb[0].mxu0
        %v722 = vadd.f32 %v477, %v721
        %v723 = vpop.f32.mrb[0].mxu0
        %v724 = vadd.f32 %v481, %v723
        %725 = vmatprep.mubr.f32.mxu0 %v303
        %726 = vmatmul.mubr.f32.gmra.mrb[0].mxu0 %v302
        %v727 = vpop.f32.mrb[0].mxu0
        %v728 = vadd.f32 %v477, %v727
        %v729 = vpop.f32.mrb[0].mxu0
        %v730 = vadd.f32 %v481, %v729
        %731 = vmatprep.mubr.f32.mxu0 %v305
        %732 = vmatmul.mubr.f32.gmra.mrb[0].mxu0 %v304
        %v733 = vpop.f32.mrb[0].mxu0
        %v734 = vadd.f32 %v477, %v733
        %v735 = vpop.f32.mrb[0].mxu0
        %v736 = vadd.f32 %v481, %v735
        %737 = vmatprep.mubr.f32.mxu0 %v307
        %738 = vmatmul.mubr.f32.gmra.mrb[0].mxu0 %v306
        %v739 = vpop.f32.mrb[0].mxu0
        %v740 = vadd.f32 %v477, %v739
        %v741 = vpop.f32.mrb[0].mxu0
        %v742 = vadd.f32 %v481, %v741
        %743 = vmatprep.mubr.f32.mxu0 %v309
        %744 = vmatmul.mubr.f32.gmra.mrb[0].mxu0 %v308
        %v745 = vpop.f32.mrb[0].mxu0
        %v746 = vadd.f32 %v477, %v745
        %v747 = vpop.f32.mrb[0].mxu0
        %v748 = vadd.f32 %v481, %v747
        %749 = vmatprep.mubr.f32.mxu0 %v311
        %750 = vmatmul.mubr.f32.gmra.mrb[0].mxu0 %v310
        %v751 = vpop.f32.mrb[0].mxu0
        %v752 = vadd.f32 %v477, %v751
        %v753 = vpop.f32.mrb[0].mxu0
        %v754 = vadd.f32 %v481, %v753
        %755 = vdwg.mxu0
        %756 = vmatprep.subr.mxu0 %v315
        %757 = vmatpush1.msra.mxu0 %v314
        %758 = vmatprep.subr.mxu0 %v320
        %759 = vmatpush1.msra.mxu0 %v319
        %760 = vmatprep.subr.mxu0 %v325
        %761 = vmatpush1.msra.mxu0 %v324
        %762 = vmatprep.subr.mxu0 %v330
        %763 = vmatpush1.msra.mxu0 %v329
        %764 = vmatprep.subr.mxu0 %v335
        %765 = vmatpush1.msra.mxu0 %v334
        %766 = vmatprep.subr.mxu0 %v340
        %767 = vmatpush1.msra.mxu0 %v339
        %768 = vmatprep.subr.mxu0 %v345
        %769 = vmatpush1.msra.mxu0 %v344
        %770 = vmatprep.subr.mxu0 %v350
        %771 = vmatpush1.msra.mxu0 %v349
        %772 = vmatprep.subr.mxu0 %v355
        %773 = vmatpush1.msra.mxu0 %v354
        %774 = vmatprep.subr.mxu0 %v360
        %775 = vmatpush1.msra.mxu0 %v359
        %776 = vmatprep.subr.mxu0 %v365
        %777 = vmatpush1.msra.mxu0 %v364
        %778 = vmatprep.subr.mxu0 %v370
        %779 = vmatpush1.msra.mxu0 %v369
        %780 = vmatprep.subr.mxu0 %v375
        %781 = vmatpush1.msra.mxu0 %v374
        %782 = vmatprep.subr.mxu0 %v380
        %783 = vmatpush1.msra.mxu0 %v379
        %784 = vmatprep.subr.mxu0 %v385
        %785 = vmatpush1.msra.mxu0 %v384
        %786 = vmatprep.subr.mxu0 %v390
        %787 = vmatpush1.msra.mxu0 %v389
        %788 = vmatprep.subr.mxu0 %v395
        %789 = vmatpush1.msra.mxu0 %v394
        %790 = vmatprep.subr.mxu0 %v400
        %791 = vmatpush1.msra.mxu0 %v399
        %792 = vmatprep.subr.mxu0 %v405
        %793 = vmatpush1.msra.mxu0 %v404
        %794 = vmatprep.subr.mxu0 %v410
        %795 = vmatpush1.msra.mxu0 %v409
        %796 = vmatprep.subr.mxu0 %v415
        %797 = vmatpush1.msra.mxu0 %v414
        %798 = vmatprep.subr.mxu0 %v420
        %799 = vmatpush1.msra.mxu0 %v419
        %800 = vmatprep.subr.mxu0 %v425
        %801 = vmatpush1.msra.mxu0 %v424
        %802 = vmatprep.subr.mxu0 %v430
        %803 = vmatpush1.msra.mxu0 %v429
        %804 = vmatprep.subr.mxu0 %v435
        %805 = vmatpush1.msra.mxu0 %v434
        %806 = vmatprep.subr.mxu0 %v440
        %807 = vmatpush1.msra.mxu0 %v439
        %808 = vmatprep.subr.mxu0 %v445
        %809 = vmatpush1.msra.mxu0 %v444
        %810 = vmatprep.subr.mxu0 %v450
        %811 = vmatpush1.msra.mxu0 %v449
        %812 = vmatprep.subr.mxu0 %v455
        %813 = vmatpush1.msra.mxu0 %v454
        %814 = vmatprep.subr.mxu0 %v460
        %815 = vmatpush1.msra.mxu0 %v459
        %816 = vmatprep.subr.mxu0 %v465
        %817 = vmatpush1.msra.mxu0 %v464
        %818 = vmatprep.subr.mxu0 %v470
        %819 = vmatpush1.msra.mxu0 %v469
        %820 = vmatprep.mubr.f32.mxu0 %v249
        %821 = vmatmul.mubr.f32.gmra.mrb[0].mxu0 %v248
        %v822 = vpop.f32.mrb[0].mxu0
        %v823 = vadd.f32 %v485, %v822
        %v824 = vpop.f32.mrb[0].mxu0
        %v825 = vadd.f32 %v489, %v824
        %826 = vmatprep.mubr.f32.mxu0 %v251
        %827 = vmatmul.mubr.f32.gmra.mrb[0].mxu0 %v250
        %v828 = vpop.f32.mrb[0].mxu0
        %v829 = vadd.f32 %v485, %v828
        %v830 = vpop.f32.mrb[0].mxu0
        %v831 = vadd.f32 %v489, %v830
        %832 = vmatprep.mubr.f32.mxu0 %v253
        %833 = vmatmul.mubr.f32.gmra.mrb[0].mxu0 %v252
        %v834 = vpop.f32.mrb[0].mxu0
        %v835 = vadd.f32 %v485, %v834
        %v836 = vpop.f32.mrb[0].mxu0
        %v837 = vadd.f32 %v489, %v836
        %838 = vmatprep.mubr.f32.mxu0 %v255
        %839 = vmatmul.mubr.f32.gmra.mrb[0].mxu0 %v254
        %v840 = vpop.f32.mrb[0].mxu0
        %v841 = vadd.f32 %v485, %v840
        %v842 = vpop.f32.mrb[0].mxu0
        %v843 = vadd.f32 %v489, %v842
        %844 = vmatprep.mubr.f32.mxu0 %v257
        %845 = vmatmul.mubr.f32.gmra.mrb[0].mxu0 %v256
        %v846 = vpop.f32.mrb[0].mxu0
        %v847 = vadd.f32 %v485, %v846
        %v848 = vpop.f32.mrb[0].mxu0
        %v849 = vadd.f32 %v489, %v848
        %850 = vmatprep.mubr.f32.mxu0 %v259
        %851 = vmatmul.mubr.f32.gmra.mrb[0].mxu0 %v258
        %v852 = vpop.f32.mrb[0].mxu0
        %v853 = vadd.f32 %v485, %v852
        %v854 = vpop.f32.mrb[0].mxu0
        %v855 = vadd.f32 %v489, %v854
        %856 = vmatprep.mubr.f32.mxu0 %v261
        %857 = vmatmul.mubr.f32.gmra.mrb[0].mxu0 %v260
        %v858 = vpop.f32.mrb[0].mxu0
        %v859 = vadd.f32 %v485, %v858
        %v860 = vpop.f32.mrb[0].mxu0
        %v861 = vadd.f32 %v489, %v860
        %862 = vmatprep.mubr.f32.mxu0 %v263
        %863 = vmatmul.mubr.f32.gmra.mrb[0].mxu0 %v262
        %v864 = vpop.f32.mrb[0].mxu0
        %v865 = vadd.f32 %v485, %v864
        %v866 = vpop.f32.mrb[0].mxu0
        %v867 = vadd.f32 %v489, %v866
        %868 = vmatprep.mubr.f32.mxu0 %v265
        %869 = vmatmul.mubr.f32.gmra.mrb[0].mxu0 %v264
        %v870 = vpop.f32.mrb[0].mxu0
        %v871 = vadd.f32 %v485, %v870
        %v872 = vpop.f32.mrb[0].mxu0
        %v873 = vadd.f32 %v489, %v872
        %874 = vmatprep.mubr.f32.mxu0 %v267
        %875 = vmatmul.mubr.f32.gmra.mrb[0].mxu0 %v266
        %v876 = vpop.f32.mrb[0].mxu0
        %v877 = vadd.f32 %v485, %v876
        %v878 = vpop.f32.mrb[0].mxu0
        %v879 = vadd.f32 %v489, %v878
        %880 = vmatprep.mubr.f32.mxu0 %v269
        %881 = vmatmul.mubr.f32.gmra.mrb[0].mxu0 %v268
        %v882 = vpop.f32.mrb[0].mxu0
        %v883 = vadd.f32 %v485, %v882
        %v884 = vpop.f32.mrb[0].mxu0
        %v885 = vadd.f32 %v489, %v884
        %886 = vmatprep.mubr.f32.mxu0 %v271
        %887 = vmatmul.mubr.f32.gmra.mrb[0].mxu0 %v270
        %v888 = vpop.f32.mrb[0].mxu0
        %v889 = vadd.f32 %v485, %v888
        %v890 = vpop.f32.mrb[0].mxu0
        %v891 = vadd.f32 %v489, %v890
        %892 = vmatprep.mubr.f32.mxu0 %v273
        %893 = vmatmul.mubr.f32.gmra.mrb[0].mxu0 %v272
        %v894 = vpop.f32.mrb[0].mxu0
        %v895 = vadd.f32 %v485, %v894
        %v896 = vpop.f32.mrb[0].mxu0
        %v897 = vadd.f32 %v489, %v896
        %898 = vmatprep.mubr.f32.mxu0 %v275
        %899 = vmatmul.mubr.f32.gmra.mrb[0].mxu0 %v274
        %v900 = vpop.f32.mrb[0].mxu0
        %v901 = vadd.f32 %v485, %v900
        %v902 = vpop.f32.mrb[0].mxu0
        %v903 = vadd.f32 %v489, %v902
        %904 = vmatprep.mubr.f32.mxu0 %v277
        %905 = vmatmul.mubr.f32.gmra.mrb[0].mxu0 %v276
        %v906 = vpop.f32.mrb[0].mxu0
        %v907 = vadd.f32 %v485, %v906
        %v908 = vpop.f32.mrb[0].mxu0
        %v909 = vadd.f32 %v489, %v908
        %910 = vmatprep.mubr.f32.mxu0 %v279
        %911 = vmatmul.mubr.f32.gmra.mrb[0].mxu0 %v278
        %v912 = vpop.f32.mrb[0].mxu0
        %v913 = vadd.f32 %v485, %v912
        %v914 = vpop.f32.mrb[0].mxu0
        %v915 = vadd.f32 %v489, %v914
        %916 = vmatprep.mubr.f32.mxu0 %v281
        %917 = vmatmul.mubr.f32.gmra.mrb[0].mxu0 %v280
        %v918 = vpop.f32.mrb[0].mxu0
        %v919 = vadd.f32 %v485, %v918
        %v920 = vpop.f32.mrb[0].mxu0
        %v921 = vadd.f32 %v489, %v920
        %922 = vmatprep.mubr.f32.mxu0 %v283
        %923 = vmatmul.mubr.f32.gmra.mrb[0].mxu0 %v282
        %v924 = vpop.f32.mrb[0].mxu0
        %v925 = vadd.f32 %v485, %v924
        %v926 = vpop.f32.mrb[0].mxu0
        %v927 = vadd.f32 %v489, %v926
        %928 = vmatprep.mubr.f32.mxu0 %v285
        %929 = vmatmul.mubr.f32.gmra.mrb[0].mxu0 %v284
        %v930 = vpop.f32.mrb[0].mxu0
        %v931 = vadd.f32 %v485, %v930
        %v932 = vpop.f32.mrb[0].mxu0
        %v933 = vadd.f32 %v489, %v932
        %934 = vmatprep.mubr.f32.mxu0 %v287
        %935 = vmatmul.mubr.f32.gmra.mrb[0].mxu0 %v286
        %v936 = vpop.f32.mrb[0].mxu0
        %v937 = vadd.f32 %v485, %v936
        %v938 = vpop.f32.mrb[0].mxu0
        %v939 = vadd.f32 %v489, %v938
        %940 = vmatprep.mubr.f32.mxu0 %v289
        %941 = vmatmul.mubr.f32.gmra.mrb[0].mxu0 %v288
        %v942 = vpop.f32.mrb[0].mxu0
        %v943 = vadd.f32 %v485, %v942
        %v944 = vpop.f32.mrb[0].mxu0
        %v945 = vadd.f32 %v489, %v944
        %946 = vmatprep.mubr.f32.mxu0 %v291
        %947 = vmatmul.mubr.f32.gmra.mrb[0].mxu0 %v290
        %v948 = vpop.f32.mrb[0].mxu0
        %v949 = vadd.f32 %v485, %v948
        %v950 = vpop.f32.mrb[0].mxu0
        %v951 = vadd.f32 %v489, %v950
        %952 = vmatprep.mubr.f32.mxu0 %v293
        %953 = vmatmul.mubr.f32.gmra.mrb[0].mxu0 %v292
        %v954 = vpop.f32.mrb[0].mxu0
        %v955 = vadd.f32 %v485, %v954
        %v956 = vpop.f32.mrb[0].mxu0
        %v957 = vadd.f32 %v489, %v956
        %958 = vmatprep.mubr.f32.mxu0 %v295
        %959 = vmatmul.mubr.f32.gmra.mrb[0].mxu0 %v294
        %v960 = vpop.f32.mrb[0].mxu0
        %v961 = vadd.f32 %v485, %v960
        %v962 = vpop.f32.mrb[0].mxu0
        %v963 = vadd.f32 %v489, %v962
        %964 = vmatprep.mubr.f32.mxu0 %v297
        %965 = vmatmul.mubr.f32.gmra.mrb[0].mxu0 %v296
        %v966 = vpop.f32.mrb[0].mxu0
        %v967 = vadd.f32 %v485, %v966
        %v968 = vpop.f32.mrb[0].mxu0
        %v969 = vadd.f32 %v489, %v968
        %970 = vmatprep.mubr.f32.mxu0 %v299
        %971 = vmatmul.mubr.f32.gmra.mrb[0].mxu0 %v298
        %v972 = vpop.f32.mrb[0].mxu0
        %v973 = vadd.f32 %v485, %v972
        %v974 = vpop.f32.mrb[0].mxu0
        %v975 = vadd.f32 %v489, %v974
        %976 = vmatprep.mubr.f32.mxu0 %v301
        %977 = vmatmul.mubr.f32.gmra.mrb[0].mxu0 %v300
        %v978 = vpop.f32.mrb[0].mxu0
        %v979 = vadd.f32 %v485, %v978
        %v980 = vpop.f32.mrb[0].mxu0
        %v981 = vadd.f32 %v489, %v980
        %982 = vmatprep.mubr.f32.mxu0 %v303
        %983 = vmatmul.mubr.f32.gmra.mrb[0].mxu0 %v302
        %v984 = vpop.f32.mrb[0].mxu0
        %v985 = vadd.f32 %v485, %v984
        %v986 = vpop.f32.mrb[0].mxu0
        %v987 = vadd.f32 %v489, %v986
        %988 = vmatprep.mubr.f32.mxu0 %v305
        %989 = vmatmul.mubr.f32.gmra.mrb[0].mxu0 %v304
        %v990 = vpop.f32.mrb[0].mxu0
        %v991 = vadd.f32 %v485, %v990
        %v992 = vpop.f32.mrb[0].mxu0
        %v993 = vadd.f32 %v489, %v992
        %994 = vmatprep.mubr.f32.mxu0 %v307
        %995 = vmatmul.mubr.f32.gmra.mrb[0].mxu0 %v306
        %v996 = vpop.f32.mrb[0].mxu0
        %v997 = vadd.f32 %v485, %v996
        %v998 = vpop.f32.mrb[0].mxu0
        %v999 = vadd.f32 %v489, %v998
        %1000 = vmatprep.mubr.f32.mxu0 %v309
        %1001 = vmatmul.mubr.f32.gmra.mrb[0].mxu0 %v308
        %v1002 = vpop.f32.mrb[0].mxu0
        %v1003 = vadd.f32 %v485, %v1002
        %v1004 = vpop.f32.mrb[0].mxu0
        %v1005 = vadd.f32 %v489, %v1004
        %1006 = vmatprep.mubr.f32.mxu0 %v311
        %1007 = vmatmul.mubr.f32.gmra.mrb[0].mxu0 %v310
        %v1008 = vpop.f32.mrb[0].mxu0
        %v1009 = vadd.f32 %v485, %v1008
        %v1010 = vpop.f32.mrb[0].mxu0
        %v1011 = vadd.f32 %v489, %v1010
        %1012 = vdwg.mxu0
        %1013 = vmatprep.subr.mxu0 0.0
        %1014 = vmatpush1.msra.mxu0 %v316
        %1015 = vmatprep.subr.mxu0 0.0
        %1016 = vmatpush1.msra.mxu0 %v321
        %1017 = vmatprep.subr.mxu0 0.0
        %1018 = vmatpush1.msra.mxu0 %v326
        %1019 = vmatprep.subr.mxu0 0.0
        %1020 = vmatpush1.msra.mxu0 %v331
        %1021 = vmatprep.subr.mxu0 0.0
        %1022 = vmatpush1.msra.mxu0 %v336
        %1023 = vmatprep.subr.mxu0 0.0
        %1024 = vmatpush1.msra.mxu0 %v341
        %1025 = vmatprep.subr.mxu0 0.0
        %1026 = vmatpush1.msra.mxu0 %v346
        %1027 = vmatprep.subr.mxu0 0.0
        %1028 = vmatpush1.msra.mxu0 %v351
        %1029 = vmatprep.subr.mxu0 0.0
        %1030 = vmatpush1.msra.mxu0 %v356
        %1031 = vmatprep.subr.mxu0 0.0
        %1032 = vmatpush1.msra.mxu0 %v361
        %1033 = vmatprep.subr.mxu0 0.0
        %1034 = vmatpush1.msra.mxu0 %v366
        %1035 = vmatprep.subr.mxu0 0.0
        %1036 = vmatpush1.msra.mxu0 %v371
        %1037 = vmatprep.subr.mxu0 0.0
        %1038 = vmatpush1.msra.mxu0 %v376
        %1039 = vmatprep.subr.mxu0 0.0
        %1040 = vmatpush1.msra.mxu0 %v381
        %1041 = vmatprep.subr.mxu0 0.0
        %1042 = vmatpush1.msra.mxu0 %v386
        %1043 = vmatprep.subr.mxu0 0.0
        %1044 = vmatpush1.msra.mxu0 %v391
        %1045 = vmatprep.subr.mxu0 0.0
        %1046 = vmatpush1.msra.mxu0 %v396
        %1047 = vmatprep.subr.mxu0 0.0
        %1048 = vmatpush1.msra.mxu0 %v401
        %1049 = vmatprep.subr.mxu0 0.0
        %1050 = vmatpush1.msra.mxu0 %v406
        %1051 = vmatprep.subr.mxu0 0.0
        %1052 = vmatpush1.msra.mxu0 %v411
        %1053 = vmatprep.subr.mxu0 0.0
        %1054 = vmatpush1.msra.mxu0 %v416
        %1055 = vmatprep.subr.mxu0 0.0
        %1056 = vmatpush1.msra.mxu0 %v421
        %1057 = vmatprep.subr.mxu0 0.0
        %1058 = vmatpush1.msra.mxu0 %v426
        %1059 = vmatprep.subr.mxu0 0.0
        %1060 = vmatpush1.msra.mxu0 %v431
        %1061 = vmatprep.subr.mxu0 0.0
        %1062 = vmatpush1.msra.mxu0 %v436
        %1063 = vmatprep.subr.mxu0 0.0
        %1064 = vmatpush1.msra.mxu0 %v441
        %1065 = vmatprep.subr.mxu0 0.0
        %1066 = vmatpush1.msra.mxu0 %v446
        %1067 = vmatprep.subr.mxu0 0.0
        %1068 = vmatpush1.msra.mxu0 %v451
        %1069 = vmatprep.subr.mxu0 0.0
        %1070 = vmatpush1.msra.mxu0 %v456
        %1071 = vmatprep.subr.mxu0 0.0
        %1072 = vmatpush1.msra.mxu0 %v461
        %1073 = vmatprep.subr.mxu0 0.0
        %1074 = vmatpush1.msra.mxu0 %v466
        %1075 = vmatprep.subr.mxu0 0.0
        %1076 = vmatpush1.msra.mxu0 %v471
        %1077 = vmatprep.mubr.f32.mxu0 %v249
        %1078 = vmatmul.mubr.f32.gmra.mrb[0].mxu0 %v248
        %v1079 = vpop.f32.mrb[0].mxu0
        %v1080 = vadd.f32 %v493, %v1079
        %v1081 = vpop.f32.mrb[0].mxu0
        %1082 = vmatprep.mubr.f32.mxu0 %v251
        %1083 = vmatmul.mubr.f32.gmra.mrb[0].mxu0 %v250
        %v1084 = vpop.f32.mrb[0].mxu0
        %v1085 = vadd.f32 %v493, %v1084
        %v1086 = vpop.f32.mrb[0].mxu0
        %1087 = vmatprep.mubr.f32.mxu0 %v253
        %1088 = vmatmul.mubr.f32.gmra.mrb[0].mxu0 %v252
        %v1089 = vpop.f32.mrb[0].mxu0
        %v1090 = vadd.f32 %v493, %v1089
        %v1091 = vpop.f32.mrb[0].mxu0
        %1092 = vmatprep.mubr.f32.mxu0 %v255
        %1093 = vmatmul.mubr.f32.gmra.mrb[0].mxu0 %v254
        %v1094 = vpop.f32.mrb[0].mxu0
        %v1095 = vadd.f32 %v493, %v1094
        %v1096 = vpop.f32.mrb[0].mxu0
        %1097 = vmatprep.mubr.f32.mxu0 %v257
        %1098 = vmatmul.mubr.f32.gmra.mrb[0].mxu0 %v256
        %v1099 = vpop.f32.mrb[0].mxu0
        %v1100 = vadd.f32 %v493, %v1099
        %v1101 = vpop.f32.mrb[0].mxu0
        %1102 = vmatprep.mubr.f32.mxu0 %v259
        %1103 = vmatmul.mubr.f32.gmra.mrb[0].mxu0 %v258
        %v1104 = vpop.f32.mrb[0].mxu0
        %v1105 = vadd.f32 %v493, %v1104
        %v1106 = vpop.f32.mrb[0].mxu0
        %1107 = vmatprep.mubr.f32.mxu0 %v261
        %1108 = vmatmul.mubr.f32.gmra.mrb[0].mxu0 %v260
        %v1109 = vpop.f32.mrb[0].mxu0
        %v1110 = vadd.f32 %v493, %v1109
        %v1111 = vpop.f32.mrb[0].mxu0
        %1112 = vmatprep.mubr.f32.mxu0 %v263
        %1113 = vmatmul.mubr.f32.gmra.mrb[0].mxu0 %v262
        %v1114 = vpop.f32.mrb[0].mxu0
        %v1115 = vadd.f32 %v493, %v1114
        %v1116 = vpop.f32.mrb[0].mxu0
        %1117 = vmatprep.mubr.f32.mxu0 %v265
        %1118 = vmatmul.mubr.f32.gmra.mrb[0].mxu0 %v264
        %v1119 = vpop.f32.mrb[0].mxu0
        %v1120 = vadd.f32 %v493, %v1119
        %v1121 = vpop.f32.mrb[0].mxu0
        %1122 = vmatprep.mubr.f32.mxu0 %v267
        %1123 = vmatmul.mubr.f32.gmra.mrb[0].mxu0 %v266
        %v1124 = vpop.f32.mrb[0].mxu0
        %v1125 = vadd.f32 %v493, %v1124
        %v1126 = vpop.f32.mrb[0].mxu0
        %1127 = vmatprep.mubr.f32.mxu0 %v269
        %1128 = vmatmul.mubr.f32.gmra.mrb[0].mxu0 %v268
        %v1129 = vpop.f32.mrb[0].mxu0
        %v1130 = vadd.f32 %v493, %v1129
        %v1131 = vpop.f32.mrb[0].mxu0
        %1132 = vmatprep.mubr.f32.mxu0 %v271
        %1133 = vmatmul.mubr.f32.gmra.mrb[0].mxu0 %v270
        %v1134 = vpop.f32.mrb[0].mxu0
        %v1135 = vadd.f32 %v493, %v1134
        %v1136 = vpop.f32.mrb[0].mxu0
        %1137 = vmatprep.mubr.f32.mxu0 %v273
        %1138 = vmatmul.mubr.f32.gmra.mrb[0].mxu0 %v272
        %v1139 = vpop.f32.mrb[0].mxu0
        %v1140 = vadd.f32 %v493, %v1139
        %v1141 = vpop.f32.mrb[0].mxu0
        %1142 = vmatprep.mubr.f32.mxu0 %v275
        %1143 = vmatmul.mubr.f32.gmra.mrb[0].mxu0 %v274
        %v1144 = vpop.f32.mrb[0].mxu0
        %v1145 = vadd.f32 %v493, %v1144
        %v1146 = vpop.f32.mrb[0].mxu0
        %1147 = vmatprep.mubr.f32.mxu0 %v277
        %1148 = vmatmul.mubr.f32.gmra.mrb[0].mxu0 %v276
        %v1149 = vpop.f32.mrb[0].mxu0
        %v1150 = vadd.f32 %v493, %v1149
        %v1151 = vpop.f32.mrb[0].mxu0
        %1152 = vmatprep.mubr.f32.mxu0 %v279
        %1153 = vmatmul.mubr.f32.gmra.mrb[0].mxu0 %v278
        %v1154 = vpop.f32.mrb[0].mxu0
        %v1155 = vadd.f32 %v493, %v1154
        %v1156 = vpop.f32.mrb[0].mxu0
        %1157 = vmatprep.mubr.f32.mxu0 %v281
        %1158 = vmatmul.mubr.f32.gmra.mrb[0].mxu0 %v280
        %v1159 = vpop.f32.mrb[0].mxu0
        %v1160 = vadd.f32 %v493, %v1159
        %v1161 = vpop.f32.mrb[0].mxu0
        %1162 = vmatprep.mubr.f32.mxu0 %v283
        %1163 = vmatmul.mubr.f32.gmra.mrb[0].mxu0 %v282
        %v1164 = vpop.f32.mrb[0].mxu0
        %v1165 = vadd.f32 %v493, %v1164
        %v1166 = vpop.f32.mrb[0].mxu0
        %1167 = vmatprep.mubr.f32.mxu0 %v285
        %1168 = vmatmul.mubr.f32.gmra.mrb[0].mxu0 %v284
        %v1169 = vpop.f32.mrb[0].mxu0
        %v1170 = vadd.f32 %v493, %v1169
        %v1171 = vpop.f32.mrb[0].mxu0
        %1172 = vmatprep.mubr.f32.mxu0 %v287
        %1173 = vmatmul.mubr.f32.gmra.mrb[0].mxu0 %v286
        %v1174 = vpop.f32.mrb[0].mxu0
        %v1175 = vadd.f32 %v493, %v1174
        %v1176 = vpop.f32.mrb[0].mxu0
        %1177 = vmatprep.mubr.f32.mxu0 %v289
        %1178 = vmatmul.mubr.f32.gmra.mrb[0].mxu0 %v288
        %v1179 = vpop.f32.mrb[0].mxu0
        %v1180 = vadd.f32 %v493, %v1179
        %v1181 = vpop.f32.mrb[0].mxu0
        %1182 = vmatprep.mubr.f32.mxu0 %v291
        %1183 = vmatmul.mubr.f32.gmra.mrb[0].mxu0 %v290
        %v1184 = vpop.f32.mrb[0].mxu0
        %v1185 = vadd.f32 %v493, %v1184
        %v1186 = vpop.f32.mrb[0].mxu0
        %1187 = vmatprep.mubr.f32.mxu0 %v293
        %1188 = vmatmul.mubr.f32.gmra.mrb[0].mxu0 %v292
        %v1189 = vpop.f32.mrb[0].mxu0
        %v1190 = vadd.f32 %v493, %v1189
        %v1191 = vpop.f32.mrb[0].mxu0
        %1192 = vmatprep.mubr.f32.mxu0 %v295
        %1193 = vmatmul.mubr.f32.gmra.mrb[0].mxu0 %v294
        %v1194 = vpop.f32.mrb[0].mxu0
        %v1195 = vadd.f32 %v493, %v1194
        %v1196 = vpop.f32.mrb[0].mxu0
        %1197 = vmatprep.mubr.f32.mxu0 %v297
        %1198 = vmatmul.mubr.f32.gmra.mrb[0].mxu0 %v296
        %v1199 = vpop.f32.mrb[0].mxu0
        %v1200 = vadd.f32 %v493, %v1199
        %v1201 = vpop.f32.mrb[0].mxu0
        %1202 = vmatprep.mubr.f32.mxu0 %v299
        %1203 = vmatmul.mubr.f32.gmra.mrb[0].mxu0 %v298
        %v1204 = vpop.f32.mrb[0].mxu0
        %v1205 = vadd.f32 %v493, %v1204
        %v1206 = vpop.f32.mrb[0].mxu0
        %1207 = vmatprep.mubr.f32.mxu0 %v301
        %1208 = vmatmul.mubr.f32.gmra.mrb[0].mxu0 %v300
        %v1209 = vpop.f32.mrb[0].mxu0
        %v1210 = vadd.f32 %v493, %v1209
        %v1211 = vpop.f32.mrb[0].mxu0
        %1212 = vmatprep.mubr.f32.mxu0 %v303
        %1213 = vmatmul.mubr.f32.gmra.mrb[0].mxu0 %v302
        %v1214 = vpop.f32.mrb[0].mxu0
        %v1215 = vadd.f32 %v493, %v1214
        %v1216 = vpop.f32.mrb[0].mxu0
        %1217 = vmatprep.mubr.f32.mxu0 %v305
        %1218 = vmatmul.mubr.f32.gmra.mrb[0].mxu0 %v304
        %v1219 = vpop.f32.mrb[0].mxu0
        %v1220 = vadd.f32 %v493, %v1219
        %v1221 = vpop.f32.mrb[0].mxu0
        %1222 = vmatprep.mubr.f32.mxu0 %v307
        %1223 = vmatmul.mubr.f32.gmra.mrb[0].mxu0 %v306
        %v1224 = vpop.f32.mrb[0].mxu0
        %v1225 = vadd.f32 %v493, %v1224
        %v1226 = vpop.f32.mrb[0].mxu0
        %1227 = vmatprep.mubr.f32.mxu0 %v309
        %1228 = vmatmul.mubr.f32.gmra.mrb[0].mxu0 %v308
        %v1229 = vpop.f32.mrb[0].mxu0
        %v1230 = vadd.f32 %v493, %v1229
        %v1231 = vpop.f32.mrb[0].mxu0
        %1232 = vmatprep.mubr.f32.mxu0 %v311
        %1233 = vmatmul.mubr.f32.gmra.mrb[0].mxu0 %v310
        %v1234 = vpop.f32.mrb[0].mxu0
        %v1235 = vadd.f32 %v493, %v1234
        %v1236 = vpop.f32.mrb[0].mxu0
        %1237 = vdwg.mxu0
        %v1238 = vmul.f32 %v566, 0.5
        %v1239 = vmul.f32 %v568, 0.5
        %v1240 = vmul.f32 %v823, 0.5
        %v1241 = vmul.f32 %v825, 0.5
        %v1242 = vmul.f32 %v1080, 0.5
        %v1243 = vmul.f32 %v572, 0.5
        %v1244 = vmul.f32 %v574, 0.5
        %v1245 = vmul.f32 %v829, 0.5
        %v1246 = vmul.f32 %v831, 0.5
        %v1247 = vmul.f32 %v1085, 0.5
        %v1248 = vmul.f32 %v578, 0.5
        %v1249 = vmul.f32 %v580, 0.5
        %v1250 = vmul.f32 %v835, 0.5
        %v1251 = vmul.f32 %v837, 0.5
        %v1252 = vmul.f32 %v1090, 0.5
        %v1253 = vmul.f32 %v584, 0.5
        %v1254 = vmul.f32 %v586, 0.5
        %v1255 = vmul.f32 %v841, 0.5
        %v1256 = vmul.f32 %v843, 0.5
        %v1257 = vmul.f32 %v1095, 0.5
        %v1258 = vmul.f32 %v590, 0.5
        %v1259 = vmul.f32 %v592, 0.5
        %v1260 = vmul.f32 %v847, 0.5
        %v1261 = vmul.f32 %v849, 0.5
        %v1262 = vmul.f32 %v1100, 0.5
        %v1263 = vmul.f32 %v596, 0.5
        %v1264 = vmul.f32 %v598, 0.5
        %v1265 = vmul.f32 %v853, 0.5
        %v1266 = vmul.f32 %v855, 0.5
        %v1267 = vmul.f32 %v1105, 0.5
        %v1268 = vmul.f32 %v602, 0.5
        %v1269 = vmul.f32 %v604, 0.5
        %v1270 = vmul.f32 %v859, 0.5
        %v1271 = vmul.f32 %v861, 0.5
        %v1272 = vmul.f32 %v1110, 0.5
        %v1273 = vmul.f32 %v608, 0.5
        %v1274 = vmul.f32 %v610, 0.5
        %v1275 = vmul.f32 %v865, 0.5
        %v1276 = vmul.f32 %v867, 0.5
        %v1277 = vmul.f32 %v1115, 0.5
        %v1278 = vmul.f32 %v614, 0.5
        %v1279 = vmul.f32 %v616, 0.5
        %v1280 = vmul.f32 %v871, 0.5
        %v1281 = vmul.f32 %v873, 0.5
        %v1282 = vmul.f32 %v1120, 0.5
        %v1283 = vmul.f32 %v620, 0.5
        %v1284 = vmul.f32 %v622, 0.5
        %v1285 = vmul.f32 %v877, 0.5
        %v1286 = vmul.f32 %v879, 0.5
        %v1287 = vmul.f32 %v1125, 0.5
        %v1288 = vmul.f32 %v626, 0.5
        %v1289 = vmul.f32 %v628, 0.5
        %v1290 = vmul.f32 %v883, 0.5
        %v1291 = vmul.f32 %v885, 0.5
        %v1292 = vmul.f32 %v1130, 0.5
        %v1293 = vmul.f32 %v632, 0.5
        %v1294 = vmul.f32 %v634, 0.5
        %v1295 = vmul.f32 %v889, 0.5
        %v1296 = vmul.f32 %v891, 0.5
        %v1297 = vmul.f32 %v1135, 0.5
        %v1298 = vmul.f32 %v638, 0.5
        %v1299 = vmul.f32 %v640, 0.5
        %v1300 = vmul.f32 %v895, 0.5
        %v1301 = vmul.f32 %v897, 0.5
        %v1302 = vmul.f32 %v1140, 0.5
        %v1303 = vmul.f32 %v644, 0.5
        %v1304 = vmul.f32 %v646, 0.5
        %v1305 = vmul.f32 %v901, 0.5
        %v1306 = vmul.f32 %v903, 0.5
        %v1307 = vmul.f32 %v1145, 0.5
        %v1308 = vmul.f32 %v650, 0.5
        %v1309 = vmul.f32 %v652, 0.5
        %v1310 = vmul.f32 %v907, 0.5
        %v1311 = vmul.f32 %v909, 0.5
        %v1312 = vmul.f32 %v1150, 0.5
        %v1313 = vmul.f32 %v656, 0.5
        %v1314 = vmul.f32 %v658, 0.5
        %v1315 = vmul.f32 %v913, 0.5
        %v1316 = vmul.f32 %v915, 0.5
        %v1317 = vmul.f32 %v1155, 0.5
        %v1318 = vmul.f32 %v662, 0.5
        %v1319 = vmul.f32 %v664, 0.5
        %v1320 = vmul.f32 %v919, 0.5
        %v1321 = vmul.f32 %v921, 0.5
        %v1322 = vmul.f32 %v1160, 0.5
        %v1323 = vmul.f32 %v668, 0.5
        %v1324 = vmul.f32 %v670, 0.5
        %v1325 = vmul.f32 %v925, 0.5
        %v1326 = vmul.f32 %v927, 0.5
        %v1327 = vmul.f32 %v1165, 0.5
        %v1328 = vmul.f32 %v674, 0.5
        %v1329 = vmul.f32 %v676, 0.5
        %v1330 = vmul.f32 %v931, 0.5
        %v1331 = vmul.f32 %v933, 0.5
        %v1332 = vmul.f32 %v1170, 0.5
        %v1333 = vmul.f32 %v680, 0.5
        %v1334 = vmul.f32 %v682, 0.5
        %v1335 = vmul.f32 %v937, 0.5
        %v1336 = vmul.f32 %v939, 0.5
        %v1337 = vmul.f32 %v1175, 0.5
        %v1338 = vmul.f32 %v686, 0.5
        %v1339 = vmul.f32 %v688, 0.5
        %v1340 = vmul.f32 %v943, 0.5
        %v1341 = vmul.f32 %v945, 0.5
        %v1342 = vmul.f32 %v1180, 0.5
        %v1343 = vmul.f32 %v692, 0.5
        %v1344 = vmul.f32 %v694, 0.5
        %v1345 = vmul.f32 %v949, 0.5
        %v1346 = vmul.f32 %v951, 0.5
        %v1347 = vmul.f32 %v1185, 0.5
        %v1348 = vmul.f32 %v698, 0.5
        %v1349 = vmul.f32 %v700, 0.5
        %v1350 = vmul.f32 %v955, 0.5
        %v1351 = vmul.f32 %v957, 0.5
        %v1352 = vmul.f32 %v1190, 0.5
        %v1353 = vmul.f32 %v704, 0.5
        %v1354 = vmul.f32 %v706, 0.5
        %v1355 = vmul.f32 %v961, 0.5
        %v1356 = vmul.f32 %v963, 0.5
        %v1357 = vmul.f32 %v1195, 0.5
        %v1358 = vmul.f32 %v710, 0.5
        %v1359 = vmul.f32 %v712, 0.5
        %v1360 = vmul.f32 %v967, 0.5
        %v1361 = vmul.f32 %v969, 0.5
        %v1362 = vmul.f32 %v1200, 0.5
        %v1363 = vmul.f32 %v716, 0.5
        %v1364 = vmul.f32 %v718, 0.5
        %v1365 = vmul.f32 %v973, 0.5
        %v1366 = vmul.f32 %v975, 0.5
        %v1367 = vmul.f32 %v1205, 0.5
        %v1368 = vmul.f32 %v722, 0.5
        %v1369 = vmul.f32 %v724, 0.5
        %v1370 = vmul.f32 %v979, 0.5
        %v1371 = vmul.f32 %v981, 0.5
        %v1372 = vmul.f32 %v1210, 0.5
        %v1373 = vmul.f32 %v728, 0.5
        %v1374 = vmul.f32 %v730, 0.5
        %v1375 = vmul.f32 %v985, 0.5
        %v1376 = vmul.f32 %v987, 0.5
        %v1377 = vmul.f32 %v1215, 0.5
        %v1378 = vmul.f32 %v734, 0.5
        %v1379 = vmul.f32 %v736, 0.5
        %v1380 = vmul.f32 %v991, 0.5
        %v1381 = vmul.f32 %v993, 0.5
        %v1382 = vmul.f32 %v1220, 0.5
        %v1383 = vmul.f32 %v740, 0.5
        %v1384 = vmul.f32 %v742, 0.5
        %v1385 = vmul.f32 %v997, 0.5
        %v1386 = vmul.f32 %v999, 0.5
        %v1387 = vmul.f32 %v1225, 0.5
        %v1388 = vmul.f32 %v746, 0.5
        %v1389 = vmul.f32 %v748, 0.5
        %v1390 = vmul.f32 %v1003, 0.5
        %v1391 = vmul.f32 %v1005, 0.5
        %v1392 = vmul.f32 %v1230, 0.5
        %v1393 = vmul.f32 %v752, 0.5
        %v1394 = vmul.f32 %v754, 0.5
        %v1395 = vmul.f32 %v1009, 0.5
        %v1396 = vmul.f32 %v1011, 0.5
        %v1397 = vmul.f32 %v1235, 0.5
        %v1398 = vmul.f32 %v566, %v566
        %v1399 = vmul.f32 %v568, %v568
        %v1400 = vmul.f32 %v823, %v823
        %v1401 = vmul.f32 %v825, %v825
        %v1402 = vmul.f32 %v1080, %v1080
        %v1403 = vmul.f32 %v572, %v572
        %v1404 = vmul.f32 %v574, %v574
        %v1405 = vmul.f32 %v829, %v829
        %v1406 = vmul.f32 %v831, %v831
        %v1407 = vmul.f32 %v1085, %v1085
        %v1408 = vmul.f32 %v578, %v578
        %v1409 = vmul.f32 %v580, %v580
        %v1410 = vmul.f32 %v835, %v835
        %v1411 = vmul.f32 %v837, %v837
        %v1412 = vmul.f32 %v1090, %v1090
        %v1413 = vmul.f32 %v584, %v584
        %v1414 = vmul.f32 %v586, %v586
        %v1415 = vmul.f32 %v841, %v841
        %v1416 = vmul.f32 %v843, %v843
        %v1417 = vmul.f32 %v1095, %v1095
        %v1418 = vmul.f32 %v590, %v590
        %v1419 = vmul.f32 %v592, %v592
        %v1420 = vmul.f32 %v847, %v847
        %v1421 = vmul.f32 %v849, %v849
        %v1422 = vmul.f32 %v1100, %v1100
        %v1423 = vmul.f32 %v596, %v596
        %v1424 = vmul.f32 %v598, %v598
        %v1425 = vmul.f32 %v853, %v853
        %v1426 = vmul.f32 %v855, %v855
        %v1427 = vmul.f32 %v1105, %v1105
        %v1428 = vmul.f32 %v602, %v602
        %v1429 = vmul.f32 %v604, %v604
        %v1430 = vmul.f32 %v859, %v859
        %v1431 = vmul.f32 %v861, %v861
        %v1432 = vmul.f32 %v1110, %v1110
        %v1433 = vmul.f32 %v608, %v608
        %v1434 = vmul.f32 %v610, %v610
        %v1435 = vmul.f32 %v865, %v865
        %v1436 = vmul.f32 %v867, %v867
        %v1437 = vmul.f32 %v1115, %v1115
        %v1438 = vmul.f32 %v614, %v614
        %v1439 = vmul.f32 %v616, %v616
        %v1440 = vmul.f32 %v871, %v871
        %v1441 = vmul.f32 %v873, %v873
        %v1442 = vmul.f32 %v1120, %v1120
        %v1443 = vmul.f32 %v620, %v620
        %v1444 = vmul.f32 %v622, %v622
        %v1445 = vmul.f32 %v877, %v877
        %v1446 = vmul.f32 %v879, %v879
        %v1447 = vmul.f32 %v1125, %v1125
        %v1448 = vmul.f32 %v626, %v626
        %v1449 = vmul.f32 %v628, %v628
        %v1450 = vmul.f32 %v883, %v883
        %v1451 = vmul.f32 %v885, %v885
        %v1452 = vmul.f32 %v1130, %v1130
        %v1453 = vmul.f32 %v632, %v632
        %v1454 = vmul.f32 %v634, %v634
        %v1455 = vmul.f32 %v889, %v889
        %v1456 = vmul.f32 %v891, %v891
        %v1457 = vmul.f32 %v1135, %v1135
        %v1458 = vmul.f32 %v638, %v638
        %v1459 = vmul.f32 %v640, %v640
        %v1460 = vmul.f32 %v895, %v895
        %v1461 = vmul.f32 %v897, %v897
        %v1462 = vmul.f32 %v1140, %v1140
        %v1463 = vmul.f32 %v644, %v644
        %v1464 = vmul.f32 %v646, %v646
        %v1465 = vmul.f32 %v901, %v901
        %v1466 = vmul.f32 %v903, %v903
        %v1467 = vmul.f32 %v1145, %v1145
        %v1468 = vmul.f32 %v650, %v650
        %v1469 = vmul.f32 %v652, %v652
        %v1470 = vmul.f32 %v907, %v907
        %v1471 = vmul.f32 %v909, %v909
        %v1472 = vmul.f32 %v1150, %v1150
        %v1473 = vmul.f32 %v656, %v656
        %v1474 = vmul.f32 %v658, %v658
        %v1475 = vmul.f32 %v913, %v913
        %v1476 = vmul.f32 %v915, %v915
        %v1477 = vmul.f32 %v1155, %v1155
        %v1478 = vmul.f32 %v662, %v662
        %v1479 = vmul.f32 %v664, %v664
        %v1480 = vmul.f32 %v919, %v919
        %v1481 = vmul.f32 %v921, %v921
        %v1482 = vmul.f32 %v1160, %v1160
        %v1483 = vmul.f32 %v668, %v668
        %v1484 = vmul.f32 %v670, %v670
        %v1485 = vmul.f32 %v925, %v925
        %v1486 = vmul.f32 %v927, %v927
        %v1487 = vmul.f32 %v1165, %v1165
        %v1488 = vmul.f32 %v674, %v674
        %v1489 = vmul.f32 %v676, %v676
        %v1490 = vmul.f32 %v931, %v931
        %v1491 = vmul.f32 %v933, %v933
        %v1492 = vmul.f32 %v1170, %v1170
        %v1493 = vmul.f32 %v680, %v680
        %v1494 = vmul.f32 %v682, %v682
        %v1495 = vmul.f32 %v937, %v937
        %v1496 = vmul.f32 %v939, %v939
        %v1497 = vmul.f32 %v1175, %v1175
        %v1498 = vmul.f32 %v686, %v686
        %v1499 = vmul.f32 %v688, %v688
        %v1500 = vmul.f32 %v943, %v943
        %v1501 = vmul.f32 %v945, %v945
        %v1502 = vmul.f32 %v1180, %v1180
        %v1503 = vmul.f32 %v692, %v692
        %v1504 = vmul.f32 %v694, %v694
        %v1505 = vmul.f32 %v949, %v949
        %v1506 = vmul.f32 %v951, %v951
        %v1507 = vmul.f32 %v1185, %v1185
        %v1508 = vmul.f32 %v698, %v698
        %v1509 = vmul.f32 %v700, %v700
        %v1510 = vmul.f32 %v955, %v955
        %v1511 = vmul.f32 %v957, %v957
        %v1512 = vmul.f32 %v1190, %v1190
        %v1513 = vmul.f32 %v704, %v704
        %v1514 = vmul.f32 %v706, %v706
        %v1515 = vmul.f32 %v961, %v961
        %v1516 = vmul.f32 %v963, %v963
        %v1517 = vmul.f32 %v1195, %v1195
        %v1518 = vmul.f32 %v710, %v710
        %v1519 = vmul.f32 %v712, %v712
        %v1520 = vmul.f32 %v967, %v967
        %v1521 = vmul.f32 %v969, %v969
        %v1522 = vmul.f32 %v1200, %v1200
        %v1523 = vmul.f32 %v716, %v716
        %v1524 = vmul.f32 %v718, %v718
        %v1525 = vmul.f32 %v973, %v973
        %v1526 = vmul.f32 %v975, %v975
        %v1527 = vmul.f32 %v1205, %v1205
        %v1528 = vmul.f32 %v722, %v722
        %v1529 = vmul.f32 %v724, %v724
        %v1530 = vmul.f32 %v979, %v979
        %v1531 = vmul.f32 %v981, %v981
        %v1532 = vmul.f32 %v1210, %v1210
        %v1533 = vmul.f32 %v728, %v728
        %v1534 = vmul.f32 %v730, %v730
        %v1535 = vmul.f32 %v985, %v985
        %v1536 = vmul.f32 %v987, %v987
        %v1537 = vmul.f32 %v1215, %v1215
        %v1538 = vmul.f32 %v734, %v734
        %v1539 = vmul.f32 %v736, %v736
        %v1540 = vmul.f32 %v991, %v991
        %v1541 = vmul.f32 %v993, %v993
        %v1542 = vmul.f32 %v1220, %v1220
        %v1543 = vmul.f32 %v740, %v740
        %v1544 = vmul.f32 %v742, %v742
        %v1545 = vmul.f32 %v997, %v997
        %v1546 = vmul.f32 %v999, %v999
        %v1547 = vmul.f32 %v1225, %v1225
        %v1548 = vmul.f32 %v746, %v746
        %v1549 = vmul.f32 %v748, %v748
        %v1550 = vmul.f32 %v1003, %v1003
        %v1551 = vmul.f32 %v1005, %v1005
        %v1552 = vmul.f32 %v1230, %v1230
        %v1553 = vmul.f32 %v752, %v752
        %v1554 = vmul.f32 %v754, %v754
        %v1555 = vmul.f32 %v1009, %v1009
        %v1556 = vmul.f32 %v1011, %v1011
        %v1557 = vmul.f32 %v1235, %v1235
        %v1558 = vmul.f32 %v1398, %v566
        %v1559 = vmul.f32 %v1399, %v568
        %v1560 = vmul.f32 %v1400, %v823
        %v1561 = vmul.f32 %v1401, %v825
        %v1562 = vmul.f32 %v1402, %v1080
        %v1563 = vmul.f32 %v1403, %v572
        %v1564 = vmul.f32 %v1404, %v574
        %v1565 = vmul.f32 %v1405, %v829
        %v1566 = vmul.f32 %v1406, %v831
        %v1567 = vmul.f32 %v1407, %v1085
        %v1568 = vmul.f32 %v1408, %v578
        %v1569 = vmul.f32 %v1409, %v580
        %v1570 = vmul.f32 %v1410, %v835
        %v1571 = vmul.f32 %v1411, %v837
        %v1572 = vmul.f32 %v1412, %v1090
        %v1573 = vmul.f32 %v1413, %v584
        %v1574 = vmul.f32 %v1414, %v586
        %v1575 = vmul.f32 %v1415, %v841
        %v1576 = vmul.f32 %v1416, %v843
        %v1577 = vmul.f32 %v1417, %v1095
        %v1578 = vmul.f32 %v1418, %v590
        %v1579 = vmul.f32 %v1419, %v592
        %v1580 = vmul.f32 %v1420, %v847
        %v1581 = vmul.f32 %v1421, %v849
        %v1582 = vmul.f32 %v1422, %v1100
        %v1583 = vmul.f32 %v1423, %v596
        %v1584 = vmul.f32 %v1424, %v598
        %v1585 = vmul.f32 %v1425, %v853
        %v1586 = vmul.f32 %v1426, %v855
        %v1587 = vmul.f32 %v1427, %v1105
        %v1588 = vmul.f32 %v1428, %v602
        %v1589 = vmul.f32 %v1429, %v604
        %v1590 = vmul.f32 %v1430, %v859
        %v1591 = vmul.f32 %v1431, %v861
        %v1592 = vmul.f32 %v1432, %v1110
        %v1593 = vmul.f32 %v1433, %v608
        %v1594 = vmul.f32 %v1434, %v610
        %v1595 = vmul.f32 %v1435, %v865
        %v1596 = vmul.f32 %v1436, %v867
        %v1597 = vmul.f32 %v1437, %v1115
        %v1598 = vmul.f32 %v1438, %v614
        %v1599 = vmul.f32 %v1439, %v616
        %v1600 = vmul.f32 %v1440, %v871
        %v1601 = vmul.f32 %v1441, %v873
        %v1602 = vmul.f32 %v1442, %v1120
        %v1603 = vmul.f32 %v1443, %v620
        %v1604 = vmul.f32 %v1444, %v622
        %v1605 = vmul.f32 %v1445, %v877
        %v1606 = vmul.f32 %v1446, %v879
        %v1607 = vmul.f32 %v1447, %v1125
        %v1608 = vmul.f32 %v1448, %v626
        %v1609 = vmul.f32 %v1449, %v628
        %v1610 = vmul.f32 %v1450, %v883
        %v1611 = vmul.f32 %v1451, %v885
        %v1612 = vmul.f32 %v1452, %v1130
        %v1613 = vmul.f32 %v1453, %v632
        %v1614 = vmul.f32 %v1454, %v634
        %v1615 = vmul.f32 %v1455, %v889
        %v1616 = vmul.f32 %v1456, %v891
        %v1617 = vmul.f32 %v1457, %v1135
        %v1618 = vmul.f32 %v1458, %v638
        %v1619 = vmul.f32 %v1459, %v640
        %v1620 = vmul.f32 %v1460, %v895
        %v1621 = vmul.f32 %v1461, %v897
        %v1622 = vmul.f32 %v1462, %v1140
        %v1623 = vmul.f32 %v1463, %v644
        %v1624 = vmul.f32 %v1464, %v646
        %v1625 = vmul.f32 %v1465, %v901
        %v1626 = vmul.f32 %v1466, %v903
        %v1627 = vmul.f32 %v1467, %v1145
        %v1628 = vmul.f32 %v1468, %v650
        %v1629 = vmul.f32 %v1469, %v652
        %v1630 = vmul.f32 %v1470, %v907
        %v1631 = vmul.f32 %v1471, %v909
        %v1632 = vmul.f32 %v1472, %v1150
        %v1633 = vmul.f32 %v1473, %v656
        %v1634 = vmul.f32 %v1474, %v658
        %v1635 = vmul.f32 %v1475, %v913
        %v1636 = vmul.f32 %v1476, %v915
        %v1637 = vmul.f32 %v1477, %v1155
        %v1638 = vmul.f32 %v1478, %v662
        %v1639 = vmul.f32 %v1479, %v664
        %v1640 = vmul.f32 %v1480, %v919
        %v1641 = vmul.f32 %v1481, %v921
        %v1642 = vmul.f32 %v1482, %v1160
        %v1643 = vmul.f32 %v1483, %v668
        %v1644 = vmul.f32 %v1484, %v670
        %v1645 = vmul.f32 %v1485, %v925
        %v1646 = vmul.f32 %v1486, %v927
        %v1647 = vmul.f32 %v1487, %v1165
        %v1648 = vmul.f32 %v1488, %v674
        %v1649 = vmul.f32 %v1489, %v676
        %v1650 = vmul.f32 %v1490, %v931
        %v1651 = vmul.f32 %v1491, %v933
        %v1652 = vmul.f32 %v1492, %v1170
        %v1653 = vmul.f32 %v1493, %v680
        %v1654 = vmul.f32 %v1494, %v682
        %v1655 = vmul.f32 %v1495, %v937
        %v1656 = vmul.f32 %v1496, %v939
        %v1657 = vmul.f32 %v1497, %v1175
        %v1658 = vmul.f32 %v1498, %v686
        %v1659 = vmul.f32 %v1499, %v688
        %v1660 = vmul.f32 %v1500, %v943
        %v1661 = vmul.f32 %v1501, %v945
        %v1662 = vmul.f32 %v1502, %v1180
        %v1663 = vmul.f32 %v1503, %v692
        %v1664 = vmul.f32 %v1504, %v694
        %v1665 = vmul.f32 %v1505, %v949
        %v1666 = vmul.f32 %v1506, %v951
        %v1667 = vmul.f32 %v1507, %v1185
        %v1668 = vmul.f32 %v1508, %v698
        %v1669 = vmul.f32 %v1509, %v700
        %v1670 = vmul.f32 %v1510, %v955
        %v1671 = vmul.f32 %v1511, %v957
        %v1672 = vmul.f32 %v1512, %v1190
        %v1673 = vmul.f32 %v1513, %v704
        %v1674 = vmul.f32 %v1514, %v706
        %v1675 = vmul.f32 %v1515, %v961
        %v1676 = vmul.f32 %v1516, %v963
        %v1677 = vmul.f32 %v1517, %v1195
        %v1678 = vmul.f32 %v1518, %v710
        %v1679 = vmul.f32 %v1519, %v712
        %v1680 = vmul.f32 %v1520, %v967
        %v1681 = vmul.f32 %v1521, %v969
        %v1682 = vmul.f32 %v1522, %v1200
        %v1683 = vmul.f32 %v1523, %v716
        %v1684 = vmul.f32 %v1524, %v718
        %v1685 = vmul.f32 %v1525, %v973
        %v1686 = vmul.f32 %v1526, %v975
        %v1687 = vmul.f32 %v1527, %v1205
        %v1688 = vmul.f32 %v1528, %v722
        %v1689 = vmul.f32 %v1529, %v724
        %v1690 = vmul.f32 %v1530, %v979
        %v1691 = vmul.f32 %v1531, %v981
        %v1692 = vmul.f32 %v1532, %v1210
        %v1693 = vmul.f32 %v1533, %v728
        %v1694 = vmul.f32 %v1534, %v730
        %v1695 = vmul.f32 %v1535, %v985
        %v1696 = vmul.f32 %v1536, %v987
        %v1697 = vmul.f32 %v1537, %v1215
        %v1698 = vmul.f32 %v1538, %v734
        %v1699 = vmul.f32 %v1539, %v736
        %v1700 = vmul.f32 %v1540, %v991
        %v1701 = vmul.f32 %v1541, %v993
        %v1702 = vmul.f32 %v1542, %v1220
        %v1703 = vmul.f32 %v1543, %v740
        %v1704 = vmul.f32 %v1544, %v742
        %v1705 = vmul.f32 %v1545, %v997
        %v1706 = vmul.f32 %v1546, %v999
        %v1707 = vmul.f32 %v1547, %v1225
        %v1708 = vmul.f32 %v1548, %v746
        %v1709 = vmul.f32 %v1549, %v748
        %v1710 = vmul.f32 %v1550, %v1003
        %v1711 = vmul.f32 %v1551, %v1005
        %v1712 = vmul.f32 %v1552, %v1230
        %v1713 = vmul.f32 %v1553, %v752
        %v1714 = vmul.f32 %v1554, %v754
        %v1715 = vmul.f32 %v1555, %v1009
        %v1716 = vmul.f32 %v1556, %v1011
        %v1717 = vmul.f32 %v1557, %v1235
        %v1718 = vmul.f32 %v1558, 0.044715
        %v1719 = vmul.f32 %v1559, 0.044715
        %v1720 = vmul.f32 %v1560, 0.044715
        %v1721 = vmul.f32 %v1561, 0.044715
        %v1722 = vmul.f32 %v1562, 0.044715
        %v1723 = vmul.f32 %v1563, 0.044715
        %v1724 = vmul.f32 %v1564, 0.044715
        %v1725 = vmul.f32 %v1565, 0.044715
        %v1726 = vmul.f32 %v1566, 0.044715
        %v1727 = vmul.f32 %v1567, 0.044715
        %v1728 = vmul.f32 %v1568, 0.044715
        %v1729 = vmul.f32 %v1569, 0.044715
        %v1730 = vmul.f32 %v1570, 0.044715
        %v1731 = vmul.f32 %v1571, 0.044715
        %v1732 = vmul.f32 %v1572, 0.044715
        %v1733 = vmul.f32 %v1573, 0.044715
        %v1734 = vmul.f32 %v1574, 0.044715
        %v1735 = vmul.f32 %v1575, 0.044715
        %v1736 = vmul.f32 %v1576, 0.044715
        %v1737 = vmul.f32 %v1577, 0.044715
        %v1738 = vmul.f32 %v1578, 0.044715
        %v1739 = vmul.f32 %v1579, 0.044715
        %v1740 = vmul.f32 %v1580, 0.044715
        %v1741 = vmul.f32 %v1581, 0.044715
        %v1742 = vmul.f32 %v1582, 0.044715
        %v1743 = vmul.f32 %v1583, 0.044715
        %v1744 = vmul.f32 %v1584, 0.044715
        %v1745 = vmul.f32 %v1585, 0.044715
        %v1746 = vmul.f32 %v1586, 0.044715
        %v1747 = vmul.f32 %v1587, 0.044715
        %v1748 = vmul.f32 %v1588, 0.044715
        %v1749 = vmul.f32 %v1589, 0.044715
        %v1750 = vmul.f32 %v1590, 0.044715
        %v1751 = vmul.f32 %v1591, 0.044715
        %v1752 = vmul.f32 %v1592, 0.044715
        %v1753 = vmul.f32 %v1593, 0.044715
        %v1754 = vmul.f32 %v1594, 0.044715
        %v1755 = vmul.f32 %v1595, 0.044715
        %v1756 = vmul.f32 %v1596, 0.044715
        %v1757 = vmul.f32 %v1597, 0.044715
        %v1758 = vmul.f32 %v1598, 0.044715
        %v1759 = vmul.f32 %v1599, 0.044715
        %v1760 = vmul.f32 %v1600, 0.044715
        %v1761 = vmul.f32 %v1601, 0.044715
        %v1762 = vmul.f32 %v1602, 0.044715
        %v1763 = vmul.f32 %v1603, 0.044715
        %v1764 = vmul.f32 %v1604, 0.044715
        %v1765 = vmul.f32 %v1605, 0.044715
        %v1766 = vmul.f32 %v1606, 0.044715
        %v1767 = vmul.f32 %v1607, 0.044715
        %v1768 = vmul.f32 %v1608, 0.044715
        %v1769 = vmul.f32 %v1609, 0.044715
        %v1770 = vmul.f32 %v1610, 0.044715
        %v1771 = vmul.f32 %v1611, 0.044715
        %v1772 = vmul.f32 %v1612, 0.044715
        %v1773 = vmul.f32 %v1613, 0.044715
        %v1774 = vmul.f32 %v1614, 0.044715
        %v1775 = vmul.f32 %v1615, 0.044715
        %v1776 = vmul.f32 %v1616, 0.044715
        %v1777 = vmul.f32 %v1617, 0.044715
        %v1778 = vmul.f32 %v1618, 0.044715
        %v1779 = vmul.f32 %v1619, 0.044715
        %v1780 = vmul.f32 %v1620, 0.044715
        %v1781 = vmul.f32 %v1621, 0.044715
        %v1782 = vmul.f32 %v1622, 0.044715
        %v1783 = vmul.f32 %v1623, 0.044715
        %v1784 = vmul.f32 %v1624, 0.044715
        %v1785 = vmul.f32 %v1625, 0.044715
        %v1786 = vmul.f32 %v1626, 0.044715
        %v1787 = vmul.f32 %v1627, 0.044715
        %v1788 = vmul.f32 %v1628, 0.044715
        %v1789 = vmul.f32 %v1629, 0.044715
        %v1790 = vmul.f32 %v1630, 0.044715
        %v1791 = vmul.f32 %v1631, 0.044715
        %v1792 = vmul.f32 %v1632, 0.044715
        %v1793 = vmul.f32 %v1633, 0.044715
        %v1794 = vmul.f32 %v1634, 0.044715
        %v1795 = vmul.f32 %v1635, 0.044715
        %v1796 = vmul.f32 %v1636, 0.044715
        %v1797 = vmul.f32 %v1637, 0.044715
        %v1798 = vmul.f32 %v1638, 0.044715
        %v1799 = vmul.f32 %v1639, 0.044715
        %v1800 = vmul.f32 %v1640, 0.044715
        %v1801 = vmul.f32 %v1641, 0.044715
        %v1802 = vmul.f32 %v1642, 0.044715
        %v1803 = vmul.f32 %v1643, 0.044715
        %v1804 = vmul.f32 %v1644, 0.044715
        %v1805 = vmul.f32 %v1645, 0.044715
        %v1806 = vmul.f32 %v1646, 0.044715
        %v1807 = vmul.f32 %v1647, 0.044715
        %v1808 = vmul.f32 %v1648, 0.044715
        %v1809 = vmul.f32 %v1649, 0.044715
        %v1810 = vmul.f32 %v1650, 0.044715
        %v1811 = vmul.f32 %v1651, 0.044715
        %v1812 = vmul.f32 %v1652, 0.044715
        %v1813 = vmul.f32 %v1653, 0.044715
        %v1814 = vmul.f32 %v1654, 0.044715
        %v1815 = vmul.f32 %v1655, 0.044715
        %v1816 = vmul.f32 %v1656, 0.044715
        %v1817 = vmul.f32 %v1657, 0.044715
        %v1818 = vmul.f32 %v1658, 0.044715
        %v1819 = vmul.f32 %v1659, 0.044715
        %v1820 = vmul.f32 %v1660, 0.044715
        %v1821 = vmul.f32 %v1661, 0.044715
        %v1822 = vmul.f32 %v1662, 0.044715
        %v1823 = vmul.f32 %v1663, 0.044715
        %v1824 = vmul.f32 %v1664, 0.044715
        %v1825 = vmul.f32 %v1665, 0.044715
        %v1826 = vmul.f32 %v1666, 0.044715
        %v1827 = vmul.f32 %v1667, 0.044715
        %v1828 = vmul.f32 %v1668, 0.044715
        %v1829 = vmul.f32 %v1669, 0.044715
        %v1830 = vmul.f32 %v1670, 0.044715
        %v1831 = vmul.f32 %v1671, 0.044715
        %v1832 = vmul.f32 %v1672, 0.044715
        %v1833 = vmul.f32 %v1673, 0.044715
        %v1834 = vmul.f32 %v1674, 0.044715
        %v1835 = vmul.f32 %v1675, 0.044715
        %v1836 = vmul.f32 %v1676, 0.044715
        %v1837 = vmul.f32 %v1677, 0.044715
        %v1838 = vmul.f32 %v1678, 0.044715
        %v1839 = vmul.f32 %v1679, 0.044715
        %v1840 = vmul.f32 %v1680, 0.044715
        %v1841 = vmul.f32 %v1681, 0.044715
        %v1842 = vmul.f32 %v1682, 0.044715
        %v1843 = vmul.f32 %v1683, 0.044715
        %v1844 = vmul.f32 %v1684, 0.044715
        %v1845 = vmul.f32 %v1685, 0.044715
        %v1846 = vmul.f32 %v1686, 0.044715
        %v1847 = vmul.f32 %v1687, 0.044715
        %v1848 = vmul.f32 %v1688, 0.044715
        %v1849 = vmul.f32 %v1689, 0.044715
        %v1850 = vmul.f32 %v1690, 0.044715
        %v1851 = vmul.f32 %v1691, 0.044715
        %v1852 = vmul.f32 %v1692, 0.044715
        %v1853 = vmul.f32 %v1693, 0.044715
        %v1854 = vmul.f32 %v1694, 0.044715
        %v1855 = vmul.f32 %v1695, 0.044715
        %v1856 = vmul.f32 %v1696, 0.044715
        %v1857 = vmul.f32 %v1697, 0.044715
        %v1858 = vmul.f32 %v1698, 0.044715
        %v1859 = vmul.f32 %v1699, 0.044715
        %v1860 = vmul.f32 %v1700, 0.044715
        %v1861 = vmul.f32 %v1701, 0.044715
        %v1862 = vmul.f32 %v1702, 0.044715
        %v1863 = vmul.f32 %v1703, 0.044715
        %v1864 = vmul.f32 %v1704, 0.044715
        %v1865 = vmul.f32 %v1705, 0.044715
        %v1866 = vmul.f32 %v1706, 0.044715
        %v1867 = vmul.f32 %v1707, 0.044715
        %v1868 = vmul.f32 %v1708, 0.044715
        %v1869 = vmul.f32 %v1709, 0.044715
        %v1870 = vmul.f32 %v1710, 0.044715
        %v1871 = vmul.f32 %v1711, 0.044715
        %v1872 = vmul.f32 %v1712, 0.044715
        %v1873 = vmul.f32 %v1713, 0.044715
        %v1874 = vmul.f32 %v1714, 0.044715
        %v1875 = vmul.f32 %v1715, 0.044715
        %v1876 = vmul.f32 %v1716, 0.044715
        %v1877 = vmul.f32 %v1717, 0.044715
        %v1878 = vadd.f32 %v566, %v1718
        %v1879 = vadd.f32 %v568, %v1719
        %v1880 = vadd.f32 %v823, %v1720
        %v1881 = vadd.f32 %v825, %v1721
        %v1882 = vadd.f32 %v1080, %v1722
        %v1883 = vadd.f32 %v572, %v1723
        %v1884 = vadd.f32 %v574, %v1724
        %v1885 = vadd.f32 %v829, %v1725
        %v1886 = vadd.f32 %v831, %v1726
        %v1887 = vadd.f32 %v1085, %v1727
        %v1888 = vadd.f32 %v578, %v1728
        %v1889 = vadd.f32 %v580, %v1729
        %v1890 = vadd.f32 %v835, %v1730
        %v1891 = vadd.f32 %v837, %v1731
        %v1892 = vadd.f32 %v1090, %v1732
        %v1893 = vadd.f32 %v584, %v1733
        %v1894 = vadd.f32 %v586, %v1734
        %v1895 = vadd.f32 %v841, %v1735
        %v1896 = vadd.f32 %v843, %v1736
        %v1897 = vadd.f32 %v1095, %v1737
        %v1898 = vadd.f32 %v590, %v1738
        %v1899 = vadd.f32 %v592, %v1739
        %v1900 = vadd.f32 %v847, %v1740
        %v1901 = vadd.f32 %v849, %v1741
        %v1902 = vadd.f32 %v1100, %v1742
        %v1903 = vadd.f32 %v596, %v1743
        %v1904 = vadd.f32 %v598, %v1744
        %v1905 = vadd.f32 %v853, %v1745
        %v1906 = vadd.f32 %v855, %v1746
        %v1907 = vadd.f32 %v1105, %v1747
        %v1908 = vadd.f32 %v602, %v1748
        %v1909 = vadd.f32 %v604, %v1749
        %v1910 = vadd.f32 %v859, %v1750
        %v1911 = vadd.f32 %v861, %v1751
        %v1912 = vadd.f32 %v1110, %v1752
        %v1913 = vadd.f32 %v608, %v1753
        %v1914 = vadd.f32 %v610, %v1754
        %v1915 = vadd.f32 %v865, %v1755
        %v1916 = vadd.f32 %v867, %v1756
        %v1917 = vadd.f32 %v1115, %v1757
        %v1918 = vadd.f32 %v614, %v1758
        %v1919 = vadd.f32 %v616, %v1759
        %v1920 = vadd.f32 %v871, %v1760
        %v1921 = vadd.f32 %v873, %v1761
        %v1922 = vadd.f32 %v1120, %v1762
        %v1923 = vadd.f32 %v620, %v1763
        %v1924 = vadd.f32 %v622, %v1764
        %v1925 = vadd.f32 %v877, %v1765
        %v1926 = vadd.f32 %v879, %v1766
        %v1927 = vadd.f32 %v1125, %v1767
        %v1928 = vadd.f32 %v626, %v1768
        %v1929 = vadd.f32 %v628, %v1769
        %v1930 = vadd.f32 %v883, %v1770
        %v1931 = vadd.f32 %v885, %v1771
        %v1932 = vadd.f32 %v1130, %v1772
        %v1933 = vadd.f32 %v632, %v1773
        %v1934 = vadd.f32 %v634, %v1774
        %v1935 = vadd.f32 %v889, %v1775
        %v1936 = vadd.f32 %v891, %v1776
        %v1937 = vadd.f32 %v1135, %v1777
        %v1938 = vadd.f32 %v638, %v1778
        %v1939 = vadd.f32 %v640, %v1779
        %v1940 = vadd.f32 %v895, %v1780
        %v1941 = vadd.f32 %v897, %v1781
        %v1942 = vadd.f32 %v1140, %v1782
        %v1943 = vadd.f32 %v644, %v1783
        %v1944 = vadd.f32 %v646, %v1784
        %v1945 = vadd.f32 %v901, %v1785
        %v1946 = vadd.f32 %v903, %v1786
        %v1947 = vadd.f32 %v1145, %v1787
        %v1948 = vadd.f32 %v650, %v1788
        %v1949 = vadd.f32 %v652, %v1789
        %v1950 = vadd.f32 %v907, %v1790
        %v1951 = vadd.f32 %v909, %v1791
        %v1952 = vadd.f32 %v1150, %v1792
        %v1953 = vadd.f32 %v656, %v1793
        %v1954 = vadd.f32 %v658, %v1794
        %v1955 = vadd.f32 %v913, %v1795
        %v1956 = vadd.f32 %v915, %v1796
        %v1957 = vadd.f32 %v1155, %v1797
        %v1958 = vadd.f32 %v662, %v1798
        %v1959 = vadd.f32 %v664, %v1799
        %v1960 = vadd.f32 %v919, %v1800
        %v1961 = vadd.f32 %v921, %v1801
        %v1962 = vadd.f32 %v1160, %v1802
        %v1963 = vadd.f32 %v668, %v1803
        %v1964 = vadd.f32 %v670, %v1804
        %v1965 = vadd.f32 %v925, %v1805
        %v1966 = vadd.f32 %v927, %v1806
        %v1967 = vadd.f32 %v1165, %v1807
        %v1968 = vadd.f32 %v674, %v1808
        %v1969 = vadd.f32 %v676, %v1809
        %v1970 = vadd.f32 %v931, %v1810
        %v1971 = vadd.f32 %v933, %v1811
        %v1972 = vadd.f32 %v1170, %v1812
        %v1973 = vadd.f32 %v680, %v1813
        %v1974 = vadd.f32 %v682, %v1814
        %v1975 = vadd.f32 %v937, %v1815
        %v1976 = vadd.f32 %v939, %v1816
        %v1977 = vadd.f32 %v1175, %v1817
        %v1978 = vadd.f32 %v686, %v1818
        %v1979 = vadd.f32 %v688, %v1819
        %v1980 = vadd.f32 %v943, %v1820
        %v1981 = vadd.f32 %v945, %v1821
        %v1982 = vadd.f32 %v1180, %v1822
        %v1983 = vadd.f32 %v692, %v1823
        %v1984 = vadd.f32 %v694, %v1824
        %v1985 = vadd.f32 %v949, %v1825
        %v1986 = vadd.f32 %v951, %v1826
        %v1987 = vadd.f32 %v1185, %v1827
        %v1988 = vadd.f32 %v698, %v1828
        %v1989 = vadd.f32 %v700, %v1829
        %v1990 = vadd.f32 %v955, %v1830
        %v1991 = vadd.f32 %v957, %v1831
        %v1992 = vadd.f32 %v1190, %v1832
        %v1993 = vadd.f32 %v704, %v1833
        %v1994 = vadd.f32 %v706, %v1834
        %v1995 = vadd.f32 %v961, %v1835
        %v1996 = vadd.f32 %v963, %v1836
        %v1997 = vadd.f32 %v1195, %v1837
        %v1998 = vadd.f32 %v710, %v1838
        %v1999 = vadd.f32 %v712, %v1839
        %v2000 = vadd.f32 %v967, %v1840
        %v2001 = vadd.f32 %v969, %v1841
        %v2002 = vadd.f32 %v1200, %v1842
        %v2003 = vadd.f32 %v716, %v1843
        %v2004 = vadd.f32 %v718, %v1844
        %v2005 = vadd.f32 %v973, %v1845
        %v2006 = vadd.f32 %v975, %v1846
        %v2007 = vadd.f32 %v1205, %v1847
        %v2008 = vadd.f32 %v722, %v1848
        %v2009 = vadd.f32 %v724, %v1849
        %v2010 = vadd.f32 %v979, %v1850
        %v2011 = vadd.f32 %v981, %v1851
        %v2012 = vadd.f32 %v1210, %v1852
        %v2013 = vadd.f32 %v728, %v1853
        %v2014 = vadd.f32 %v730, %v1854
        %v2015 = vadd.f32 %v985, %v1855
        %v2016 = vadd.f32 %v987, %v1856
        %v2017 = vadd.f32 %v1215, %v1857
        %v2018 = vadd.f32 %v734, %v1858
        %v2019 = vadd.f32 %v736, %v1859
        %v2020 = vadd.f32 %v991, %v1860
        %v2021 = vadd.f32 %v993, %v1861
        %v2022 = vadd.f32 %v1220, %v1862
        %v2023 = vadd.f32 %v740, %v1863
        %v2024 = vadd.f32 %v742, %v1864
        %v2025 = vadd.f32 %v997, %v1865
        %v2026 = vadd.f32 %v999, %v1866
        %v2027 = vadd.f32 %v1225, %v1867
        %v2028 = vadd.f32 %v746, %v1868
        %v2029 = vadd.f32 %v748, %v1869
        %v2030 = vadd.f32 %v1003, %v1870
        %v2031 = vadd.f32 %v1005, %v1871
        %v2032 = vadd.f32 %v1230, %v1872
        %v2033 = vadd.f32 %v752, %v1873
        %v2034 = vadd.f32 %v754, %v1874
        %v2035 = vadd.f32 %v1009, %v1875
        %v2036 = vadd.f32 %v1011, %v1876
        %v2037 = vadd.f32 %v1235, %v1877
        %v2038 = vmul.f32 %v1878, 0.7978846
        %v2039 = vmul.f32 %v1879, 0.7978846
        %v2040 = vmul.f32 %v1880, 0.7978846
        %v2041 = vmul.f32 %v1881, 0.7978846
        %v2042 = vmul.f32 %v1882, 0.7978846
        %v2043 = vmul.f32 %v1883, 0.7978846
        %v2044 = vmul.f32 %v1884, 0.7978846
        %v2045 = vmul.f32 %v1885, 0.7978846
        %v2046 = vmul.f32 %v1886, 0.7978846
        %v2047 = vmul.f32 %v1887, 0.7978846
        %v2048 = vmul.f32 %v1888, 0.7978846
        %v2049 = vmul.f32 %v1889, 0.7978846
        %v2050 = vmul.f32 %v1890, 0.7978846
        %v2051 = vmul.f32 %v1891, 0.7978846
        %v2052 = vmul.f32 %v1892, 0.7978846
        %v2053 = vmul.f32 %v1893, 0.7978846
        %v2054 = vmul.f32 %v1894, 0.7978846
        %v2055 = vmul.f32 %v1895, 0.7978846
        %v2056 = vmul.f32 %v1896, 0.7978846
        %v2057 = vmul.f32 %v1897, 0.7978846
        %v2058 = vmul.f32 %v1898, 0.7978846
        %v2059 = vmul.f32 %v1899, 0.7978846
        %v2060 = vmul.f32 %v1900, 0.7978846
        %v2061 = vmul.f32 %v1901, 0.7978846
        %v2062 = vmul.f32 %v1902, 0.7978846
        %v2063 = vmul.f32 %v1903, 0.7978846
        %v2064 = vmul.f32 %v1904, 0.7978846
        %v2065 = vmul.f32 %v1905, 0.7978846
        %v2066 = vmul.f32 %v1906, 0.7978846
        %v2067 = vmul.f32 %v1907, 0.7978846
        %v2068 = vmul.f32 %v1908, 0.7978846
        %v2069 = vmul.f32 %v1909, 0.7978846
        %v2070 = vmul.f32 %v1910, 0.7978846
        %v2071 = vmul.f32 %v1911, 0.7978846
        %v2072 = vmul.f32 %v1912, 0.7978846
        %v2073 = vmul.f32 %v1913, 0.7978846
        %v2074 = vmul.f32 %v1914, 0.7978846
        %v2075 = vmul.f32 %v1915, 0.7978846
        %v2076 = vmul.f32 %v1916, 0.7978846
        %v2077 = vmul.f32 %v1917, 0.7978846
        %v2078 = vmul.f32 %v1918, 0.7978846
        %v2079 = vmul.f32 %v1919, 0.7978846
        %v2080 = vmul.f32 %v1920, 0.7978846
        %v2081 = vmul.f32 %v1921, 0.7978846
        %v2082 = vmul.f32 %v1922, 0.7978846
        %v2083 = vmul.f32 %v1923, 0.7978846
        %v2084 = vmul.f32 %v1924, 0.7978846
        %v2085 = vmul.f32 %v1925, 0.7978846
        %v2086 = vmul.f32 %v1926, 0.7978846
        %v2087 = vmul.f32 %v1927, 0.7978846
        %v2088 = vmul.f32 %v1928, 0.7978846
        %v2089 = vmul.f32 %v1929, 0.7978846
        %v2090 = vmul.f32 %v1930, 0.7978846
        %v2091 = vmul.f32 %v1931, 0.7978846
        %v2092 = vmul.f32 %v1932, 0.7978846
        %v2093 = vmul.f32 %v1933, 0.7978846
        %v2094 = vmul.f32 %v1934, 0.7978846
        %v2095 = vmul.f32 %v1935, 0.7978846
        %v2096 = vmul.f32 %v1936, 0.7978846
        %v2097 = vmul.f32 %v1937, 0.7978846
        %v2098 = vmul.f32 %v1938, 0.7978846
        %v2099 = vmul.f32 %v1939, 0.7978846
        %v2100 = vmul.f32 %v1940, 0.7978846
        %v2101 = vmul.f32 %v1941, 0.7978846
        %v2102 = vmul.f32 %v1942, 0.7978846
        %v2103 = vmul.f32 %v1943, 0.7978846
        %v2104 = vmul.f32 %v1944, 0.7978846
        %v2105 = vmul.f32 %v1945, 0.7978846
        %v2106 = vmul.f32 %v1946, 0.7978846
        %v2107 = vmul.f32 %v1947, 0.7978846
        %v2108 = vmul.f32 %v1948, 0.7978846
        %v2109 = vmul.f32 %v1949, 0.7978846
        %v2110 = vmul.f32 %v1950, 0.7978846
        %v2111 = vmul.f32 %v1951, 0.7978846
        %v2112 = vmul.f32 %v1952, 0.7978846
        %v2113 = vmul.f32 %v1953, 0.7978846
        %v2114 = vmul.f32 %v1954, 0.7978846
        %v2115 = vmul.f32 %v1955, 0.7978846
        %v2116 = vmul.f32 %v1956, 0.7978846
        %v2117 = vmul.f32 %v1957, 0.7978846
        %v2118 = vmul.f32 %v1958, 0.7978846
        %v2119 = vmul.f32 %v1959, 0.7978846
        %v2120 = vmul.f32 %v1960, 0.7978846
        %v2121 = vmul.f32 %v1961, 0.7978846
        %v2122 = vmul.f32 %v1962, 0.7978846
        %v2123 = vmul.f32 %v1963, 0.7978846
        %v2124 = vmul.f32 %v1964, 0.7978846
        %v2125 = vmul.f32 %v1965, 0.7978846
        %v2126 = vmul.f32 %v1966, 0.7978846
        %v2127 = vmul.f32 %v1967, 0.7978846
        %v2128 = vmul.f32 %v1968, 0.7978846
        %v2129 = vmul.f32 %v1969, 0.7978846
        %v2130 = vmul.f32 %v1970, 0.7978846
        %v2131 = vmul.f32 %v1971, 0.7978846
        %v2132 = vmul.f32 %v1972, 0.7978846
        %v2133 = vmul.f32 %v1973, 0.7978846
        %v2134 = vmul.f32 %v1974, 0.7978846
        %v2135 = vmul.f32 %v1975, 0.7978846
        %v2136 = vmul.f32 %v1976, 0.7978846
        %v2137 = vmul.f32 %v1977, 0.7978846
        %v2138 = vmul.f32 %v1978, 0.7978846
        %v2139 = vmul.f32 %v1979, 0.7978846
        %v2140 = vmul.f32 %v1980, 0.7978846
        %v2141 = vmul.f32 %v1981, 0.7978846
        %v2142 = vmul.f32 %v1982, 0.7978846
        %v2143 = vmul.f32 %v1983, 0.7978846
        %v2144 = vmul.f32 %v1984, 0.7978846
        %v2145 = vmul.f32 %v1985, 0.7978846
        %v2146 = vmul.f32 %v1986, 0.7978846
        %v2147 = vmul.f32 %v1987, 0.7978846
        %v2148 = vmul.f32 %v1988, 0.7978846
        %v2149 = vmul.f32 %v1989, 0.7978846
        %v2150 = vmul.f32 %v1990, 0.7978846
        %v2151 = vmul.f32 %v1991, 0.7978846
        %v2152 = vmul.f32 %v1992, 0.7978846
        %v2153 = vmul.f32 %v1993, 0.7978846
        %v2154 = vmul.f32 %v1994, 0.7978846
        %v2155 = vmul.f32 %v1995, 0.7978846
        %v2156 = vmul.f32 %v1996, 0.7978846
        %v2157 = vmul.f32 %v1997, 0.7978846
        %v2158 = vmul.f32 %v1998, 0.7978846
        %v2159 = vmul.f32 %v1999, 0.7978846
        %v2160 = vmul.f32 %v2000, 0.7978846
        %v2161 = vmul.f32 %v2001, 0.7978846
        %v2162 = vmul.f32 %v2002, 0.7978846
        %v2163 = vmul.f32 %v2003, 0.7978846
        %v2164 = vmul.f32 %v2004, 0.7978846
        %v2165 = vmul.f32 %v2005, 0.7978846
        %v2166 = vmul.f32 %v2006, 0.7978846
        %v2167 = vmul.f32 %v2007, 0.7978846
        %v2168 = vmul.f32 %v2008, 0.7978846
        %v2169 = vmul.f32 %v2009, 0.7978846
        %v2170 = vmul.f32 %v2010, 0.7978846
        %v2171 = vmul.f32 %v2011, 0.7978846
        %v2172 = vmul.f32 %v2012, 0.7978846
        %v2173 = vmul.f32 %v2013, 0.7978846
        %v2174 = vmul.f32 %v2014, 0.7978846
        %v2175 = vmul.f32 %v2015, 0.7978846
        %v2176 = vmul.f32 %v2016, 0.7978846
        %v2177 = vmul.f32 %v2017, 0.7978846
        %v2178 = vmul.f32 %v2018, 0.7978846
        %v2179 = vmul.f32 %v2019, 0.7978846
        %v2180 = vmul.f32 %v2020, 0.7978846
        %v2181 = vmul.f32 %v2021, 0.7978846
        %v2182 = vmul.f32 %v2022, 0.7978846
        %v2183 = vmul.f32 %v2023, 0.7978846
        %v2184 = vmul.f32 %v2024, 0.7978846
        %v2185 = vmul.f32 %v2025, 0.7978846
        %v2186 = vmul.f32 %v2026, 0.7978846
        %v2187 = vmul.f32 %v2027, 0.7978846
        %v2188 = vmul.f32 %v2028, 0.7978846
        %v2189 = vmul.f32 %v2029, 0.7978846
        %v2190 = vmul.f32 %v2030, 0.7978846
        %v2191 = vmul.f32 %v2031, 0.7978846
        %v2192 = vmul.f32 %v2032, 0.7978846
        %v2193 = vmul.f32 %v2033, 0.7978846
        %v2194 = vmul.f32 %v2034, 0.7978846
        %v2195 = vmul.f32 %v2035, 0.7978846
        %v2196 = vmul.f32 %v2036, 0.7978846
        %v2197 = vmul.f32 %v2037, 0.7978846
        %v2198 = vtanh.pop %v2038
        %v2199 = vtanh.pop %v2039
        %v2200 = vtanh.pop %v2040
        %v2201 = vtanh.pop %v2041
        %v2202 = vtanh.pop %v2042
        %v2203 = vtanh.pop %v2043
        %v2204 = vtanh.pop %v2044
        %v2205 = vtanh.pop %v2045
        %v2206 = vtanh.pop %v2046
        %v2207 = vtanh.pop %v2047
        %v2208 = vtanh.pop %v2048
        %v2209 = vtanh.pop %v2049
        %v2210 = vtanh.pop %v2050
        %v2211 = vtanh.pop %v2051
        %v2212 = vtanh.pop %v2052
        %v2213 = vtanh.pop %v2053
        %v2214 = vtanh.pop %v2054
        %v2215 = vtanh.pop %v2055
        %v2216 = vtanh.pop %v2056
        %v2217 = vtanh.pop %v2057
        %v2218 = vtanh.pop %v2058
        %v2219 = vtanh.pop %v2059
        %v2220 = vtanh.pop %v2060
        %v2221 = vtanh.pop %v2061
        %v2222 = vtanh.pop %v2062
        %v2223 = vtanh.pop %v2063
        %v2224 = vtanh.pop %v2064
        %v2225 = vtanh.pop %v2065
        %v2226 = vtanh.pop %v2066
        %v2227 = vtanh.pop %v2067
        %v2228 = vtanh.pop %v2068
        %v2229 = vtanh.pop %v2069
        %v2230 = vtanh.pop %v2070
        %v2231 = vtanh.pop %v2071
        %v2232 = vtanh.pop %v2072
        %v2233 = vtanh.pop %v2073
        %v2234 = vtanh.pop %v2074
        %v2235 = vtanh.pop %v2075
        %v2236 = vtanh.pop %v2076
        %v2237 = vtanh.pop %v2077
        %v2238 = vtanh.pop %v2078
        %v2239 = vtanh.pop %v2079
        %v2240 = vtanh.pop %v2080
        %v2241 = vtanh.pop %v2081
        %v2242 = vtanh.pop %v2082
        %v2243 = vtanh.pop %v2083
        %v2244 = vtanh.pop %v2084
        %v2245 = vtanh.pop %v2085
        %v2246 = vtanh.pop %v2086
        %v2247 = vtanh.pop %v2087
        %v2248 = vtanh.pop %v2088
        %v2249 = vtanh.pop %v2089
        %v2250 = vtanh.pop %v2090
        %v2251 = vtanh.pop %v2091
        %v2252 = vtanh.pop %v2092
        %v2253 = vtanh.pop %v2093
        %v2254 = vtanh.pop %v2094
        %v2255 = vtanh.pop %v2095
        %v2256 = vtanh.pop %v2096
        %v2257 = vtanh.pop %v2097
        %v2258 = vtanh.pop %v2098
        %v2259 = vtanh.pop %v2099
        %v2260 = vtanh.pop %v2100
        %v2261 = vtanh.pop %v2101
        %v2262 = vtanh.pop %v2102
        %v2263 = vtanh.pop %v2103
        %v2264 = vtanh.pop %v2104
        %v2265 = vtanh.pop %v2105
        %v2266 = vtanh.pop %v2106
        %v2267 = vtanh.pop %v2107
        %v2268 = vtanh.pop %v2108
        %v2269 = vtanh.pop %v2109
        %v2270 = vtanh.pop %v2110
        %v2271 = vtanh.pop %v2111
        %v2272 = vtanh.pop %v2112
        %v2273 = vtanh.pop %v2113
        %v2274 = vtanh.pop %v2114
        %v2275 = vtanh.pop %v2115
        %v2276 = vtanh.pop %v2116
        %v2277 = vtanh.pop %v2117
        %v2278 = vtanh.pop %v2118
        %v2279 = vtanh.pop %v2119
        %v2280 = vtanh.pop %v2120
        %v2281 = vtanh.pop %v2121
        %v2282 = vtanh.pop %v2122
        %v2283 = vtanh.pop %v2123
        %v2284 = vtanh.pop %v2124
        %v2285 = vtanh.pop %v2125
        %v2286 = vtanh.pop %v2126
        %v2287 = vtanh.pop %v2127
        %v2288 = vtanh.pop %v2128
        %v2289 = vtanh.pop %v2129
        %v2290 = vtanh.pop %v2130
        %v2291 = vtanh.pop %v2131
        %v2292 = vtanh.pop %v2132
        %v2293 = vtanh.pop %v2133
        %v2294 = vtanh.pop %v2134
        %v2295 = vtanh.pop %v2135
        %v2296 = vtanh.pop %v2136
        %v2297 = vtanh.pop %v2137
        %v2298 = vtanh.pop %v2138
        %v2299 = vtanh.pop %v2139
        %v2300 = vtanh.pop %v2140
        %v2301 = vtanh.pop %v2141
        %v2302 = vtanh.pop %v2142
        %v2303 = vtanh.pop %v2143
        %v2304 = vtanh.pop %v2144
        %v2305 = vtanh.pop %v2145
        %v2306 = vtanh.pop %v2146
        %v2307 = vtanh.pop %v2147
        %v2308 = vtanh.pop %v2148
        %v2309 = vtanh.pop %v2149
        %v2310 = vtanh.pop %v2150
        %v2311 = vtanh.pop %v2151
        %v2312 = vtanh.pop %v2152
        %v2313 = vtanh.pop %v2153
        %v2314 = vtanh.pop %v2154
        %v2315 = vtanh.pop %v2155
        %v2316 = vtanh.pop %v2156
        %v2317 = vtanh.pop %v2157
        %v2318 = vtanh.pop %v2158
        %v2319 = vtanh.pop %v2159
        %v2320 = vtanh.pop %v2160
        %v2321 = vtanh.pop %v2161
        %v2322 = vtanh.pop %v2162
        %v2323 = vtanh.pop %v2163
        %v2324 = vtanh.pop %v2164
        %v2325 = vtanh.pop %v2165
        %v2326 = vtanh.pop %v2166
        %v2327 = vtanh.pop %v2167
        %v2328 = vtanh.pop %v2168
        %v2329 = vtanh.pop %v2169
        %v2330 = vtanh.pop %v2170
        %v2331 = vtanh.pop %v2171
        %v2332 = vtanh.pop %v2172
        %v2333 = vtanh.pop %v2173
        %v2334 = vtanh.pop %v2174
        %v2335 = vtanh.pop %v2175
        %v2336 = vtanh.pop %v2176
        %v2337 = vtanh.pop %v2177
        %v2338 = vtanh.pop %v2178
        %v2339 = vtanh.pop %v2179
        %v2340 = vtanh.pop %v2180
        %v2341 = vtanh.pop %v2181
        %v2342 = vtanh.pop %v2182
        %v2343 = vtanh.pop %v2183
        %v2344 = vtanh.pop %v2184
        %v2345 = vtanh.pop %v2185
        %v2346 = vtanh.pop %v2186
        %v2347 = vtanh.pop %v2187
        %v2348 = vtanh.pop %v2188
        %v2349 = vtanh.pop %v2189
        %v2350 = vtanh.pop %v2190
        %v2351 = vtanh.pop %v2191
        %v2352 = vtanh.pop %v2192
        %v2353 = vtanh.pop %v2193
        %v2354 = vtanh.pop %v2194
        %v2355 = vtanh.pop %v2195
        %v2356 = vtanh.pop %v2196
        %v2357 = vtanh.pop %v2197
        %v2358 = vadd.f32 %v2198, 1.0
        %v2359 = vadd.f32 %v2199, 1.0
        %v2360 = vadd.f32 %v2200, 1.0
        %v2361 = vadd.f32 %v2201, 1.0
        %v2362 = vadd.f32 %v2202, 1.0
        %v2363 = vadd.f32 %v2203, 1.0
        %v2364 = vadd.f32 %v2204, 1.0
        %v2365 = vadd.f32 %v2205, 1.0
        %v2366 = vadd.f32 %v2206, 1.0
        %v2367 = vadd.f32 %v2207, 1.0
        %v2368 = vadd.f32 %v2208, 1.0
        %v2369 = vadd.f32 %v2209, 1.0
        %v2370 = vadd.f32 %v2210, 1.0
        %v2371 = vadd.f32 %v2211, 1.0
        %v2372 = vadd.f32 %v2212, 1.0
        %v2373 = vadd.f32 %v2213, 1.0
        %v2374 = vadd.f32 %v2214, 1.0
        %v2375 = vadd.f32 %v2215, 1.0
        %v2376 = vadd.f32 %v2216, 1.0
        %v2377 = vadd.f32 %v2217, 1.0
        %v2378 = vadd.f32 %v2218, 1.0
        %v2379 = vadd.f32 %v2219, 1.0
        %v2380 = vadd.f32 %v2220, 1.0
        %v2381 = vadd.f32 %v2221, 1.0
        %v2382 = vadd.f32 %v2222, 1.0
        %v2383 = vadd.f32 %v2223, 1.0
        %v2384 = vadd.f32 %v2224, 1.0
        %v2385 = vadd.f32 %v2225, 1.0
        %v2386 = vadd.f32 %v2226, 1.0
        %v2387 = vadd.f32 %v2227, 1.0
        %v2388 = vadd.f32 %v2228, 1.0
        %v2389 = vadd.f32 %v2229, 1.0
        %v2390 = vadd.f32 %v2230, 1.0
        %v2391 = vadd.f32 %v2231, 1.0
        %v2392 = vadd.f32 %v2232, 1.0
        %v2393 = vadd.f32 %v2233, 1.0
        %v2394 = vadd.f32 %v2234, 1.0
        %v2395 = vadd.f32 %v2235, 1.0
        %v2396 = vadd.f32 %v2236, 1.0
        %v2397 = vadd.f32 %v2237, 1.0
        %v2398 = vadd.f32 %v2238, 1.0
        %v2399 = vadd.f32 %v2239, 1.0
        %v2400 = vadd.f32 %v2240, 1.0
        %v2401 = vadd.f32 %v2241, 1.0
        %v2402 = vadd.f32 %v2242, 1.0
        %v2403 = vadd.f32 %v2243, 1.0
        %v2404 = vadd.f32 %v2244, 1.0
        %v2405 = vadd.f32 %v2245, 1.0
        %v2406 = vadd.f32 %v2246, 1.0
        %v2407 = vadd.f32 %v2247, 1.0
        %v2408 = vadd.f32 %v2248, 1.0
        %v2409 = vadd.f32 %v2249, 1.0
        %v2410 = vadd.f32 %v2250, 1.0
        %v2411 = vadd.f32 %v2251, 1.0
        %v2412 = vadd.f32 %v2252, 1.0
        %v2413 = vadd.f32 %v2253, 1.0
        %v2414 = vadd.f32 %v2254, 1.0
        %v2415 = vadd.f32 %v2255, 1.0
        %v2416 = vadd.f32 %v2256, 1.0
        %v2417 = vadd.f32 %v2257, 1.0
        %v2418 = vadd.f32 %v2258, 1.0
        %v2419 = vadd.f32 %v2259, 1.0
        %v2420 = vadd.f32 %v2260, 1.0
        %v2421 = vadd.f32 %v2261, 1.0
        %v2422 = vadd.f32 %v2262, 1.0
        %v2423 = vadd.f32 %v2263, 1.0
        %v2424 = vadd.f32 %v2264, 1.0
        %v2425 = vadd.f32 %v2265, 1.0
        %v2426 = vadd.f32 %v2266, 1.0
        %v2427 = vadd.f32 %v2267, 1.0
        %v2428 = vadd.f32 %v2268, 1.0
        %v2429 = vadd.f32 %v2269, 1.0
        %v2430 = vadd.f32 %v2270, 1.0
        %v2431 = vadd.f32 %v2271, 1.0
        %v2432 = vadd.f32 %v2272, 1.0
        %v2433 = vadd.f32 %v2273, 1.0
        %v2434 = vadd.f32 %v2274, 1.0
        %v2435 = vadd.f32 %v2275, 1.0
        %v2436 = vadd.f32 %v2276, 1.0
        %v2437 = vadd.f32 %v2277, 1.0
        %v2438 = vadd.f32 %v2278, 1.0
        %v2439 = vadd.f32 %v2279, 1.0
        %v2440 = vadd.f32 %v2280, 1.0
        %v2441 = vadd.f32 %v2281, 1.0
        %v2442 = vadd.f32 %v2282, 1.0
        %v2443 = vadd.f32 %v2283, 1.0
        %v2444 = vadd.f32 %v2284, 1.0
        %v2445 = vadd.f32 %v2285, 1.0
        %v2446 = vadd.f32 %v2286, 1.0
        %v2447 = vadd.f32 %v2287, 1.0
        %v2448 = vadd.f32 %v2288, 1.0
        %v2449 = vadd.f32 %v2289, 1.0
        %v2450 = vadd.f32 %v2290, 1.0
        %v2451 = vadd.f32 %v2291, 1.0
        %v2452 = vadd.f32 %v2292, 1.0
        %v2453 = vadd.f32 %v2293, 1.0
        %v2454 = vadd.f32 %v2294, 1.0
        %v2455 = vadd.f32 %v2295, 1.0
        %v2456 = vadd.f32 %v2296, 1.0
        %v2457 = vadd.f32 %v2297, 1.0
        %v2458 = vadd.f32 %v2298, 1.0
        %v2459 = vadd.f32 %v2299, 1.0
        %v2460 = vadd.f32 %v2300, 1.0
        %v2461 = vadd.f32 %v2301, 1.0
        %v2462 = vadd.f32 %v2302, 1.0
        %v2463 = vadd.f32 %v2303, 1.0
        %v2464 = vadd.f32 %v2304, 1.0
        %v2465 = vadd.f32 %v2305, 1.0
        %v2466 = vadd.f32 %v2306, 1.0
        %v2467 = vadd.f32 %v2307, 1.0
        %v2468 = vadd.f32 %v2308, 1.0
        %v2469 = vadd.f32 %v2309, 1.0
        %v2470 = vadd.f32 %v2310, 1.0
        %v2471 = vadd.f32 %v2311, 1.0
        %v2472 = vadd.f32 %v2312, 1.0
        %v2473 = vadd.f32 %v2313, 1.0
        %v2474 = vadd.f32 %v2314, 1.0
        %v2475 = vadd.f32 %v2315, 1.0
        %v2476 = vadd.f32 %v2316, 1.0
        %v2477 = vadd.f32 %v2317, 1.0
        %v2478 = vadd.f32 %v2318, 1.0
        %v2479 = vadd.f32 %v2319, 1.0
        %v2480 = vadd.f32 %v2320, 1.0
        %v2481 = vadd.f32 %v2321, 1.0
        %v2482 = vadd.f32 %v2322, 1.0
        %v2483 = vadd.f32 %v2323, 1.0
        %v2484 = vadd.f32 %v2324, 1.0
        %v2485 = vadd.f32 %v2325, 1.0
        %v2486 = vadd.f32 %v2326, 1.0
        %v2487 = vadd.f32 %v2327, 1.0
        %v2488 = vadd.f32 %v2328, 1.0
        %v2489 = vadd.f32 %v2329, 1.0
        %v2490 = vadd.f32 %v2330, 1.0
        %v2491 = vadd.f32 %v2331, 1.0
        %v2492 = vadd.f32 %v2332, 1.0
        %v2493 = vadd.f32 %v2333, 1.0
        %v2494 = vadd.f32 %v2334, 1.0
        %v2495 = vadd.f32 %v2335, 1.0
        %v2496 = vadd.f32 %v2336, 1.0
        %v2497 = vadd.f32 %v2337, 1.0
        %v2498 = vadd.f32 %v2338, 1.0
        %v2499 = vadd.f32 %v2339, 1.0
        %v2500 = vadd.f32 %v2340, 1.0
        %v2501 = vadd.f32 %v2341, 1.0
        %v2502 = vadd.f32 %v2342, 1.0
        %v2503 = vadd.f32 %v2343, 1.0
        %v2504 = vadd.f32 %v2344, 1.0
        %v2505 = vadd.f32 %v2345, 1.0
        %v2506 = vadd.f32 %v2346, 1.0
        %v2507 = vadd.f32 %v2347, 1.0
        %v2508 = vadd.f32 %v2348, 1.0
        %v2509 = vadd.f32 %v2349, 1.0
        %v2510 = vadd.f32 %v2350, 1.0
        %v2511 = vadd.f32 %v2351, 1.0
        %v2512 = vadd.f32 %v2352, 1.0
        %v2513 = vadd.f32 %v2353, 1.0
        %v2514 = vadd.f32 %v2354, 1.0
        %v2515 = vadd.f32 %v2355, 1.0
        %v2516 = vadd.f32 %v2356, 1.0
        %v2517 = vadd.f32 %v2357, 1.0
        %v2518 = vmul.f32 %v1238, %v2358
        %v2519 = vmul.f32 %v1239, %v2359
        %v2520 = vmul.f32 %v1240, %v2360
        %v2521 = vmul.f32 %v1241, %v2361
        %v2522 = vmul.f32 %v1242, %v2362
        %v2523 = vmul.f32 %v1243, %v2363
        %v2524 = vmul.f32 %v1244, %v2364
        %v2525 = vmul.f32 %v1245, %v2365
        %v2526 = vmul.f32 %v1246, %v2366
        %v2527 = vmul.f32 %v1247, %v2367
        %v2528 = vmul.f32 %v1248, %v2368
        %v2529 = vmul.f32 %v1249, %v2369
        %v2530 = vmul.f32 %v1250, %v2370
        %v2531 = vmul.f32 %v1251, %v2371
        %v2532 = vmul.f32 %v1252, %v2372
        %v2533 = vmul.f32 %v1253, %v2373
        %v2534 = vmul.f32 %v1254, %v2374
        %v2535 = vmul.f32 %v1255, %v2375
        %v2536 = vmul.f32 %v1256, %v2376
        %v2537 = vmul.f32 %v1257, %v2377
        %v2538 = vmul.f32 %v1258, %v2378
        %v2539 = vmul.f32 %v1259, %v2379
        %v2540 = vmul.f32 %v1260, %v2380
        %v2541 = vmul.f32 %v1261, %v2381
        %v2542 = vmul.f32 %v1262, %v2382
        %v2543 = vmul.f32 %v1263, %v2383
        %v2544 = vmul.f32 %v1264, %v2384
        %v2545 = vmul.f32 %v1265, %v2385
        %v2546 = vmul.f32 %v1266, %v2386
        %v2547 = vmul.f32 %v1267, %v2387
        %v2548 = vmul.f32 %v1268, %v2388
        %v2549 = vmul.f32 %v1269, %v2389
        %v2550 = vmul.f32 %v1270, %v2390
        %v2551 = vmul.f32 %v1271, %v2391
        %v2552 = vmul.f32 %v1272, %v2392
        %v2553 = vmul.f32 %v1273, %v2393
        %v2554 = vmul.f32 %v1274, %v2394
        %v2555 = vmul.f32 %v1275, %v2395
        %v2556 = vmul.f32 %v1276, %v2396
        %v2557 = vmul.f32 %v1277, %v2397
        %v2558 = vmul.f32 %v1278, %v2398
        %v2559 = vmul.f32 %v1279, %v2399
        %v2560 = vmul.f32 %v1280, %v2400
        %v2561 = vmul.f32 %v1281, %v2401
        %v2562 = vmul.f32 %v1282, %v2402
        %v2563 = vmul.f32 %v1283, %v2403
        %v2564 = vmul.f32 %v1284, %v2404
        %v2565 = vmul.f32 %v1285, %v2405
        %v2566 = vmul.f32 %v1286, %v2406
        %v2567 = vmul.f32 %v1287, %v2407
        %v2568 = vmul.f32 %v1288, %v2408
        %v2569 = vmul.f32 %v1289, %v2409
        %v2570 = vmul.f32 %v1290, %v2410
        %v2571 = vmul.f32 %v1291, %v2411
        %v2572 = vmul.f32 %v1292, %v2412
        %v2573 = vmul.f32 %v1293, %v2413
        %v2574 = vmul.f32 %v1294, %v2414
        %v2575 = vmul.f32 %v1295, %v2415
        %v2576 = vmul.f32 %v1296, %v2416
        %v2577 = vmul.f32 %v1297, %v2417
        %v2578 = vmul.f32 %v1298, %v2418
        %v2579 = vmul.f32 %v1299, %v2419
        %v2580 = vmul.f32 %v1300, %v2420
        %v2581 = vmul.f32 %v1301, %v2421
        %v2582 = vmul.f32 %v1302, %v2422
        %v2583 = vmul.f32 %v1303, %v2423
        %v2584 = vmul.f32 %v1304, %v2424
        %v2585 = vmul.f32 %v1305, %v2425
        %v2586 = vmul.f32 %v1306, %v2426
        %v2587 = vmul.f32 %v1307, %v2427
        %v2588 = vmul.f32 %v1308, %v2428
        %v2589 = vmul.f32 %v1309, %v2429
        %v2590 = vmul.f32 %v1310, %v2430
        %v2591 = vmul.f32 %v1311, %v2431
        %v2592 = vmul.f32 %v1312, %v2432
        %v2593 = vmul.f32 %v1313, %v2433
        %v2594 = vmul.f32 %v1314, %v2434
        %v2595 = vmul.f32 %v1315, %v2435
        %v2596 = vmul.f32 %v1316, %v2436
        %v2597 = vmul.f32 %v1317, %v2437
        %v2598 = vmul.f32 %v1318, %v2438
        %v2599 = vmul.f32 %v1319, %v2439
        %v2600 = vmul.f32 %v1320, %v2440
        %v2601 = vmul.f32 %v1321, %v2441
        %v2602 = vmul.f32 %v1322, %v2442
        %v2603 = vmul.f32 %v1323, %v2443
        %v2604 = vmul.f32 %v1324, %v2444
        %v2605 = vmul.f32 %v1325, %v2445
        %v2606 = vmul.f32 %v1326, %v2446
        %v2607 = vmul.f32 %v1327, %v2447
        %v2608 = vmul.f32 %v1328, %v2448
        %v2609 = vmul.f32 %v1329, %v2449
        %v2610 = vmul.f32 %v1330, %v2450
        %v2611 = vmul.f32 %v1331, %v2451
        %v2612 = vmul.f32 %v1332, %v2452
        %v2613 = vmul.f32 %v1333, %v2453
        %v2614 = vmul.f32 %v1334, %v2454
        %v2615 = vmul.f32 %v1335, %v2455
        %v2616 = vmul.f32 %v1336, %v2456
        %v2617 = vmul.f32 %v1337, %v2457
        %v2618 = vmul.f32 %v1338, %v2458
        %v2619 = vmul.f32 %v1339, %v2459
        %v2620 = vmul.f32 %v1340, %v2460
        %v2621 = vmul.f32 %v1341, %v2461
        %v2622 = vmul.f32 %v1342, %v2462
        %v2623 = vmul.f32 %v1343, %v2463
        %v2624 = vmul.f32 %v1344, %v2464
        %v2625 = vmul.f32 %v1345, %v2465
        %v2626 = vmul.f32 %v1346, %v2466
        %v2627 = vmul.f32 %v1347, %v2467
        %v2628 = vmul.f32 %v1348, %v2468
        %v2629 = vmul.f32 %v1349, %v2469
        %v2630 = vmul.f32 %v1350, %v2470
        %v2631 = vmul.f32 %v1351, %v2471
        %v2632 = vmul.f32 %v1352, %v2472
        %v2633 = vmul.f32 %v1353, %v2473
        %v2634 = vmul.f32 %v1354, %v2474
        %v2635 = vmul.f32 %v1355, %v2475
        %v2636 = vmul.f32 %v1356, %v2476
        %v2637 = vmul.f32 %v1357, %v2477
        %v2638 = vmul.f32 %v1358, %v2478
        %v2639 = vmul.f32 %v1359, %v2479
        %v2640 = vmul.f32 %v1360, %v2480
        %v2641 = vmul.f32 %v1361, %v2481
        %v2642 = vmul.f32 %v1362, %v2482
        %v2643 = vmul.f32 %v1363, %v2483
        %v2644 = vmul.f32 %v1364, %v2484
        %v2645 = vmul.f32 %v1365, %v2485
        %v2646 = vmul.f32 %v1366, %v2486
        %v2647 = vmul.f32 %v1367, %v2487
        %v2648 = vmul.f32 %v1368, %v2488
        %v2649 = vmul.f32 %v1369, %v2489
        %v2650 = vmul.f32 %v1370, %v2490
        %v2651 = vmul.f32 %v1371, %v2491
        %v2652 = vmul.f32 %v1372, %v2492
        %v2653 = vmul.f32 %v1373, %v2493
        %v2654 = vmul.f32 %v1374, %v2494
        %v2655 = vmul.f32 %v1375, %v2495
        %v2656 = vmul.f32 %v1376, %v2496
        %v2657 = vmul.f32 %v1377, %v2497
        %v2658 = vmul.f32 %v1378, %v2498
        %v2659 = vmul.f32 %v1379, %v2499
        %v2660 = vmul.f32 %v1380, %v2500
        %v2661 = vmul.f32 %v1381, %v2501
        %v2662 = vmul.f32 %v1382, %v2502
        %v2663 = vmul.f32 %v1383, %v2503
        %v2664 = vmul.f32 %v1384, %v2504
        %v2665 = vmul.f32 %v1385, %v2505
        %v2666 = vmul.f32 %v1386, %v2506
        %v2667 = vmul.f32 %v1387, %v2507
        %v2668 = vmul.f32 %v1388, %v2508
        %v2669 = vmul.f32 %v1389, %v2509
        %v2670 = vmul.f32 %v1390, %v2510
        %v2671 = vmul.f32 %v1391, %v2511
        %v2672 = vmul.f32 %v1392, %v2512
        %v2673 = vmul.f32 %v1393, %v2513
        %v2674 = vmul.f32 %v1394, %v2514
        %v2675 = vmul.f32 %v1395, %v2515
        %v2676 = vmul.f32 %v1396, %v2516
        %v2677 = vmul.f32 %v1397, %v2517
        %v2678 = vld [vmem:[#allocation2] sm:$0xff]
        %v2679 = vld [vmem:[#allocation2 + $0x8] sm:$0xff]
        %v2680 = vld [vmem:[#allocation2 + $0x10] sm:$0xff]
        %v2681 = vld [vmem:[#allocation2 + $0x18] sm:$0xff]
        %v2682 = vld [vmem:[#allocation2 + $0x20] sm:$0xff]
        %v2683 = vld [vmem:[#allocation2 + $0x28] sm:$0xff]
        %v2684 = vld [vmem:[#allocation2 + $0x30] sm:$0xff]
        %v2685 = vld [vmem:[#allocation2 + $0x38] sm:$0xff]
        %v2686 = vld [vmem:[#allocation2 + $0x40] sm:$0xff]
        %v2687 = vld [vmem:[#allocation2 + $0x48] sm:$0xff]
        %v2688 = vld [vmem:[#allocation2 + $0x50] sm:$0xff]
        %v2689 = vld [vmem:[#allocation2 + $0x58] sm:$0xff]
        %v2690 = vld [vmem:[#allocation2 + $0x60] sm:$0xff]
        %v2691 = vld [vmem:[#allocation2 + $0x68] sm:$0xff]
        %v2692 = vld [vmem:[#allocation2 + $0x70] sm:$0xff]
        %v2693 = vld [vmem:[#allocation2 + $0x78] sm:$0xff]
        %v2694 = vld [vmem:[#allocation2 + $0x80] sm:$0xff]
        %v2695 = vld [vmem:[#allocation2 + $0x88] sm:$0xff]
        %v2696 = vld [vmem:[#allocation2 + $0x90] sm:$0xff]
        %v2697 = vld [vmem:[#allocation2 + $0x98] sm:$0xff]
        %v2698 = vld [vmem:[#allocation2 + $0xa0] sm:$0xff]
        %v2699 = vld [vmem:[#allocation2 + $0xa8] sm:$0xff]
        %v2700 = vld [vmem:[#allocation2 + $0xb0] sm:$0xff]
        %v2701 = vld [vmem:[#allocation2 + $0xb8] sm:$0xff]
        %v2702 = vld [vmem:[#allocation2 + $0xc0] sm:$0xff]
        %v2703 = vld [vmem:[#allocation2 + $0xc8] sm:$0xff]
        %v2704 = vld [vmem:[#allocation2 + $0xd0] sm:$0xff]
        %v2705 = vld [vmem:[#allocation2 + $0xd8] sm:$0xff]
        %v2706 = vld [vmem:[#allocation2 + $0xe0] sm:$0xff]
        %v2707 = vld [vmem:[#allocation2 + $0xe8] sm:$0xff]
        %v2708 = vld [vmem:[#allocation2 + $0xf0] sm:$0xff]
        %v2709 = vld [vmem:[#allocation2 + $0xf8] sm:$0xff]
        %v2710 = vld [vmem:[#allocation2 + $0x100] sm:$0xff]
        %v2711 = vld [vmem:[#allocation2 + $0x108] sm:$0xff]
        %v2712 = vld [vmem:[#allocation2 + $0x110] sm:$0xff]
        %v2713 = vld [vmem:[#allocation2 + $0x118] sm:$0xff]
        %v2714 = vld [vmem:[#allocation2 + $0x120] sm:$0xff]
        %v2715 = vld [vmem:[#allocation2 + $0x128] sm:$0xff]
        %v2716 = vld [vmem:[#allocation2 + $0x130] sm:$0xff]
        %v2717 = vld [vmem:[#allocation2 + $0x138] sm:$0xff]
        %v2718 = vld [vmem:[#allocation2 + $0x140] sm:$0xff]
        %v2719 = vld [vmem:[#allocation2 + $0x148] sm:$0xff]
        %v2720 = vld [vmem:[#allocation2 + $0x150] sm:$0xff]
        %v2721 = vld [vmem:[#allocation2 + $0x158] sm:$0xff]
        %v2722 = vld [vmem:[#allocation2 + $0x160] sm:$0xff]
        %v2723 = vld [vmem:[#allocation2 + $0x168] sm:$0xff]
        %v2724 = vld [vmem:[#allocation2 + $0x170] sm:$0xff]
        %v2725 = vld [vmem:[#allocation2 + $0x178] sm:$0xff]
        %v2726 = vld [vmem:[#allocation2 + $0x180] sm:$0xff]
        %v2727 = vld [vmem:[#allocation2 + $0x188] sm:$0xff]
        %v2728 = vld [vmem:[#allocation2 + $0x190] sm:$0xff]
        %v2729 = vld [vmem:[#allocation2 + $0x198] sm:$0xff]
        %v2730 = vld [vmem:[#allocation2 + $0x1a0] sm:$0xff]
        %v2731 = vld [vmem:[#allocation2 + $0x1a8] sm:$0xff]
        %v2732 = vld [vmem:[#allocation2 + $0x1b0] sm:$0xff]
        %v2733 = vld [vmem:[#allocation2 + $0x1b8] sm:$0xff]
        %v2734 = vld [vmem:[#allocation2 + $0x1c0] sm:$0xff]
        %v2735 = vld [vmem:[#allocation2 + $0x1c8] sm:$0xff]
        %v2736 = vld [vmem:[#allocation2 + $0x1d0] sm:$0xff]
        %v2737 = vld [vmem:[#allocation2 + $0x1d8] sm:$0xff]
        %v2738 = vld [vmem:[#allocation2 + $0x1e0] sm:$0xff]
        %v2739 = vld [vmem:[#allocation2 + $0x1e8] sm:$0xff]
        %v2740 = vld [vmem:[#allocation2 + $0x1f0] sm:$0xff]
        %v2741 = vld [vmem:[#allocation2 + $0x1f8] sm:$0xff]
        %v2742 = vld [vmem:[#allocation2 + $0x200] sm:$0xff]
        %v2743 = vld [vmem:[#allocation2 + $0x208] sm:$0xff]
        %v2744 = vld [vmem:[#allocation2 + $0x210] sm:$0xff]
        %v2745 = vld [vmem:[#allocation2 + $0x218] sm:$0xff]
        %v2746 = vld [vmem:[#allocation2 + $0x220] sm:$0xff]
        %v2747 = vld [vmem:[#allocation2 + $0x228] sm:$0xff]
        %v2748 = vld [vmem:[#allocation2 + $0x230] sm:$0xff]
        %v2749 = vld [vmem:[#allocation2 + $0x238] sm:$0xff]
        %v2750 = vld [vmem:[#allocation2 + $0x240] sm:$0xff]
        %v2751 = vld [vmem:[#allocation2 + $0x248] sm:$0xff]
        %v2752 = vld [vmem:[#allocation2 + $0x250] sm:$0xff]
        %v2753 = vld [vmem:[#allocation2 + $0x258] sm:$0xff]
        %v2754 = vld [vmem:[#allocation2 + $0x260] sm:$0xff]
        %v2755 = vld [vmem:[#allocation2 + $0x268] sm:$0xff]
        %v2756 = vld [vmem:[#allocation2 + $0x270] sm:$0xff]
        %v2757 = vld [vmem:[#allocation2 + $0x278] sm:$0xff]
        %v2758 = vld [vmem:[#allocation2 + $0x280] sm:$0xff]
        %v2759 = vld [vmem:[#allocation2 + $0x288] sm:$0xff]
        %v2760 = vld [vmem:[#allocation2 + $0x290] sm:$0xff]
        %v2761 = vld [vmem:[#allocation2 + $0x298] sm:$0xff]
        %v2762 = vld [vmem:[#allocation2 + $0x2a0] sm:$0xff]
        %v2763 = vld [vmem:[#allocation2 + $0x2a8] sm:$0xff]
        %v2764 = vld [vmem:[#allocation2 + $0x2b0] sm:$0xff]
        %v2765 = vld [vmem:[#allocation2 + $0x2b8] sm:$0xff]
        %v2766 = vld [vmem:[#allocation2 + $0x2c0] sm:$0xff]
        %v2767 = vld [vmem:[#allocation2 + $0x2c8] sm:$0xff]
        %v2768 = vld [vmem:[#allocation2 + $0x2d0] sm:$0xff]
        %v2769 = vld [vmem:[#allocation2 + $0x2d8] sm:$0xff]
        %v2770 = vld [vmem:[#allocation2 + $0x2e0] sm:$0xff]
        %v2771 = vld [vmem:[#allocation2 + $0x2e8] sm:$0xff]
        %v2772 = vld [vmem:[#allocation2 + $0x2f0] sm:$0xff]
        %v2773 = vld [vmem:[#allocation2 + $0x2f8] sm:$0xff]
        %v2774 = vld [vmem:[#allocation2 + $0x300] sm:$0xff]
        %v2775 = vld [vmem:[#allocation2 + $0x308] sm:$0xff]
        %v2776 = vld [vmem:[#allocation2 + $0x310] sm:$0xff]
        %v2777 = vld [vmem:[#allocation2 + $0x318] sm:$0xff]
        %v2778 = vld [vmem:[#allocation2 + $0x320] sm:$0xff]
        %v2779 = vld [vmem:[#allocation2 + $0x328] sm:$0xff]
        %v2780 = vld [vmem:[#allocation2 + $0x330] sm:$0xff]
        %v2781 = vld [vmem:[#allocation2 + $0x338] sm:$0xff]
        %v2782 = vld [vmem:[#allocation2 + $0x340] sm:$0xff]
        %v2783 = vld [vmem:[#allocation2 + $0x348] sm:$0xff]
        %v2784 = vld [vmem:[#allocation2 + $0x350] sm:$0xff]
        %v2785 = vld [vmem:[#allocation2 + $0x358] sm:$0xff]
        %v2786 = vld [vmem:[#allocation2 + $0x360] sm:$0xff]
        %v2787 = vld [vmem:[#allocation2 + $0x368] sm:$0xff]
        %v2788 = vld [vmem:[#allocation2 + $0x370] sm:$0xff]
        %v2789 = vld [vmem:[#allocation2 + $0x378] sm:$0xff]
        %v2790 = vld [vmem:[#allocation2 + $0x380] sm:$0xff]
        %v2791 = vld [vmem:[#allocation2 + $0x388] sm:$0xff]
        %v2792 = vld [vmem:[#allocation2 + $0x390] sm:$0xff]
        %v2793 = vld [vmem:[#allocation2 + $0x398] sm:$0xff]
        %v2794 = vld [vmem:[#allocation2 + $0x3a0] sm:$0xff]
        %v2795 = vld [vmem:[#allocation2 + $0x3a8] sm:$0xff]
        %v2796 = vld [vmem:[#allocation2 + $0x3b0] sm:$0xff]
        %v2797 = vld [vmem:[#allocation2 + $0x3b8] sm:$0xff]
        %v2798 = vld [vmem:[#allocation2 + $0x3c0] sm:$0xff]
        %v2799 = vld [vmem:[#allocation2 + $0x3c8] sm:$0xff]
        %v2800 = vld [vmem:[#allocation2 + $0x3d0] sm:$0xff]
        %v2801 = vld [vmem:[#allocation2 + $0x3d8] sm:$0xff]
        %v2802 = vld [vmem:[#allocation2 + $0x3e0] sm:$0xff]
        %v2803 = vld [vmem:[#allocation2 + $0x3e8] sm:$0xff]
        %v2804 = vld [vmem:[#allocation2 + $0x3f0] sm:$0xff]
        %v2805 = vld [vmem:[#allocation2 + $0x3f8] sm:$0xff]
        %v2806 = vld [vmem:[#allocation2 + $0x400] sm:$0xff]
        %v2807 = vld [vmem:[#allocation2 + $0x408] sm:$0xff]
        %v2808 = vld [vmem:[#allocation2 + $0x410] sm:$0xff]
        %v2809 = vld [vmem:[#allocation2 + $0x418] sm:$0xff]
        %v2810 = vld [vmem:[#allocation2 + $0x420] sm:$0xff]
        %v2811 = vld [vmem:[#allocation2 + $0x428] sm:$0xff]
        %v2812 = vld [vmem:[#allocation2 + $0x430] sm:$0xff]
        %v2813 = vld [vmem:[#allocation2 + $0x438] sm:$0xff]
        %v2814 = vld [vmem:[#allocation2 + $0x440] sm:$0xff]
        %v2815 = vld [vmem:[#allocation2 + $0x448] sm:$0xff]
        %v2816 = vld [vmem:[#allocation2 + $0x450] sm:$0xff]
        %v2817 = vld [vmem:[#allocation2 + $0x458] sm:$0xff]
        %v2818 = vld [vmem:[#allocation2 + $0x460] sm:$0xff]
        %v2819 = vld [vmem:[#allocation2 + $0x468] sm:$0xff]
        %v2820 = vld [vmem:[#allocation2 + $0x470] sm:$0xff]
        %v2821 = vld [vmem:[#allocation2 + $0x478] sm:$0xff]
        %v2822 = vld [vmem:[#allocation2 + $0x480] sm:$0xff]
        %v2823 = vld [vmem:[#allocation2 + $0x488] sm:$0xff]
        %v2824 = vld [vmem:[#allocation2 + $0x490] sm:$0xff]
        %v2825 = vld [vmem:[#allocation2 + $0x498] sm:$0xff]
        %v2826 = vld [vmem:[#allocation2 + $0x4a0] sm:$0xff]
        %v2827 = vld [vmem:[#allocation2 + $0x4a8] sm:$0xff]
        %v2828 = vld [vmem:[#allocation2 + $0x4b0] sm:$0xff]
        %v2829 = vld [vmem:[#allocation2 + $0x4b8] sm:$0xff]
        %v2830 = vld [vmem:[#allocation2 + $0x4c0] sm:$0xff]
        %v2831 = vld [vmem:[#allocation2 + $0x4c8] sm:$0xff]
        %v2832 = vld [vmem:[#allocation2 + $0x4d0] sm:$0xff]
        %v2833 = vld [vmem:[#allocation2 + $0x4d8] sm:$0xff]
        %v2834 = vld [vmem:[#allocation2 + $0x4e0] sm:$0xff]
        %v2835 = vld [vmem:[#allocation2 + $0x4e8] sm:$0xff]
        %v2836 = vld [vmem:[#allocation2 + $0x4f0] sm:$0xff]
        %v2837 = vld [vmem:[#allocation2 + $0x4f8] sm:$0xff]
        %v2838 = vld [vmem:[%s4] sm:$0x3]
        %v2840 = vlaneseq
        %v2841 = vshrl.u32 %v2840, 7
        %v2842 = vsub.s32 0, %v2841
        %v2843 = vrot.slane %v2838, %v2842
        %v2844 = vlaneseq
        %v2845 = vshrl.u32 %v2844, 7
        %v2846 = vsub.s32 1, %v2845
        %v2847 = vrot.slane %v2838, %v2846
        %2850 = vmatprep.subr.mxu0 %v2679
        %2851 = vmatpush1.msra.mxu0 %v2678
        %2852 = vmatprep.subr.mxu0 %v2681
        %2853 = vmatpush1.msra.mxu0 %v2680
        %2854 = vmatprep.subr.mxu0 %v2683
        %2855 = vmatpush1.msra.mxu0 %v2682
        %2856 = vmatprep.subr.mxu0 %v2685
        %2857 = vmatpush1.msra.mxu0 %v2684
        %2858 = vmatprep.subr.mxu0 %v2687
        %2859 = vmatpush1.msra.mxu0 %v2686
        %2860 = vmatprep.subr.mxu0 %v2689
        %2861 = vmatpush1.msra.mxu0 %v2688
        %2862 = vmatprep.subr.mxu0 %v2691
        %2863 = vmatpush1.msra.mxu0 %v2690
        %2864 = vmatprep.subr.mxu0 %v2693
        %2865 = vmatpush1.msra.mxu0 %v2692
        %2866 = vmatprep.subr.mxu0 %v2695
        %2867 = vmatpush1.msra.mxu0 %v2694
        %2868 = vmatprep.subr.mxu0 %v2697
        %2869 = vmatpush1.msra.mxu0 %v2696
        %2870 = vmatprep.subr.mxu0 %v2699
        %2871 = vmatpush1.msra.mxu0 %v2698
        %2872 = vmatprep.subr.mxu0 %v2701
        %2873 = vmatpush1.msra.mxu0 %v2700
        %2874 = vmatprep.subr.mxu0 %v2703
        %2875 = vmatpush1.msra.mxu0 %v2702
        %2876 = vmatprep.subr.mxu0 %v2705
        %2877 = vmatpush1.msra.mxu0 %v2704
        %2878 = vmatprep.subr.mxu0 %v2707
        %2879 = vmatpush1.msra.mxu0 %v2706
        %2880 = vmatprep.subr.mxu0 %v2709
        %2881 = vmatpush1.msra.mxu0 %v2708
        %2882 = vmatprep.subr.mxu0 %v2711
        %2883 = vmatpush1.msra.mxu0 %v2710
        %2884 = vmatprep.subr.mxu0 %v2713
        %2885 = vmatpush1.msra.mxu0 %v2712
        %2886 = vmatprep.subr.mxu0 %v2715
        %2887 = vmatpush1.msra.mxu0 %v2714
        %2888 = vmatprep.subr.mxu0 %v2717
        %2889 = vmatpush1.msra.mxu0 %v2716
        %2890 = vmatprep.subr.mxu0 %v2719
        %2891 = vmatpush1.msra.mxu0 %v2718
        %2892 = vmatprep.subr.mxu0 %v2721
        %2893 = vmatpush1.msra.mxu0 %v2720
        %2894 = vmatprep.subr.mxu0 %v2723
        %2895 = vmatpush1.msra.mxu0 %v2722
        %2896 = vmatprep.subr.mxu0 %v2725
        %2897 = vmatpush1.msra.mxu0 %v2724
        %2898 = vmatprep.subr.mxu0 %v2727
        %2899 = vmatpush1.msra.mxu0 %v2726
        %2900 = vmatprep.subr.mxu0 %v2729
        %2901 = vmatpush1.msra.mxu0 %v2728
        %2902 = vmatprep.subr.mxu0 %v2731
        %2903 = vmatpush1.msra.mxu0 %v2730
        %2904 = vmatprep.subr.mxu0 %v2733
        %2905 = vmatpush1.msra.mxu0 %v2732
        %2906 = vmatprep.subr.mxu0 %v2735
        %2907 = vmatpush1.msra.mxu0 %v2734
        %2908 = vmatprep.subr.mxu0 %v2737
        %2909 = vmatpush1.msra.mxu0 %v2736
        %2910 = vmatprep.subr.mxu0 %v2739
        %2911 = vmatpush1.msra.mxu0 %v2738
        %2912 = vmatprep.subr.mxu0 %v2741
        %2913 = vmatpush1.msra.mxu0 %v2740
        %2914 = vmatprep.mubr.f32.mxu0 %v2519
        %2915 = vmatmul.mubr.f32.gmra.mrb[0].mxu0 %v2518
        %v2916 = vpop.f32.mrb[0].mxu0
        %v2917 = vadd.f32 %v2843, %v2916
        %v2918 = vpop.f32.mrb[0].mxu0
        %v2919 = vadd.f32 %v2847, %v2918
        %2920 = vmatprep.mubr.f32.mxu0 %v2524
        %2921 = vmatmul.mubr.f32.gmra.mrb[0].mxu0 %v2523
        %v2922 = vpop.f32.mrb[0].mxu0
        %v2923 = vadd.f32 %v2843, %v2922
        %v2924 = vpop.f32.mrb[0].mxu0
        %v2925 = vadd.f32 %v2847, %v2924
        %2926 = vmatprep.mubr.f32.mxu0 %v2529
        %2927 = vmatmul.mubr.f32.gmra.mrb[0].mxu0 %v2528
        %v2928 = vpop.f32.mrb[0].mxu0
        %v2929 = vadd.f32 %v2843, %v2928
        %v2930 = vpop.f32.mrb[0].mxu0
        %v2931 = vadd.f32 %v2847, %v2930
        %2932 = vmatprep.mubr.f32.mxu0 %v2534
        %2933 = vmatmul.mubr.f32.gmra.mrb[0].mxu0 %v2533
        %v2934 = vpop.f32.mrb[0].mxu0
        %v2935 = vadd.f32 %v2843, %v2934
        %v2936 = vpop.f32.mrb[0].mxu0
        %v2937 = vadd.f32 %v2847, %v2936
        %2938 = vmatprep.mubr.f32.mxu0 %v2539
        %2939 = vmatmul.mubr.f32.gmra.mrb[0].mxu0 %v2538
        %v2940 = vpop.f32.mrb[0].mxu0
        %v2941 = vadd.f32 %v2843, %v2940
        %v2942 = vpop.f32.mrb[0].mxu0
        %v2943 = vadd.f32 %v2847, %v2942
        %2944 = vmatprep.mubr.f32.mxu0 %v2544
        %2945 = vmatmul.mubr.f32.gmra.mrb[0].mxu0 %v2543
        %v2946 = vpop.f32.mrb[0].mxu0
        %v2947 = vadd.f32 %v2843, %v2946
        %v2948 = vpop.f32.mrb[0].mxu0
        %v2949 = vadd.f32 %v2847, %v2948
        %2950 = vmatprep.mubr.f32.mxu0 %v2549
        %2951 = vmatmul.mubr.f32.gmra.mrb[0].mxu0 %v2548
        %v2952 = vpop.f32.mrb[0].mxu0
        %v2953 = vadd.f32 %v2843, %v2952
        %v2954 = vpop.f32.mrb[0].mxu0
        %v2955 = vadd.f32 %v2847, %v2954
        %2956 = vmatprep.mubr.f32.mxu0 %v2554
        %2957 = vmatmul.mubr.f32.gmra.mrb[0].mxu0 %v2553
        %v2958 = vpop.f32.mrb[0].mxu0
        %v2959 = vadd.f32 %v2843, %v2958
        %v2960 = vpop.f32.mrb[0].mxu0
        %v2961 = vadd.f32 %v2847, %v2960
        %2962 = vmatprep.mubr.f32.mxu0 %v2559
        %2963 = vmatmul.mubr.f32.gmra.mrb[0].mxu0 %v2558
        %v2964 = vpop.f32.mrb[0].mxu0
        %v2965 = vadd.f32 %v2843, %v2964
        %v2966 = vpop.f32.mrb[0].mxu0
        %v2967 = vadd.f32 %v2847, %v2966
        %2968 = vmatprep.mubr.f32.mxu0 %v2564
        %2969 = vmatmul.mubr.f32.gmra.mrb[0].mxu0 %v2563
        %v2970 = vpop.f32.mrb[0].mxu0
        %v2971 = vadd.f32 %v2843, %v2970
        %v2972 = vpop.f32.mrb[0].mxu0
        %v2973 = vadd.f32 %v2847, %v2972
        %2974 = vmatprep.mubr.f32.mxu0 %v2569
        %2975 = vmatmul.mubr.f32.gmra.mrb[0].mxu0 %v2568
        %v2976 = vpop.f32.mrb[0].mxu0
        %v2977 = vadd.f32 %v2843, %v2976
        %v2978 = vpop.f32.mrb[0].mxu0
        %v2979 = vadd.f32 %v2847, %v2978
        %2980 = vmatprep.mubr.f32.mxu0 %v2574
        %2981 = vmatmul.mubr.f32.gmra.mrb[0].mxu0 %v2573
        %v2982 = vpop.f32.mrb[0].mxu0
        %v2983 = vadd.f32 %v2843, %v2982
        %v2984 = vpop.f32.mrb[0].mxu0
        %v2985 = vadd.f32 %v2847, %v2984
        %2986 = vmatprep.mubr.f32.mxu0 %v2579
        %2987 = vmatmul.mubr.f32.gmra.mrb[0].mxu0 %v2578
        %v2988 = vpop.f32.mrb[0].mxu0
        %v2989 = vadd.f32 %v2843, %v2988
        %v2990 = vpop.f32.mrb[0].mxu0
        %v2991 = vadd.f32 %v2847, %v2990
        %2992 = vmatprep.mubr.f32.mxu0 %v2584
        %2993 = vmatmul.mubr.f32.gmra.mrb[0].mxu0 %v2583
        %v2994 = vpop.f32.mrb[0].mxu0
        %v2995 = vadd.f32 %v2843, %v2994
        %v2996 = vpop.f32.mrb[0].mxu0
        %v2997 = vadd.f32 %v2847, %v2996
        %2998 = vmatprep.mubr.f32.mxu0 %v2589
        %2999 = vmatmul.mubr.f32.gmra.mrb[0].mxu0 %v2588
        %v3000 = vpop.f32.mrb[0].mxu0
        %v3001 = vadd.f32 %v2843, %v3000
        %v3002 = vpop.f32.mrb[0].mxu0
        %v3003 = vadd.f32 %v2847, %v3002
        %3004 = vmatprep.mubr.f32.mxu0 %v2594
        %3005 = vmatmul.mubr.f32.gmra.mrb[0].mxu0 %v2593
        %v3006 = vpop.f32.mrb[0].mxu0
        %v3007 = vadd.f32 %v2843, %v3006
        %v3008 = vpop.f32.mrb[0].mxu0
        %v3009 = vadd.f32 %v2847, %v3008
        %3010 = vmatprep.mubr.f32.mxu0 %v2599
        %3011 = vmatmul.mubr.f32.gmra.mrb[0].mxu0 %v2598
        %v3012 = vpop.f32.mrb[0].mxu0
        %v3013 = vadd.f32 %v2843, %v3012
        %v3014 = vpop.f32.mrb[0].mxu0
        %v3015 = vadd.f32 %v2847, %v3014
        %3016 = vmatprep.mubr.f32.mxu0 %v2604
        %3017 = vmatmul.mubr.f32.gmra.mrb[0].mxu0 %v2603
        %v3018 = vpop.f32.mrb[0].mxu0
        %v3019 = vadd.f32 %v2843, %v3018
        %v3020 = vpop.f32.mrb[0].mxu0
        %v3021 = vadd.f32 %v2847, %v3020
        %3022 = vmatprep.mubr.f32.mxu0 %v2609
        %3023 = vmatmul.mubr.f32.gmra.mrb[0].mxu0 %v2608
        %v3024 = vpop.f32.mrb[0].mxu0
        %v3025 = vadd.f32 %v2843, %v3024
        %v3026 = vpop.f32.mrb[0].mxu0
        %v3027 = vadd.f32 %v2847, %v3026
        %3028 = vmatprep.mubr.f32.mxu0 %v2614
        %3029 = vmatmul.mubr.f32.gmra.mrb[0].mxu0 %v2613
        %v3030 = vpop.f32.mrb[0].mxu0
        %v3031 = vadd.f32 %v2843, %v3030
        %v3032 = vpop.f32.mrb[0].mxu0
        %v3033 = vadd.f32 %v2847, %v3032
        %3034 = vmatprep.mubr.f32.mxu0 %v2619
        %3035 = vmatmul.mubr.f32.gmra.mrb[0].mxu0 %v2618
        %v3036 = vpop.f32.mrb[0].mxu0
        %v3037 = vadd.f32 %v2843, %v3036
        %v3038 = vpop.f32.mrb[0].mxu0
        %v3039 = vadd.f32 %v2847, %v3038
        %3040 = vmatprep.mubr.f32.mxu0 %v2624
        %3041 = vmatmul.mubr.f32.gmra.mrb[0].mxu0 %v2623
        %v3042 = vpop.f32.mrb[0].mxu0
        %v3043 = vadd.f32 %v2843, %v3042
        %v3044 = vpop.f32.mrb[0].mxu0
        %v3045 = vadd.f32 %v2847, %v3044
        %3046 = vmatprep.mubr.f32.mxu0 %v2629
        %3047 = vmatmul.mubr.f32.gmra.mrb[0].mxu0 %v2628
        %v3048 = vpop.f32.mrb[0].mxu0
        %v3049 = vadd.f32 %v2843, %v3048
        %v3050 = vpop.f32.mrb[0].mxu0
        %v3051 = vadd.f32 %v2847, %v3050
        %3052 = vmatprep.mubr.f32.mxu0 %v2634
        %3053 = vmatmul.mubr.f32.gmra.mrb[0].mxu0 %v2633
        %v3054 = vpop.f32.mrb[0].mxu0
        %v3055 = vadd.f32 %v2843, %v3054
        %v3056 = vpop.f32.mrb[0].mxu0
        %v3057 = vadd.f32 %v2847, %v3056
        %3058 = vmatprep.mubr.f32.mxu0 %v2639
        %3059 = vmatmul.mubr.f32.gmra.mrb[0].mxu0 %v2638
        %v3060 = vpop.f32.mrb[0].mxu0
        %v3061 = vadd.f32 %v2843, %v3060
        %v3062 = vpop.f32.mrb[0].mxu0
        %v3063 = vadd.f32 %v2847, %v3062
        %3064 = vmatprep.mubr.f32.mxu0 %v2644
        %3065 = vmatmul.mubr.f32.gmra.mrb[0].mxu0 %v2643
        %v3066 = vpop.f32.mrb[0].mxu0
        %v3067 = vadd.f32 %v2843, %v3066
        %v3068 = vpop.f32.mrb[0].mxu0
        %v3069 = vadd.f32 %v2847, %v3068
        %3070 = vmatprep.mubr.f32.mxu0 %v2649
        %3071 = vmatmul.mubr.f32.gmra.mrb[0].mxu0 %v2648
        %v3072 = vpop.f32.mrb[0].mxu0
        %v3073 = vadd.f32 %v2843, %v3072
        %v3074 = vpop.f32.mrb[0].mxu0
        %v3075 = vadd.f32 %v2847, %v3074
        %3076 = vmatprep.mubr.f32.mxu0 %v2654
        %3077 = vmatmul.mubr.f32.gmra.mrb[0].mxu0 %v2653
        %v3078 = vpop.f32.mrb[0].mxu0
        %v3079 = vadd.f32 %v2843, %v3078
        %v3080 = vpop.f32.mrb[0].mxu0
        %v3081 = vadd.f32 %v2847, %v3080
        %3082 = vmatprep.mubr.f32.mxu0 %v2659
        %3083 = vmatmul.mubr.f32.gmra.mrb[0].mxu0 %v2658
        %v3084 = vpop.f32.mrb[0].mxu0
        %v3085 = vadd.f32 %v2843, %v3084
        %v3086 = vpop.f32.mrb[0].mxu0
        %v3087 = vadd.f32 %v2847, %v3086
        %3088 = vmatprep.mubr.f32.mxu0 %v2664
        %3089 = vmatmul.mubr.f32.gmra.mrb[0].mxu0 %v2663
        %v3090 = vpop.f32.mrb[0].mxu0
        %v3091 = vadd.f32 %v2843, %v3090
        %v3092 = vpop.f32.mrb[0].mxu0
        %v3093 = vadd.f32 %v2847, %v3092
        %3094 = vmatprep.mubr.f32.mxu0 %v2669
        %3095 = vmatmul.mubr.f32.gmra.mrb[0].mxu0 %v2668
        %v3096 = vpop.f32.mrb[0].mxu0
        %v3097 = vadd.f32 %v2843, %v3096
        %v3098 = vpop.f32.mrb[0].mxu0
        %v3099 = vadd.f32 %v2847, %v3098
        %3100 = vmatprep.mubr.f32.mxu0 %v2674
        %3101 = vmatmul.mubr.f32.gmra.mrb[0].mxu0 %v2673
        %v3102 = vpop.f32.mrb[0].mxu0
        %v3103 = vadd.f32 %v2843, %v3102
        %v3104 = vpop.f32.mrb[0].mxu0
        %v3105 = vadd.f32 %v2847, %v3104
        %3106 = vdwg.mxu0
        %3107 = vmatprep.subr.mxu0 %v2743
        %3108 = vmatpush1.msra.mxu0 %v2742
        %3109 = vmatprep.subr.mxu0 %v2745
        %3110 = vmatpush1.msra.mxu0 %v2744
        %3111 = vmatprep.subr.mxu0 %v2747
        %3112 = vmatpush1.msra.mxu0 %v2746
        %3113 = vmatprep.subr.mxu0 %v2749
        %3114 = vmatpush1.msra.mxu0 %v2748
        %3115 = vmatprep.subr.mxu0 %v2751
        %3116 = vmatpush1.msra.mxu0 %v2750
        %3117 = vmatprep.subr.mxu0 %v2753
        %3118 = vmatpush1.msra.mxu0 %v2752
        %3119 = vmatprep.subr.mxu0 %v2755
        %3120 = vmatpush1.msra.mxu0 %v2754
        %3121 = vmatprep.subr.mxu0 %v2757
        %3122 = vmatpush1.msra.mxu0 %v2756
        %3123 = vmatprep.subr.mxu0 %v2759
        %3124 = vmatpush1.msra.mxu0 %v2758
        %3125 = vmatprep.subr.mxu0 %v2761
        %3126 = vmatpush1.msra.mxu0 %v2760
        %3127 = vmatprep.subr.mxu0 %v2763
        %3128 = vmatpush1.msra.mxu0 %v2762
        %3129 = vmatprep.subr.mxu0 %v2765
        %3130 = vmatpush1.msra.mxu0 %v2764
        %3131 = vmatprep.subr.mxu0 %v2767
        %3132 = vmatpush1.msra.mxu0 %v2766
        %3133 = vmatprep.subr.mxu0 %v2769
        %3134 = vmatpush1.msra.mxu0 %v2768
        %3135 = vmatprep.subr.mxu0 %v2771
        %3136 = vmatpush1.msra.mxu0 %v2770
        %3137 = vmatprep.subr.mxu0 %v2773
        %3138 = vmatpush1.msra.mxu0 %v2772
        %3139 = vmatprep.subr.mxu0 %v2775
        %3140 = vmatpush1.msra.mxu0 %v2774
        %3141 = vmatprep.subr.mxu0 %v2777
        %3142 = vmatpush1.msra.mxu0 %v2776
        %3143 = vmatprep.subr.mxu0 %v2779
        %3144 = vmatpush1.msra.mxu0 %v2778
        %3145 = vmatprep.subr.mxu0 %v2781
        %3146 = vmatpush1.msra.mxu0 %v2780
        %3147 = vmatprep.subr.mxu0 %v2783
        %3148 = vmatpush1.msra.mxu0 %v2782
        %3149 = vmatprep.subr.mxu0 %v2785
        %3150 = vmatpush1.msra.mxu0 %v2784
        %3151 = vmatprep.subr.mxu0 %v2787
        %3152 = vmatpush1.msra.mxu0 %v2786
        %3153 = vmatprep.subr.mxu0 %v2789
        %3154 = vmatpush1.msra.mxu0 %v2788
        %3155 = vmatprep.subr.mxu0 %v2791
        %3156 = vmatpush1.msra.mxu0 %v2790
        %3157 = vmatprep.subr.mxu0 %v2793
        %3158 = vmatpush1.msra.mxu0 %v2792
        %3159 = vmatprep.subr.mxu0 %v2795
        %3160 = vmatpush1.msra.mxu0 %v2794
        %3161 = vmatprep.subr.mxu0 %v2797
        %3162 = vmatpush1.msra.mxu0 %v2796
        %3163 = vmatprep.subr.mxu0 %v2799
        %3164 = vmatpush1.msra.mxu0 %v2798
        %3165 = vmatprep.subr.mxu0 %v2801
        %3166 = vmatpush1.msra.mxu0 %v2800
        %3167 = vmatprep.subr.mxu0 %v2803
        %3168 = vmatpush1.msra.mxu0 %v2802
        %3169 = vmatprep.subr.mxu0 %v2805
        %3170 = vmatpush1.msra.mxu0 %v2804
        %3171 = vmatprep.mubr.f32.mxu0 %v2521
        %3172 = vmatmul.mubr.f32.gmra.mrb[0].mxu0 %v2520
        %v3173 = vpop.f32.mrb[0].mxu0
        %v3174 = vadd.f32 %v2917, %v3173
        %v3175 = vpop.f32.mrb[0].mxu0
        %v3176 = vadd.f32 %v2919, %v3175
        %3177 = vmatprep.mubr.f32.mxu0 %v2526
        %3178 = vmatmul.mubr.f32.gmra.mrb[0].mxu0 %v2525
        %v3179 = vpop.f32.mrb[0].mxu0
        %v3180 = vadd.f32 %v2923, %v3179
        %v3181 = vpop.f32.mrb[0].mxu0
        %v3182 = vadd.f32 %v2925, %v3181
        %3183 = vmatprep.mubr.f32.mxu0 %v2531
        %3184 = vmatmul.mubr.f32.gmra.mrb[0].mxu0 %v2530
        %v3185 = vpop.f32.mrb[0].mxu0
        %v3186 = vadd.f32 %v2929, %v3185
        %v3187 = vpop.f32.mrb[0].mxu0
        %v3188 = vadd.f32 %v2931, %v3187
        %3189 = vmatprep.mubr.f32.mxu0 %v2536
        %3190 = vmatmul.mubr.f32.gmra.mrb[0].mxu0 %v2535
        %v3191 = vpop.f32.mrb[0].mxu0
        %v3192 = vadd.f32 %v2935, %v3191
        %v3193 = vpop.f32.mrb[0].mxu0
        %v3194 = vadd.f32 %v2937, %v3193
        %3195 = vmatprep.mubr.f32.mxu0 %v2541
        %3196 = vmatmul.mubr.f32.gmra.mrb[0].mxu0 %v2540
        %v3197 = vpop.f32.mrb[0].mxu0
        %v3198 = vadd.f32 %v2941, %v3197
        %v3199 = vpop.f32.mrb[0].mxu0
        %v3200 = vadd.f32 %v2943, %v3199
        %3201 = vmatprep.mubr.f32.mxu0 %v2546
        %3202 = vmatmul.mubr.f32.gmra.mrb[0].mxu0 %v2545
        %v3203 = vpop.f32.mrb[0].mxu0
        %v3204 = vadd.f32 %v2947, %v3203
        %v3205 = vpop.f32.mrb[0].mxu0
        %v3206 = vadd.f32 %v2949, %v3205
        %3207 = vmatprep.mubr.f32.mxu0 %v2551
        %3208 = vmatmul.mubr.f32.gmra.mrb[0].mxu0 %v2550
        %v3209 = vpop.f32.mrb[0].mxu0
        %v3210 = vadd.f32 %v2953, %v3209
        %v3211 = vpop.f32.mrb[0].mxu0
        %v3212 = vadd.f32 %v2955, %v3211
        %3213 = vmatprep.mubr.f32.mxu0 %v2556
        %3214 = vmatmul.mubr.f32.gmra.mrb[0].mxu0 %v2555
        %v3215 = vpop.f32.mrb[0].mxu0
        %v3216 = vadd.f32 %v2959, %v3215
        %v3217 = vpop.f32.mrb[0].mxu0
        %v3218 = vadd.f32 %v2961, %v3217
        %3219 = vmatprep.mubr.f32.mxu0 %v2561
        %3220 = vmatmul.mubr.f32.gmra.mrb[0].mxu0 %v2560
        %v3221 = vpop.f32.mrb[0].mxu0
        %v3222 = vadd.f32 %v2965, %v3221
        %v3223 = vpop.f32.mrb[0].mxu0
        %v3224 = vadd.f32 %v2967, %v3223
        %3225 = vmatprep.mubr.f32.mxu0 %v2566
        %3226 = vmatmul.mubr.f32.gmra.mrb[0].mxu0 %v2565
        %v3227 = vpop.f32.mrb[0].mxu0
        %v3228 = vadd.f32 %v2971, %v3227
        %v3229 = vpop.f32.mrb[0].mxu0
        %v3230 = vadd.f32 %v2973, %v3229
        %3231 = vmatprep.mubr.f32.mxu0 %v2571
        %3232 = vmatmul.mubr.f32.gmra.mrb[0].mxu0 %v2570
        %v3233 = vpop.f32.mrb[0].mxu0
        %v3234 = vadd.f32 %v2977, %v3233
        %v3235 = vpop.f32.mrb[0].mxu0
        %v3236 = vadd.f32 %v2979, %v3235
        %3237 = vmatprep.mubr.f32.mxu0 %v2576
        %3238 = vmatmul.mubr.f32.gmra.mrb[0].mxu0 %v2575
        %v3239 = vpop.f32.mrb[0].mxu0
        %v3240 = vadd.f32 %v2983, %v3239
        %v3241 = vpop.f32.mrb[0].mxu0
        %v3242 = vadd.f32 %v2985, %v3241
        %3243 = vmatprep.mubr.f32.mxu0 %v2581
        %3244 = vmatmul.mubr.f32.gmra.mrb[0].mxu0 %v2580
        %v3245 = vpop.f32.mrb[0].mxu0
        %v3246 = vadd.f32 %v2989, %v3245
        %v3247 = vpop.f32.mrb[0].mxu0
        %v3248 = vadd.f32 %v2991, %v3247
        %3249 = vmatprep.mubr.f32.mxu0 %v2586
        %3250 = vmatmul.mubr.f32.gmra.mrb[0].mxu0 %v2585
        %v3251 = vpop.f32.mrb[0].mxu0
        %v3252 = vadd.f32 %v2995, %v3251
        %v3253 = vpop.f32.mrb[0].mxu0
        %v3254 = vadd.f32 %v2997, %v3253
        %3255 = vmatprep.mubr.f32.mxu0 %v2591
        %3256 = vmatmul.mubr.f32.gmra.mrb[0].mxu0 %v2590
        %v3257 = vpop.f32.mrb[0].mxu0
        %v3258 = vadd.f32 %v3001, %v3257
        %v3259 = vpop.f32.mrb[0].mxu0
        %v3260 = vadd.f32 %v3003, %v3259
        %3261 = vmatprep.mubr.f32.mxu0 %v2596
        %3262 = vmatmul.mubr.f32.gmra.mrb[0].mxu0 %v2595
        %v3263 = vpop.f32.mrb[0].mxu0
        %v3264 = vadd.f32 %v3007, %v3263
        %v3265 = vpop.f32.mrb[0].mxu0
        %v3266 = vadd.f32 %v3009, %v3265
        %3267 = vmatprep.mubr.f32.mxu0 %v2601
        %3268 = vmatmul.mubr.f32.gmra.mrb[0].mxu0 %v2600
        %v3269 = vpop.f32.mrb[0].mxu0
        %v3270 = vadd.f32 %v3013, %v3269
        %v3271 = vpop.f32.mrb[0].mxu0
        %v3272 = vadd.f32 %v3015, %v3271
        %3273 = vmatprep.mubr.f32.mxu0 %v2606
        %3274 = vmatmul.mubr.f32.gmra.mrb[0].mxu0 %v2605
        %v3275 = vpop.f32.mrb[0].mxu0
        %v3276 = vadd.f32 %v3019, %v3275
        %v3277 = vpop.f32.mrb[0].mxu0
        %v3278 = vadd.f32 %v3021, %v3277
        %3279 = vmatprep.mubr.f32.mxu0 %v2611
        %3280 = vmatmul.mubr.f32.gmra.mrb[0].mxu0 %v2610
        %v3281 = vpop.f32.mrb[0].mxu0
        %v3282 = vadd.f32 %v3025, %v3281
        %v3283 = vpop.f32.mrb[0].mxu0
        %v3284 = vadd.f32 %v3027, %v3283
        %3285 = vmatprep.mubr.f32.mxu0 %v2616
        %3286 = vmatmul.mubr.f32.gmra.mrb[0].mxu0 %v2615
        %v3287 = vpop.f32.mrb[0].mxu0
        %v3288 = vadd.f32 %v3031, %v3287
        %v3289 = vpop.f32.mrb[0].mxu0
        %v3290 = vadd.f32 %v3033, %v3289
        %3291 = vmatprep.mubr.f32.mxu0 %v2621
        %3292 = vmatmul.mubr.f32.gmra.mrb[0].mxu0 %v2620
        %v3293 = vpop.f32.mrb[0].mxu0
        %v3294 = vadd.f32 %v3037, %v3293
        %v3295 = vpop.f32.mrb[0].mxu0
        %v3296 = vadd.f32 %v3039, %v3295
        %3297 = vmatprep.mubr.f32.mxu0 %v2626
        %3298 = vmatmul.mubr.f32.gmra.mrb[0].mxu0 %v2625
        %v3299 = vpop.f32.mrb[0].mxu0
        %v3300 = vadd.f32 %v3043, %v3299
        %v3301 = vpop.f32.mrb[0].mxu0
        %v3302 = vadd.f32 %v3045, %v3301
        %3303 = vmatprep.mubr.f32.mxu0 %v2631
        %3304 = vmatmul.mubr.f32.gmra.mrb[0].mxu0 %v2630
        %v3305 = vpop.f32.mrb[0].mxu0
        %v3306 = vadd.f32 %v3049, %v3305
        %v3307 = vpop.f32.mrb[0].mxu0
        %v3308 = vadd.f32 %v3051, %v3307
        %3309 = vmatprep.mubr.f32.mxu0 %v2636
        %3310 = vmatmul.mubr.f32.gmra.mrb[0].mxu0 %v2635
        %v3311 = vpop.f32.mrb[0].mxu0
        %v3312 = vadd.f32 %v3055, %v3311
        %v3313 = vpop.f32.mrb[0].mxu0
        %v3314 = vadd.f32 %v3057, %v3313
        %3315 = vmatprep.mubr.f32.mxu0 %v2641
        %3316 = vmatmul.mubr.f32.gmra.mrb[0].mxu0 %v2640
        %v3317 = vpop.f32.mrb[0].mxu0
        %v3318 = vadd.f32 %v3061, %v3317
        %v3319 = vpop.f32.mrb[0].mxu0
        %v3320 = vadd.f32 %v3063, %v3319
        %3321 = vmatprep.mubr.f32.mxu0 %v2646
        %3322 = vmatmul.mubr.f32.gmra.mrb[0].mxu0 %v2645
        %v3323 = vpop.f32.mrb[0].mxu0
        %v3324 = vadd.f32 %v3067, %v3323
        %v3325 = vpop.f32.mrb[0].mxu0
        %v3326 = vadd.f32 %v3069, %v3325
        %3327 = vmatprep.mubr.f32.mxu0 %v2651
        %3328 = vmatmul.mubr.f32.gmra.mrb[0].mxu0 %v2650
        %v3329 = vpop.f32.mrb[0].mxu0
        %v3330 = vadd.f32 %v3073, %v3329
        %v3331 = vpop.f32.mrb[0].mxu0
        %v3332 = vadd.f32 %v3075, %v3331
        %3333 = vmatprep.mubr.f32.mxu0 %v2656
        %3334 = vmatmul.mubr.f32.gmra.mrb[0].mxu0 %v2655
        %v3335 = vpop.f32.mrb[0].mxu0
        %v3336 = vadd.f32 %v3079, %v3335
        %v3337 = vpop.f32.mrb[0].mxu0
        %v3338 = vadd.f32 %v3081, %v3337
        %3339 = vmatprep.mubr.f32.mxu0 %v2661
        %3340 = vmatmul.mubr.f32.gmra.mrb[0].mxu0 %v2660
        %v3341 = vpop.f32.mrb[0].mxu0
        %v3342 = vadd.f32 %v3085, %v3341
        %v3343 = vpop.f32.mrb[0].mxu0
        %v3344 = vadd.f32 %v3087, %v3343
        %3345 = vmatprep.mubr.f32.mxu0 %v2666
        %3346 = vmatmul.mubr.f32.gmra.mrb[0].mxu0 %v2665
        %v3347 = vpop.f32.mrb[0].mxu0
        %v3348 = vadd.f32 %v3091, %v3347
        %v3349 = vpop.f32.mrb[0].mxu0
        %v3350 = vadd.f32 %v3093, %v3349
        %3351 = vmatprep.mubr.f32.mxu0 %v2671
        %3352 = vmatmul.mubr.f32.gmra.mrb[0].mxu0 %v2670
        %v3353 = vpop.f32.mrb[0].mxu0
        %v3354 = vadd.f32 %v3097, %v3353
        %v3355 = vpop.f32.mrb[0].mxu0
        %v3356 = vadd.f32 %v3099, %v3355
        %3357 = vmatprep.mubr.f32.mxu0 %v2676
        %3358 = vmatmul.mubr.f32.gmra.mrb[0].mxu0 %v2675
        %v3359 = vpop.f32.mrb[0].mxu0
        %v3360 = vadd.f32 %v3103, %v3359
        %v3361 = vpop.f32.mrb[0].mxu0
        %v3362 = vadd.f32 %v3105, %v3361
        %3363 = vdwg.mxu0
        %3364 = vmatprep.subr.mxu0 %v2807
        %3365 = vmatpush1.msra.mxu0 %v2806
        %3366 = vmatprep.subr.mxu0 %v2809
        %3367 = vmatpush1.msra.mxu0 %v2808
        %3368 = vmatprep.subr.mxu0 %v2811
        %3369 = vmatpush1.msra.mxu0 %v2810
        %3370 = vmatprep.subr.mxu0 %v2813
        %3371 = vmatpush1.msra.mxu0 %v2812
        %3372 = vmatprep.subr.mxu0 %v2815
        %3373 = vmatpush1.msra.mxu0 %v2814
        %3374 = vmatprep.subr.mxu0 %v2817
        %3375 = vmatpush1.msra.mxu0 %v2816
        %3376 = vmatprep.subr.mxu0 %v2819
        %3377 = vmatpush1.msra.mxu0 %v2818
        %3378 = vmatprep.subr.mxu0 %v2821
        %3379 = vmatpush1.msra.mxu0 %v2820
        %3380 = vmatprep.subr.mxu0 %v2823
        %3381 = vmatpush1.msra.mxu0 %v2822
        %3382 = vmatprep.subr.mxu0 %v2825
        %3383 = vmatpush1.msra.mxu0 %v2824
        %3384 = vmatprep.subr.mxu0 %v2827
        %3385 = vmatpush1.msra.mxu0 %v2826
        %3386 = vmatprep.subr.mxu0 %v2829
        %3387 = vmatpush1.msra.mxu0 %v2828
        %3388 = vmatprep.subr.mxu0 %v2831
        %3389 = vmatpush1.msra.mxu0 %v2830
        %3390 = vmatprep.subr.mxu0 %v2833
        %3391 = vmatpush1.msra.mxu0 %v2832
        %3392 = vmatprep.subr.mxu0 %v2835
        %3393 = vmatpush1.msra.mxu0 %v2834
        %3394 = vmatprep.subr.mxu0 %v2837
        %3395 = vmatpush1.msra.mxu0 %v2836
        %3396 = vmatprep.subr.mxu0 0.0
        %3397 = vmatpush1.msra.mxu0 0.0
        %3398 = vmatprep.subr.mxu0 0.0
        %3399 = vmatpush1.msra.mxu0 0.0
        %3400 = vmatprep.subr.mxu0 0.0
        %3401 = vmatpush1.msra.mxu0 0.0
        %3402 = vmatprep.subr.mxu0 0.0
        %3403 = vmatpush1.msra.mxu0 0.0
        %3404 = vmatprep.subr.mxu0 0.0
        %3405 = vmatpush1.msra.mxu0 0.0
        %3406 = vmatprep.subr.mxu0 0.0
        %3407 = vmatpush1.msra.mxu0 0.0
        %3408 = vmatprep.subr.mxu0 0.0
        %3409 = vmatpush1.msra.mxu0 0.0
        %3410 = vmatprep.subr.mxu0 0.0
        %3411 = vmatpush1.msra.mxu0 0.0
        %3412 = vmatprep.subr.mxu0 0.0
        %3413 = vmatpush1.msra.mxu0 0.0
        %3414 = vmatprep.subr.mxu0 0.0
        %3415 = vmatpush1.msra.mxu0 0.0
        %3416 = vmatprep.subr.mxu0 0.0
        %3417 = vmatpush1.msra.mxu0 0.0
        %3418 = vmatprep.subr.mxu0 0.0
        %3419 = vmatpush1.msra.mxu0 0.0
        %3420 = vmatprep.subr.mxu0 0.0
        %3421 = vmatpush1.msra.mxu0 0.0
        %3422 = vmatprep.subr.mxu0 0.0
        %3423 = vmatpush1.msra.mxu0 0.0
        %3424 = vmatprep.subr.mxu0 0.0
        %3425 = vmatpush1.msra.mxu0 0.0
        %3426 = vmatprep.subr.mxu0 0.0
        %3427 = vmatpush1.msra.mxu0 0.0
        %3428 = vmatprep.mubr.f32.mxu0 0.0
        %3429 = vmatmul.mubr.f32.gmra.mrb[0].mxu0 %v2522
        %v3430 = vpop.f32.mrb[0].mxu0
        %v3431 = vadd.f32 %v3174, %v3430
        %v3432 = vpop.f32.mrb[0].mxu0
        %v3433 = vadd.f32 %v3176, %v3432
        %3434 = vmatprep.mubr.f32.mxu0 0.0
        %3435 = vmatmul.mubr.f32.gmra.mrb[0].mxu0 %v2527
        %v3436 = vpop.f32.mrb[0].mxu0
        %v3437 = vadd.f32 %v3180, %v3436
        %v3438 = vpop.f32.mrb[0].mxu0
        %v3439 = vadd.f32 %v3182, %v3438
        %3440 = vmatprep.mubr.f32.mxu0 0.0
        %3441 = vmatmul.mubr.f32.gmra.mrb[0].mxu0 %v2532
        %v3442 = vpop.f32.mrb[0].mxu0
        %v3443 = vadd.f32 %v3186, %v3442
        %v3444 = vpop.f32.mrb[0].mxu0
        %v3445 = vadd.f32 %v3188, %v3444
        %3446 = vmatprep.mubr.f32.mxu0 0.0
        %3447 = vmatmul.mubr.f32.gmra.mrb[0].mxu0 %v2537
        %v3448 = vpop.f32.mrb[0].mxu0
        %v3449 = vadd.f32 %v3192, %v3448
        %v3450 = vpop.f32.mrb[0].mxu0
        %v3451 = vadd.f32 %v3194, %v3450
        %3452 = vmatprep.mubr.f32.mxu0 0.0
        %3453 = vmatmul.mubr.f32.gmra.mrb[0].mxu0 %v2542
        %v3454 = vpop.f32.mrb[0].mxu0
        %v3455 = vadd.f32 %v3198, %v3454
        %v3456 = vpop.f32.mrb[0].mxu0
        %v3457 = vadd.f32 %v3200, %v3456
        %3458 = vmatprep.mubr.f32.mxu0 0.0
        %3459 = vmatmul.mubr.f32.gmra.mrb[0].mxu0 %v2547
        %v3460 = vpop.f32.mrb[0].mxu0
        %v3461 = vadd.f32 %v3204, %v3460
        %v3462 = vpop.f32.mrb[0].mxu0
        %v3463 = vadd.f32 %v3206, %v3462
        %3464 = vmatprep.mubr.f32.mxu0 0.0
        %3465 = vmatmul.mubr.f32.gmra.mrb[0].mxu0 %v2552
        %v3466 = vpop.f32.mrb[0].mxu0
        %v3467 = vadd.f32 %v3210, %v3466
        %v3468 = vpop.f32.mrb[0].mxu0
        %v3469 = vadd.f32 %v3212, %v3468
        %3470 = vmatprep.mubr.f32.mxu0 0.0
        %3471 = vmatmul.mubr.f32.gmra.mrb[0].mxu0 %v2557
        %v3472 = vpop.f32.mrb[0].mxu0
        %v3473 = vadd.f32 %v3216, %v3472
        %v3474 = vpop.f32.mrb[0].mxu0
        %v3475 = vadd.f32 %v3218, %v3474
        %3476 = vmatprep.mubr.f32.mxu0 0.0
        %3477 = vmatmul.mubr.f32.gmra.mrb[0].mxu0 %v2562
        %v3478 = vpop.f32.mrb[0].mxu0
        %v3479 = vadd.f32 %v3222, %v3478
        %v3480 = vpop.f32.mrb[0].mxu0
        %v3481 = vadd.f32 %v3224, %v3480
        %3482 = vmatprep.mubr.f32.mxu0 0.0
        %3483 = vmatmul.mubr.f32.gmra.mrb[0].mxu0 %v2567
        %v3484 = vpop.f32.mrb[0].mxu0
        %v3485 = vadd.f32 %v3228, %v3484
        %v3486 = vpop.f32.mrb[0].mxu0
        %v3487 = vadd.f32 %v3230, %v3486
        %3488 = vmatprep.mubr.f32.mxu0 0.0
        %3489 = vmatmul.mubr.f32.gmra.mrb[0].mxu0 %v2572
        %v3490 = vpop.f32.mrb[0].mxu0
        %v3491 = vadd.f32 %v3234, %v3490
        %v3492 = vpop.f32.mrb[0].mxu0
        %v3493 = vadd.f32 %v3236, %v3492
        %3494 = vmatprep.mubr.f32.mxu0 0.0
        %3495 = vmatmul.mubr.f32.gmra.mrb[0].mxu0 %v2577
        %v3496 = vpop.f32.mrb[0].mxu0
        %v3497 = vadd.f32 %v3240, %v3496
        %v3498 = vpop.f32.mrb[0].mxu0
        %v3499 = vadd.f32 %v3242, %v3498
        %3500 = vmatprep.mubr.f32.mxu0 0.0
        %3501 = vmatmul.mubr.f32.gmra.mrb[0].mxu0 %v2582
        %v3502 = vpop.f32.mrb[0].mxu0
        %v3503 = vadd.f32 %v3246, %v3502
        %v3504 = vpop.f32.mrb[0].mxu0
        %v3505 = vadd.f32 %v3248, %v3504
        %3506 = vmatprep.mubr.f32.mxu0 0.0
        %3507 = vmatmul.mubr.f32.gmra.mrb[0].mxu0 %v2587
        %v3508 = vpop.f32.mrb[0].mxu0
        %v3509 = vadd.f32 %v3252, %v3508
        %v3510 = vpop.f32.mrb[0].mxu0
        %v3511 = vadd.f32 %v3254, %v3510
        %3512 = vmatprep.mubr.f32.mxu0 0.0
        %3513 = vmatmul.mubr.f32.gmra.mrb[0].mxu0 %v2592
        %v3514 = vpop.f32.mrb[0].mxu0
        %v3515 = vadd.f32 %v3258, %v3514
        %v3516 = vpop.f32.mrb[0].mxu0
        %v3517 = vadd.f32 %v3260, %v3516
        %3518 = vmatprep.mubr.f32.mxu0 0.0
        %3519 = vmatmul.mubr.f32.gmra.mrb[0].mxu0 %v2597
        %v3520 = vpop.f32.mrb[0].mxu0
        %v3521 = vadd.f32 %v3264, %v3520
        %v3522 = vpop.f32.mrb[0].mxu0
        %v3523 = vadd.f32 %v3266, %v3522
        %3524 = vmatprep.mubr.f32.mxu0 0.0
        %3525 = vmatmul.mubr.f32.gmra.mrb[0].mxu0 %v2602
        %v3526 = vpop.f32.mrb[0].mxu0
        %v3527 = vadd.f32 %v3270, %v3526
        %v3528 = vpop.f32.mrb[0].mxu0
        %v3529 = vadd.f32 %v3272, %v3528
        %3530 = vmatprep.mubr.f32.mxu0 0.0
        %3531 = vmatmul.mubr.f32.gmra.mrb[0].mxu0 %v2607
        %v3532 = vpop.f32.mrb[0].mxu0
        %v3533 = vadd.f32 %v3276, %v3532
        %v3534 = vpop.f32.mrb[0].mxu0
        %v3535 = vadd.f32 %v3278, %v3534
        %3536 = vmatprep.mubr.f32.mxu0 0.0
        %3537 = vmatmul.mubr.f32.gmra.mrb[0].mxu0 %v2612
        %v3538 = vpop.f32.mrb[0].mxu0
        %v3539 = vadd.f32 %v3282, %v3538
        %v3540 = vpop.f32.mrb[0].mxu0
        %v3541 = vadd.f32 %v3284, %v3540
        %3542 = vmatprep.mubr.f32.mxu0 0.0
        %3543 = vmatmul.mubr.f32.gmra.mrb[0].mxu0 %v2617
        %v3544 = vpop.f32.mrb[0].mxu0
        %v3545 = vadd.f32 %v3288, %v3544
        %v3546 = vpop.f32.mrb[0].mxu0
        %v3547 = vadd.f32 %v3290, %v3546
        %3548 = vmatprep.mubr.f32.mxu0 0.0
        %3549 = vmatmul.mubr.f32.gmra.mrb[0].mxu0 %v2622
        %v3550 = vpop.f32.mrb[0].mxu0
        %v3551 = vadd.f32 %v3294, %v3550
        %v3552 = vpop.f32.mrb[0].mxu0
        %v3553 = vadd.f32 %v3296, %v3552
        %3554 = vmatprep.mubr.f32.mxu0 0.0
        %3555 = vmatmul.mubr.f32.gmra.mrb[0].mxu0 %v2627
        %v3556 = vpop.f32.mrb[0].mxu0
        %v3557 = vadd.f32 %v3300, %v3556
        %v3558 = vpop.f32.mrb[0].mxu0
        %v3559 = vadd.f32 %v3302, %v3558
        %3560 = vmatprep.mubr.f32.mxu0 0.0
        %3561 = vmatmul.mubr.f32.gmra.mrb[0].mxu0 %v2632
        %v3562 = vpop.f32.mrb[0].mxu0
        %v3563 = vadd.f32 %v3306, %v3562
        %v3564 = vpop.f32.mrb[0].mxu0
        %v3565 = vadd.f32 %v3308, %v3564
        %3566 = vmatprep.mubr.f32.mxu0 0.0
        %3567 = vmatmul.mubr.f32.gmra.mrb[0].mxu0 %v2637
        %v3568 = vpop.f32.mrb[0].mxu0
        %v3569 = vadd.f32 %v3312, %v3568
        %v3570 = vpop.f32.mrb[0].mxu0
        %v3571 = vadd.f32 %v3314, %v3570
        %3572 = vmatprep.mubr.f32.mxu0 0.0
        %3573 = vmatmul.mubr.f32.gmra.mrb[0].mxu0 %v2642
        %v3574 = vpop.f32.mrb[0].mxu0
        %v3575 = vadd.f32 %v3318, %v3574
        %v3576 = vpop.f32.mrb[0].mxu0
        %v3577 = vadd.f32 %v3320, %v3576
        %3578 = vmatprep.mubr.f32.mxu0 0.0
        %3579 = vmatmul.mubr.f32.gmra.mrb[0].mxu0 %v2647
        %v3580 = vpop.f32.mrb[0].mxu0
        %v3581 = vadd.f32 %v3324, %v3580
        %v3582 = vpop.f32.mrb[0].mxu0
        %v3583 = vadd.f32 %v3326, %v3582
        %3584 = vmatprep.mubr.f32.mxu0 0.0
        %3585 = vmatmul.mubr.f32.gmra.mrb[0].mxu0 %v2652
        %v3586 = vpop.f32.mrb[0].mxu0
        %v3587 = vadd.f32 %v3330, %v3586
        %v3588 = vpop.f32.mrb[0].mxu0
        %v3589 = vadd.f32 %v3332, %v3588
        %3590 = vmatprep.mubr.f32.mxu0 0.0
        %3591 = vmatmul.mubr.f32.gmra.mrb[0].mxu0 %v2657
        %v3592 = vpop.f32.mrb[0].mxu0
        %v3593 = vadd.f32 %v3336, %v3592
        %v3594 = vpop.f32.mrb[0].mxu0
        %v3595 = vadd.f32 %v3338, %v3594
        %3596 = vmatprep.mubr.f32.mxu0 0.0
        %3597 = vmatmul.mubr.f32.gmra.mrb[0].mxu0 %v2662
        %v3598 = vpop.f32.mrb[0].mxu0
        %v3599 = vadd.f32 %v3342, %v3598
        %v3600 = vpop.f32.mrb[0].mxu0
        %v3601 = vadd.f32 %v3344, %v3600
        %3602 = vmatprep.mubr.f32.mxu0 0.0
        %3603 = vmatmul.mubr.f32.gmra.mrb[0].mxu0 %v2667
        %v3604 = vpop.f32.mrb[0].mxu0
        %v3605 = vadd.f32 %v3348, %v3604
        %v3606 = vpop.f32.mrb[0].mxu0
        %v3607 = vadd.f32 %v3350, %v3606
        %3608 = vmatprep.mubr.f32.mxu0 0.0
        %3609 = vmatmul.mubr.f32.gmra.mrb[0].mxu0 %v2672
        %v3610 = vpop.f32.mrb[0].mxu0
        %v3611 = vadd.f32 %v3354, %v3610
        %v3612 = vpop.f32.mrb[0].mxu0
        %v3613 = vadd.f32 %v3356, %v3612
        %3614 = vmatprep.mubr.f32.mxu0 0.0
        %3615 = vmatmul.mubr.f32.gmra.mrb[0].mxu0 %v2677
        %v3616 = vpop.f32.mrb[0].mxu0
        %v3617 = vadd.f32 %v3360, %v3616
        %v3618 = vpop.f32.mrb[0].mxu0
        %v3619 = vadd.f32 %v3362, %v3618
        %3620 = vdwg.mxu0
        %3621 = vst [vmem:[%s246] sm:$0xff] %v3431
        %3622 = vst [vmem:[%s246 + $0x8] sm:$0xff] %v3433
        %3623 = vst [vmem:[%s246 + $0x10] sm:$0xff] %v3437
        %3624 = vst [vmem:[%s246 + $0x18] sm:$0xff] %v3439
        %3625 = vst [vmem:[%s246 + $0x20] sm:$0xff] %v3443
        %3626 = vst [vmem:[%s246 + $0x28] sm:$0xff] %v3445
        %3627 = vst [vmem:[%s246 + $0x30] sm:$0xff] %v3449
        %3628 = vst [vmem:[%s246 + $0x38] sm:$0xff] %v3451
        %3629 = vst [vmem:[%s246 + $0x40] sm:$0xff] %v3455
        %3630 = vst [vmem:[%s246 + $0x48] sm:$0xff] %v3457
        %3631 = vst [vmem:[%s246 + $0x50] sm:$0xff] %v3461
        %3632 = vst [vmem:[%s246 + $0x58] sm:$0xff] %v3463
        %3633 = vst [vmem:[%s246 + $0x60] sm:$0xff] %v3467
        %3634 = vst [vmem:[%s246 + $0x68] sm:$0xff] %v3469
        %3635 = vst [vmem:[%s246 + $0x70] sm:$0xff] %v3473
        %3636 = vst [vmem:[%s246 + $0x78] sm:$0xff] %v3475
        %3637 = vst [vmem:[%s246 + $0x80] sm:$0xff] %v3479
        %3638 = vst [vmem:[%s246 + $0x88] sm:$0xff] %v3481
        %3639 = vst [vmem:[%s246 + $0x90] sm:$0xff] %v3485
        %3640 = vst [vmem:[%s246 + $0x98] sm:$0xff] %v3487
        %3641 = vst [vmem:[%s246 + $0xa0] sm:$0xff] %v3491
        %3642 = vst [vmem:[%s246 + $0xa8] sm:$0xff] %v3493
        %3643 = vst [vmem:[%s246 + $0xb0] sm:$0xff] %v3497
        %3644 = vst [vmem:[%s246 + $0xb8] sm:$0xff] %v3499
        %3645 = vst [vmem:[%s246 + $0xc0] sm:$0xff] %v3503
        %3646 = vst [vmem:[%s246 + $0xc8] sm:$0xff] %v3505
        %3647 = vst [vmem:[%s246 + $0xd0] sm:$0xff] %v3509
        %3648 = vst [vmem:[%s246 + $0xd8] sm:$0xff] %v3511
        %3649 = vst [vmem:[%s246 + $0xe0] sm:$0xff] %v3515
        %3650 = vst [vmem:[%s246 + $0xe8] sm:$0xff] %v3517
        %3651 = vst [vmem:[%s246 + $0xf0] sm:$0xff] %v3521
        %3652 = vst [vmem:[%s246 + $0xf8] sm:$0xff] %v3523
        %3653 = vst [vmem:[%s246 + $0x100] sm:$0xff] %v3527
        %3654 = vst [vmem:[%s246 + $0x108] sm:$0xff] %v3529
        %3655 = vst [vmem:[%s246 + $0x110] sm:$0xff] %v3533
        %3656 = vst [vmem:[%s246 + $0x118] sm:$0xff] %v3535
        %3657 = vst [vmem:[%s246 + $0x120] sm:$0xff] %v3539
        %3658 = vst [vmem:[%s246 + $0x128] sm:$0xff] %v3541
        %3659 = vst [vmem:[%s246 + $0x130] sm:$0xff] %v3545
        %3660 = vst [vmem:[%s246 + $0x138] sm:$0xff] %v3547
        %3661 = vst [vmem:[%s246 + $0x140] sm:$0xff] %v3551
        %3662 = vst [vmem:[%s246 + $0x148] sm:$0xff] %v3553
        %3663 = vst [vmem:[%s246 + $0x150] sm:$0xff] %v3557
        %3664 = vst [vmem:[%s246 + $0x158] sm:$0xff] %v3559
        %3665 = vst [vmem:[%s246 + $0x160] sm:$0xff] %v3563
        %3666 = vst [vmem:[%s246 + $0x168] sm:$0xff] %v3565
        %3667 = vst [vmem:[%s246 + $0x170] sm:$0xff] %v3569
        %3668 = vst [vmem:[%s246 + $0x178] sm:$0xff] %v3571
        %3669 = vst [vmem:[%s246 + $0x180] sm:$0xff] %v3575
        %3670 = vst [vmem:[%s246 + $0x188] sm:$0xff] %v3577
        %3671 = vst [vmem:[%s246 + $0x190] sm:$0xff] %v3581
        %3672 = vst [vmem:[%s246 + $0x198] sm:$0xff] %v3583
        %3673 = vst [vmem:[%s246 + $0x1a0] sm:$0xff] %v3587
        %3674 = vst [vmem:[%s246 + $0x1a8] sm:$0xff] %v3589
        %3675 = vst [vmem:[%s246 + $0x1b0] sm:$0xff] %v3593
        %3676 = vst [vmem:[%s246 + $0x1b8] sm:$0xff] %v3595
        %3677 = vst [vmem:[%s246 + $0x1c0] sm:$0xff] %v3599
        %3678 = vst [vmem:[%s246 + $0x1c8] sm:$0xff] %v3601
        %3679 = vst [vmem:[%s246 + $0x1d0] sm:$0xff] %v3605
        %3680 = vst [vmem:[%s246 + $0x1d8] sm:$0xff] %v3607
        %3681 = vst [vmem:[%s246 + $0x1e0] sm:$0xff] %v3611
        %3682 = vst [vmem:[%s246 + $0x1e8] sm:$0xff] %v3613
        %3683 = vst [vmem:[%s246 + $0x1f0] sm:$0xff] %v3617
        %3684 = vst [vmem:[%s246 + $0x1f8] sm:$0xff] %v3619
        %s3685 = smul.u32 32, %s17
        %p3686 = scmp.lt.s32.totalorder %s3685, 63
        %s3687 = scalar_select %p3686, %s3685, 63
        %s3688 = smul.addr %s3687, 2
        %s3689 = smul.addr %s3688, 8
        %s3690 = scalar_lea.vmem %s5, %s3689
        // Predicated region
        $region45: #{_siglip_mlp_fwd.1} parent=39 // pred_check
          %p3691 = pneg %p145
        $region46: #{_siglip_mlp_fwd.1} parent=39 // pred_check_branch
          %3693 = sbr.rel (%p3691) target = $region48
        $region47: #{_siglip_mlp_fwd.1} parent=39 // pred_region
          %s3694 = smul.u32 32, %s17
        $region48: #{_siglip_mlp_fwd.1} parent=39 // pred_fallthru
          _
      $region40: #{_siglip_mlp_fwd.1} parent=5 // pred_fallthru
        _
      %p3695 = scmp.le.s32.totalorder 2, %s12
      // Predicated region
      $region49: #{_siglip_mlp_fwd.1} parent=5 // pred_check
        %p3696 = pneg %p3695
      $region50: #{_siglip_mlp_fwd.1} parent=5 // pred_check_branch
        %3698 = sbr.rel (%p3696) target = $region52
      $region51: #{_siglip_mlp_fwd.1} parent=5 // pred_region
        %s3699 = ssub.s32 %s12, 2
        // Predicated region
        $region53: #{_siglip_mlp_fwd.1} parent=51 // pred_check
          %p3700 = pneg %p151
        $region54: #{_siglip_mlp_fwd.1} parent=51 // pred_check_branch
          %3702 = sbr.rel (%p3700) target = $region56
        $region55: #{_siglip_mlp_fwd.1} parent=51 // pred_region
          %s3703 = smul.u32 32, %s18
          %p3704 = scmp.lt.s32.totalorder %s3703, 63
          %s3705 = scalar_select %p3704, %s3703, 63
          %s3706 = smul.addr %s3705, 2
          %s3707 = smul.addr %s3706, 8
          %s3708 = scalar_lea.vmem %s5, %s3707
        $region56: #{_siglip_mlp_fwd.1} parent=51 // pred_fallthru
          _
      $region52: #{_siglip_mlp_fwd.1} parent=5 // pred_fallthru
        _
    $region6: #{_siglip_mlp_fwd.1} parent=1 // loop_footer
      %s16 = sadd.s32 1, %s12
    $region7: #{_siglip_mlp_fwd.1} parent=1 // loop_footer_branch
      %11 = sbr.rel target = $region3
    $region8: #{_siglip_mlp_fwd.1} parent=1 // loop_exit
      _
    %3709 = vsyncpa [#allocation3], 1
    %s3710 = scalar_lea.sflag [#allocation3], 1
    %3711 = vsyncpa %s3710, 1

// kernel: _siglip_mlp_fwd.1
$region0: #{_siglip_mlp_fwd.1}
  #allocation0 [shape = 'u32[]', space=smem, size = 0x4, offset = 0x4, fixed_abs, tag = 'smem constant byte address 0x4 - core index']
  #allocation1 [shape = 'u32[144,128]{1,0:T(1,128)}', space=vmem, size = 0x12000, scoped, tag = 'internal scratch']
  %s0 = inlined_call_operand.vmem [shape: f32[512,256], index: 0, kind: input, shape index: {}]
  %s1 = inlined_call_operand.vmem [shape: f32[256,640], index: 1, kind: input, shape index: {}]
  %s2 = inlined_call_operand.vmem [shape: f32[1,640], index: 2, kind: input, shape index: {}]
  %s3 = inlined_call_operand.hbm [shape: f32[640,256], index: 3, kind: input, shape index: {}]
  %s4 = inlined_call_operand.vmem [shape: f32[1,256], index: 4, kind: input, shape index: {}]
  %s5 = inlined_call_operand.vmem [shape: f32[512,256], index: 5, kind: output, shape index: {}]
  %s6 = sld [smem:[#allocation0]]
  $region57: #{_siglip_mlp_fwd.1} parent=0
    _
  %s8 = ssub.s32 1, %s6
  %s9 = scalar_select 0, %s8, %s6
  $region1: #{_siglip_mlp_fwd.1} parent=0
    #allocation2 [shape = 'u8[655360]{0}', space=vmem, size = 0xa0000, scoped, tag = 'input window, operand 3, single buffered']
    #allocation3 [shape = 's32[2]{0}', space=sflag, size = 0x8, scoped, tag = 'scoped memory for _siglip_mlp_fwd.1']
    %10 = vsyncpa [#allocation3], 0
    loop: start=0, step=1, limit=4
    $region2: #{_siglip_mlp_fwd.1} parent=1 // loop_pre_header
      _
    $region3: #{_siglip_mlp_fwd.1} parent=1 // loop_header
      %s12 = sphi 0, %s16
      %p13 = scmp.ge.s32.totalorder %s12, 4
      %s22 = sphi 0, %s24
      %s25 = sphi 0, %s22
      %s26 = sphi 0, %s25
      %s42 = sphi 0, %s26
      %s46 = sphi 0, %s46
      %s48 = sphi 0, %s46
      %s49 = sphi 0, %s48
      %s63 = sphi 0, %s49
      %s67 = sphi 0, %s67
      %s69 = sphi 0, %s67
      %s70 = sphi 0, %s69
      %s84 = sphi 0, %s70
      %s88 = sphi 0, %s88
      %s90 = sphi 0, %s88
      %s91 = sphi 0, %s90
      %s105 = sphi 0, %s91
      %s109 = sphi 0, %s109
      %s111 = sphi 0, %s109
      %s112 = sphi 0, %s111
      %s126 = sphi 0, %s112
      %s132 = sphi 0, %s134
      %s135 = sphi 0, %s132
      %s136 = sphi 0, %s135
      %s152 = sphi 0, %s136
    $region4: #{_siglip_mlp_fwd.1} parent=1 // loop_header_branch
      %15 = sbr.rel (%p13) target = $region8
    $region5: #{_siglip_mlp_fwd.1} parent=1 // loop_body
      %s17 = ssub.s32 %s12, 1
      %s18 = ssub.s32 %s12, 2
      %s19 = sadd.s32 %s12, 1
      %s20 = ssub.s32 %s12, %s19
      %p21 = scmp.eq.s32.totalorder %s20, 0
      %s23 = sadd.s32 %s22, 1
      %s24 = scalar_select %p21, %s22, %s23
      %p27 = pneg %p21
      %p28 = scmp.eq.s32.totalorder %s12, 1
      %p29 = por %p27, %p28
      %p30 = scmp.ne.s32.totalorder %s22, %s25
      %p31 = scmp.eq.s32.totalorder %s12, 0
      %p32 = por %p30, %p31
      %p33 = scmp.ne.s32.totalorder %s22, %s25
      %p34 = scmp.eq.s32.totalorder %s17, 1
      %p35 = por %p33, %p34
      %p36 = scmp.ne.s32.totalorder %s25, %s26
      %p37 = scmp.eq.s32.totalorder %s17, 0
      %p38 = por %p36, %p37
      %p39 = scmp.ne.s32.totalorder %s25, %s26
      %p40 = scmp.eq.s32.totalorder %s18, 1
      %p41 = por %p39, %p40
      %p43 = scmp.ne.s32.totalorder %s26, %s42
      %p44 = scmp.eq.s32.totalorder %s18, 0
      %p45 = por %p43, %p44
      %s47 = sadd.s32 %s46, 1
      %p50 = scmp.eq.s32.totalorder %s12, 1
      %p51 = scmp.ne.s32.totalorder %s46, %s48
      %p52 = scmp.eq.s32.totalorder %s12, 0
      %p53 = por %p51, %p52
      %p54 = scmp.ne.s32.totalorder %s46, %s48
      %p55 = scmp.eq.s32.totalorder %s17, 1
      %p56 = por %p54, %p55
      %p57 = scmp.ne.s32.totalorder %s48, %s49
      %p58 = scmp.eq.s32.totalorder %s17, 0
      %p59 = por %p57, %p58
      %p60 = scmp.ne.s32.totalorder %s48, %s49
      %p61 = scmp.eq.s32.totalorder %s18, 1
      %p62 = por %p60, %p61
      %p64 = scmp.ne.s32.totalorder %s49, %s63
      %p65 = scmp.eq.s32.totalorder %s18, 0
      %p66 = por %p64, %p65
      %s68 = sadd.s32 %s67, 1
      %p71 = scmp.eq.s32.totalorder %s12, 1
      %p72 = scmp.ne.s32.totalorder %s67, %s69
      %p73 = scmp.eq.s32.totalorder %s12, 0
      %p74 = por %p72, %p73
      %p75 = scmp.ne.s32.totalorder %s67, %s69
      %p76 = scmp.eq.s32.totalorder %s17, 1
      %p77 = por %p75, %p76
      %p78 = scmp.ne.s32.totalorder %s69, %s70
      %p79 = scmp.eq.s32.totalorder %s17, 0
      %p80 = por %p78, %p79
      %p81 = scmp.ne.s32.totalorder %s69, %s70
      %p82 = scmp.eq.s32.totalorder %s18, 1
      %p83 = por %p81, %p82
      %p85 = scmp.ne.s32.totalorder %s70, %s84
      %p86 = scmp.eq.s32.totalorder %s18, 0
      %p87 = por %p85, %p86
      %s89 = sadd.s32 %s88, 1
      %p92 = scmp.eq.s32.totalorder %s12, 1
      %p93 = scmp.ne.s32.totalorder %s88, %s90
      %p94 = scmp.eq.s32.totalorder %s12, 0
      %p95 = por %p93, %p94
      %p96 = scmp.ne.s32.totalorder %s88, %s90
      %p97 = scmp.eq.s32.totalorder %s17, 1
      %p98 = por %p96, %p97
      %p99 = scmp.ne.s32.totalorder %s90, %s91
      %p100 = scmp.eq.s32.totalorder %s17, 0
      %p101 = por %p99, %p100
      %p102 = scmp.ne.s32.totalorder %s90, %s91
      %p103 = scmp.eq.s32.totalorder %s18, 1
      %p104 = por %p102, %p103
      %p106 = scmp.ne.s32.totalorder %s91, %s105
      %p107 = scmp.eq.s32.totalorder %s18, 0
      %p108 = por %p106, %p107
      %s110 = sadd.s32 %s109, 1
      %p113 = scmp.eq.s32.totalorder %s12, 1
      %p114 = scmp.ne.s32.totalorder %s109, %s111
      %p115 = scmp.eq.s32.totalorder %s12, 0
      %p116 = por %p114, %p115
      %p117 = scmp.ne.s32.totalorder %s109, %s111
      %p118 = scmp.eq.s32.totalorder %s17, 1
      %p119 = por %p117, %p118
      %p120 = scmp.ne.s32.totalorder %s111, %s112
      %p121 = scmp.eq.s32.totalorder %s17, 0
      %p122 = por %p120, %p121
      %p123 = scmp.ne.s32.totalorder %s111, %s112
      %p124 = scmp.eq.s32.totalorder %s18, 1
      %p125 = por %p123, %p124
      %p127 = scmp.ne.s32.totalorder %s112, %s126
      %p128 = scmp.eq.s32.totalorder %s18, 0
      %p129 = por %p127, %p128
      %s130 = ssub.s32 %s12, %s19
      %p131 = scmp.eq.s32.totalorder %s130, 0
      %s133 = sadd.s32 %s132, 1
      %s134 = scalar_select %p131, %s132, %s133
      %p137 = pneg %p131
      %p138 = scmp.eq.s32.totalorder %s12, 1
      %p139 = por %p137, %p138
      %p140 = scmp.ne.s32.totalorder %s132, %s135
      %p141 = scmp.eq.s32.totalorder %s12, 0
      %p142 = por %p140, %p141
      %p143 = scmp.ne.s32.totalorder %s132, %s135
      %p144 = scmp.eq.s32.totalorder %s17, 1
      %p145 = por %p143, %p144
      %p146 = scmp.ne.s32.totalorder %s135, %s136
      %p147 = scmp.eq.s32.totalorder %s17, 0
      %p148 = por %p146, %p147
      %p149 = scmp.ne.s32.totalorder %s135, %s136
      %p150 = scmp.eq.s32.totalorder %s18, 1
      %p151 = por %p149, %p150
      %p153 = scmp.ne.s32.totalorder %s136, %s152
      %p154 = scmp.eq.s32.totalorder %s18, 0
      %p155 = por %p153, %p154
      %p156 = scmp.le.s32.totalorder 1, %s12
      %p157 = scmp.lt.s32.totalorder %s12, 3
      %p158 = pnand %p156, %p157
      %p159 = pneg %p158
      // Predicated region
      $region9: #{_siglip_mlp_fwd.1} parent=5 // pred_check
        _
      $region10: #{_siglip_mlp_fwd.1} parent=5 // pred_check_branch
        %161 = sbr.rel (%p158) target = $region12
      $region11: #{_siglip_mlp_fwd.1} parent=5 // pred_region
        %s162 = ssub.s32 %s12, 1
        // Predicated region
        $region13: #{_siglip_mlp_fwd.1} parent=11 // pred_check
          %p163 = pneg %p59
        $region14: #{_siglip_mlp_fwd.1} parent=11 // pred_check_branch
          %165 = sbr.rel (%p163) target = $region16
        $region15: #{_siglip_mlp_fwd.1} parent=11 // pred_region
          _
        $region16: #{_siglip_mlp_fwd.1} parent=11 // pred_fallthru
          _
        // Predicated region
        $region17: #{_siglip_mlp_fwd.1} parent=11 // pred_check
          %p166 = pneg %p80
        $region18: #{_siglip_mlp_fwd.1} parent=11 // pred_check_branch
          %168 = sbr.rel (%p166) target = $region20
        $region19: #{_siglip_mlp_fwd.1} parent=11 // pred_region
          _
        $region20: #{_siglip_mlp_fwd.1} parent=11 // pred_fallthru
          _
        // Predicated region
        $region21: #{_siglip_mlp_fwd.1} parent=11 // pred_check
          %p169 = pneg %p101
        $region22: #{_siglip_mlp_fwd.1} parent=11 // pred_check_branch
          %171 = sbr.rel (%p169) target = $region24
        $region23: #{_siglip_mlp_fwd.1} parent=11 // pred_region
          %s173 = ssub.s32 20480, 20480
          %174 = vsyncadd [#allocation3], %s173
          %s175 = sshll.u32 [#allocation2], 4
          %s176 = int_to_ptr.vmem [resolvable:$true] %s175
          %181 = dma.hbm_to_vmem [thread:$0]  %s3, 20480, %s176, [#allocation3], 256, 256, 16
        $region24: #{_siglip_mlp_fwd.1} parent=11 // pred_fallthru
          _
        // Predicated region
        $region25: #{_siglip_mlp_fwd.1} parent=11 // pred_check
          %p182 = pneg %p122
        $region26: #{_siglip_mlp_fwd.1} parent=11 // pred_check_branch
          %184 = sbr.rel (%p182) target = $region28
        $region27: #{_siglip_mlp_fwd.1} parent=11 // pred_region
          _
        $region28: #{_siglip_mlp_fwd.1} parent=11 // pred_fallthru
          _
      $region12: #{_siglip_mlp_fwd.1} parent=5 // pred_fallthru
        _
      %p185 = scmp.lt.s32.totalorder %s12, 2
      // Predicated region
      $region29: #{_siglip_mlp_fwd.1} parent=5 // pred_check
        %p186 = pneg %p185
      $region30: #{_siglip_mlp_fwd.1} parent=5 // pred_check_branch
        %188 = sbr.rel (%p186) target = $region32
      $region31: #{_siglip_mlp_fwd.1} parent=5 // pred_region
        // Predicated region
        $region33: #{_siglip_mlp_fwd.1} parent=31 // pred_check
          %p189 = pneg %p32
        $region34: #{_siglip_mlp_fwd.1} parent=31 // pred_check_branch
          %191 = sbr.rel (%p189) target = $region36
        $region35: #{_siglip_mlp_fwd.1} parent=31 // pred_region
          %s192 = smul.u32 32, %s12
          %p193 = scmp.lt.s32.totalorder %s192, 63
          %s194 = scalar_select %p193, %s192, 63
          %s195 = smul.addr %s194, 2
          %s196 = smul.addr %s195, 8
          %s197 = scalar_lea.vmem %s0, %s196
          %s198 = smul.u32 32, %s12
        $region36: #{_siglip_mlp_fwd.1} parent=31 // pred_fallthru
          _
      $region32: #{_siglip_mlp_fwd.1} parent=5 // pred_fallthru
        _
      %p199 = scmp.le.s32.totalorder 1, %s12
      %p200 = scmp.lt.s32.totalorder %s12, 3
      %p201 = pnand %p199, %p200
      %p202 = pneg %p201
      // Predicated region
      $region37: #{_siglip_mlp_fwd.1} parent=5 // pred_check
        _
      $region38: #{_siglip_mlp_fwd.1} parent=5 // pred_check_branch
        %204 = sbr.rel (%p201) target = $region40
      $region39: #{_siglip_mlp_fwd.1} parent=5 // pred_region
        %s205 = ssub.s32 %s12, 1
        // Predicated region
        $region41: #{_siglip_mlp_fwd.1} parent=39 // pred_check
          %p206 = pneg %p101
        $region42: #{_siglip_mlp_fwd.1} parent=39 // pred_check_branch
          %208 = sbr.rel (%p206) target = $region44
        $region43: #{_siglip_mlp_fwd.1} parent=39 // pred_region
          %209 = dma.done [#allocation3], 20480
        $region44: #{_siglip_mlp_fwd.1} parent=39 // pred_fallthru
          _
        %s210 = smul.u32 32, %s17
        %p211 = scmp.lt.s32.totalorder %s210, 63
        %s212 = scalar_select %p211, %s210, 63
        %s213 = smul.addr %s212, 2
        %s214 = smul.addr %s213, 8
        %s215 = scalar_lea.vmem %s0, %s214
        %p216 = pneg %p38
        %p217 = pneg %p35
        %p218 = pneg %p59
        %p219 = pneg %p56
        %p220 = pneg %p80
        %p221 = pneg %p77
        %p222 = pneg %p101
        %p223 = pneg %p98
        %p224 = pneg %p122
        %p225 = pneg %p119
        %p226 = pneg %p148
        %p227 = pneg %p145
        %s228 = smul.u32 32, %s17
        %p229 = scmp.lt.s32.totalorder %s228, 63
        %s230 = scalar_select %p229, %s228, 63
        %s231 = smul.addr %s230, 2
        %s232 = smul.addr %s231, 8
        %s233 = scalar_lea.vmem %s5, %s232
        %s234 = smul.u32 32, %s17
        %p235 = scmp.lt.s32.totalorder %s234, 63
        %s236 = scalar_select %p235, %s234, 63
        %s237 = smul.addr %s236, 2
        %s238 = smul.addr %s237, 8
        %s239 = scalar_lea.vmem %s0, %s238
        %s240 = smul.u32 32, %s17
        %s241 = smul.u32 32, %s17
        %p242 = scmp.lt.s32.totalorder %s241, 63
        %s243 = scalar_select %p242, %s241, 63
        %s244 = smul.addr %s243, 2
        %s245 = smul.addr %s244, 8
        %s246 = scalar_lea.vmem %s5, %s245
        %s247 = smul.u32 32, %s17
        %v248 = vld [vmem:[%s239] sm:$0xff]
        %v249 = vld [vmem:[%s239 + $0x8] sm:$0xff]
        %v250 = vld [vmem:[%s239 + $0x10] sm:$0xff]
        %v251 = vld [vmem:[%s239 + $0x18] sm:$0xff]
        %v252 = vld [vmem:[%s239 + $0x20] sm:$0xff]
        %v253 = vld [vmem:[%s239 + $0x28] sm:$0xff]
        %v254 = vld [vmem:[%s239 + $0x30] sm:$0xff]
        %v255 = vld [vmem:[%s239 + $0x38] sm:$0xff]
        %v256 = vld [vmem:[%s239 + $0x40] sm:$0xff]
        %v257 = vld [vmem:[%s239 + $0x48] sm:$0xff]
        %v258 = vld [vmem:[%s239 + $0x50] sm:$0xff]
        %v259 = vld [vmem:[%s239 + $0x58] sm:$0xff]
        %v260 = vld [vmem:[%s239 + $0x60] sm:$0xff]
        %v261 = vld [vmem:[%s239 + $0x68] sm:$0xff]
        %v262 = vld [vmem:[%s239 + $0x70] sm:$0xff]
        %v263 = vld [vmem:[%s239 + $0x78] sm:$0xff]
        %v264 = vld [vmem:[%s239 + $0x80] sm:$0xff]
        %v265 = vld [vmem:[%s239 + $0x88] sm:$0xff]
        %v266 = vld [vmem:[%s239 + $0x90] sm:$0xff]
        %v267 = vld [vmem:[%s239 + $0x98] sm:$0xff]
        %v268 = vld [vmem:[%s239 + $0xa0] sm:$0xff]
        %v269 = vld [vmem:[%s239 + $0xa8] sm:$0xff]
        %v270 = vld [vmem:[%s239 + $0xb0] sm:$0xff]
        %v271 = vld [vmem:[%s239 + $0xb8] sm:$0xff]
        %v272 = vld [vmem:[%s239 + $0xc0] sm:$0xff]
        %v273 = vld [vmem:[%s239 + $0xc8] sm:$0xff]
        %v274 = vld [vmem:[%s239 + $0xd0] sm:$0xff]
        %v275 = vld [vmem:[%s239 + $0xd8] sm:$0xff]
        %v276 = vld [vmem:[%s239 + $0xe0] sm:$0xff]
        %v277 = vld [vmem:[%s239 + $0xe8] sm:$0xff]
        %v278 = vld [vmem:[%s239 + $0xf0] sm:$0xff]
        %v279 = vld [vmem:[%s239 + $0xf8] sm:$0xff]
        %v280 = vld [vmem:[%s239 + $0x100] sm:$0xff]
        %v281 = vld [vmem:[%s239 + $0x108] sm:$0xff]
        %v282 = vld [vmem:[%s239 + $0x110] sm:$0xff]
        %v283 = vld [vmem:[%s239 + $0x118] sm:$0xff]
        %v284 = vld [vmem:[%s239 + $0x120] sm:$0xff]
        %v285 = vld [vmem:[%s239 + $0x128] sm:$0xff]
        %v286 = vld [vmem:[%s239 + $0x130] sm:$0xff]
        %v287 = vld [vmem:[%s239 + $0x138] sm:$0xff]
        %v288 = vld [vmem:[%s239 + $0x140] sm:$0xff]
        %v289 = vld [vmem:[%s239 + $0x148] sm:$0xff]
        %v290 = vld [vmem:[%s239 + $0x150] sm:$0xff]
        %v291 = vld [vmem:[%s239 + $0x158] sm:$0xff]
        %v292 = vld [vmem:[%s239 + $0x160] sm:$0xff]
        %v293 = vld [vmem:[%s239 + $0x168] sm:$0xff]
        %v294 = vld [vmem:[%s239 + $0x170] sm:$0xff]
        %v295 = vld [vmem:[%s239 + $0x178] sm:$0xff]
        %v296 = vld [vmem:[%s239 + $0x180] sm:$0xff]
        %v297 = vld [vmem:[%s239 + $0x188] sm:$0xff]
        %v298 = vld [vmem:[%s239 + $0x190] sm:$0xff]
        %v299 = vld [vmem:[%s239 + $0x198] sm:$0xff]
        %v300 = vld [vmem:[%s239 + $0x1a0] sm:$0xff]
        %v301 = vld [vmem:[%s239 + $0x1a8] sm:$0xff]
        %v302 = vld [vmem:[%s239 + $0x1b0] sm:$0xff]
        %v303 = vld [vmem:[%s239 + $0x1b8] sm:$0xff]
        %v304 = vld [vmem:[%s239 + $0x1c0] sm:$0xff]
        %v305 = vld [vmem:[%s239 + $0x1c8] sm:$0xff]
        %v306 = vld [vmem:[%s239 + $0x1d0] sm:$0xff]
        %v307 = vld [vmem:[%s239 + $0x1d8] sm:$0xff]
        %v308 = vld [vmem:[%s239 + $0x1e0] sm:$0xff]
        %v309 = vld [vmem:[%s239 + $0x1e8] sm:$0xff]
        %v310 = vld [vmem:[%s239 + $0x1f0] sm:$0xff]
        %v311 = vld [vmem:[%s239 + $0x1f8] sm:$0xff]
        %v312 = vld [vmem:[%s1] sm:$0xff]
        %v313 = vld [vmem:[%s1 + $0x8] sm:$0xff]
        %v314 = vld [vmem:[%s1 + $0x10] sm:$0xff]
        %v315 = vld [vmem:[%s1 + $0x18] sm:$0xff]
        %v316 = vld [vmem:[%s1 + $0x20] sm:$0xff]
        %v317 = vld [vmem:[%s1 + $0x28] sm:$0xff]
        %v318 = vld [vmem:[%s1 + $0x30] sm:$0xff]
        %v319 = vld [vmem:[%s1 + $0x38] sm:$0xff]
        %v320 = vld [vmem:[%s1 + $0x40] sm:$0xff]
        %v321 = vld [vmem:[%s1 + $0x48] sm:$0xff]
        %v322 = vld [vmem:[%s1 + $0x50] sm:$0xff]
        %v323 = vld [vmem:[%s1 + $0x58] sm:$0xff]
        %v324 = vld [vmem:[%s1 + $0x60] sm:$0xff]
        %v325 = vld [vmem:[%s1 + $0x68] sm:$0xff]
        %v326 = vld [vmem:[%s1 + $0x70] sm:$0xff]
        %v327 = vld [vmem:[%s1 + $0x78] sm:$0xff]
        %v328 = vld [vmem:[%s1 + $0x80] sm:$0xff]
        %v329 = vld [vmem:[%s1 + $0x88] sm:$0xff]
        %v330 = vld [vmem:[%s1 + $0x90] sm:$0xff]
        %v331 = vld [vmem:[%s1 + $0x98] sm:$0xff]
        %v332 = vld [vmem:[%s1 + $0xa0] sm:$0xff]
        %v333 = vld [vmem:[%s1 + $0xa8] sm:$0xff]
        %v334 = vld [vmem:[%s1 + $0xb0] sm:$0xff]
        %v335 = vld [vmem:[%s1 + $0xb8] sm:$0xff]
        %v336 = vld [vmem:[%s1 + $0xc0] sm:$0xff]
        %v337 = vld [vmem:[%s1 + $0xc8] sm:$0xff]
        %v338 = vld [vmem:[%s1 + $0xd0] sm:$0xff]
        %v339 = vld [vmem:[%s1 + $0xd8] sm:$0xff]
        %v340 = vld [vmem:[%s1 + $0xe0] sm:$0xff]
        %v341 = vld [vmem:[%s1 + $0xe8] sm:$0xff]
        %v342 = vld [vmem:[%s1 + $0xf0] sm:$0xff]
        %v343 = vld [vmem:[%s1 + $0xf8] sm:$0xff]
        %v344 = vld [vmem:[%s1 + $0x100] sm:$0xff]
        %v345 = vld [vmem:[%s1 + $0x108] sm:$0xff]
        %v346 = vld [vmem:[%s1 + $0x110] sm:$0xff]
        %v347 = vld [vmem:[%s1 + $0x118] sm:$0xff]
        %v348 = vld [vmem:[%s1 + $0x120] sm:$0xff]
        %v349 = vld [vmem:[%s1 + $0x128] sm:$0xff]
        %v350 = vld [vmem:[%s1 + $0x130] sm:$0xff]
        %v351 = vld [vmem:[%s1 + $0x138] sm:$0xff]
        %v352 = vld [vmem:[%s1 + $0x140] sm:$0xff]
        %v353 = vld [vmem:[%s1 + $0x148] sm:$0xff]
        %v354 = vld [vmem:[%s1 + $0x150] sm:$0xff]
        %v355 = vld [vmem:[%s1 + $0x158] sm:$0xff]
        %v356 = vld [vmem:[%s1 + $0x160] sm:$0xff]
        %v357 = vld [vmem:[%s1 + $0x168] sm:$0xff]
        %v358 = vld [vmem:[%s1 + $0x170] sm:$0xff]
        %v359 = vld [vmem:[%s1 + $0x178] sm:$0xff]
        %v360 = vld [vmem:[%s1 + $0x180] sm:$0xff]
        %v361 = vld [vmem:[%s1 + $0x188] sm:$0xff]
        %v362 = vld [vmem:[%s1 + $0x190] sm:$0xff]
        %v363 = vld [vmem:[%s1 + $0x198] sm:$0xff]
        %v364 = vld [vmem:[%s1 + $0x1a0] sm:$0xff]
        %v365 = vld [vmem:[%s1 + $0x1a8] sm:$0xff]
        %v366 = vld [vmem:[%s1 + $0x1b0] sm:$0xff]
        %v367 = vld [vmem:[%s1 + $0x1b8] sm:$0xff]
        %v368 = vld [vmem:[%s1 + $0x1c0] sm:$0xff]
        %v369 = vld [vmem:[%s1 + $0x1c8] sm:$0xff]
        %v370 = vld [vmem:[%s1 + $0x1d0] sm:$0xff]
        %v371 = vld [vmem:[%s1 + $0x1d8] sm:$0xff]
        %v372 = vld [vmem:[%s1 + $0x1e0] sm:$0xff]
        %v373 = vld [vmem:[%s1 + $0x1e8] sm:$0xff]
        %v374 = vld [vmem:[%s1 + $0x1f0] sm:$0xff]
        %v375 = vld [vmem:[%s1 + $0x1f8] sm:$0xff]
        %v376 = vld [vmem:[%s1 + $0x200] sm:$0xff]
        %v377 = vld [vmem:[%s1 + $0x208] sm:$0xff]
        %v378 = vld [vmem:[%s1 + $0x210] sm:$0xff]
        %v379 = vld [vmem:[%s1 + $0x218] sm:$0xff]
        %v380 = vld [vmem:[%s1 + $0x220] sm:$0xff]
        %v381 = vld [vmem:[%s1 + $0x228] sm:$0xff]
        %v382 = vld [vmem:[%s1 + $0x230] sm:$0xff]
        %v383 = vld [vmem:[%s1 + $0x238] sm:$0xff]
        %v384 = vld [vmem:[%s1 + $0x240] sm:$0xff]
        %v385 = vld [vmem:[%s1 + $0x248] sm:$0xff]
        %v386 = vld [vmem:[%s1 + $0x250] sm:$0xff]
        %v387 = vld [vmem:[%s1 + $0x258] sm:$0xff]
        %v388 = vld [vmem:[%s1 + $0x260] sm:$0xff]
        %v389 = vld [vmem:[%s1 + $0x268] sm:$0xff]
        %v390 = vld [vmem:[%s1 + $0x270] sm:$0xff]
        %v391 = vld [vmem:[%s1 + $0x278] sm:$0xff]
        %v392 = vld [vmem:[%s1 + $0x280] sm:$0xff]
        %v393 = vld [vmem:[%s1 + $0x288] sm:$0xff]
        %v394 = vld [vmem:[%s1 + $0x290] sm:$0xff]
        %v395 = vld [vmem:[%s1 + $0x298] sm:$0xff]
        %v396 = vld [vmem:[%s1 + $0x2a0] sm:$0xff]
        %v397 = vld [vmem:[%s1 + $0x2a8] sm:$0xff]
        %v398 = vld [vmem:[%s1 + $0x2b0] sm:$0xff]
        %v399 = vld [vmem:[%s1 + $0x2b8] sm:$0xff]
        %v400 = vld [vmem:[%s1 + $0x2c0] sm:$0xff]
        %v401 = vld [vmem:[%s1 + $0x2c8] sm:$0xff]
        %v402 = vld [vmem:[%s1 + $0x2d0] sm:$0xff]
        %v403 = vld [vmem:[%s1 + $0x2d8] sm:$0xff]
        %v404 = vld [vmem:[%s1 + $0x2e0] sm:$0xff]
        %v405 = vld [vmem:[%s1 + $0x2e8] sm:$0xff]
        %v406 = vld [vmem:[%s1 + $0x2f0] sm:$0xff]
        %v407 = vld [vmem:[%s1 + $0x2f8] sm:$0xff]
        %v408 = vld [vmem:[%s1 + $0x300] sm:$0xff]
        %v409 = vld [vmem:[%s1 + $0x308] sm:$0xff]
        %v410 = vld [vmem:[%s1 + $0x310] sm:$0xff]
        %v411 = vld [vmem:[%s1 + $0x318] sm:$0xff]
        %v412 = vld [vmem:[%s1 + $0x320] sm:$0xff]
        %v413 = vld [vmem:[%s1 + $0x328] sm:$0xff]
        %v414 = vld [vmem:[%s1 + $0x330] sm:$0xff]
        %v415 = vld [vmem:[%s1 + $0x338] sm:$0xff]
        %v416 = vld [vmem:[%s1 + $0x340] sm:$0xff]
        %v417 = vld [vmem:[%s1 + $0x348] sm:$0xff]
        %v418 = vld [vmem:[%s1 + $0x350] sm:$0xff]
        %v419 = vld [vmem:[%s1 + $0x358] sm:$0xff]
        %v420 = vld [vmem:[%s1 + $0x360] sm:$0xff]
        %v421 = vld [vmem:[%s1 + $0x368] sm:$0xff]
        %v422 = vld [vmem:[%s1 + $0x370] sm:$0xff]
        %v423 = vld [vmem:[%s1 + $0x378] sm:$0xff]
        %v424 = vld [vmem:[%s1 + $0x380] sm:$0xff]
        %v425 = vld [vmem:[%s1 + $0x388] sm:$0xff]
        %v426 = vld [vmem:[%s1 + $0x390] sm:$0xff]
        %v427 = vld [vmem:[%s1 + $0x398] sm:$0xff]
        %v428 = vld [vmem:[%s1 + $0x3a0] sm:$0xff]
        %v429 = vld [vmem:[%s1 + $0x3a8] sm:$0xff]
        %v430 = vld [vmem:[%s1 + $0x3b0] sm:$0xff]
        %v431 = vld [vmem:[%s1 + $0x3b8] sm:$0xff]
        %v432 = vld [vmem:[%s1 + $0x3c0] sm:$0xff]
        %v433 = vld [vmem:[%s1 + $0x3c8] sm:$0xff]
        %v434 = vld [vmem:[%s1 + $0x3d0] sm:$0xff]
        %v435 = vld [vmem:[%s1 + $0x3d8] sm:$0xff]
        %v436 = vld [vmem:[%s1 + $0x3e0] sm:$0xff]
        %v437 = vld [vmem:[%s1 + $0x3e8] sm:$0xff]
        %v438 = vld [vmem:[%s1 + $0x3f0] sm:$0xff]
        %v439 = vld [vmem:[%s1 + $0x3f8] sm:$0xff]
        %v440 = vld [vmem:[%s1 + $0x400] sm:$0xff]
        %v441 = vld [vmem:[%s1 + $0x408] sm:$0xff]
        %v442 = vld [vmem:[%s1 + $0x410] sm:$0xff]
        %v443 = vld [vmem:[%s1 + $0x418] sm:$0xff]
        %v444 = vld [vmem:[%s1 + $0x420] sm:$0xff]
        %v445 = vld [vmem:[%s1 + $0x428] sm:$0xff]
        %v446 = vld [vmem:[%s1 + $0x430] sm:$0xff]
        %v447 = vld [vmem:[%s1 + $0x438] sm:$0xff]
        %v448 = vld [vmem:[%s1 + $0x440] sm:$0xff]
        %v449 = vld [vmem:[%s1 + $0x448] sm:$0xff]
        %v450 = vld [vmem:[%s1 + $0x450] sm:$0xff]
        %v451 = vld [vmem:[%s1 + $0x458] sm:$0xff]
        %v452 = vld [vmem:[%s1 + $0x460] sm:$0xff]
        %v453 = vld [vmem:[%s1 + $0x468] sm:$0xff]
        %v454 = vld [vmem:[%s1 + $0x470] sm:$0xff]
        %v455 = vld [vmem:[%s1 + $0x478] sm:$0xff]
        %v456 = vld [vmem:[%s1 + $0x480] sm:$0xff]
        %v457 = vld [vmem:[%s1 + $0x488] sm:$0xff]
        %v458 = vld [vmem:[%s1 + $0x490] sm:$0xff]
        %v459 = vld [vmem:[%s1 + $0x498] sm:$0xff]
        %v460 = vld [vmem:[%s1 + $0x4a0] sm:$0xff]
        %v461 = vld [vmem:[%s1 + $0x4a8] sm:$0xff]
        %v462 = vld [vmem:[%s1 + $0x4b0] sm:$0xff]
        %v463 = vld [vmem:[%s1 + $0x4b8] sm:$0xff]
        %v464 = vld [vmem:[%s1 + $0x4c0] sm:$0xff]
        %v465 = vld [vmem:[%s1 + $0x4c8] sm:$0xff]
        %v466 = vld [vmem:[%s1 + $0x4d0] sm:$0xff]
        %v467 = vld [vmem:[%s1 + $0x4d8] sm:$0xff]
        %v468 = vld [vmem:[%s1 + $0x4e0] sm:$0xff]
        %v469 = vld [vmem:[%s1 + $0x4e8] sm:$0xff]
        %v470 = vld [vmem:[%s1 + $0x4f0] sm:$0xff]
        %v471 = vld [vmem:[%s1 + $0x4f8] sm:$0xff]
        %v472 = vld [vmem:[%s2] sm:$0x1f]
        %v474 = vlaneseq
        %v475 = vshrl.u32 %v474, 7
        %v476 = vsub.s32 0, %v475
        %v477 = vrot.slane %v472, %v476
        %v478 = vlaneseq
        %v479 = vshrl.u32 %v478, 7
        %v480 = vsub.s32 1, %v479
        %v481 = vrot.slane %v472, %v480
        %v482 = vlaneseq
        %v483 = vshrl.u32 %v482, 7
        %v484 = vsub.s32 2, %v483
        %v485 = vrot.slane %v472, %v484
        %v486 = vlaneseq
        %v487 = vshrl.u32 %v486, 7
        %v488 = vsub.s32 3, %v487
        %v489 = vrot.slane %v472, %v488
        %v490 = vlaneseq
        %v491 = vshrl.u32 %v490, 7
        %v492 = vsub.s32 4, %v491
        %v493 = vrot.slane %v472, %v492
        %499 = vmatprep.subr.mxu0 %v313
        %500 = vmatpush1.msra.mxu0 %v312
        %501 = vmatprep.subr.mxu0 %v318
        %502 = vmatpush1.msra.mxu0 %v317
        %503 = vmatprep.subr.mxu0 %v323
        %504 = vmatpush1.msra.mxu0 %v322
        %505 = vmatprep.subr.mxu0 %v328
        %506 = vmatpush1.msra.mxu0 %v327
        %507 = vmatprep.subr.mxu0 %v333
        %508 = vmatpush1.msra.mxu0 %v332
        %509 = vmatprep.subr.mxu0 %v338
        %510 = vmatpush1.msra.mxu0 %v337
        %511 = vmatprep.subr.mxu0 %v343
        %512 = vmatpush1.msra.mxu0 %v342
        %513 = vmatprep.subr.mxu0 %v348
        %514 = vmatpush1.msra.mxu0 %v347
        %515 = vmatprep.subr.mxu0 %v353
        %516 = vmatpush1.msra.mxu0 %v352
        %517 = vmatprep.subr.mxu0 %v358
        %518 = vmatpush1.msra.mxu0 %v357
        %519 = vmatprep.subr.mxu0 %v363
        %520 = vmatpush1.msra.mxu0 %v362
        %521 = vmatprep.subr.mxu0 %v368
        %522 = vmatpush1.msra.mxu0 %v367
        %523 = vmatprep.subr.mxu0 %v373
        %524 = vmatpush1.msra.mxu0 %v372
        %525 = vmatprep.subr.mxu0 %v378
        %526 = vmatpush1.msra.mxu0 %v377
        %527 = vmatprep.subr.mxu0 %v383
        %528 = vmatpush1.msra.mxu0 %v382
        %529 = vmatprep.subr.mxu0 %v388
        %530 = vmatpush1.msra.mxu0 %v387
        %531 = vmatprep.subr.mxu0 %v393
        %532 = vmatpush1.msra.mxu0 %v392
        %533 = vmatprep.subr.mxu0 %v398
        %534 = vmatpush1.msra.mxu0 %v397
        %535 = vmatprep.subr.mxu0 %v403
        %536 = vmatpush1.msra.mxu0 %v402
        %537 = vmatprep.subr.mxu0 %v408
        %538 = vmatpush1.msra.mxu0 %v407
        %539 = vmatprep.subr.mxu0 %v413
        %540 = vmatpush1.msra.mxu0 %v412
        %541 = vmatprep.subr.mxu0 %v418
        %542 = vmatpush1.msra.mxu0 %v417
        %543 = vmatprep.subr.mxu0 %v423
        %544 = vmatpush1.msra.mxu0 %v422
        %545 = vmatprep.subr.mxu0 %v428
        %546 = vmatpush1.msra.mxu0 %v427
        %547 = vmatprep.subr.mxu0 %v433
        %548 = vmatpush1.msra.mxu0 %v432
        %549 = vmatprep.subr.mxu0 %v438
        %550 = vmatpush1.msra.mxu0 %v437
        %551 = vmatprep.subr.mxu0 %v443
        %552 = vmatpush1.msra.mxu0 %v442
        %553 = vmatprep.subr.mxu0 %v448
        %554 = vmatpush1.msra.mxu0 %v447
        %555 = vmatprep.subr.mxu0 %v453
        %556 = vmatpush1.msra.mxu0 %v452
        %557 = vmatprep.subr.mxu0 %v458
        %558 = vmatpush1.msra.mxu0 %v457
        %559 = vmatprep.subr.mxu0 %v463
        %560 = vmatpush1.msra.mxu0 %v462
        %561 = vmatprep.subr.mxu0 %v468
        %562 = vmatpush1.msra.mxu0 %v467
        %563 = vmatprep.mubr.f32.mxu0 %v249
        %564 = vmatmul.mubr.f32.gmra.mrb[0].mxu0 %v248
        %v565 = vpop.f32.mrb[0].mxu0
        %v566 = vadd.f32 %v477, %v565
        %v567 = vpop.f32.mrb[0].mxu0
        %v568 = vadd.f32 %v481, %v567
        %569 = vmatprep.mubr.f32.mxu0 %v251
        %570 = vmatmul.mubr.f32.gmra.mrb[0].mxu0 %v250
        %v571 = vpop.f32.mrb[0].mxu0
        %v572 = vadd.f32 %v477, %v571
        %v573 = vpop.f32.mrb[0].mxu0
        %v574 = vadd.f32 %v481, %v573
        %575 = vmatprep.mubr.f32.mxu0 %v253
        %576 = vmatmul.mubr.f32.gmra.mrb[0].mxu0 %v252
        %v577 = vpop.f32.mrb[0].mxu0
        %v578 = vadd.f32 %v477, %v577
        %v579 = vpop.f32.mrb[0].mxu0
        %v580 = vadd.f32 %v481, %v579
        %581 = vmatprep.mubr.f32.mxu0 %v255
        %582 = vmatmul.mubr.f32.gmra.mrb[0].mxu0 %v254
        %v583 = vpop.f32.mrb[0].mxu0
        %v584 = vadd.f32 %v477, %v583
        %v585 = vpop.f32.mrb[0].mxu0
        %v586 = vadd.f32 %v481, %v585
        %587 = vmatprep.mubr.f32.mxu0 %v257
        %588 = vmatmul.mubr.f32.gmra.mrb[0].mxu0 %v256
        %v589 = vpop.f32.mrb[0].mxu0
        %v590 = vadd.f32 %v477, %v589
        %v591 = vpop.f32.mrb[0].mxu0
        %v592 = vadd.f32 %v481, %v591
        %593 = vmatprep.mubr.f32.mxu0 %v259
        %594 = vmatmul.mubr.f32.gmra.mrb[0].mxu0 %v258
        %v595 = vpop.f32.mrb[0].mxu0
        %v596 = vadd.f32 %v477, %v595
        %v597 = vpop.f32.mrb[0].mxu0
        %v598 = vadd.f32 %v481, %v597
        %599 = vmatprep.mubr.f32.mxu0 %v261
        %600 = vmatmul.mubr.f32.gmra.mrb[0].mxu0 %v260
        %v601 = vpop.f32.mrb[0].mxu0
        %v602 = vadd.f32 %v477, %v601
        %v603 = vpop.f32.mrb[0].mxu0
        %v604 = vadd.f32 %v481, %v603
        %605 = vmatprep.mubr.f32.mxu0 %v263
        %606 = vmatmul.mubr.f32.gmra.mrb[0].mxu0 %v262
        %v607 = vpop.f32.mrb[0].mxu0
        %v608 = vadd.f32 %v477, %v607
        %v609 = vpop.f32.mrb[0].mxu0
        %v610 = vadd.f32 %v481, %v609
        %611 = vmatprep.mubr.f32.mxu0 %v265
        %612 = vmatmul.mubr.f32.gmra.mrb[0].mxu0 %v264
        %v613 = vpop.f32.mrb[0].mxu0
        %v614 = vadd.f32 %v477, %v613
        %v615 = vpop.f32.mrb[0].mxu0
        %v616 = vadd.f32 %v481, %v615
        %617 = vmatprep.mubr.f32.mxu0 %v267
        %618 = vmatmul.mubr.f32.gmra.mrb[0].mxu0 %v266
        %v619 = vpop.f32.mrb[0].mxu0
        %v620 = vadd.f32 %v477, %v619
        %v621 = vpop.f32.mrb[0].mxu0
        %v622 = vadd.f32 %v481, %v621
        %623 = vmatprep.mubr.f32.mxu0 %v269
        %624 = vmatmul.mubr.f32.gmra.mrb[0].mxu0 %v268
        %v625 = vpop.f32.mrb[0].mxu0
        %v626 = vadd.f32 %v477, %v625
        %v627 = vpop.f32.mrb[0].mxu0
        %v628 = vadd.f32 %v481, %v627
        %629 = vmatprep.mubr.f32.mxu0 %v271
        %630 = vmatmul.mubr.f32.gmra.mrb[0].mxu0 %v270
        %v631 = vpop.f32.mrb[0].mxu0
        %v632 = vadd.f32 %v477, %v631
        %v633 = vpop.f32.mrb[0].mxu0
        %v634 = vadd.f32 %v481, %v633
        %635 = vmatprep.mubr.f32.mxu0 %v273
        %636 = vmatmul.mubr.f32.gmra.mrb[0].mxu0 %v272
        %v637 = vpop.f32.mrb[0].mxu0
        %v638 = vadd.f32 %v477, %v637
        %v639 = vpop.f32.mrb[0].mxu0
        %v640 = vadd.f32 %v481, %v639
        %641 = vmatprep.mubr.f32.mxu0 %v275
        %642 = vmatmul.mubr.f32.gmra.mrb[0].mxu0 %v274
        %v643 = vpop.f32.mrb[0].mxu0
        %v644 = vadd.f32 %v477, %v643
        %v645 = vpop.f32.mrb[0].mxu0
        %v646 = vadd.f32 %v481, %v645
        %647 = vmatprep.mubr.f32.mxu0 %v277
        %648 = vmatmul.mubr.f32.gmra.mrb[0].mxu0 %v276
        %v649 = vpop.f32.mrb[0].mxu0
        %v650 = vadd.f32 %v477, %v649
        %v651 = vpop.f32.mrb[0].mxu0
        %v652 = vadd.f32 %v481, %v651
        %653 = vmatprep.mubr.f32.mxu0 %v279
        %654 = vmatmul.mubr.f32.gmra.mrb[0].mxu0 %v278
        %v655 = vpop.f32.mrb[0].mxu0
        %v656 = vadd.f32 %v477, %v655
        %v657 = vpop.f32.mrb[0].mxu0
        %v658 = vadd.f32 %v481, %v657
        %659 = vmatprep.mubr.f32.mxu0 %v281
        %660 = vmatmul.mubr.f32.gmra.mrb[0].mxu0 %v280
        %v661 = vpop.f32.mrb[0].mxu0
        %v662 = vadd.f32 %v477, %v661
        %v663 = vpop.f32.mrb[0].mxu0
        %v664 = vadd.f32 %v481, %v663
        %665 = vmatprep.mubr.f32.mxu0 %v283
        %666 = vmatmul.mubr.f32.gmra.mrb[0].mxu0 %v282
        %v667 = vpop.f32.mrb[0].mxu0
        %v668 = vadd.f32 %v477, %v667
        %v669 = vpop.f32.mrb[0].mxu0
        %v670 = vadd.f32 %v481, %v669
        %671 = vmatprep.mubr.f32.mxu0 %v285
        %672 = vmatmul.mubr.f32.gmra.mrb[0].mxu0 %v284
        %v673 = vpop.f32.mrb[0].mxu0
        %v674 = vadd.f32 %v477, %v673
        %v675 = vpop.f32.mrb[0].mxu0
        %v676 = vadd.f32 %v481, %v675
        %677 = vmatprep.mubr.f32.mxu0 %v287
        %678 = vmatmul.mubr.f32.gmra.mrb[0].mxu0 %v286
        %v679 = vpop.f32.mrb[0].mxu0
        %v680 = vadd.f32 %v477, %v679
        %v681 = vpop.f32.mrb[0].mxu0
        %v682 = vadd.f32 %v481, %v681
        %683 = vmatprep.mubr.f32.mxu0 %v289
        %684 = vmatmul.mubr.f32.gmra.mrb[0].mxu0 %v288
        %v685 = vpop.f32.mrb[0].mxu0
        %v686 = vadd.f32 %v477, %v685
        %v687 = vpop.f32.mrb[0].mxu0
        %v688 = vadd.f32 %v481, %v687
        %689 = vmatprep.mubr.f32.mxu0 %v291
        %690 = vmatmul.mubr.f32.gmra.mrb[0].mxu0 %v290
        %v691 = vpop.f32.mrb[0].mxu0
        %v692 = vadd.f32 %v477, %v691
        %v693 = vpop.f32.mrb[0].mxu0
        %v694 = vadd.f32 %v481, %v693
        %695 = vmatprep.mubr.f32.mxu0 %v293
        %696 = vmatmul.mubr.f32.gmra.mrb[0].mxu0 %v292
        %v697 = vpop.f32.mrb[0].mxu0
        %v698 = vadd.f32 %v477, %v697
        %v699 = vpop.f32.mrb[0].mxu0
        %v700 = vadd.f32 %v481, %v699
        %701 = vmatprep.mubr.f32.mxu0 %v295
        %702 = vmatmul.mubr.f32.gmra.mrb[0].mxu0 %v294
        %v703 = vpop.f32.mrb[0].mxu0
        %v704 = vadd.f32 %v477, %v703
        %v705 = vpop.f32.mrb[0].mxu0
        %v706 = vadd.f32 %v481, %v705
        %707 = vmatprep.mubr.f32.mxu0 %v297
        %708 = vmatmul.mubr.f32.gmra.mrb[0].mxu0 %v296
        %v709 = vpop.f32.mrb[0].mxu0
        %v710 = vadd.f32 %v477, %v709
        %v711 = vpop.f32.mrb[0].mxu0
        %v712 = vadd.f32 %v481, %v711
        %713 = vmatprep.mubr.f32.mxu0 %v299
        %714 = vmatmul.mubr.f32.gmra.mrb[0].mxu0 %v298
        %v715 = vpop.f32.mrb[0].mxu0
        %v716 = vadd.f32 %v477, %v715
        %v717 = vpop.f32.mrb[0].mxu0
        %v718 = vadd.f32 %v481, %v717
        %719 = vmatprep.mubr.f32.mxu0 %v301
        %720 = vmatmul.mubr.f32.gmra.mrb[0].mxu0 %v300
        %v721 = vpop.f32.mrb[0].mxu0
        %v722 = vadd.f32 %v477, %v721
        %v723 = vpop.f32.mrb[0].mxu0
        %v724 = vadd.f32 %v481, %v723
        %725 = vmatprep.mubr.f32.mxu0 %v303
        %726 = vmatmul.mubr.f32.gmra.mrb[0].mxu0 %v302
        %v727 = vpop.f32.mrb[0].mxu0
        %v728 = vadd.f32 %v477, %v727
        %v729 = vpop.f32.mrb[0].mxu0
        %v730 = vadd.f32 %v481, %v729
        %731 = vmatprep.mubr.f32.mxu0 %v305
        %732 = vmatmul.mubr.f32.gmra.mrb[0].mxu0 %v304
        %v733 = vpop.f32.mrb[0].mxu0
        %v734 = vadd.f32 %v477, %v733
        %v735 = vpop.f32.mrb[0].mxu0
        %v736 = vadd.f32 %v481, %v735
        %737 = vmatprep.mubr.f32.mxu0 %v307
        %738 = vmatmul.mubr.f32.gmra.mrb[0].mxu0 %v306
        %v739 = vpop.f32.mrb[0].mxu0
        %v740 = vadd.f32 %v477, %v739
        %v741 = vpop.f32.mrb[0].mxu0
        %v742 = vadd.f32 %v481, %v741
        %743 = vmatprep.mubr.f32.mxu0 %v309
        %744 = vmatmul.mubr.f32.gmra.mrb[0].mxu0 %v308
        %v745 = vpop.f32.mrb[0].mxu0
        %v746 = vadd.f32 %v477, %v745
        %v747 = vpop.f32.mrb[0].mxu0
        %v748 = vadd.f32 %v481, %v747
        %749 = vmatprep.mubr.f32.mxu0 %v311
        %750 = vmatmul.mubr.f32.gmra.mrb[0].mxu0 %v310
        %v751 = vpop.f32.mrb[0].mxu0
        %v752 = vadd.f32 %v477, %v751
        %v753 = vpop.f32.mrb[0].mxu0
        %v754 = vadd.f32 %v481, %v753
        %755 = vdwg.mxu0
        %756 = vmatprep.subr.mxu0 %v315
        %757 = vmatpush1.msra.mxu0 %v314
        %758 = vmatprep.subr.mxu0 %v320
        %759 = vmatpush1.msra.mxu0 %v319
        %760 = vmatprep.subr.mxu0 %v325
        %761 = vmatpush1.msra.mxu0 %v324
        %762 = vmatprep.subr.mxu0 %v330
        %763 = vmatpush1.msra.mxu0 %v329
        %764 = vmatprep.subr.mxu0 %v335
        %765 = vmatpush1.msra.mxu0 %v334
        %766 = vmatprep.subr.mxu0 %v340
        %767 = vmatpush1.msra.mxu0 %v339
        %768 = vmatprep.subr.mxu0 %v345
        %769 = vmatpush1.msra.mxu0 %v344
        %770 = vmatprep.subr.mxu0 %v350
        %771 = vmatpush1.msra.mxu0 %v349
        %772 = vmatprep.subr.mxu0 %v355
        %773 = vmatpush1.msra.mxu0 %v354
        %774 = vmatprep.subr.mxu0 %v360
        %775 = vmatpush1.msra.mxu0 %v359
        %776 = vmatprep.subr.mxu0 %v365
        %777 = vmatpush1.msra.mxu0 %v364
        %778 = vmatprep.subr.mxu0 %v370
        %779 = vmatpush1.msra.mxu0 %v369
        %780 = vmatprep.subr.mxu0 %v375
        %781 = vmatpush1.msra.mxu0 %v374
        %782 = vmatprep.subr.mxu0 %v380
        %783 = vmatpush1.msra.mxu0 %v379
        %784 = vmatprep.subr.mxu0 %v385
        %785 = vmatpush1.msra.mxu0 %v384
        %786 = vmatprep.subr.mxu0 %v390
        %787 = vmatpush1.msra.mxu0 %v389
        %788 = vmatprep.subr.mxu0 %v395
        %789 = vmatpush1.msra.mxu0 %v394
        %790 = vmatprep.subr.mxu0 %v400
        %791 = vmatpush1.msra.mxu0 %v399
        %792 = vmatprep.subr.mxu0 %v405
        %793 = vmatpush1.msra.mxu0 %v404
        %794 = vmatprep.subr.mxu0 %v410
        %795 = vmatpush1.msra.mxu0 %v409
        %796 = vmatprep.subr.mxu0 %v415
        %797 = vmatpush1.msra.mxu0 %v414
        %798 = vmatprep.subr.mxu0 %v420
        %799 = vmatpush1.msra.mxu0 %v419
        %800 = vmatprep.subr.mxu0 %v425
        %801 = vmatpush1.msra.mxu0 %v424
        %802 = vmatprep.subr.mxu0 %v430
        %803 = vmatpush1.msra.mxu0 %v429
        %804 = vmatprep.subr.mxu0 %v435
        %805 = vmatpush1.msra.mxu0 %v434
        %806 = vmatprep.subr.mxu0 %v440
        %807 = vmatpush1.msra.mxu0 %v439
        %808 = vmatprep.subr.mxu0 %v445
        %809 = vmatpush1.msra.mxu0 %v444
        %810 = vmatprep.subr.mxu0 %v450
        %811 = vmatpush1.msra.mxu0 %v449
        %812 = vmatprep.subr.mxu0 %v455
        %813 = vmatpush1.msra.mxu0 %v454
        %814 = vmatprep.subr.mxu0 %v460
        %815 = vmatpush1.msra.mxu0 %v459
        %816 = vmatprep.subr.mxu0 %v465
        %817 = vmatpush1.msra.mxu0 %v464
        %818 = vmatprep.subr.mxu0 %v470
        %819 = vmatpush1.msra.mxu0 %v469
        %820 = vmatprep.mubr.f32.mxu0 %v249
        %821 = vmatmul.mubr.f32.gmra.mrb[0].mxu0 %v248
        %v822 = vpop.f32.mrb[0].mxu0
        %v823 = vadd.f32 %v485, %v822
        %v824 = vpop.f32.mrb[0].mxu0
        %v825 = vadd.f32 %v489, %v824
        %826 = vmatprep.mubr.f32.mxu0 %v251
        %827 = vmatmul.mubr.f32.gmra.mrb[0].mxu0 %v250
        %v828 = vpop.f32.mrb[0].mxu0
        %v829 = vadd.f32 %v485, %v828
        %v830 = vpop.f32.mrb[0].mxu0
        %v831 = vadd.f32 %v489, %v830
        %832 = vmatprep.mubr.f32.mxu0 %v253
        %833 = vmatmul.mubr.f32.gmra.mrb[0].mxu0 %v252
        %v834 = vpop.f32.mrb[0].mxu0
        %v835 = vadd.f32 %v485, %v834
        %v836 = vpop.f32.mrb[0].mxu0
        %v837 = vadd.f32 %v489, %v836
        %838 = vmatprep.mubr.f32.mxu0 %v255
        %839 = vmatmul.mubr.f32.gmra.mrb[0].mxu0 %v254
        %v840 = vpop.f32.mrb[0].mxu0
        %v841 = vadd.f32 %v485, %v840
        %v842 = vpop.f32.mrb[0].mxu0
        %v843 = vadd.f32 %v489, %v842
        %844 = vmatprep.mubr.f32.mxu0 %v257
        %845 = vmatmul.mubr.f32.gmra.mrb[0].mxu0 %v256
        %v846 = vpop.f32.mrb[0].mxu0
        %v847 = vadd.f32 %v485, %v846
        %v848 = vpop.f32.mrb[0].mxu0
        %v849 = vadd.f32 %v489, %v848
        %850 = vmatprep.mubr.f32.mxu0 %v259
        %851 = vmatmul.mubr.f32.gmra.mrb[0].mxu0 %v258
        %v852 = vpop.f32.mrb[0].mxu0
        %v853 = vadd.f32 %v485, %v852
        %v854 = vpop.f32.mrb[0].mxu0
        %v855 = vadd.f32 %v489, %v854
        %856 = vmatprep.mubr.f32.mxu0 %v261
        %857 = vmatmul.mubr.f32.gmra.mrb[0].mxu0 %v260
        %v858 = vpop.f32.mrb[0].mxu0
        %v859 = vadd.f32 %v485, %v858
        %v860 = vpop.f32.mrb[0].mxu0
        %v861 = vadd.f32 %v489, %v860
        %862 = vmatprep.mubr.f32.mxu0 %v263
        %863 = vmatmul.mubr.f32.gmra.mrb[0].mxu0 %v262
        %v864 = vpop.f32.mrb[0].mxu0
        %v865 = vadd.f32 %v485, %v864
        %v866 = vpop.f32.mrb[0].mxu0
        %v867 = vadd.f32 %v489, %v866
        %868 = vmatprep.mubr.f32.mxu0 %v265
        %869 = vmatmul.mubr.f32.gmra.mrb[0].mxu0 %v264
        %v870 = vpop.f32.mrb[0].mxu0
        %v871 = vadd.f32 %v485, %v870
        %v872 = vpop.f32.mrb[0].mxu0
        %v873 = vadd.f32 %v489, %v872
        %874 = vmatprep.mubr.f32.mxu0 %v267
        %875 = vmatmul.mubr.f32.gmra.mrb[0].mxu0 %v266
        %v876 = vpop.f32.mrb[0].mxu0
        %v877 = vadd.f32 %v485, %v876
        %v878 = vpop.f32.mrb[0].mxu0
        %v879 = vadd.f32 %v489, %v878
        %880 = vmatprep.mubr.f32.mxu0 %v269
        %881 = vmatmul.mubr.f32.gmra.mrb[0].mxu0 %v268
        %v882 = vpop.f32.mrb[0].mxu0
        %v883 = vadd.f32 %v485, %v882
        %v884 = vpop.f32.mrb[0].mxu0
        %v885 = vadd.f32 %v489, %v884
        %886 = vmatprep.mubr.f32.mxu0 %v271
        %887 = vmatmul.mubr.f32.gmra.mrb[0].mxu0 %v270
        %v888 = vpop.f32.mrb[0].mxu0
        %v889 = vadd.f32 %v485, %v888
        %v890 = vpop.f32.mrb[0].mxu0
        %v891 = vadd.f32 %v489, %v890
        %892 = vmatprep.mubr.f32.mxu0 %v273
        %893 = vmatmul.mubr.f32.gmra.mrb[0].mxu0 %v272
        %v894 = vpop.f32.mrb[0].mxu0
        %v895 = vadd.f32 %v485, %v894
        %v896 = vpop.f32.mrb[0].mxu0
        %v897 = vadd.f32 %v489, %v896
        %898 = vmatprep.mubr.f32.mxu0 %v275
        %899 = vmatmul.mubr.f32.gmra.mrb[0].mxu0 %v274
        %v900 = vpop.f32.mrb[0].mxu0
        %v901 = vadd.f32 %v485, %v900
        %v902 = vpop.f32.mrb[0].mxu0
        %v903 = vadd.f32 %v489, %v902
        %904 = vmatprep.mubr.f32.mxu0 %v277
        %905 = vmatmul.mubr.f32.gmra.mrb[0].mxu0 %v276
        %v906 = vpop.f32.mrb[0].mxu0
        %v907 = vadd.f32 %v485, %v906
        %v908 = vpop.f32.mrb[0].mxu0
        %v909 = vadd.f32 %v489, %v908
        %910 = vmatprep.mubr.f32.mxu0 %v279
        %911 = vmatmul.mubr.f32.gmra.mrb[0].mxu0 %v278
        %v912 = vpop.f32.mrb[0].mxu0
        %v913 = vadd.f32 %v485, %v912
        %v914 = vpop.f32.mrb[0].mxu0
        %v915 = vadd.f32 %v489, %v914
        %916 = vmatprep.mubr.f32.mxu0 %v281
        %917 = vmatmul.mubr.f32.gmra.mrb[0].mxu0 %v280
        %v918 = vpop.f32.mrb[0].mxu0
        %v919 = vadd.f32 %v485, %v918
        %v920 = vpop.f32.mrb[0].mxu0
        %v921 = vadd.f32 %v489, %v920
        %922 = vmatprep.mubr.f32.mxu0 %v283
        %923 = vmatmul.mubr.f32.gmra.mrb[0].mxu0 %v282
        %v924 = vpop.f32.mrb[0].mxu0
        %v925 = vadd.f32 %v485, %v924
        %v926 = vpop.f32.mrb[0].mxu0
        %v927 = vadd.f32 %v489, %v926
        %928 = vmatprep.mubr.f32.mxu0 %v285
        %929 = vmatmul.mubr.f32.gmra.mrb[0].mxu0 %v284
        %v930 = vpop.f32.mrb[0].mxu0
        %v931 = vadd.f32 %v485, %v930
        %v932 = vpop.f32.mrb[0].mxu0
        %v933 = vadd.f32 %v489, %v932
        %934 = vmatprep.mubr.f32.mxu0 %v287
        %935 = vmatmul.mubr.f32.gmra.mrb[0].mxu0 %v286
        %v936 = vpop.f32.mrb[0].mxu0
        %v937 = vadd.f32 %v485, %v936
        %v938 = vpop.f32.mrb[0].mxu0
        %v939 = vadd.f32 %v489, %v938
        %940 = vmatprep.mubr.f32.mxu0 %v289
        %941 = vmatmul.mubr.f32.gmra.mrb[0].mxu0 %v288
        %v942 = vpop.f32.mrb[0].mxu0
        %v943 = vadd.f32 %v485, %v942
        %v944 = vpop.f32.mrb[0].mxu0
        %v945 = vadd.f32 %v489, %v944
        %946 = vmatprep.mubr.f32.mxu0 %v291
        %947 = vmatmul.mubr.f32.gmra.mrb[0].mxu0 %v290
        %v948 = vpop.f32.mrb[0].mxu0
        %v949 = vadd.f32 %v485, %v948
        %v950 = vpop.f32.mrb[0].mxu0
        %v951 = vadd.f32 %v489, %v950
        %952 = vmatprep.mubr.f32.mxu0 %v293
        %953 = vmatmul.mubr.f32.gmra.mrb[0].mxu0 %v292
        %v954 = vpop.f32.mrb[0].mxu0
        %v955 = vadd.f32 %v485, %v954
        %v956 = vpop.f32.mrb[0].mxu0
        %v957 = vadd.f32 %v489, %v956
        %958 = vmatprep.mubr.f32.mxu0 %v295
        %959 = vmatmul.mubr.f32.gmra.mrb[0].mxu0 %v294
        %v960 = vpop.f32.mrb[0].mxu0
        %v961 = vadd.f32 %v485, %v960
        %v962 = vpop.f32.mrb[0].mxu0
        %v963 = vadd.f32 %v489, %v962
        %964 = vmatprep.mubr.f32.mxu0 %v297
        %965 = vmatmul.mubr.f32.gmra.mrb[0].mxu0 %v296
        %v966 = vpop.f32.mrb[0].mxu0
        %v967 = vadd.f32 %v485, %v966
        %v968 = vpop.f32.mrb[0].mxu0
        %v969 = vadd.f32 %v489, %v968
        %970 = vmatprep.mubr.f32.mxu0 %v299
        %971 = vmatmul.mubr.f32.gmra.mrb[0].mxu0 %v298
        %v972 = vpop.f32.mrb[0].mxu0
        %v973 = vadd.f32 %v485, %v972
        %v974 = vpop.f32.mrb[0].mxu0
        %v975 = vadd.f32 %v489, %v974
        %976 = vmatprep.mubr.f32.mxu0 %v301
        %977 = vmatmul.mubr.f32.gmra.mrb[0].mxu0 %v300
        %v978 = vpop.f32.mrb[0].mxu0
        %v979 = vadd.f32 %v485, %v978
        %v980 = vpop.f32.mrb[0].mxu0
        %v981 = vadd.f32 %v489, %v980
        %982 = vmatprep.mubr.f32.mxu0 %v303
        %983 = vmatmul.mubr.f32.gmra.mrb[0].mxu0 %v302
        %v984 = vpop.f32.mrb[0].mxu0
        %v985 = vadd.f32 %v485, %v984
        %v986 = vpop.f32.mrb[0].mxu0
        %v987 = vadd.f32 %v489, %v986
        %988 = vmatprep.mubr.f32.mxu0 %v305
        %989 = vmatmul.mubr.f32.gmra.mrb[0].mxu0 %v304
        %v990 = vpop.f32.mrb[0].mxu0
        %v991 = vadd.f32 %v485, %v990
        %v992 = vpop.f32.mrb[0].mxu0
        %v993 = vadd.f32 %v489, %v992
        %994 = vmatprep.mubr.f32.mxu0 %v307
        %995 = vmatmul.mubr.f32.gmra.mrb[0].mxu0 %v306
        %v996 = vpop.f32.mrb[0].mxu0
        %v997 = vadd.f32 %v485, %v996
        %v998 = vpop.f32.mrb[0].mxu0
        %v999 = vadd.f32 %v489, %v998
        %1000 = vmatprep.mubr.f32.mxu0 %v309
        %1001 = vmatmul.mubr.f32.gmra.mrb[0].mxu0 %v308
        %v1002 = vpop.f32.mrb[0].mxu0
        %v1003 = vadd.f32 %v485, %v1002
        %v1004 = vpop.f32.mrb[0].mxu0
        %v1005 = vadd.f32 %v489, %v1004
        %1006 = vmatprep.mubr.f32.mxu0 %v311
        %1007 = vmatmul.mubr.f32.gmra.mrb[0].mxu0 %v310
        %v1008 = vpop.f32.mrb[0].mxu0
        %v1009 = vadd.f32 %v485, %v1008
        %v1010 = vpop.f32.mrb[0].mxu0
        %v1011 = vadd.f32 %v489, %v1010
        %1012 = vdwg.mxu0
        %1013 = vmatprep.subr.mxu0 0.0
        %1014 = vmatpush1.msra.mxu0 %v316
        %1015 = vmatprep.subr.mxu0 0.0
        %1016 = vmatpush1.msra.mxu0 %v321
        %1017 = vmatprep.subr.mxu0 0.0
        %1018 = vmatpush1.msra.mxu0 %v326
        %1019 = vmatprep.subr.mxu0 0.0
        %1020 = vmatpush1.msra.mxu0 %v331
        %1021 = vmatprep.subr.mxu0 0.0
        %1022 = vmatpush1.msra.mxu0 %v336
        %1023 = vmatprep.subr.mxu0 0.0
        %1024 = vmatpush1.msra.mxu0 %v341
        %1025 = vmatprep.subr.mxu0 0.0
        %1026 = vmatpush1.msra.mxu0 %v346
        %1027 = vmatprep.subr.mxu0 0.0
        %1028 = vmatpush1.msra.mxu0 %v351
        %1029 = vmatprep.subr.mxu0 0.0
        %1030 = vmatpush1.msra.mxu0 %v356
        %1031 = vmatprep.subr.mxu0 0.0
        %1032 = vmatpush1.msra.mxu0 %v361
        %1033 = vmatprep.subr.mxu0 0.0
        %1034 = vmatpush1.msra.mxu0 %v366
        %1035 = vmatprep.subr.mxu0 0.0
        %1036 = vmatpush1.msra.mxu0 %v371
        %1037 = vmatprep.subr.mxu0 0.0
        %1038 = vmatpush1.msra.mxu0 %v376
        %1039 = vmatprep.subr.mxu0 0.0
        %1040 = vmatpush1.msra.mxu0 %v381
        %1041 = vmatprep.subr.mxu0 0.0
        %1042 = vmatpush1.msra.mxu0 %v386
        %1043 = vmatprep.subr.mxu0 0.0
        %1044 = vmatpush1.msra.mxu0 %v391
        %1045 = vmatprep.subr.mxu0 0.0
        %1046 = vmatpush1.msra.mxu0 %v396
        %1047 = vmatprep.subr.mxu0 0.0
        %1048 = vmatpush1.msra.mxu0 %v401
        %1049 = vmatprep.subr.mxu0 0.0
        %1050 = vmatpush1.msra.mxu0 %v406
        %1051 = vmatprep.subr.mxu0 0.0
        %1052 = vmatpush1.msra.mxu0 %v411
        %1053 = vmatprep.subr.mxu0 0.0
        %1054 = vmatpush1.msra.mxu0 %v416
        %1055 = vmatprep.subr.mxu0 0.0
        %1056 = vmatpush1.msra.mxu0 %v421
        %1057 = vmatprep.subr.mxu0 0.0
        %1058 = vmatpush1.msra.mxu0 %v426
        %1059 = vmatprep.subr.mxu0 0.0
        %1060 = vmatpush1.msra.mxu0 %v431
        %1061 = vmatprep.subr.mxu0 0.0
        %1062 = vmatpush1.msra.mxu0 %v436
        %1063 = vmatprep.subr.mxu0 0.0
        %1064 = vmatpush1.msra.mxu0 %v441
        %1065 = vmatprep.subr.mxu0 0.0
        %1066 = vmatpush1.msra.mxu0 %v446
        %1067 = vmatprep.subr.mxu0 0.0
        %1068 = vmatpush1.msra.mxu0 %v451
        %1069 = vmatprep.subr.mxu0 0.0
        %1070 = vmatpush1.msra.mxu0 %v456
        %1071 = vmatprep.subr.mxu0 0.0
        %1072 = vmatpush1.msra.mxu0 %v461
        %1073 = vmatprep.subr.mxu0 0.0
        %1074 = vmatpush1.msra.mxu0 %v466
        %1075 = vmatprep.subr.mxu0 0.0
        %1076 = vmatpush1.msra.mxu0 %v471
        %1077 = vmatprep.mubr.f32.mxu0 %v249
        %1078 = vmatmul.mubr.f32.gmra.mrb[0].mxu0 %v248
        %v1079 = vpop.f32.mrb[0].mxu0
        %v1080 = vadd.f32 %v493, %v1079
        %v1081 = vpop.f32.mrb[0].mxu0
        %1082 = vmatprep.mubr.f32.mxu0 %v251
        %1083 = vmatmul.mubr.f32.gmra.mrb[0].mxu0 %v250
        %v1084 = vpop.f32.mrb[0].mxu0
        %v1085 = vadd.f32 %v493, %v1084
        %v1086 = vpop.f32.mrb[0].mxu0
        %1087 = vmatprep.mubr.f32.mxu0 %v253
        %1088 = vmatmul.mubr.f32.gmra.mrb[0].mxu0 %v252
        %v1089 = vpop.f32.mrb[0].mxu0
        %v1090 = vadd.f32 %v493, %v1089
        %v1091 = vpop.f32.mrb[0].mxu0
        %1092 = vmatprep.mubr.f32.mxu0 %v255
        %1093 = vmatmul.mubr.f32.gmra.mrb[0].mxu0 %v254
        %v1094 = vpop.f32.mrb[0].mxu0
        %v1095 = vadd.f32 %v493, %v1094
        %v1096 = vpop.f32.mrb[0].mxu0
        %1097 = vmatprep.mubr.f32.mxu0 %v257
        %1098 = vmatmul.mubr.f32.gmra.mrb[0].mxu0 %v256
        %v1099 = vpop.f32.mrb[0].mxu0
        %v1100 = vadd.f32 %v493, %v1099
        %v1101 = vpop.f32.mrb[0].mxu0
        %1102 = vmatprep.mubr.f32.mxu0 %v259
        %1103 = vmatmul.mubr.f32.gmra.mrb[0].mxu0 %v258
        %v1104 = vpop.f32.mrb[0].mxu0
        %v1105 = vadd.f32 %v493, %v1104
        %v1106 = vpop.f32.mrb[0].mxu0
        %1107 = vmatprep.mubr.f32.mxu0 %v261
        %1108 = vmatmul.mubr.f32.gmra.mrb[0].mxu0 %v260
        %v1109 = vpop.f32.mrb[0].mxu0
        %v1110 = vadd.f32 %v493, %v1109
        %v1111 = vpop.f32.mrb[0].mxu0
        %1112 = vmatprep.mubr.f32.mxu0 %v263
        %1113 = vmatmul.mubr.f32.gmra.mrb[0].mxu0 %v262
        %v1114 = vpop.f32.mrb[0].mxu0
        %v1115 = vadd.f32 %v493, %v1114
        %v1116 = vpop.f32.mrb[0].mxu0
        %1117 = vmatprep.mubr.f32.mxu0 %v265
        %1118 = vmatmul.mubr.f32.gmra.mrb[0].mxu0 %v264
        %v1119 = vpop.f32.mrb[0].mxu0
        %v1120 = vadd.f32 %v493, %v1119
        %v1121 = vpop.f32.mrb[0].mxu0
        %1122 = vmatprep.mubr.f32.mxu0 %v267
        %1123 = vmatmul.mubr.f32.gmra.mrb[0].mxu0 %v266
        %v1124 = vpop.f32.mrb[0].mxu0
        %v1125 = vadd.f32 %v493, %v1124
        %v1126 = vpop.f32.mrb[0].mxu0
        %1127 = vmatprep.mubr.f32.mxu0 %v269
        %1128 = vmatmul.mubr.f32.gmra.mrb[0].mxu0 %v268
        %v1129 = vpop.f32.mrb[0].mxu0
        %v1130 = vadd.f32 %v493, %v1129
        %v1131 = vpop.f32.mrb[0].mxu0
        %1132 = vmatprep.mubr.f32.mxu0 %v271
        %1133 = vmatmul.mubr.f32.gmra.mrb[0].mxu0 %v270
        %v1134 = vpop.f32.mrb[0].mxu0
        %v1135 = vadd.f32 %v493, %v1134
        %v1136 = vpop.f32.mrb[0].mxu0
        %1137 = vmatprep.mubr.f32.mxu0 %v273
        %1138 = vmatmul.mubr.f32.gmra.mrb[0].mxu0 %v272
        %v1139 = vpop.f32.mrb[0].mxu0
        %v1140 = vadd.f32 %v493, %v1139
        %v1141 = vpop.f32.mrb[0].mxu0
        %1142 = vmatprep.mubr.f32.mxu0 %v275
        %1143 = vmatmul.mubr.f32.gmra.mrb[0].mxu0 %v274
        %v1144 = vpop.f32.mrb[0].mxu0
        %v1145 = vadd.f32 %v493, %v1144
        %v1146 = vpop.f32.mrb[0].mxu0
        %1147 = vmatprep.mubr.f32.mxu0 %v277
        %1148 = vmatmul.mubr.f32.gmra.mrb[0].mxu0 %v276
        %v1149 = vpop.f32.mrb[0].mxu0
        %v1150 = vadd.f32 %v493, %v1149
        %v1151 = vpop.f32.mrb[0].mxu0
        %1152 = vmatprep.mubr.f32.mxu0 %v279
        %1153 = vmatmul.mubr.f32.gmra.mrb[0].mxu0 %v278
        %v1154 = vpop.f32.mrb[0].mxu0
        %v1155 = vadd.f32 %v493, %v1154
        %v1156 = vpop.f32.mrb[0].mxu0
        %1157 = vmatprep.mubr.f32.mxu0 %v281
        %1158 = vmatmul.mubr.f32.gmra.mrb[0].mxu0 %v280
        %v1159 = vpop.f32.mrb[0].mxu0
        %v1160 = vadd.f32 %v493, %v1159
        %v1161 = vpop.f32.mrb[0].mxu0
        %1162 = vmatprep.mubr.f32.mxu0 %v283
        %1163 = vmatmul.mubr.f32.gmra.mrb[0].mxu0 %v282
        %v1164 = vpop.f32.mrb[0].mxu0
        %v1165 = vadd.f32 %v493, %v1164
        %v1166 = vpop.f32.mrb[0].mxu0
        %1167 = vmatprep.mubr.f32.mxu0 %v285
        %1168 = vmatmul.mubr.f32.gmra.mrb[0].mxu0 %v284
        %v1169 = vpop.f32.mrb[0].mxu0
        %v1170 = vadd.f32 %v493, %v1169
        %v1171 = vpop.f32.mrb[0].mxu0
        %1172 = vmatprep.mubr.f32.mxu0 %v287
        %1173 = vmatmul.mubr.f32.gmra.mrb[0].mxu0 %v286
        %v1174 = vpop.f32.mrb[0].mxu0
        %v1175 = vadd.f32 %v493, %v1174
        %v1176 = vpop.f32.mrb[0].mxu0
        %1177 = vmatprep.mubr.f32.mxu0 %v289
        %1178 = vmatmul.mubr.f32.gmra.mrb[0].mxu0 %v288
        %v1179 = vpop.f32.mrb[0].mxu0
        %v1180 = vadd.f32 %v493, %v1179
        %v1181 = vpop.f32.mrb[0].mxu0
        %1182 = vmatprep.mubr.f32.mxu0 %v291
        %1183 = vmatmul.mubr.f32.gmra.mrb[0].mxu0 %v290
        %v1184 = vpop.f32.mrb[0].mxu0
        %v1185 = vadd.f32 %v493, %v1184
        %v1186 = vpop.f32.mrb[0].mxu0
        %1187 = vmatprep.mubr.f32.mxu0 %v293
        %1188 = vmatmul.mubr.f32.gmra.mrb[0].mxu0 %v292
        %v1189 = vpop.f32.mrb[0].mxu0
        %v1190 = vadd.f32 %v493, %v1189
        %v1191 = vpop.f32.mrb[0].mxu0
        %1192 = vmatprep.mubr.f32.mxu0 %v295
        %1193 = vmatmul.mubr.f32.gmra.mrb[0].mxu0 %v294
        %v1194 = vpop.f32.mrb[0].mxu0
        %v1195 = vadd.f32 %v493, %v1194
        %v1196 = vpop.f32.mrb[0].mxu0
        %1197 = vmatprep.mubr.f32.mxu0 %v297
        %1198 = vmatmul.mubr.f32.gmra.mrb[0].mxu0 %v296
        %v1199 = vpop.f32.mrb[0].mxu0
        %v1200 = vadd.f32 %v493, %v1199
        %v1201 = vpop.f32.mrb[0].mxu0
        %1202 = vmatprep.mubr.f32.mxu0 %v299
        %1203 = vmatmul.mubr.f32.gmra.mrb[0].mxu0 %v298
        %v1204 = vpop.f32.mrb[0].mxu0
        %v1205 = vadd.f32 %v493, %v1204
        %v1206 = vpop.f32.mrb[0].mxu0
        %1207 = vmatprep.mubr.f32.mxu0 %v301
        %1208 = vmatmul.mubr.f32.gmra.mrb[0].mxu0 %v300
        %v1209 = vpop.f32.mrb[0].mxu0
        %v1210 = vadd.f32 %v493, %v1209
        %v1211 = vpop.f32.mrb[0].mxu0
        %1212 = vmatprep.mubr.f32.mxu0 %v303
        %1213 = vmatmul.mubr.f32.gmra.mrb[0].mxu0 %v302
        %v1214 = vpop.f32.mrb[0].mxu0
        %v1215 = vadd.f32 %v493, %v1214
        %v1216 = vpop.f32.mrb[0].mxu0
        %1217 = vmatprep.mubr.f32.mxu0 %v305
        %1218 = vmatmul.mubr.f32.gmra.mrb[0].mxu0 %v304
        %v1219 = vpop.f32.mrb[0].mxu0
        %v1220 = vadd.f32 %v493, %v1219
        %v1221 = vpop.f32.mrb[0].mxu0
        %1222 = vmatprep.mubr.f32.mxu0 %v307
        %1223 = vmatmul.mubr.f32.gmra.mrb[0].mxu0 %v306
        %v1224 = vpop.f32.mrb[0].mxu0
        %v1225 = vadd.f32 %v493, %v1224
        %v1226 = vpop.f32.mrb[0].mxu0
        %1227 = vmatprep.mubr.f32.mxu0 %v309
        %1228 = vmatmul.mubr.f32.gmra.mrb[0].mxu0 %v308
        %v1229 = vpop.f32.mrb[0].mxu0
        %v1230 = vadd.f32 %v493, %v1229
        %v1231 = vpop.f32.mrb[0].mxu0
        %1232 = vmatprep.mubr.f32.mxu0 %v311
        %1233 = vmatmul.mubr.f32.gmra.mrb[0].mxu0 %v310
        %v1234 = vpop.f32.mrb[0].mxu0
        %v1235 = vadd.f32 %v493, %v1234
        %v1236 = vpop.f32.mrb[0].mxu0
        %1237 = vdwg.mxu0
        %v1238 = vmul.f32 %v566, 0.5
        %v1239 = vmul.f32 %v568, 0.5
        %v1240 = vmul.f32 %v823, 0.5
        %v1241 = vmul.f32 %v825, 0.5
        %v1242 = vmul.f32 %v1080, 0.5
        %v1243 = vmul.f32 %v572, 0.5
        %v1244 = vmul.f32 %v574, 0.5
        %v1245 = vmul.f32 %v829, 0.5
        %v1246 = vmul.f32 %v831, 0.5
        %v1247 = vmul.f32 %v1085, 0.5
        %v1248 = vmul.f32 %v578, 0.5
        %v1249 = vmul.f32 %v580, 0.5
        %v1250 = vmul.f32 %v835, 0.5
        %v1251 = vmul.f32 %v837, 0.5
        %v1252 = vmul.f32 %v1090, 0.5
        %v1253 = vmul.f32 %v584, 0.5
        %v1254 = vmul.f32 %v586, 0.5
        %v1255 = vmul.f32 %v841, 0.5
        %v1256 = vmul.f32 %v843, 0.5
        %v1257 = vmul.f32 %v1095, 0.5
        %v1258 = vmul.f32 %v590, 0.5
        %v1259 = vmul.f32 %v592, 0.5
        %v1260 = vmul.f32 %v847, 0.5
        %v1261 = vmul.f32 %v849, 0.5
        %v1262 = vmul.f32 %v1100, 0.5
        %v1263 = vmul.f32 %v596, 0.5
        %v1264 = vmul.f32 %v598, 0.5
        %v1265 = vmul.f32 %v853, 0.5
        %v1266 = vmul.f32 %v855, 0.5
        %v1267 = vmul.f32 %v1105, 0.5
        %v1268 = vmul.f32 %v602, 0.5
        %v1269 = vmul.f32 %v604, 0.5
        %v1270 = vmul.f32 %v859, 0.5
        %v1271 = vmul.f32 %v861, 0.5
        %v1272 = vmul.f32 %v1110, 0.5
        %v1273 = vmul.f32 %v608, 0.5
        %v1274 = vmul.f32 %v610, 0.5
        %v1275 = vmul.f32 %v865, 0.5
        %v1276 = vmul.f32 %v867, 0.5
        %v1277 = vmul.f32 %v1115, 0.5
        %v1278 = vmul.f32 %v614, 0.5
        %v1279 = vmul.f32 %v616, 0.5
        %v1280 = vmul.f32 %v871, 0.5
        %v1281 = vmul.f32 %v873, 0.5
        %v1282 = vmul.f32 %v1120, 0.5
        %v1283 = vmul.f32 %v620, 0.5
        %v1284 = vmul.f32 %v622, 0.5
        %v1285 = vmul.f32 %v877, 0.5
        %v1286 = vmul.f32 %v879, 0.5
        %v1287 = vmul.f32 %v1125, 0.5
        %v1288 = vmul.f32 %v626, 0.5
        %v1289 = vmul.f32 %v628, 0.5
        %v1290 = vmul.f32 %v883, 0.5
        %v1291 = vmul.f32 %v885, 0.5
        %v1292 = vmul.f32 %v1130, 0.5
        %v1293 = vmul.f32 %v632, 0.5
        %v1294 = vmul.f32 %v634, 0.5
        %v1295 = vmul.f32 %v889, 0.5
        %v1296 = vmul.f32 %v891, 0.5
        %v1297 = vmul.f32 %v1135, 0.5
        %v1298 = vmul.f32 %v638, 0.5
        %v1299 = vmul.f32 %v640, 0.5
        %v1300 = vmul.f32 %v895, 0.5
        %v1301 = vmul.f32 %v897, 0.5
        %v1302 = vmul.f32 %v1140, 0.5
        %v1303 = vmul.f32 %v644, 0.5
        %v1304 = vmul.f32 %v646, 0.5
        %v1305 = vmul.f32 %v901, 0.5
        %v1306 = vmul.f32 %v903, 0.5
        %v1307 = vmul.f32 %v1145, 0.5
        %v1308 = vmul.f32 %v650, 0.5
        %v1309 = vmul.f32 %v652, 0.5
        %v1310 = vmul.f32 %v907, 0.5
        %v1311 = vmul.f32 %v909, 0.5
        %v1312 = vmul.f32 %v1150, 0.5
        %v1313 = vmul.f32 %v656, 0.5
        %v1314 = vmul.f32 %v658, 0.5
        %v1315 = vmul.f32 %v913, 0.5
        %v1316 = vmul.f32 %v915, 0.5
        %v1317 = vmul.f32 %v1155, 0.5
        %v1318 = vmul.f32 %v662, 0.5
        %v1319 = vmul.f32 %v664, 0.5
        %v1320 = vmul.f32 %v919, 0.5
        %v1321 = vmul.f32 %v921, 0.5
        %v1322 = vmul.f32 %v1160, 0.5
        %v1323 = vmul.f32 %v668, 0.5
        %v1324 = vmul.f32 %v670, 0.5
        %v1325 = vmul.f32 %v925, 0.5
        %v1326 = vmul.f32 %v927, 0.5
        %v1327 = vmul.f32 %v1165, 0.5
        %v1328 = vmul.f32 %v674, 0.5
        %v1329 = vmul.f32 %v676, 0.5
        %v1330 = vmul.f32 %v931, 0.5
        %v1331 = vmul.f32 %v933, 0.5
        %v1332 = vmul.f32 %v1170, 0.5
        %v1333 = vmul.f32 %v680, 0.5
        %v1334 = vmul.f32 %v682, 0.5
        %v1335 = vmul.f32 %v937, 0.5
        %v1336 = vmul.f32 %v939, 0.5
        %v1337 = vmul.f32 %v1175, 0.5
        %v1338 = vmul.f32 %v686, 0.5
        %v1339 = vmul.f32 %v688, 0.5
        %v1340 = vmul.f32 %v943, 0.5
        %v1341 = vmul.f32 %v945, 0.5
        %v1342 = vmul.f32 %v1180, 0.5
        %v1343 = vmul.f32 %v692, 0.5
        %v1344 = vmul.f32 %v694, 0.5
        %v1345 = vmul.f32 %v949, 0.5
        %v1346 = vmul.f32 %v951, 0.5
        %v1347 = vmul.f32 %v1185, 0.5
        %v1348 = vmul.f32 %v698, 0.5
        %v1349 = vmul.f32 %v700, 0.5
        %v1350 = vmul.f32 %v955, 0.5
        %v1351 = vmul.f32 %v957, 0.5
        %v1352 = vmul.f32 %v1190, 0.5
        %v1353 = vmul.f32 %v704, 0.5
        %v1354 = vmul.f32 %v706, 0.5
        %v1355 = vmul.f32 %v961, 0.5
        %v1356 = vmul.f32 %v963, 0.5
        %v1357 = vmul.f32 %v1195, 0.5
        %v1358 = vmul.f32 %v710, 0.5
        %v1359 = vmul.f32 %v712, 0.5
        %v1360 = vmul.f32 %v967, 0.5
        %v1361 = vmul.f32 %v969, 0.5
        %v1362 = vmul.f32 %v1200, 0.5
        %v1363 = vmul.f32 %v716, 0.5
        %v1364 = vmul.f32 %v718, 0.5
        %v1365 = vmul.f32 %v973, 0.5
        %v1366 = vmul.f32 %v975, 0.5
        %v1367 = vmul.f32 %v1205, 0.5
        %v1368 = vmul.f32 %v722, 0.5
        %v1369 = vmul.f32 %v724, 0.5
        %v1370 = vmul.f32 %v979, 0.5
        %v1371 = vmul.f32 %v981, 0.5
        %v1372 = vmul.f32 %v1210, 0.5
        %v1373 = vmul.f32 %v728, 0.5
        %v1374 = vmul.f32 %v730, 0.5
        %v1375 = vmul.f32 %v985, 0.5
        %v1376 = vmul.f32 %v987, 0.5
        %v1377 = vmul.f32 %v1215, 0.5
        %v1378 = vmul.f32 %v734, 0.5
        %v1379 = vmul.f32 %v736, 0.5
        %v1380 = vmul.f32 %v991, 0.5
        %v1381 = vmul.f32 %v993, 0.5
        %v1382 = vmul.f32 %v1220, 0.5
        %v1383 = vmul.f32 %v740, 0.5
        %v1384 = vmul.f32 %v742, 0.5
        %v1385 = vmul.f32 %v997, 0.5
        %v1386 = vmul.f32 %v999, 0.5
        %v1387 = vmul.f32 %v1225, 0.5
        %v1388 = vmul.f32 %v746, 0.5
        %v1389 = vmul.f32 %v748, 0.5
        %v1390 = vmul.f32 %v1003, 0.5
        %v1391 = vmul.f32 %v1005, 0.5
        %v1392 = vmul.f32 %v1230, 0.5
        %v1393 = vmul.f32 %v752, 0.5
        %v1394 = vmul.f32 %v754, 0.5
        %v1395 = vmul.f32 %v1009, 0.5
        %v1396 = vmul.f32 %v1011, 0.5
        %v1397 = vmul.f32 %v1235, 0.5
        %v1398 = vmul.f32 %v566, %v566
        %v1399 = vmul.f32 %v568, %v568
        %v1400 = vmul.f32 %v823, %v823
        %v1401 = vmul.f32 %v825, %v825
        %v1402 = vmul.f32 %v1080, %v1080
        %v1403 = vmul.f32 %v572, %v572
        %v1404 = vmul.f32 %v574, %v574
        %v1405 = vmul.f32 %v829, %v829
        %v1406 = vmul.f32 %v831, %v831
        %v1407 = vmul.f32 %v1085, %v1085
        %v1408 = vmul.f32 %v578, %v578
        %v1409 = vmul.f32 %v580, %v580
        %v1410 = vmul.f32 %v835, %v835
        %v1411 = vmul.f32 %v837, %v837
        %v1412 = vmul.f32 %v1090, %v1090
        %v1413 = vmul.f32 %v584, %v584
        %v1414 = vmul.f32 %v586, %v586
        %v1415 = vmul.f32 %v841, %v841
        %v1416 = vmul.f32 %v843, %v843
        %v1417 = vmul.f32 %v1095, %v1095
        %v1418 = vmul.f32 %v590, %v590
        %v1419 = vmul.f32 %v592, %v592
        %v1420 = vmul.f32 %v847, %v847
        %v1421 = vmul.f32 %v849, %v849
        %v1422 = vmul.f32 %v1100, %v1100
        %v1423 = vmul.f32 %v596, %v596
        %v1424 = vmul.f32 %v598, %v598
        %v1425 = vmul.f32 %v853, %v853
        %v1426 = vmul.f32 %v855, %v855
        %v1427 = vmul.f32 %v1105, %v1105
        %v1428 = vmul.f32 %v602, %v602
        %v1429 = vmul.f32 %v604, %v604
        %v1430 = vmul.f32 %v859, %v859
        %v1431 = vmul.f32 %v861, %v861
        %v1432 = vmul.f32 %v1110, %v1110
        %v1433 = vmul.f32 %v608, %v608
        %v1434 = vmul.f32 %v610, %v610
        %v1435 = vmul.f32 %v865, %v865
        %v1436 = vmul.f32 %v867, %v867
        %v1437 = vmul.f32 %v1115, %v1115
        %v1438 = vmul.f32 %v614, %v614
        %v1439 = vmul.f32 %v616, %v616
        %v1440 = vmul.f32 %v871, %v871
        %v1441 = vmul.f32 %v873, %v873
        %v1442 = vmul.f32 %v1120, %v1120
        %v1443 = vmul.f32 %v620, %v620
        %v1444 = vmul.f32 %v622, %v622
        %v1445 = vmul.f32 %v877, %v877
        %v1446 = vmul.f32 %v879, %v879
        %v1447 = vmul.f32 %v1125, %v1125
        %v1448 = vmul.f32 %v626, %v626
        %v1449 = vmul.f32 %v628, %v628
        %v1450 = vmul.f32 %v883, %v883
        %v1451 = vmul.f32 %v885, %v885
        %v1452 = vmul.f32 %v1130, %v1130
        %v1453 = vmul.f32 %v632, %v632
        %v1454 = vmul.f32 %v634, %v634
        %v1455 = vmul.f32 %v889, %v889
        %v1456 = vmul.f32 %v891, %v891
        %v1457 = vmul.f32 %v1135, %v1135
        %v1458 = vmul.f32 %v638, %v638
        %v1459 = vmul.f32 %v640, %v640
        %v1460 = vmul.f32 %v895, %v895
        %v1461 = vmul.f32 %v897, %v897
        %v1462 = vmul.f32 %v1140, %v1140
        %v1463 = vmul.f32 %v644, %v644
        %v1464 = vmul.f32 %v646, %v646
        %v1465 = vmul.f32 %v901, %v901
        %v1466 = vmul.f32 %v903, %v903
        %v1467 = vmul.f32 %v1145, %v1145
        %v1468 = vmul.f32 %v650, %v650
        %v1469 = vmul.f32 %v652, %v652
        %v1470 = vmul.f32 %v907, %v907
        %v1471 = vmul.f32 %v909, %v909
        %v1472 = vmul.f32 %v1150, %v1150
        %v1473 = vmul.f32 %v656, %v656
        %v1474 = vmul.f32 %v658, %v658
        %v1475 = vmul.f32 %v913, %v913
        %v1476 = vmul.f32 %v915, %v915
        %v1477 = vmul.f32 %v1155, %v1155
        %v1478 = vmul.f32 %v662, %v662
        %v1479 = vmul.f32 %v664, %v664
        %v1480 = vmul.f32 %v919, %v919
        %v1481 = vmul.f32 %v921, %v921
        %v1482 = vmul.f32 %v1160, %v1160
        %v1483 = vmul.f32 %v668, %v668
        %v1484 = vmul.f32 %v670, %v670
        %v1485 = vmul.f32 %v925, %v925
        %v1486 = vmul.f32 %v927, %v927
        %v1487 = vmul.f32 %v1165, %v1165
        %v1488 = vmul.f32 %v674, %v674
        %v1489 = vmul.f32 %v676, %v676
        %v1490 = vmul.f32 %v931, %v931
        %v1491 = vmul.f32 %v933, %v933
        %v1492 = vmul.f32 %v1170, %v1170
        %v1493 = vmul.f32 %v680, %v680
        %v1494 = vmul.f32 %v682, %v682
        %v1495 = vmul.f32 %v937, %v937
        %v1496 = vmul.f32 %v939, %v939
        %v1497 = vmul.f32 %v1175, %v1175
        %v1498 = vmul.f32 %v686, %v686
        %v1499 = vmul.f32 %v688, %v688
        %v1500 = vmul.f32 %v943, %v943
        %v1501 = vmul.f32 %v945, %v945
        %v1502 = vmul.f32 %v1180, %v1180
        %v1503 = vmul.f32 %v692, %v692
        %v1504 = vmul.f32 %v694, %v694
        %v1505 = vmul.f32 %v949, %v949
        %v1506 = vmul.f32 %v951, %v951
        %v1507 = vmul.f32 %v1185, %v1185
        %v1508 = vmul.f32 %v698, %v698
        %v1509 = vmul.f32 %v700, %v700
        %v1510 = vmul.f32 %v955, %v955
        %v1511 = vmul.f32 %v957, %v957
        %v1512 = vmul.f32 %v1190, %v1190
        %v1513 = vmul.f32 %v704, %v704
        %v1514 = vmul.f32 %v706, %v706
        %v1515 = vmul.f32 %v961, %v961
        %v1516 = vmul.f32 %v963, %v963
        %v1517 = vmul.f32 %v1195, %v1195
        %v1518 = vmul.f32 %v710, %v710
        %v1519 = vmul.f32 %v712, %v712
        %v1520 = vmul.f32 %v967, %v967
        %v1521 = vmul.f32 %v969, %v969
        %v1522 = vmul.f32 %v1200, %v1200
        %v1523 = vmul.f32 %v716, %v716
        %v1524 = vmul.f32 %v718, %v718
        %v1525 = vmul.f32 %v973, %v973
        %v1526 = vmul.f32 %v975, %v975
        %v1527 = vmul.f32 %v1205, %v1205
        %v1528 = vmul.f32 %v722, %v722
        %v1529 = vmul.f32 %v724, %v724
        %v1530 = vmul.f32 %v979, %v979
        %v1531 = vmul.f32 %v981, %v981
        %v1532 = vmul.f32 %v1210, %v1210
        %v1533 = vmul.f32 %v728, %v728
        %v1534 = vmul.f32 %v730, %v730
        %v1535 = vmul.f32 %v985, %v985
        %v1536 = vmul.f32 %v987, %v987
        %v1537 = vmul.f32 %v1215, %v1215
        %v1538 = vmul.f32 %v734, %v734
        %v1539 = vmul.f32 %v736, %v736
        %v1540 = vmul.f32 %v991, %v991
        %v1541 = vmul.f32 %v993, %v993
        %v1542 = vmul.f32 %v1220, %v1220
        %v1543 = vmul.f32 %v740, %v740
        %v1544 = vmul.f32 %v742, %v742
        %v1545 = vmul.f32 %v997, %v997
        %v1546 = vmul.f32 %v999, %v999
        %v1547 = vmul.f32 %v1225, %v1225
        %v1548 = vmul.f32 %v746, %v746
        %v1549 = vmul.f32 %v748, %v748
        %v1550 = vmul.f32 %v1003, %v1003
        %v1551 = vmul.f32 %v1005, %v1005
        %v1552 = vmul.f32 %v1230, %v1230
        %v1553 = vmul.f32 %v752, %v752
        %v1554 = vmul.f32 %v754, %v754
        %v1555 = vmul.f32 %v1009, %v1009
        %v1556 = vmul.f32 %v1011, %v1011
        %v1557 = vmul.f32 %v1235, %v1235
        %v1558 = vmul.f32 %v1398, %v566
        %v1559 = vmul.f32 %v1399, %v568
        %v1560 = vmul.f32 %v1400, %v823
        %v1561 = vmul.f32 %v1401, %v825
        %v1562 = vmul.f32 %v1402, %v1080
        %v1563 = vmul.f32 %v1403, %v572
        %v1564 = vmul.f32 %v1404, %v574
        %v1565 = vmul.f32 %v1405, %v829
        %v1566 = vmul.f32 %v1406, %v831
        %v1567 = vmul.f32 %v1407, %v1085
        %v1568 = vmul.f32 %v1408, %v578
        %v1569 = vmul.f32 %v1409, %v580
        %v1570 = vmul.f32 %v1410, %v835
        %v1571 = vmul.f32 %v1411, %v837
        %v1572 = vmul.f32 %v1412, %v1090
        %v1573 = vmul.f32 %v1413, %v584
        %v1574 = vmul.f32 %v1414, %v586
        %v1575 = vmul.f32 %v1415, %v841
        %v1576 = vmul.f32 %v1416, %v843
        %v1577 = vmul.f32 %v1417, %v1095
        %v1578 = vmul.f32 %v1418, %v590
        %v1579 = vmul.f32 %v1419, %v592
        %v1580 = vmul.f32 %v1420, %v847
        %v1581 = vmul.f32 %v1421, %v849
        %v1582 = vmul.f32 %v1422, %v1100
        %v1583 = vmul.f32 %v1423, %v596
        %v1584 = vmul.f32 %v1424, %v598
        %v1585 = vmul.f32 %v1425, %v853
        %v1586 = vmul.f32 %v1426, %v855
        %v1587 = vmul.f32 %v1427, %v1105
        %v1588 = vmul.f32 %v1428, %v602
        %v1589 = vmul.f32 %v1429, %v604
        %v1590 = vmul.f32 %v1430, %v859
        %v1591 = vmul.f32 %v1431, %v861
        %v1592 = vmul.f32 %v1432, %v1110
        %v1593 = vmul.f32 %v1433, %v608
        %v1594 = vmul.f32 %v1434, %v610
        %v1595 = vmul.f32 %v1435, %v865
        %v1596 = vmul.f32 %v1436, %v867
        %v1597 = vmul.f32 %v1437, %v1115
        %v1598 = vmul.f32 %v1438, %v614
        %v1599 = vmul.f32 %v1439, %v616
        %v1600 = vmul.f32 %v1440, %v871
        %v1601 = vmul.f32 %v1441, %v873
        %v1602 = vmul.f32 %v1442, %v1120
        %v1603 = vmul.f32 %v1443, %v620
        %v1604 = vmul.f32 %v1444, %v622
        %v1605 = vmul.f32 %v1445, %v877
        %v1606 = vmul.f32 %v1446, %v879
        %v1607 = vmul.f32 %v1447, %v1125
        %v1608 = vmul.f32 %v1448, %v626
        %v1609 = vmul.f32 %v1449, %v628
        %v1610 = vmul.f32 %v1450, %v883
        %v1611 = vmul.f32 %v1451, %v885
        %v1612 = vmul.f32 %v1452, %v1130
        %v1613 = vmul.f32 %v1453, %v632
        %v1614 = vmul.f32 %v1454, %v634
        %v1615 = vmul.f32 %v1455, %v889
        %v1616 = vmul.f32 %v1456, %v891
        %v1617 = vmul.f32 %v1457, %v1135
        %v1618 = vmul.f32 %v1458, %v638
        %v1619 = vmul.f32 %v1459, %v640
        %v1620 = vmul.f32 %v1460, %v895
        %v1621 = vmul.f32 %v1461, %v897
        %v1622 = vmul.f32 %v1462, %v1140
        %v1623 = vmul.f32 %v1463, %v644
        %v1624 = vmul.f32 %v1464, %v646
        %v1625 = vmul.f32 %v1465, %v901
        %v1626 = vmul.f32 %v1466, %v903
        %v1627 = vmul.f32 %v1467, %v1145
        %v1628 = vmul.f32 %v1468, %v650
        %v1629 = vmul.f32 %v1469, %v652
        %v1630 = vmul.f32 %v1470, %v907
        %v1631 = vmul.f32 %v1471, %v909
        %v1632 = vmul.f32 %v1472, %v1150
        %v1633 = vmul.f32 %v1473, %v656
        %v1634 = vmul.f32 %v1474, %v658
        %v1635 = vmul.f32 %v1475, %v913
        %v1636 = vmul.f32 %v1476, %v915
        %v1637 = vmul.f32 %v1477, %v1155
        %v1638 = vmul.f32 %v1478, %v662
        %v1639 = vmul.f32 %v1479, %v664
        %v1640 = vmul.f32 %v1480, %v919
        %v1641 = vmul.f32 %v1481, %v921
        %v1642 = vmul.f32 %v1482, %v1160
        %v1643 = vmul.f32 %v1483, %v668
        %v1644 = vmul.f32 %v1484, %v670
        %v1645 = vmul.f32 %v1485, %v925
        %v1646 = vmul.f32 %v1486, %v927
        %v1647 = vmul.f32 %v1487, %v1165
        %v1648 = vmul.f32 %v1488, %v674
        %v1649 = vmul.f32 %v1489, %v676
        %v1650 = vmul.f32 %v1490, %v931
        %v1651 = vmul.f32 %v1491, %v933
        %v1652 = vmul.f32 %v1492, %v1170
        %v1653 = vmul.f32 %v1493, %v680
        %v1654 = vmul.f32 %v1494, %v682
        %v1655 = vmul.f32 %v1495, %v937
        %v1656 = vmul.f32 %v1496, %v939
        %v1657 = vmul.f32 %v1497, %v1175
        %v1658 = vmul.f32 %v1498, %v686
        %v1659 = vmul.f32 %v1499, %v688
        %v1660 = vmul.f32 %v1500, %v943
        %v1661 = vmul.f32 %v1501, %v945
        %v1662 = vmul.f32 %v1502, %v1180
        %v1663 = vmul.f32 %v1503, %v692
        %v1664 = vmul.f32 %v1504, %v694
        %v1665 = vmul.f32 %v1505, %v949
        %v1666 = vmul.f32 %v1506, %v951
        %v1667 = vmul.f32 %v1507, %v1185
        %v1668 = vmul.f32 %v1508, %v698
        %v1669 = vmul.f32 %v1509, %v700
        %v1670 = vmul.f32 %v1510, %v955
        %v1671 = vmul.f32 %v1511, %v957
        %v1672 = vmul.f32 %v1512, %v1190
        %v1673 = vmul.f32 %v1513, %v704
        %v1674 = vmul.f32 %v1514, %v706
        %v1675 = vmul.f32 %v1515, %v961
        %v1676 = vmul.f32 %v1516, %v963
        %v1677 = vmul.f32 %v1517, %v1195
        %v1678 = vmul.f32 %v1518, %v710
        %v1679 = vmul.f32 %v1519, %v712
        %v1680 = vmul.f32 %v1520, %v967
        %v1681 = vmul.f32 %v1521, %v969
        %v1682 = vmul.f32 %v1522, %v1200
        %v1683 = vmul.f32 %v1523, %v716
        %v1684 = vmul.f32 %v1524, %v718
        %v1685 = vmul.f32 %v1525, %v973
        %v1686 = vmul.f32 %v1526, %v975
        %v1687 = vmul.f32 %v1527, %v1205
        %v1688 = vmul.f32 %v1528, %v722
        %v1689 = vmul.f32 %v1529, %v724
        %v1690 = vmul.f32 %v1530, %v979
        %v1691 = vmul.f32 %v1531, %v981
        %v1692 = vmul.f32 %v1532, %v1210
        %v1693 = vmul.f32 %v1533, %v728
        %v1694 = vmul.f32 %v1534, %v730
        %v1695 = vmul.f32 %v1535, %v985
        %v1696 = vmul.f32 %v1536, %v987
        %v1697 = vmul.f32 %v1537, %v1215
        %v1698 = vmul.f32 %v1538, %v734
        %v1699 = vmul.f32 %v1539, %v736
        %v1700 = vmul.f32 %v1540, %v991
        %v1701 = vmul.f32 %v1541, %v993
        %v1702 = vmul.f32 %v1542, %v1220
        %v1703 = vmul.f32 %v1543, %v740
        %v1704 = vmul.f32 %v1544, %v742
        %v1705 = vmul.f32 %v1545, %v997
        %v1706 = vmul.f32 %v1546, %v999
        %v1707 = vmul.f32 %v1547, %v1225
        %v1708 = vmul.f32 %v1548, %v746
        %v1709 = vmul.f32 %v1549, %v748
        %v1710 = vmul.f32 %v1550, %v1003
        %v1711 = vmul.f32 %v1551, %v1005
        %v1712 = vmul.f32 %v1552, %v1230
        %v1713 = vmul.f32 %v1553, %v752
        %v1714 = vmul.f32 %v1554, %v754
        %v1715 = vmul.f32 %v1555, %v1009
        %v1716 = vmul.f32 %v1556, %v1011
        %v1717 = vmul.f32 %v1557, %v1235
        %v1718 = vmul.f32 %v1558, 0.044715
        %v1719 = vmul.f32 %v1559, 0.044715
        %v1720 = vmul.f32 %v1560, 0.044715
        %v1721 = vmul.f32 %v1561, 0.044715
        %v1722 = vmul.f32 %v1562, 0.044715
        %v1723 = vmul.f32 %v1563, 0.044715
        %v1724 = vmul.f32 %v1564, 0.044715
        %v1725 = vmul.f32 %v1565, 0.044715
        %v1726 = vmul.f32 %v1566, 0.044715
        %v1727 = vmul.f32 %v1567, 0.044715
        %v1728 = vmul.f32 %v1568, 0.044715
        %v1729 = vmul.f32 %v1569, 0.044715
        %v1730 = vmul.f32 %v1570, 0.044715
        %v1731 = vmul.f32 %v1571, 0.044715
        %v1732 = vmul.f32 %v1572, 0.044715
        %v1733 = vmul.f32 %v1573, 0.044715
        %v1734 = vmul.f32 %v1574, 0.044715
        %v1735 = vmul.f32 %v1575, 0.044715
        %v1736 = vmul.f32 %v1576, 0.044715
        %v1737 = vmul.f32 %v1577, 0.044715
        %v1738 = vmul.f32 %v1578, 0.044715
        %v1739 = vmul.f32 %v1579, 0.044715
        %v1740 = vmul.f32 %v1580, 0.044715
        %v1741 = vmul.f32 %v1581, 0.044715
        %v1742 = vmul.f32 %v1582, 0.044715
        %v1743 = vmul.f32 %v1583, 0.044715
        %v1744 = vmul.f32 %v1584, 0.044715
        %v1745 = vmul.f32 %v1585, 0.044715
        %v1746 = vmul.f32 %v1586, 0.044715
        %v1747 = vmul.f32 %v1587, 0.044715
        %v1748 = vmul.f32 %v1588, 0.044715
        %v1749 = vmul.f32 %v1589, 0.044715
        %v1750 = vmul.f32 %v1590, 0.044715
        %v1751 = vmul.f32 %v1591, 0.044715
        %v1752 = vmul.f32 %v1592, 0.044715
        %v1753 = vmul.f32 %v1593, 0.044715
        %v1754 = vmul.f32 %v1594, 0.044715
        %v1755 = vmul.f32 %v1595, 0.044715
        %v1756 = vmul.f32 %v1596, 0.044715
        %v1757 = vmul.f32 %v1597, 0.044715
        %v1758 = vmul.f32 %v1598, 0.044715
        %v1759 = vmul.f32 %v1599, 0.044715
        %v1760 = vmul.f32 %v1600, 0.044715
        %v1761 = vmul.f32 %v1601, 0.044715
        %v1762 = vmul.f32 %v1602, 0.044715
        %v1763 = vmul.f32 %v1603, 0.044715
        %v1764 = vmul.f32 %v1604, 0.044715
        %v1765 = vmul.f32 %v1605, 0.044715
        %v1766 = vmul.f32 %v1606, 0.044715
        %v1767 = vmul.f32 %v1607, 0.044715
        %v1768 = vmul.f32 %v1608, 0.044715
        %v1769 = vmul.f32 %v1609, 0.044715
        %v1770 = vmul.f32 %v1610, 0.044715
        %v1771 = vmul.f32 %v1611, 0.044715
        %v1772 = vmul.f32 %v1612, 0.044715
        %v1773 = vmul.f32 %v1613, 0.044715
        %v1774 = vmul.f32 %v1614, 0.044715
        %v1775 = vmul.f32 %v1615, 0.044715
        %v1776 = vmul.f32 %v1616, 0.044715
        %v1777 = vmul.f32 %v1617, 0.044715
        %v1778 = vmul.f32 %v1618, 0.044715
        %v1779 = vmul.f32 %v1619, 0.044715
        %v1780 = vmul.f32 %v1620, 0.044715
        %v1781 = vmul.f32 %v1621, 0.044715
        %v1782 = vmul.f32 %v1622, 0.044715
        %v1783 = vmul.f32 %v1623, 0.044715
        %v1784 = vmul.f32 %v1624, 0.044715
        %v1785 = vmul.f32 %v1625, 0.044715
        %v1786 = vmul.f32 %v1626, 0.044715
        %v1787 = vmul.f32 %v1627, 0.044715
        %v1788 = vmul.f32 %v1628, 0.044715
        %v1789 = vmul.f32 %v1629, 0.044715
        %v1790 = vmul.f32 %v1630, 0.044715
        %v1791 = vmul.f32 %v1631, 0.044715
        %v1792 = vmul.f32 %v1632, 0.044715
        %v1793 = vmul.f32 %v1633, 0.044715
        %v1794 = vmul.f32 %v1634, 0.044715
        %v1795 = vmul.f32 %v1635, 0.044715
        %v1796 = vmul.f32 %v1636, 0.044715
        %v1797 = vmul.f32 %v1637, 0.044715
        %v1798 = vmul.f32 %v1638, 0.044715
        %v1799 = vmul.f32 %v1639, 0.044715
        %v1800 = vmul.f32 %v1640, 0.044715
        %v1801 = vmul.f32 %v1641, 0.044715
        %v1802 = vmul.f32 %v1642, 0.044715
        %v1803 = vmul.f32 %v1643, 0.044715
        %v1804 = vmul.f32 %v1644, 0.044715
        %v1805 = vmul.f32 %v1645, 0.044715
        %v1806 = vmul.f32 %v1646, 0.044715
        %v1807 = vmul.f32 %v1647, 0.044715
        %v1808 = vmul.f32 %v1648, 0.044715
        %v1809 = vmul.f32 %v1649, 0.044715
        %v1810 = vmul.f32 %v1650, 0.044715
        %v1811 = vmul.f32 %v1651, 0.044715
        %v1812 = vmul.f32 %v1652, 0.044715
        %v1813 = vmul.f32 %v1653, 0.044715
        %v1814 = vmul.f32 %v1654, 0.044715
        %v1815 = vmul.f32 %v1655, 0.044715
        %v1816 = vmul.f32 %v1656, 0.044715
        %v1817 = vmul.f32 %v1657, 0.044715
        %v1818 = vmul.f32 %v1658, 0.044715
        %v1819 = vmul.f32 %v1659, 0.044715
        %v1820 = vmul.f32 %v1660, 0.044715
        %v1821 = vmul.f32 %v1661, 0.044715
        %v1822 = vmul.f32 %v1662, 0.044715
        %v1823 = vmul.f32 %v1663, 0.044715
        %v1824 = vmul.f32 %v1664, 0.044715
        %v1825 = vmul.f32 %v1665, 0.044715
        %v1826 = vmul.f32 %v1666, 0.044715
        %v1827 = vmul.f32 %v1667, 0.044715
        %v1828 = vmul.f32 %v1668, 0.044715
        %v1829 = vmul.f32 %v1669, 0.044715
        %v1830 = vmul.f32 %v1670, 0.044715
        %v1831 = vmul.f32 %v1671, 0.044715
        %v1832 = vmul.f32 %v1672, 0.044715
        %v1833 = vmul.f32 %v1673, 0.044715
        %v1834 = vmul.f32 %v1674, 0.044715
        %v1835 = vmul.f32 %v1675, 0.044715
        %v1836 = vmul.f32 %v1676, 0.044715
        %v1837 = vmul.f32 %v1677, 0.044715
        %v1838 = vmul.f32 %v1678, 0.044715
        %v1839 = vmul.f32 %v1679, 0.044715
        %v1840 = vmul.f32 %v1680, 0.044715
        %v1841 = vmul.f32 %v1681, 0.044715
        %v1842 = vmul.f32 %v1682, 0.044715
        %v1843 = vmul.f32 %v1683, 0.044715
        %v1844 = vmul.f32 %v1684, 0.044715
        %v1845 = vmul.f32 %v1685, 0.044715
        %v1846 = vmul.f32 %v1686, 0.044715
        %v1847 = vmul.f32 %v1687, 0.044715
        %v1848 = vmul.f32 %v1688, 0.044715
        %v1849 = vmul.f32 %v1689, 0.044715
        %v1850 = vmul.f32 %v1690, 0.044715
        %v1851 = vmul.f32 %v1691, 0.044715
        %v1852 = vmul.f32 %v1692, 0.044715
        %v1853 = vmul.f32 %v1693, 0.044715
        %v1854 = vmul.f32 %v1694, 0.044715
        %v1855 = vmul.f32 %v1695, 0.044715
        %v1856 = vmul.f32 %v1696, 0.044715
        %v1857 = vmul.f32 %v1697, 0.044715
        %v1858 = vmul.f32 %v1698, 0.044715
        %v1859 = vmul.f32 %v1699, 0.044715
        %v1860 = vmul.f32 %v1700, 0.044715
        %v1861 = vmul.f32 %v1701, 0.044715
        %v1862 = vmul.f32 %v1702, 0.044715
        %v1863 = vmul.f32 %v1703, 0.044715
        %v1864 = vmul.f32 %v1704, 0.044715
        %v1865 = vmul.f32 %v1705, 0.044715
        %v1866 = vmul.f32 %v1706, 0.044715
        %v1867 = vmul.f32 %v1707, 0.044715
        %v1868 = vmul.f32 %v1708, 0.044715
        %v1869 = vmul.f32 %v1709, 0.044715
        %v1870 = vmul.f32 %v1710, 0.044715
        %v1871 = vmul.f32 %v1711, 0.044715
        %v1872 = vmul.f32 %v1712, 0.044715
        %v1873 = vmul.f32 %v1713, 0.044715
        %v1874 = vmul.f32 %v1714, 0.044715
        %v1875 = vmul.f32 %v1715, 0.044715
        %v1876 = vmul.f32 %v1716, 0.044715
        %v1877 = vmul.f32 %v1717, 0.044715
        %v1878 = vadd.f32 %v566, %v1718
        %v1879 = vadd.f32 %v568, %v1719
        %v1880 = vadd.f32 %v823, %v1720
        %v1881 = vadd.f32 %v825, %v1721
        %v1882 = vadd.f32 %v1080, %v1722
        %v1883 = vadd.f32 %v572, %v1723
        %v1884 = vadd.f32 %v574, %v1724
        %v1885 = vadd.f32 %v829, %v1725
        %v1886 = vadd.f32 %v831, %v1726
        %v1887 = vadd.f32 %v1085, %v1727
        %v1888 = vadd.f32 %v578, %v1728
        %v1889 = vadd.f32 %v580, %v1729
        %v1890 = vadd.f32 %v835, %v1730
        %v1891 = vadd.f32 %v837, %v1731
        %v1892 = vadd.f32 %v1090, %v1732
        %v1893 = vadd.f32 %v584, %v1733
        %v1894 = vadd.f32 %v586, %v1734
        %v1895 = vadd.f32 %v841, %v1735
        %v1896 = vadd.f32 %v843, %v1736
        %v1897 = vadd.f32 %v1095, %v1737
        %v1898 = vadd.f32 %v590, %v1738
        %v1899 = vadd.f32 %v592, %v1739
        %v1900 = vadd.f32 %v847, %v1740
        %v1901 = vadd.f32 %v849, %v1741
        %v1902 = vadd.f32 %v1100, %v1742
        %v1903 = vadd.f32 %v596, %v1743
        %v1904 = vadd.f32 %v598, %v1744
        %v1905 = vadd.f32 %v853, %v1745
        %v1906 = vadd.f32 %v855, %v1746
        %v1907 = vadd.f32 %v1105, %v1747
        %v1908 = vadd.f32 %v602, %v1748
        %v1909 = vadd.f32 %v604, %v1749
        %v1910 = vadd.f32 %v859, %v1750
        %v1911 = vadd.f32 %v861, %v1751
        %v1912 = vadd.f32 %v1110, %v1752
        %v1913 = vadd.f32 %v608, %v1753
        %v1914 = vadd.f32 %v610, %v1754
        %v1915 = vadd.f32 %v865, %v1755
        %v1916 = vadd.f32 %v867, %v1756
        %v1917 = vadd.f32 %v1115, %v1757
        %v1918 = vadd.f32 %v614, %v1758
        %v1919 = vadd.f32 %v616, %v1759
        %v1920 = vadd.f32 %v871, %v1760
        %v1921 = vadd.f32 %v873, %v1761
        %v1922 = vadd.f32 %v1120, %v1762
        %v1923 = vadd.f32 %v620, %v1763
        %v1924 = vadd.f32 %v622, %v1764
        %v1925 = vadd.f32 %v877, %v1765
        %v1926 = vadd.f32 %v879, %v1766
        %v1927 = vadd.f32 %v1125, %v1767
        %v1928 = vadd.f32 %v626, %v1768
        %v1929 = vadd.f32 %v628, %v1769
        %v1930 = vadd.f32 %v883, %v1770
        %v1931 = vadd.f32 %v885, %v1771
        %v1932 = vadd.f32 %v1130, %v1772
        %v1933 = vadd.f32 %v632, %v1773
        %v1934 = vadd.f32 %v634, %v1774
        %v1935 = vadd.f32 %v889, %v1775
        %v1936 = vadd.f32 %v891, %v1776
        %v1937 = vadd.f32 %v1135, %v1777
        %v1938 = vadd.f32 %v638, %v1778
        %v1939 = vadd.f32 %v640, %v1779
        %v1940 = vadd.f32 %v895, %v1780
        %v1941 = vadd.f32 %v897, %v1781
        %v1942 = vadd.f32 %v1140, %v1782
        %v1943 = vadd.f32 %v644, %v1783
        %v1944 = vadd.f32 %v646, %v1784
        %v1945 = vadd.f32 %v901, %v1785
        %v1946 = vadd.f32 %v903, %v1786
        %v1947 = vadd.f32 %v1145, %v1787
        %v1948 = vadd.f32 %v650, %v1788
        %v1949 = vadd.f32 %v652, %v1789
        %v1950 = vadd.f32 %v907, %v1790
        %v1951 = vadd.f32 %v909, %v1791
        %v1952 = vadd.f32 %v1150, %v1792
        %v1953 = vadd.f32 %v656, %v1793
        %v1954 = vadd.f32 %v658, %v1794
        %v1955 = vadd.f32 %v913, %v1795
        %v1956 = vadd.f32 %v915, %v1796
        %v1957 = vadd.f32 %v1155, %v1797
        %v1958 = vadd.f32 %v662, %v1798
        %v1959 = vadd.f32 %v664, %v1799
        %v1960 = vadd.f32 %v919, %v1800
        %v1961 = vadd.f32 %v921, %v1801
        %v1962 = vadd.f32 %v1160, %v1802
        %v1963 = vadd.f32 %v668, %v1803
        %v1964 = vadd.f32 %v670, %v1804
        %v1965 = vadd.f32 %v925, %v1805
        %v1966 = vadd.f32 %v927, %v1806
        %v1967 = vadd.f32 %v1165, %v1807
        %v1968 = vadd.f32 %v674, %v1808
        %v1969 = vadd.f32 %v676, %v1809
        %v1970 = vadd.f32 %v931, %v1810
        %v1971 = vadd.f32 %v933, %v1811
        %v1972 = vadd.f32 %v1170, %v1812
        %v1973 = vadd.f32 %v680, %v1813
        %v1974 = vadd.f32 %v682, %v1814
        %v1975 = vadd.f32 %v937, %v1815
        %v1976 = vadd.f32 %v939, %v1816
        %v1977 = vadd.f32 %v1175, %v1817
        %v1978 = vadd.f32 %v686, %v1818
        %v1979 = vadd.f32 %v688, %v1819
        %v1980 = vadd.f32 %v943, %v1820
        %v1981 = vadd.f32 %v945, %v1821
        %v1982 = vadd.f32 %v1180, %v1822
        %v1983 = vadd.f32 %v692, %v1823
        %v1984 = vadd.f32 %v694, %v1824
        %v1985 = vadd.f32 %v949, %v1825
        %v1986 = vadd.f32 %v951, %v1826
        %v1987 = vadd.f32 %v1185, %v1827
        %v1988 = vadd.f32 %v698, %v1828
        %v1989 = vadd.f32 %v700, %v1829
        %v1990 = vadd.f32 %v955, %v1830
        %v1991 = vadd.f32 %v957, %v1831
        %v1992 = vadd.f32 %v1190, %v1832
        %v1993 = vadd.f32 %v704, %v1833
        %v1994 = vadd.f32 %v706, %v1834
        %v1995 = vadd.f32 %v961, %v1835
        %v1996 = vadd.f32 %v963, %v1836
        %v1997 = vadd.f32 %v1195, %v1837
        %v1998 = vadd.f32 %v710, %v1838
        %v1999 = vadd.f32 %v712, %v1839
        %v2000 = vadd.f32 %v967, %v1840
        %v2001 = vadd.f32 %v969, %v1841
        %v2002 = vadd.f32 %v1200, %v1842
        %v2003 = vadd.f32 %v716, %v1843
        %v2004 = vadd.f32 %v718, %v1844
        %v2005 = vadd.f32 %v973, %v1845
        %v2006 = vadd.f32 %v975, %v1846
        %v2007 = vadd.f32 %v1205, %v1847
        %v2008 = vadd.f32 %v722, %v1848
        %v2009 = vadd.f32 %v724, %v1849
        %v2010 = vadd.f32 %v979, %v1850
        %v2011 = vadd.f32 %v981, %v1851
        %v2012 = vadd.f32 %v1210, %v1852
        %v2013 = vadd.f32 %v728, %v1853
        %v2014 = vadd.f32 %v730, %v1854
        %v2015 = vadd.f32 %v985, %v1855
        %v2016 = vadd.f32 %v987, %v1856
        %v2017 = vadd.f32 %v1215, %v1857
        %v2018 = vadd.f32 %v734, %v1858
        %v2019 = vadd.f32 %v736, %v1859
        %v2020 = vadd.f32 %v991, %v1860
        %v2021 = vadd.f32 %v993, %v1861
        %v2022 = vadd.f32 %v1220, %v1862
        %v2023 = vadd.f32 %v740, %v1863
        %v2024 = vadd.f32 %v742, %v1864
        %v2025 = vadd.f32 %v997, %v1865
        %v2026 = vadd.f32 %v999, %v1866
        %v2027 = vadd.f32 %v1225, %v1867
        %v2028 = vadd.f32 %v746, %v1868
        %v2029 = vadd.f32 %v748, %v1869
        %v2030 = vadd.f32 %v1003, %v1870
        %v2031 = vadd.f32 %v1005, %v1871
        %v2032 = vadd.f32 %v1230, %v1872
        %v2033 = vadd.f32 %v752, %v1873
        %v2034 = vadd.f32 %v754, %v1874
        %v2035 = vadd.f32 %v1009, %v1875
        %v2036 = vadd.f32 %v1011, %v1876
        %v2037 = vadd.f32 %v1235, %v1877
        %v2038 = vmul.f32 %v1878, 0.7978846
        %v2039 = vmul.f32 %v1879, 0.7978846
        %v2040 = vmul.f32 %v1880, 0.7978846
        %v2041 = vmul.f32 %v1881, 0.7978846
        %v2042 = vmul.f32 %v1882, 0.7978846
        %v2043 = vmul.f32 %v1883, 0.7978846
        %v2044 = vmul.f32 %v1884, 0.7978846
        %v2045 = vmul.f32 %v1885, 0.7978846
        %v2046 = vmul.f32 %v1886, 0.7978846
        %v2047 = vmul.f32 %v1887, 0.7978846
        %v2048 = vmul.f32 %v1888, 0.7978846
        %v2049 = vmul.f32 %v1889, 0.7978846
        %v2050 = vmul.f32 %v1890, 0.7978846
        %v2051 = vmul.f32 %v1891, 0.7978846
        %v2052 = vmul.f32 %v1892, 0.7978846
        %v2053 = vmul.f32 %v1893, 0.7978846
        %v2054 = vmul.f32 %v1894, 0.7978846
        %v2055 = vmul.f32 %v1895, 0.7978846
        %v2056 = vmul.f32 %v1896, 0.7978846
        %v2057 = vmul.f32 %v1897, 0.7978846
        %v2058 = vmul.f32 %v1898, 0.7978846
        %v2059 = vmul.f32 %v1899, 0.7978846
        %v2060 = vmul.f32 %v1900, 0.7978846
        %v2061 = vmul.f32 %v1901, 0.7978846
        %v2062 = vmul.f32 %v1902, 0.7978846
        %v2063 = vmul.f32 %v1903, 0.7978846
        %v2064 = vmul.f32 %v1904, 0.7978846
        %v2065 = vmul.f32 %v1905, 0.7978846
        %v2066 = vmul.f32 %v1906, 0.7978846
        %v2067 = vmul.f32 %v1907, 0.7978846
        %v2068 = vmul.f32 %v1908, 0.7978846
        %v2069 = vmul.f32 %v1909, 0.7978846
        %v2070 = vmul.f32 %v1910, 0.7978846
        %v2071 = vmul.f32 %v1911, 0.7978846
        %v2072 = vmul.f32 %v1912, 0.7978846
        %v2073 = vmul.f32 %v1913, 0.7978846
        %v2074 = vmul.f32 %v1914, 0.7978846
        %v2075 = vmul.f32 %v1915, 0.7978846
        %v2076 = vmul.f32 %v1916, 0.7978846
        %v2077 = vmul.f32 %v1917, 0.7978846
        %v2078 = vmul.f32 %v1918, 0.7978846
        %v2079 = vmul.f32 %v1919, 0.7978846
        %v2080 = vmul.f32 %v1920, 0.7978846
        %v2081 = vmul.f32 %v1921, 0.7978846
        %v2082 = vmul.f32 %v1922, 0.7978846
        %v2083 = vmul.f32 %v1923, 0.7978846
        %v2084 = vmul.f32 %v1924, 0.7978846
        %v2085 = vmul.f32 %v1925, 0.7978846
        %v2086 = vmul.f32 %v1926, 0.7978846
        %v2087 = vmul.f32 %v1927, 0.7978846
        %v2088 = vmul.f32 %v1928, 0.7978846
        %v2089 = vmul.f32 %v1929, 0.7978846
        %v2090 = vmul.f32 %v1930, 0.7978846
        %v2091 = vmul.f32 %v1931, 0.7978846
        %v2092 = vmul.f32 %v1932, 0.7978846
        %v2093 = vmul.f32 %v1933, 0.7978846
        %v2094 = vmul.f32 %v1934, 0.7978846
        %v2095 = vmul.f32 %v1935, 0.7978846
        %v2096 = vmul.f32 %v1936, 0.7978846
        %v2097 = vmul.f32 %v1937, 0.7978846
        %v2098 = vmul.f32 %v1938, 0.7978846
        %v2099 = vmul.f32 %v1939, 0.7978846
        %v2100 = vmul.f32 %v1940, 0.7978846
        %v2101 = vmul.f32 %v1941, 0.7978846
        %v2102 = vmul.f32 %v1942, 0.7978846
        %v2103 = vmul.f32 %v1943, 0.7978846
        %v2104 = vmul.f32 %v1944, 0.7978846
        %v2105 = vmul.f32 %v1945, 0.7978846
        %v2106 = vmul.f32 %v1946, 0.7978846
        %v2107 = vmul.f32 %v1947, 0.7978846
        %v2108 = vmul.f32 %v1948, 0.7978846
        %v2109 = vmul.f32 %v1949, 0.7978846
        %v2110 = vmul.f32 %v1950, 0.7978846
        %v2111 = vmul.f32 %v1951, 0.7978846
        %v2112 = vmul.f32 %v1952, 0.7978846
        %v2113 = vmul.f32 %v1953, 0.7978846
        %v2114 = vmul.f32 %v1954, 0.7978846
        %v2115 = vmul.f32 %v1955, 0.7978846
        %v2116 = vmul.f32 %v1956, 0.7978846
        %v2117 = vmul.f32 %v1957, 0.7978846
        %v2118 = vmul.f32 %v1958, 0.7978846
        %v2119 = vmul.f32 %v1959, 0.7978846
        %v2120 = vmul.f32 %v1960, 0.7978846
        %v2121 = vmul.f32 %v1961, 0.7978846
        %v2122 = vmul.f32 %v1962, 0.7978846
        %v2123 = vmul.f32 %v1963, 0.7978846
        %v2124 = vmul.f32 %v1964, 0.7978846
        %v2125 = vmul.f32 %v1965, 0.7978846
        %v2126 = vmul.f32 %v1966, 0.7978846
        %v2127 = vmul.f32 %v1967, 0.7978846
        %v2128 = vmul.f32 %v1968, 0.7978846
        %v2129 = vmul.f32 %v1969, 0.7978846
        %v2130 = vmul.f32 %v1970, 0.7978846
        %v2131 = vmul.f32 %v1971, 0.7978846
        %v2132 = vmul.f32 %v1972, 0.7978846
        %v2133 = vmul.f32 %v1973, 0.7978846
        %v2134 = vmul.f32 %v1974, 0.7978846
        %v2135 = vmul.f32 %v1975, 0.7978846
        %v2136 = vmul.f32 %v1976, 0.7978846
        %v2137 = vmul.f32 %v1977, 0.7978846
        %v2138 = vmul.f32 %v1978, 0.7978846
        %v2139 = vmul.f32 %v1979, 0.7978846
        %v2140 = vmul.f32 %v1980, 0.7978846
        %v2141 = vmul.f32 %v1981, 0.7978846
        %v2142 = vmul.f32 %v1982, 0.7978846
        %v2143 = vmul.f32 %v1983, 0.7978846
        %v2144 = vmul.f32 %v1984, 0.7978846
        %v2145 = vmul.f32 %v1985, 0.7978846
        %v2146 = vmul.f32 %v1986, 0.7978846
        %v2147 = vmul.f32 %v1987, 0.7978846
        %v2148 = vmul.f32 %v1988, 0.7978846
        %v2149 = vmul.f32 %v1989, 0.7978846
        %v2150 = vmul.f32 %v1990, 0.7978846
        %v2151 = vmul.f32 %v1991, 0.7978846
        %v2152 = vmul.f32 %v1992, 0.7978846
        %v2153 = vmul.f32 %v1993, 0.7978846
        %v2154 = vmul.f32 %v1994, 0.7978846
        %v2155 = vmul.f32 %v1995, 0.7978846
        %v2156 = vmul.f32 %v1996, 0.7978846
        %v2157 = vmul.f32 %v1997, 0.7978846
        %v2158 = vmul.f32 %v1998, 0.7978846
        %v2159 = vmul.f32 %v1999, 0.7978846
        %v2160 = vmul.f32 %v2000, 0.7978846
        %v2161 = vmul.f32 %v2001, 0.7978846
        %v2162 = vmul.f32 %v2002, 0.7978846
        %v2163 = vmul.f32 %v2003, 0.7978846
        %v2164 = vmul.f32 %v2004, 0.7978846
        %v2165 = vmul.f32 %v2005, 0.7978846
        %v2166 = vmul.f32 %v2006, 0.7978846
        %v2167 = vmul.f32 %v2007, 0.7978846
        %v2168 = vmul.f32 %v2008, 0.7978846
        %v2169 = vmul.f32 %v2009, 0.7978846
        %v2170 = vmul.f32 %v2010, 0.7978846
        %v2171 = vmul.f32 %v2011, 0.7978846
        %v2172 = vmul.f32 %v2012, 0.7978846
        %v2173 = vmul.f32 %v2013, 0.7978846
        %v2174 = vmul.f32 %v2014, 0.7978846
        %v2175 = vmul.f32 %v2015, 0.7978846
        %v2176 = vmul.f32 %v2016, 0.7978846
        %v2177 = vmul.f32 %v2017, 0.7978846
        %v2178 = vmul.f32 %v2018, 0.7978846
        %v2179 = vmul.f32 %v2019, 0.7978846
        %v2180 = vmul.f32 %v2020, 0.7978846
        %v2181 = vmul.f32 %v2021, 0.7978846
        %v2182 = vmul.f32 %v2022, 0.7978846
        %v2183 = vmul.f32 %v2023, 0.7978846
        %v2184 = vmul.f32 %v2024, 0.7978846
        %v2185 = vmul.f32 %v2025, 0.7978846
        %v2186 = vmul.f32 %v2026, 0.7978846
        %v2187 = vmul.f32 %v2027, 0.7978846
        %v2188 = vmul.f32 %v2028, 0.7978846
        %v2189 = vmul.f32 %v2029, 0.7978846
        %v2190 = vmul.f32 %v2030, 0.7978846
        %v2191 = vmul.f32 %v2031, 0.7978846
        %v2192 = vmul.f32 %v2032, 0.7978846
        %v2193 = vmul.f32 %v2033, 0.7978846
        %v2194 = vmul.f32 %v2034, 0.7978846
        %v2195 = vmul.f32 %v2035, 0.7978846
        %v2196 = vmul.f32 %v2036, 0.7978846
        %v2197 = vmul.f32 %v2037, 0.7978846
        %v2198 = vtanh.pop %v2038
        %v2199 = vtanh.pop %v2039
        %v2200 = vtanh.pop %v2040
        %v2201 = vtanh.pop %v2041
        %v2202 = vtanh.pop %v2042
        %v2203 = vtanh.pop %v2043
        %v2204 = vtanh.pop %v2044
        %v2205 = vtanh.pop %v2045
        %v2206 = vtanh.pop %v2046
        %v2207 = vtanh.pop %v2047
        %v2208 = vtanh.pop %v2048
        %v2209 = vtanh.pop %v2049
        %v2210 = vtanh.pop %v2050
        %v2211 = vtanh.pop %v2051
        %v2212 = vtanh.pop %v2052
        %v2213 = vtanh.pop %v2053
        %v2214 = vtanh.pop %v2054
        %v2215 = vtanh.pop %v2055
        %v2216 = vtanh.pop %v2056
        %v2217 = vtanh.pop %v2057
        %v2218 = vtanh.pop %v2058
        %v2219 = vtanh.pop %v2059
        %v2220 = vtanh.pop %v2060
        %v2221 = vtanh.pop %v2061
        %v2222 = vtanh.pop %v2062
        %v2223 = vtanh.pop %v2063
        %v2224 = vtanh.pop %v2064
        %v2225 = vtanh.pop %v2065
        %v2226 = vtanh.pop %v2066
        %v2227 = vtanh.pop %v2067
        %v2228 = vtanh.pop %v2068
        %v2229 = vtanh.pop %v2069
        %v2230 = vtanh.pop %v2070
        %v2231 = vtanh.pop %v2071
        %v2232 = vtanh.pop %v2072
        %v2233 = vtanh.pop %v2073
        %v2234 = vtanh.pop %v2074
        %v2235 = vtanh.pop %v2075
        %v2236 = vtanh.pop %v2076
        %v2237 = vtanh.pop %v2077
        %v2238 = vtanh.pop %v2078
        %v2239 = vtanh.pop %v2079
        %v2240 = vtanh.pop %v2080
        %v2241 = vtanh.pop %v2081
        %v2242 = vtanh.pop %v2082
        %v2243 = vtanh.pop %v2083
        %v2244 = vtanh.pop %v2084
        %v2245 = vtanh.pop %v2085
        %v2246 = vtanh.pop %v2086
        %v2247 = vtanh.pop %v2087
        %v2248 = vtanh.pop %v2088
        %v2249 = vtanh.pop %v2089
        %v2250 = vtanh.pop %v2090
        %v2251 = vtanh.pop %v2091
        %v2252 = vtanh.pop %v2092
        %v2253 = vtanh.pop %v2093
        %v2254 = vtanh.pop %v2094
        %v2255 = vtanh.pop %v2095
        %v2256 = vtanh.pop %v2096
        %v2257 = vtanh.pop %v2097
        %v2258 = vtanh.pop %v2098
        %v2259 = vtanh.pop %v2099
        %v2260 = vtanh.pop %v2100
        %v2261 = vtanh.pop %v2101
        %v2262 = vtanh.pop %v2102
        %v2263 = vtanh.pop %v2103
        %v2264 = vtanh.pop %v2104
        %v2265 = vtanh.pop %v2105
        %v2266 = vtanh.pop %v2106
        %v2267 = vtanh.pop %v2107
        %v2268 = vtanh.pop %v2108
        %v2269 = vtanh.pop %v2109
        %v2270 = vtanh.pop %v2110
        %v2271 = vtanh.pop %v2111
        %v2272 = vtanh.pop %v2112
        %v2273 = vtanh.pop %v2113
        %v2274 = vtanh.pop %v2114
        %v2275 = vtanh.pop %v2115
        %v2276 = vtanh.pop %v2116
        %v2277 = vtanh.pop %v2117
        %v2278 = vtanh.pop %v2118
        %v2279 = vtanh.pop %v2119
        %v2280 = vtanh.pop %v2120
        %v2281 = vtanh.pop %v2121
        %v2282 = vtanh.pop %v2122
        %v2283 = vtanh.pop %v2123
        %v2284 = vtanh.pop %v2124
        %v2285 = vtanh.pop %v2125
        %v2286 = vtanh.pop %v2126
        %v2287 = vtanh.pop %v2127
        %v2288 = vtanh.pop %v2128
        %v2289 = vtanh.pop %v2129
        %v2290 = vtanh.pop %v2130
        %v2291 = vtanh.pop %v2131
        %v2292 = vtanh.pop %v2132
        %v2293 = vtanh.pop %v2133
        %v2294 = vtanh.pop %v2134
        %v2295 = vtanh.pop %v2135
        %v2296 = vtanh.pop %v2136
        %v2297 = vtanh.pop %v2137
        %v2298 = vtanh.pop %v2138
        %v2299 = vtanh.pop %v2139
        %v2300 = vtanh.pop %v2140
        %v2301 = vtanh.pop %v2141
        %v2302 = vtanh.pop %v2142
        %v2303 = vtanh.pop %v2143
        %v2304 = vtanh.pop %v2144
        %v2305 = vtanh.pop %v2145
        %v2306 = vtanh.pop %v2146
        %v2307 = vtanh.pop %v2147
        %v2308 = vtanh.pop %v2148
        %v2309 = vtanh.pop %v2149
        %v2310 = vtanh.pop %v2150
        %v2311 = vtanh.pop %v2151
        %v2312 = vtanh.pop %v2152
        %v2313 = vtanh.pop %v2153
        %v2314 = vtanh.pop %v2154
        %v2315 = vtanh.pop %v2155
        %v2316 = vtanh.pop %v2156
        %v2317 = vtanh.pop %v2157
        %v2318 = vtanh.pop %v2158
        %v2319 = vtanh.pop %v2159
        %v2320 = vtanh.pop %v2160
        %v2321 = vtanh.pop %v2161
        %v2322 = vtanh.pop %v2162
        %v2323 = vtanh.pop %v2163
        %v2324 = vtanh.pop %v2164
        %v2325 = vtanh.pop %v2165
        %v2326 = vtanh.pop %v2166
        %v2327 = vtanh.pop %v2167
        %v2328 = vtanh.pop %v2168
        %v2329 = vtanh.pop %v2169
        %v2330 = vtanh.pop %v2170
        %v2331 = vtanh.pop %v2171
        %v2332 = vtanh.pop %v2172
        %v2333 = vtanh.pop %v2173
        %v2334 = vtanh.pop %v2174
        %v2335 = vtanh.pop %v2175
        %v2336 = vtanh.pop %v2176
        %v2337 = vtanh.pop %v2177
        %v2338 = vtanh.pop %v2178
        %v2339 = vtanh.pop %v2179
        %v2340 = vtanh.pop %v2180
        %v2341 = vtanh.pop %v2181
        %v2342 = vtanh.pop %v2182
        %v2343 = vtanh.pop %v2183
        %v2344 = vtanh.pop %v2184
        %v2345 = vtanh.pop %v2185
        %v2346 = vtanh.pop %v2186
        %v2347 = vtanh.pop %v2187
        %v2348 = vtanh.pop %v2188
        %v2349 = vtanh.pop %v2189
        %v2350 = vtanh.pop %v2190
        %v2351 = vtanh.pop %v2191
        %v2352 = vtanh.pop %v2192
        %v2353 = vtanh.pop %v2193
        %v2354 = vtanh.pop %v2194
        %v2355 = vtanh.pop %v2195
        %v2356 = vtanh.pop %v2196
        %v2357 = vtanh.pop %v2197
        %v2358 = vadd.f32 %v2198, 1.0
        %v2359 = vadd.f32 %v2199, 1.0
        %v2360 = vadd.f32 %v2200, 1.0
        %v2361 = vadd.f32 %v2201, 1.0
        %v2362 = vadd.f32 %v2202, 1.0
        %v2363 = vadd.f32 %v2203, 1.0
        %v2364 = vadd.f32 %v2204, 1.0
        %v2365 = vadd.f32 %v2205, 1.0
        %v2366 = vadd.f32 %v2206, 1.0
        %v2367 = vadd.f32 %v2207, 1.0
        %v2368 = vadd.f32 %v2208, 1.0
        %v2369 = vadd.f32 %v2209, 1.0
        %v2370 = vadd.f32 %v2210, 1.0
        %v2371 = vadd.f32 %v2211, 1.0
        %v2372 = vadd.f32 %v2212, 1.0
        %v2373 = vadd.f32 %v2213, 1.0
        %v2374 = vadd.f32 %v2214, 1.0
        %v2375 = vadd.f32 %v2215, 1.0
        %v2376 = vadd.f32 %v2216, 1.0
        %v2377 = vadd.f32 %v2217, 1.0
        %v2378 = vadd.f32 %v2218, 1.0
        %v2379 = vadd.f32 %v2219, 1.0
        %v2380 = vadd.f32 %v2220, 1.0
        %v2381 = vadd.f32 %v2221, 1.0
        %v2382 = vadd.f32 %v2222, 1.0
        %v2383 = vadd.f32 %v2223, 1.0
        %v2384 = vadd.f32 %v2224, 1.0
        %v2385 = vadd.f32 %v2225, 1.0
        %v2386 = vadd.f32 %v2226, 1.0
        %v2387 = vadd.f32 %v2227, 1.0
        %v2388 = vadd.f32 %v2228, 1.0
        %v2389 = vadd.f32 %v2229, 1.0
        %v2390 = vadd.f32 %v2230, 1.0
        %v2391 = vadd.f32 %v2231, 1.0
        %v2392 = vadd.f32 %v2232, 1.0
        %v2393 = vadd.f32 %v2233, 1.0
        %v2394 = vadd.f32 %v2234, 1.0
        %v2395 = vadd.f32 %v2235, 1.0
        %v2396 = vadd.f32 %v2236, 1.0
        %v2397 = vadd.f32 %v2237, 1.0
        %v2398 = vadd.f32 %v2238, 1.0
        %v2399 = vadd.f32 %v2239, 1.0
        %v2400 = vadd.f32 %v2240, 1.0
        %v2401 = vadd.f32 %v2241, 1.0
        %v2402 = vadd.f32 %v2242, 1.0
        %v2403 = vadd.f32 %v2243, 1.0
        %v2404 = vadd.f32 %v2244, 1.0
        %v2405 = vadd.f32 %v2245, 1.0
        %v2406 = vadd.f32 %v2246, 1.0
        %v2407 = vadd.f32 %v2247, 1.0
        %v2408 = vadd.f32 %v2248, 1.0
        %v2409 = vadd.f32 %v2249, 1.0
        %v2410 = vadd.f32 %v2250, 1.0
        %v2411 = vadd.f32 %v2251, 1.0
        %v2412 = vadd.f32 %v2252, 1.0
        %v2413 = vadd.f32 %v2253, 1.0
        %v2414 = vadd.f32 %v2254, 1.0
        %v2415 = vadd.f32 %v2255, 1.0
        %v2416 = vadd.f32 %v2256, 1.0
        %v2417 = vadd.f32 %v2257, 1.0
        %v2418 = vadd.f32 %v2258, 1.0
        %v2419 = vadd.f32 %v2259, 1.0
        %v2420 = vadd.f32 %v2260, 1.0
        %v2421 = vadd.f32 %v2261, 1.0
        %v2422 = vadd.f32 %v2262, 1.0
        %v2423 = vadd.f32 %v2263, 1.0
        %v2424 = vadd.f32 %v2264, 1.0
        %v2425 = vadd.f32 %v2265, 1.0
        %v2426 = vadd.f32 %v2266, 1.0
        %v2427 = vadd.f32 %v2267, 1.0
        %v2428 = vadd.f32 %v2268, 1.0
        %v2429 = vadd.f32 %v2269, 1.0
        %v2430 = vadd.f32 %v2270, 1.0
        %v2431 = vadd.f32 %v2271, 1.0
        %v2432 = vadd.f32 %v2272, 1.0
        %v2433 = vadd.f32 %v2273, 1.0
        %v2434 = vadd.f32 %v2274, 1.0
        %v2435 = vadd.f32 %v2275, 1.0
        %v2436 = vadd.f32 %v2276, 1.0
        %v2437 = vadd.f32 %v2277, 1.0
        %v2438 = vadd.f32 %v2278, 1.0
        %v2439 = vadd.f32 %v2279, 1.0
        %v2440 = vadd.f32 %v2280, 1.0
        %v2441 = vadd.f32 %v2281, 1.0
        %v2442 = vadd.f32 %v2282, 1.0
        %v2443 = vadd.f32 %v2283, 1.0
        %v2444 = vadd.f32 %v2284, 1.0
        %v2445 = vadd.f32 %v2285, 1.0
        %v2446 = vadd.f32 %v2286, 1.0
        %v2447 = vadd.f32 %v2287, 1.0
        %v2448 = vadd.f32 %v2288, 1.0
        %v2449 = vadd.f32 %v2289, 1.0
        %v2450 = vadd.f32 %v2290, 1.0
        %v2451 = vadd.f32 %v2291, 1.0
        %v2452 = vadd.f32 %v2292, 1.0
        %v2453 = vadd.f32 %v2293, 1.0
        %v2454 = vadd.f32 %v2294, 1.0
        %v2455 = vadd.f32 %v2295, 1.0
        %v2456 = vadd.f32 %v2296, 1.0
        %v2457 = vadd.f32 %v2297, 1.0
        %v2458 = vadd.f32 %v2298, 1.0
        %v2459 = vadd.f32 %v2299, 1.0
        %v2460 = vadd.f32 %v2300, 1.0
        %v2461 = vadd.f32 %v2301, 1.0
        %v2462 = vadd.f32 %v2302, 1.0
        %v2463 = vadd.f32 %v2303, 1.0
        %v2464 = vadd.f32 %v2304, 1.0
        %v2465 = vadd.f32 %v2305, 1.0
        %v2466 = vadd.f32 %v2306, 1.0
        %v2467 = vadd.f32 %v2307, 1.0
        %v2468 = vadd.f32 %v2308, 1.0
        %v2469 = vadd.f32 %v2309, 1.0
        %v2470 = vadd.f32 %v2310, 1.0
        %v2471 = vadd.f32 %v2311, 1.0
        %v2472 = vadd.f32 %v2312, 1.0
        %v2473 = vadd.f32 %v2313, 1.0
        %v2474 = vadd.f32 %v2314, 1.0
        %v2475 = vadd.f32 %v2315, 1.0
        %v2476 = vadd.f32 %v2316, 1.0
        %v2477 = vadd.f32 %v2317, 1.0
        %v2478 = vadd.f32 %v2318, 1.0
        %v2479 = vadd.f32 %v2319, 1.0
        %v2480 = vadd.f32 %v2320, 1.0
        %v2481 = vadd.f32 %v2321, 1.0
        %v2482 = vadd.f32 %v2322, 1.0
        %v2483 = vadd.f32 %v2323, 1.0
        %v2484 = vadd.f32 %v2324, 1.0
        %v2485 = vadd.f32 %v2325, 1.0
        %v2486 = vadd.f32 %v2326, 1.0
        %v2487 = vadd.f32 %v2327, 1.0
        %v2488 = vadd.f32 %v2328, 1.0
        %v2489 = vadd.f32 %v2329, 1.0
        %v2490 = vadd.f32 %v2330, 1.0
        %v2491 = vadd.f32 %v2331, 1.0
        %v2492 = vadd.f32 %v2332, 1.0
        %v2493 = vadd.f32 %v2333, 1.0
        %v2494 = vadd.f32 %v2334, 1.0
        %v2495 = vadd.f32 %v2335, 1.0
        %v2496 = vadd.f32 %v2336, 1.0
        %v2497 = vadd.f32 %v2337, 1.0
        %v2498 = vadd.f32 %v2338, 1.0
        %v2499 = vadd.f32 %v2339, 1.0
        %v2500 = vadd.f32 %v2340, 1.0
        %v2501 = vadd.f32 %v2341, 1.0
        %v2502 = vadd.f32 %v2342, 1.0
        %v2503 = vadd.f32 %v2343, 1.0
        %v2504 = vadd.f32 %v2344, 1.0
        %v2505 = vadd.f32 %v2345, 1.0
        %v2506 = vadd.f32 %v2346, 1.0
        %v2507 = vadd.f32 %v2347, 1.0
        %v2508 = vadd.f32 %v2348, 1.0
        %v2509 = vadd.f32 %v2349, 1.0
        %v2510 = vadd.f32 %v2350, 1.0
        %v2511 = vadd.f32 %v2351, 1.0
        %v2512 = vadd.f32 %v2352, 1.0
        %v2513 = vadd.f32 %v2353, 1.0
        %v2514 = vadd.f32 %v2354, 1.0
        %v2515 = vadd.f32 %v2355, 1.0
        %v2516 = vadd.f32 %v2356, 1.0
        %v2517 = vadd.f32 %v2357, 1.0
        %v2518 = vmul.f32 %v1238, %v2358
        %v2519 = vmul.f32 %v1239, %v2359
        %v2520 = vmul.f32 %v1240, %v2360
        %v2521 = vmul.f32 %v1241, %v2361
        %v2522 = vmul.f32 %v1242, %v2362
        %v2523 = vmul.f32 %v1243, %v2363
        %v2524 = vmul.f32 %v1244, %v2364
        %v2525 = vmul.f32 %v1245, %v2365
        %v2526 = vmul.f32 %v1246, %v2366
        %v2527 = vmul.f32 %v1247, %v2367
        %v2528 = vmul.f32 %v1248, %v2368
        %v2529 = vmul.f32 %v1249, %v2369
        %v2530 = vmul.f32 %v1250, %v2370
        %v2531 = vmul.f32 %v1251, %v2371
        %v2532 = vmul.f32 %v1252, %v2372
        %v2533 = vmul.f32 %v1253, %v2373
        %v2534 = vmul.f32 %v1254, %v2374
        %v2535 = vmul.f32 %v1255, %v2375
        %v2536 = vmul.f32 %v1256, %v2376
        %v2537 = vmul.f32 %v1257, %v2377
        %v2538 = vmul.f32 %v1258, %v2378
        %v2539 = vmul.f32 %v1259, %v2379
        %v2540 = vmul.f32 %v1260, %v2380
        %v2541 = vmul.f32 %v1261, %v2381
        %v2542 = vmul.f32 %v1262, %v2382
        %v2543 = vmul.f32 %v1263, %v2383
        %v2544 = vmul.f32 %v1264, %v2384
        %v2545 = vmul.f32 %v1265, %v2385
        %v2546 = vmul.f32 %v1266, %v2386
        %v2547 = vmul.f32 %v1267, %v2387
        %v2548 = vmul.f32 %v1268, %v2388
        %v2549 = vmul.f32 %v1269, %v2389
        %v2550 = vmul.f32 %v1270, %v2390
        %v2551 = vmul.f32 %v1271, %v2391
        %v2552 = vmul.f32 %v1272, %v2392
        %v2553 = vmul.f32 %v1273, %v2393
        %v2554 = vmul.f32 %v1274, %v2394
        %v2555 = vmul.f32 %v1275, %v2395
        %v2556 = vmul.f32 %v1276, %v2396
        %v2557 = vmul.f32 %v1277, %v2397
        %v2558 = vmul.f32 %v1278, %v2398
        %v2559 = vmul.f32 %v1279, %v2399
        %v2560 = vmul.f32 %v1280, %v2400
        %v2561 = vmul.f32 %v1281, %v2401
        %v2562 = vmul.f32 %v1282, %v2402
        %v2563 = vmul.f32 %v1283, %v2403
        %v2564 = vmul.f32 %v1284, %v2404
        %v2565 = vmul.f32 %v1285, %v2405
        %v2566 = vmul.f32 %v1286, %v2406
        %v2567 = vmul.f32 %v1287, %v2407
        %v2568 = vmul.f32 %v1288, %v2408
        %v2569 = vmul.f32 %v1289, %v2409
        %v2570 = vmul.f32 %v1290, %v2410
        %v2571 = vmul.f32 %v1291, %v2411
        %v2572 = vmul.f32 %v1292, %v2412
        %v2573 = vmul.f32 %v1293, %v2413
        %v2574 = vmul.f32 %v1294, %v2414
        %v2575 = vmul.f32 %v1295, %v2415
        %v2576 = vmul.f32 %v1296, %v2416
        %v2577 = vmul.f32 %v1297, %v2417
        %v2578 = vmul.f32 %v1298, %v2418
        %v2579 = vmul.f32 %v1299, %v2419
        %v2580 = vmul.f32 %v1300, %v2420
        %v2581 = vmul.f32 %v1301, %v2421
        %v2582 = vmul.f32 %v1302, %v2422
        %v2583 = vmul.f32 %v1303, %v2423
        %v2584 = vmul.f32 %v1304, %v2424
        %v2585 = vmul.f32 %v1305, %v2425
        %v2586 = vmul.f32 %v1306, %v2426
        %v2587 = vmul.f32 %v1307, %v2427
        %v2588 = vmul.f32 %v1308, %v2428
        %v2589 = vmul.f32 %v1309, %v2429
        %v2590 = vmul.f32 %v1310, %v2430
        %v2591 = vmul.f32 %v1311, %v2431
        %v2592 = vmul.f32 %v1312, %v2432
        %v2593 = vmul.f32 %v1313, %v2433
        %v2594 = vmul.f32 %v1314, %v2434
        %v2595 = vmul.f32 %v1315, %v2435
        %v2596 = vmul.f32 %v1316, %v2436
        %v2597 = vmul.f32 %v1317, %v2437
        %v2598 = vmul.f32 %v1318, %v2438
        %v2599 = vmul.f32 %v1319, %v2439
        %v2600 = vmul.f32 %v1320, %v2440
        %v2601 = vmul.f32 %v1321, %v2441
        %v2602 = vmul.f32 %v1322, %v2442
        %v2603 = vmul.f32 %v1323, %v2443
        %v2604 = vmul.f32 %v1324, %v2444
        %v2605 = vmul.f32 %v1325, %v2445
        %v2606 = vmul.f32 %v1326, %v2446
        %v2607 = vmul.f32 %v1327, %v2447
        %v2608 = vmul.f32 %v1328, %v2448
        %v2609 = vmul.f32 %v1329, %v2449
        %v2610 = vmul.f32 %v1330, %v2450
        %v2611 = vmul.f32 %v1331, %v2451
        %v2612 = vmul.f32 %v1332, %v2452
        %v2613 = vmul.f32 %v1333, %v2453
        %v2614 = vmul.f32 %v1334, %v2454
        %v2615 = vmul.f32 %v1335, %v2455
        %v2616 = vmul.f32 %v1336, %v2456
        %v2617 = vmul.f32 %v1337, %v2457
        %v2618 = vmul.f32 %v1338, %v2458
        %v2619 = vmul.f32 %v1339, %v2459
        %v2620 = vmul.f32 %v1340, %v2460
        %v2621 = vmul.f32 %v1341, %v2461
        %v2622 = vmul.f32 %v1342, %v2462
        %v2623 = vmul.f32 %v1343, %v2463
        %v2624 = vmul.f32 %v1344, %v2464
        %v2625 = vmul.f32 %v1345, %v2465
        %v2626 = vmul.f32 %v1346, %v2466
        %v2627 = vmul.f32 %v1347, %v2467
        %v2628 = vmul.f32 %v1348, %v2468
        %v2629 = vmul.f32 %v1349, %v2469
        %v2630 = vmul.f32 %v1350, %v2470
        %v2631 = vmul.f32 %v1351, %v2471
        %v2632 = vmul.f32 %v1352, %v2472
        %v2633 = vmul.f32 %v1353, %v2473
        %v2634 = vmul.f32 %v1354, %v2474
        %v2635 = vmul.f32 %v1355, %v2475
        %v2636 = vmul.f32 %v1356, %v2476
        %v2637 = vmul.f32 %v1357, %v2477
        %v2638 = vmul.f32 %v1358, %v2478
        %v2639 = vmul.f32 %v1359, %v2479
        %v2640 = vmul.f32 %v1360, %v2480
        %v2641 = vmul.f32 %v1361, %v2481
        %v2642 = vmul.f32 %v1362, %v2482
        %v2643 = vmul.f32 %v1363, %v2483
        %v2644 = vmul.f32 %v1364, %v2484
        %v2645 = vmul.f32 %v1365, %v2485
        %v2646 = vmul.f32 %v1366, %v2486
        %v2647 = vmul.f32 %v1367, %v2487
        %v2648 = vmul.f32 %v1368, %v2488
        %v2649 = vmul.f32 %v1369, %v2489
        %v2650 = vmul.f32 %v1370, %v2490
        %v2651 = vmul.f32 %v1371, %v2491
        %v2652 = vmul.f32 %v1372, %v2492
        %v2653 = vmul.f32 %v1373, %v2493
        %v2654 = vmul.f32 %v1374, %v2494
        %v2655 = vmul.f32 %v1375, %v2495
        %v2656 = vmul.f32 %v1376, %v2496
        %v2657 = vmul.f32 %v1377, %v2497
        %v2658 = vmul.f32 %v1378, %v2498
        %v2659 = vmul.f32 %v1379, %v2499
        %v2660 = vmul.f32 %v1380, %v2500
        %v2661 = vmul.f32 %v1381, %v2501
        %v2662 = vmul.f32 %v1382, %v2502
        %v2663 = vmul.f32 %v1383, %v2503
        %v2664 = vmul.f32 %v1384, %v2504
        %v2665 = vmul.f32 %v1385, %v2505
        %v2666 = vmul.f32 %v1386, %v2506
        %v2667 = vmul.f32 %v1387, %v2507
        %v2668 = vmul.f32 %v1388, %v2508
        %v2669 = vmul.f32 %v1389, %v2509
        %v2670 = vmul.f32 %v1390, %v2510
        %v2671 = vmul.f32 %v1391, %v2511
        %v2672 = vmul.f32 %v1392, %v2512
        %v2673 = vmul.f32 %v1393, %v2513
        %v2674 = vmul.f32 %v1394, %v2514
        %v2675 = vmul.f32 %v1395, %v2515
        %v2676 = vmul.f32 %v1396, %v2516
        %v2677 = vmul.f32 %v1397, %v2517
        %v2678 = vld [vmem:[#allocation2] sm:$0xff]
        %v2679 = vld [vmem:[#allocation2 + $0x8] sm:$0xff]
        %v2680 = vld [vmem:[#allocation2 + $0x10] sm:$0xff]
        %v2681 = vld [vmem:[#allocation2 + $0x18] sm:$0xff]
        %v2682 = vld [vmem:[#allocation2 + $0x20] sm:$0xff]
        %v2683 = vld [vmem:[#allocation2 + $0x28] sm:$0xff]
        %v2684 = vld [vmem:[#allocation2 + $0x30] sm:$0xff]
        %v2685 = vld [vmem:[#allocation2 + $0x38] sm:$0xff]
        %v2686 = vld [vmem:[#allocation2 + $0x40] sm:$0xff]
        %v2687 = vld [vmem:[#allocation2 + $0x48] sm:$0xff]
        %v2688 = vld [vmem:[#allocation2 + $0x50] sm:$0xff]
        %v2689 = vld [vmem:[#allocation2 + $0x58] sm:$0xff]
        %v2690 = vld [vmem:[#allocation2 + $0x60] sm:$0xff]
        %v2691 = vld [vmem:[#allocation2 + $0x68] sm:$0xff]
        %v2692 = vld [vmem:[#allocation2 + $0x70] sm:$0xff]
        %v2693 = vld [vmem:[#allocation2 + $0x78] sm:$0xff]
        %v2694 = vld [vmem:[#allocation2 + $0x80] sm:$0xff]
        %v2695 = vld [vmem:[#allocation2 + $0x88] sm:$0xff]
        %v2696 = vld [vmem:[#allocation2 + $0x90] sm:$0xff]
        %v2697 = vld [vmem:[#allocation2 + $0x98] sm:$0xff]
        %v2698 = vld [vmem:[#allocation2 + $0xa0] sm:$0xff]
        %v2699 = vld [vmem:[#allocation2 + $0xa8] sm:$0xff]
        %v2700 = vld [vmem:[#allocation2 + $0xb0] sm:$0xff]
        %v2701 = vld [vmem:[#allocation2 + $0xb8] sm:$0xff]
        %v2702 = vld [vmem:[#allocation2 + $0xc0] sm:$0xff]
        %v2703 = vld [vmem:[#allocation2 + $0xc8] sm:$0xff]
        %v2704 = vld [vmem:[#allocation2 + $0xd0] sm:$0xff]
        %v2705 = vld [vmem:[#allocation2 + $0xd8] sm:$0xff]
        %v2706 = vld [vmem:[#allocation2 + $0xe0] sm:$0xff]
        %v2707 = vld [vmem:[#allocation2 + $0xe8] sm:$0xff]
        %v2708 = vld [vmem:[#allocation2 + $0xf0] sm:$0xff]
        %v2709 = vld [vmem:[#allocation2 + $0xf8] sm:$0xff]
        %v2710 = vld [vmem:[#allocation2 + $0x100] sm:$0xff]
        %v2711 = vld [vmem:[#allocation2 + $0x108] sm:$0xff]
        %v2712 = vld [vmem:[#allocation2 + $0x110] sm:$0xff]
        %v2713 = vld [vmem:[#allocation2 + $0x118] sm:$0xff]
        %v2714 = vld [vmem:[#allocation2 + $0x120] sm:$0xff]
        %v2715 = vld [vmem:[#allocation2 + $0x128] sm:$0xff]
        %v2716 = vld [vmem:[#allocation2 + $0x130] sm:$0xff]
        %v2717 = vld [vmem:[#allocation2 + $0x138] sm:$0xff]
        %v2718 = vld [vmem:[#allocation2 + $0x140] sm:$0xff]
        %v2719 = vld [vmem:[#allocation2 + $0x148] sm:$0xff]
        %v2720 = vld [vmem:[#allocation2 + $0x150] sm:$0xff]
        %v2721 = vld [vmem:[#allocation2 + $0x158] sm:$0xff]
        %v2722 = vld [vmem:[#allocation2 + $0x160] sm:$0xff]
        %v2723 = vld [vmem:[#allocation2 + $0x168] sm:$0xff]
        %v2724 = vld [vmem:[#allocation2 + $0x170] sm:$0xff]
        %v2725 = vld [vmem:[#allocation2 + $0x178] sm:$0xff]
        %v2726 = vld [vmem:[#allocation2 + $0x180] sm:$0xff]
        %v2727 = vld [vmem:[#allocation2 + $0x188] sm:$0xff]
        %v2728 = vld [vmem:[#allocation2 + $0x190] sm:$0xff]
        %v2729 = vld [vmem:[#allocation2 + $0x198] sm:$0xff]
        %v2730 = vld [vmem:[#allocation2 + $0x1a0] sm:$0xff]
        %v2731 = vld [vmem:[#allocation2 + $0x1a8] sm:$0xff]
        %v2732 = vld [vmem:[#allocation2 + $0x1b0] sm:$0xff]
        %v2733 = vld [vmem:[#allocation2 + $0x1b8] sm:$0xff]
        %v2734 = vld [vmem:[#allocation2 + $0x1c0] sm:$0xff]
        %v2735 = vld [vmem:[#allocation2 + $0x1c8] sm:$0xff]
        %v2736 = vld [vmem:[#allocation2 + $0x1d0] sm:$0xff]
        %v2737 = vld [vmem:[#allocation2 + $0x1d8] sm:$0xff]
        %v2738 = vld [vmem:[#allocation2 + $0x1e0] sm:$0xff]
        %v2739 = vld [vmem:[#allocation2 + $0x1e8] sm:$0xff]
        %v2740 = vld [vmem:[#allocation2 + $0x1f0] sm:$0xff]
        %v2741 = vld [vmem:[#allocation2 + $0x1f8] sm:$0xff]
        %v2742 = vld [vmem:[#allocation2 + $0x200] sm:$0xff]
        %v2743 = vld [vmem:[#allocation2 + $0x208] sm:$0xff]
        %v2744 = vld [vmem:[#allocation2 + $0x210] sm:$0xff]
        %v2745 = vld [vmem:[#allocation2 + $0x218] sm:$0xff]
        %v2746 = vld [vmem:[#allocation2 + $0x220] sm:$0xff]
        %v2747 = vld [vmem:[#allocation2 + $0x228] sm:$0xff]
        %v2748 = vld [vmem:[#allocation2 + $0x230] sm:$0xff]
        %v2749 = vld [vmem:[#allocation2 + $0x238] sm:$0xff]
        %v2750 = vld [vmem:[#allocation2 + $0x240] sm:$0xff]
        %v2751 = vld [vmem:[#allocation2 + $0x248] sm:$0xff]
        %v2752 = vld [vmem:[#allocation2 + $0x250] sm:$0xff]
        %v2753 = vld [vmem:[#allocation2 + $0x258] sm:$0xff]
        %v2754 = vld [vmem:[#allocation2 + $0x260] sm:$0xff]
        %v2755 = vld [vmem:[#allocation2 + $0x268] sm:$0xff]
        %v2756 = vld [vmem:[#allocation2 + $0x270] sm:$0xff]
        %v2757 = vld [vmem:[#allocation2 + $0x278] sm:$0xff]
        %v2758 = vld [vmem:[#allocation2 + $0x280] sm:$0xff]
        %v2759 = vld [vmem:[#allocation2 + $0x288] sm:$0xff]
        %v2760 = vld [vmem:[#allocation2 + $0x290] sm:$0xff]
        %v2761 = vld [vmem:[#allocation2 + $0x298] sm:$0xff]
        %v2762 = vld [vmem:[#allocation2 + $0x2a0] sm:$0xff]
        %v2763 = vld [vmem:[#allocation2 + $0x2a8] sm:$0xff]
        %v2764 = vld [vmem:[#allocation2 + $0x2b0] sm:$0xff]
        %v2765 = vld [vmem:[#allocation2 + $0x2b8] sm:$0xff]
        %v2766 = vld [vmem:[#allocation2 + $0x2c0] sm:$0xff]
        %v2767 = vld [vmem:[#allocation2 + $0x2c8] sm:$0xff]
        %v2768 = vld [vmem:[#allocation2 + $0x2d0] sm:$0xff]
        %v2769 = vld [vmem:[#allocation2 + $0x2d8] sm:$0xff]
        %v2770 = vld [vmem:[#allocation2 + $0x2e0] sm:$0xff]
        %v2771 = vld [vmem:[#allocation2 + $0x2e8] sm:$0xff]
        %v2772 = vld [vmem:[#allocation2 + $0x2f0] sm:$0xff]
        %v2773 = vld [vmem:[#allocation2 + $0x2f8] sm:$0xff]
        %v2774 = vld [vmem:[#allocation2 + $0x300] sm:$0xff]
        %v2775 = vld [vmem:[#allocation2 + $0x308] sm:$0xff]
        %v2776 = vld [vmem:[#allocation2 + $0x310] sm:$0xff]
        %v2777 = vld [vmem:[#allocation2 + $0x318] sm:$0xff]
        %v2778 = vld [vmem:[#allocation2 + $0x320] sm:$0xff]
        %v2779 = vld [vmem:[#allocation2 + $0x328] sm:$0xff]
        %v2780 = vld [vmem:[#allocation2 + $0x330] sm:$0xff]
        %v2781 = vld [vmem:[#allocation2 + $0x338] sm:$0xff]
        %v2782 = vld [vmem:[#allocation2 + $0x340] sm:$0xff]
        %v2783 = vld [vmem:[#allocation2 + $0x348] sm:$0xff]
        %v2784 = vld [vmem:[#allocation2 + $0x350] sm:$0xff]
        %v2785 = vld [vmem:[#allocation2 + $0x358] sm:$0xff]
        %v2786 = vld [vmem:[#allocation2 + $0x360] sm:$0xff]
        %v2787 = vld [vmem:[#allocation2 + $0x368] sm:$0xff]
        %v2788 = vld [vmem:[#allocation2 + $0x370] sm:$0xff]
        %v2789 = vld [vmem:[#allocation2 + $0x378] sm:$0xff]
        %v2790 = vld [vmem:[#allocation2 + $0x380] sm:$0xff]
        %v2791 = vld [vmem:[#allocation2 + $0x388] sm:$0xff]
        %v2792 = vld [vmem:[#allocation2 + $0x390] sm:$0xff]
        %v2793 = vld [vmem:[#allocation2 + $0x398] sm:$0xff]
        %v2794 = vld [vmem:[#allocation2 + $0x3a0] sm:$0xff]
        %v2795 = vld [vmem:[#allocation2 + $0x3a8] sm:$0xff]
        %v2796 = vld [vmem:[#allocation2 + $0x3b0] sm:$0xff]
        %v2797 = vld [vmem:[#allocation2 + $0x3b8] sm:$0xff]
        %v2798 = vld [vmem:[#allocation2 + $0x3c0] sm:$0xff]
        %v2799 = vld [vmem:[#allocation2 + $0x3c8] sm:$0xff]
        %v2800 = vld [vmem:[#allocation2 + $0x3d0] sm:$0xff]
        %v2801 = vld [vmem:[#allocation2 + $0x3d8] sm:$0xff]
        %v2802 = vld [vmem:[#allocation2 + $0x3e0] sm:$0xff]
        %v2803 = vld [vmem:[#allocation2 + $0x3e8] sm:$0xff]
        %v2804 = vld [vmem:[#allocation2 + $0x3f0] sm:$0xff]
        %v2805 = vld [vmem:[#allocation2 + $0x3f8] sm:$0xff]
        %v2806 = vld [vmem:[#allocation2 + $0x400] sm:$0xff]
        %v2807 = vld [vmem:[#allocation2 + $0x408] sm:$0xff]
        %v2808 = vld [vmem:[#allocation2 + $0x410] sm:$0xff]
        %v2809 = vld [vmem:[#allocation2 + $0x418] sm:$0xff]
        %v2810 = vld [vmem:[#allocation2 + $0x420] sm:$0xff]
        %v2811 = vld [vmem:[#allocation2 + $0x428] sm:$0xff]
        %v2812 = vld [vmem:[#allocation2 + $0x430] sm:$0xff]
        %v2813 = vld [vmem:[#allocation2 + $0x438] sm:$0xff]
        %v2814 = vld [vmem:[#allocation2 + $0x440] sm:$0xff]
        %v2815 = vld [vmem:[#allocation2 + $0x448] sm:$0xff]
        %v2816 = vld [vmem:[#allocation2 + $0x450] sm:$0xff]
        %v2817 = vld [vmem:[#allocation2 + $0x458] sm:$0xff]
        %v2818 = vld [vmem:[#allocation2 + $0x460] sm:$0xff]
        %v2819 = vld [vmem:[#allocation2 + $0x468] sm:$0xff]
        %v2820 = vld [vmem:[#allocation2 + $0x470] sm:$0xff]
        %v2821 = vld [vmem:[#allocation2 + $0x478] sm:$0xff]
        %v2822 = vld [vmem:[#allocation2 + $0x480] sm:$0xff]
        %v2823 = vld [vmem:[#allocation2 + $0x488] sm:$0xff]
        %v2824 = vld [vmem:[#allocation2 + $0x490] sm:$0xff]
        %v2825 = vld [vmem:[#allocation2 + $0x498] sm:$0xff]
        %v2826 = vld [vmem:[#allocation2 + $0x4a0] sm:$0xff]
        %v2827 = vld [vmem:[#allocation2 + $0x4a8] sm:$0xff]
        %v2828 = vld [vmem:[#allocation2 + $0x4b0] sm:$0xff]
        %v2829 = vld [vmem:[#allocation2 + $0x4b8] sm:$0xff]
        %v2830 = vld [vmem:[#allocation2 + $0x4c0] sm:$0xff]
        %v2831 = vld [vmem:[#allocation2 + $0x4c8] sm:$0xff]
        %v2832 = vld [vmem:[#allocation2 + $0x4d0] sm:$0xff]
        %v2833 = vld [vmem:[#allocation2 + $0x4d8] sm:$0xff]
        %v2834 = vld [vmem:[#allocation2 + $0x4e0] sm:$0xff]
        %v2835 = vld [vmem:[#allocation2 + $0x4e8] sm:$0xff]
        %v2836 = vld [vmem:[#allocation2 + $0x4f0] sm:$0xff]
        %v2837 = vld [vmem:[#allocation2 + $0x4f8] sm:$0xff]
        %v2838 = vld [vmem:[%s4] sm:$0x3]
        %v2840 = vlaneseq
        %v2841 = vshrl.u32 %v2840, 7
        %v2842 = vsub.s32 0, %v2841
        %v2843 = vrot.slane %v2838, %v2842
        %v2844 = vlaneseq
        %v2845 = vshrl.u32 %v2844, 7
        %v2846 = vsub.s32 1, %v2845
        %v2847 = vrot.slane %v2838, %v2846
        %2850 = vmatprep.subr.mxu0 %v2679
        %2851 = vmatpush1.msra.mxu0 %v2678
        %2852 = vmatprep.subr.mxu0 %v2681
        %2853 = vmatpush1.msra.mxu0 %v2680
        %2854 = vmatprep.subr.mxu0 %v2683
        %2855 = vmatpush1.msra.mxu0 %v2682
        %2856 = vmatprep.subr.mxu0 %v2685
        %2857 = vmatpush1.msra.mxu0 %v2684
        %2858 = vmatprep.subr.mxu0 %v2687
        %2859 = vmatpush1.msra.mxu0 %v2686
        %2860 = vmatprep.subr.mxu0 %v2689
        %2861 = vmatpush1.msra.mxu0 %v2688
        %2862 = vmatprep.subr.mxu0 %v2691
        %2863 = vmatpush1.msra.mxu0 %v2690
        %2864 = vmatprep.subr.mxu0 %v2693
        %2865 = vmatpush1.msra.mxu0 %v2692
        %2866 = vmatprep.subr.mxu0 %v2695
        %2867 = vmatpush1.msra.mxu0 %v2694
        %2868 = vmatprep.subr.mxu0 %v2697
        %2869 = vmatpush1.msra.mxu0 %v2696
        %2870 = vmatprep.subr.mxu0 %v2699
        %2871 = vmatpush1.msra.mxu0 %v2698
        %2872 = vmatprep.subr.mxu0 %v2701
        %2873 = vmatpush1.msra.mxu0 %v2700
        %2874 = vmatprep.subr.mxu0 %v2703
        %2875 = vmatpush1.msra.mxu0 %v2702
        %2876 = vmatprep.subr.mxu0 %v2705
        %2877 = vmatpush1.msra.mxu0 %v2704
        %2878 = vmatprep.subr.mxu0 %v2707
        %2879 = vmatpush1.msra.mxu0 %v2706
        %2880 = vmatprep.subr.mxu0 %v2709
        %2881 = vmatpush1.msra.mxu0 %v2708
        %2882 = vmatprep.subr.mxu0 %v2711
        %2883 = vmatpush1.msra.mxu0 %v2710
        %2884 = vmatprep.subr.mxu0 %v2713
        %2885 = vmatpush1.msra.mxu0 %v2712
        %2886 = vmatprep.subr.mxu0 %v2715
        %2887 = vmatpush1.msra.mxu0 %v2714
        %2888 = vmatprep.subr.mxu0 %v2717
        %2889 = vmatpush1.msra.mxu0 %v2716
        %2890 = vmatprep.subr.mxu0 %v2719
        %2891 = vmatpush1.msra.mxu0 %v2718
        %2892 = vmatprep.subr.mxu0 %v2721
        %2893 = vmatpush1.msra.mxu0 %v2720
        %2894 = vmatprep.subr.mxu0 %v2723
        %2895 = vmatpush1.msra.mxu0 %v2722
        %2896 = vmatprep.subr.mxu0 %v2725
        %2897 = vmatpush1.msra.mxu0 %v2724
        %2898 = vmatprep.subr.mxu0 %v2727
        %2899 = vmatpush1.msra.mxu0 %v2726
        %2900 = vmatprep.subr.mxu0 %v2729
        %2901 = vmatpush1.msra.mxu0 %v2728
        %2902 = vmatprep.subr.mxu0 %v2731
        %2903 = vmatpush1.msra.mxu0 %v2730
        %2904 = vmatprep.subr.mxu0 %v2733
        %2905 = vmatpush1.msra.mxu0 %v2732
        %2906 = vmatprep.subr.mxu0 %v2735
        %2907 = vmatpush1.msra.mxu0 %v2734
        %2908 = vmatprep.subr.mxu0 %v2737
        %2909 = vmatpush1.msra.mxu0 %v2736
        %2910 = vmatprep.subr.mxu0 %v2739
        %2911 = vmatpush1.msra.mxu0 %v2738
        %2912 = vmatprep.subr.mxu0 %v2741
        %2913 = vmatpush1.msra.mxu0 %v2740
        %2914 = vmatprep.mubr.f32.mxu0 %v2519
        %2915 = vmatmul.mubr.f32.gmra.mrb[0].mxu0 %v2518
        %v2916 = vpop.f32.mrb[0].mxu0
        %v2917 = vadd.f32 %v2843, %v2916
        %v2918 = vpop.f32.mrb[0].mxu0
        %v2919 = vadd.f32 %v2847, %v2918
        %2920 = vmatprep.mubr.f32.mxu0 %v2524
        %2921 = vmatmul.mubr.f32.gmra.mrb[0].mxu0 %v2523
        %v2922 = vpop.f32.mrb[0].mxu0
        %v2923 = vadd.f32 %v2843, %v2922
        %v2924 = vpop.f32.mrb[0].mxu0
        %v2925 = vadd.f32 %v2847, %v2924
        %2926 = vmatprep.mubr.f32.mxu0 %v2529
        %2927 = vmatmul.mubr.f32.gmra.mrb[0].mxu0 %v2528
        %v2928 = vpop.f32.mrb[0].mxu0
        %v2929 = vadd.f32 %v2843, %v2928
        %v2930 = vpop.f32.mrb[0].mxu0
        %v2931 = vadd.f32 %v2847, %v2930
        %2932 = vmatprep.mubr.f32.mxu0 %v2534
        %2933 = vmatmul.mubr.f32.gmra.mrb[0].mxu0 %v2533
        %v2934 = vpop.f32.mrb[0].mxu0
        %v2935 = vadd.f32 %v2843, %v2934
        %v2936 = vpop.f32.mrb[0].mxu0
        %v2937 = vadd.f32 %v2847, %v2936
        %2938 = vmatprep.mubr.f32.mxu0 %v2539
        %2939 = vmatmul.mubr.f32.gmra.mrb[0].mxu0 %v2538
        %v2940 = vpop.f32.mrb[0].mxu0
        %v2941 = vadd.f32 %v2843, %v2940
        %v2942 = vpop.f32.mrb[0].mxu0
        %v2943 = vadd.f32 %v2847, %v2942
        %2944 = vmatprep.mubr.f32.mxu0 %v2544
        %2945 = vmatmul.mubr.f32.gmra.mrb[0].mxu0 %v2543
        %v2946 = vpop.f32.mrb[0].mxu0
        %v2947 = vadd.f32 %v2843, %v2946
        %v2948 = vpop.f32.mrb[0].mxu0
        %v2949 = vadd.f32 %v2847, %v2948
        %2950 = vmatprep.mubr.f32.mxu0 %v2549
        %2951 = vmatmul.mubr.f32.gmra.mrb[0].mxu0 %v2548
        %v2952 = vpop.f32.mrb[0].mxu0
        %v2953 = vadd.f32 %v2843, %v2952
        %v2954 = vpop.f32.mrb[0].mxu0
        %v2955 = vadd.f32 %v2847, %v2954
        %2956 = vmatprep.mubr.f32.mxu0 %v2554
        %2957 = vmatmul.mubr.f32.gmra.mrb[0].mxu0 %v2553
        %v2958 = vpop.f32.mrb[0].mxu0
        %v2959 = vadd.f32 %v2843, %v2958
        %v2960 = vpop.f32.mrb[0].mxu0
        %v2961 = vadd.f32 %v2847, %v2960
        %2962 = vmatprep.mubr.f32.mxu0 %v2559
        %2963 = vmatmul.mubr.f32.gmra.mrb[0].mxu0 %v2558
        %v2964 = vpop.f32.mrb[0].mxu0
        %v2965 = vadd.f32 %v2843, %v2964
        %v2966 = vpop.f32.mrb[0].mxu0
        %v2967 = vadd.f32 %v2847, %v2966
        %2968 = vmatprep.mubr.f32.mxu0 %v2564
        %2969 = vmatmul.mubr.f32.gmra.mrb[0].mxu0 %v2563
        %v2970 = vpop.f32.mrb[0].mxu0
        %v2971 = vadd.f32 %v2843, %v2970
        %v2972 = vpop.f32.mrb[0].mxu0
        %v2973 = vadd.f32 %v2847, %v2972
        %2974 = vmatprep.mubr.f32.mxu0 %v2569
        %2975 = vmatmul.mubr.f32.gmra.mrb[0].mxu0 %v2568
        %v2976 = vpop.f32.mrb[0].mxu0
        %v2977 = vadd.f32 %v2843, %v2976
        %v2978 = vpop.f32.mrb[0].mxu0
        %v2979 = vadd.f32 %v2847, %v2978
        %2980 = vmatprep.mubr.f32.mxu0 %v2574
        %2981 = vmatmul.mubr.f32.gmra.mrb[0].mxu0 %v2573
        %v2982 = vpop.f32.mrb[0].mxu0
        %v2983 = vadd.f32 %v2843, %v2982
        %v2984 = vpop.f32.mrb[0].mxu0
        %v2985 = vadd.f32 %v2847, %v2984
        %2986 = vmatprep.mubr.f32.mxu0 %v2579
        %2987 = vmatmul.mubr.f32.gmra.mrb[0].mxu0 %v2578
        %v2988 = vpop.f32.mrb[0].mxu0
        %v2989 = vadd.f32 %v2843, %v2988
        %v2990 = vpop.f32.mrb[0].mxu0
        %v2991 = vadd.f32 %v2847, %v2990
        %2992 = vmatprep.mubr.f32.mxu0 %v2584
        %2993 = vmatmul.mubr.f32.gmra.mrb[0].mxu0 %v2583
        %v2994 = vpop.f32.mrb[0].mxu0
        %v2995 = vadd.f32 %v2843, %v2994
        %v2996 = vpop.f32.mrb[0].mxu0
        %v2997 = vadd.f32 %v2847, %v2996
        %2998 = vmatprep.mubr.f32.mxu0 %v2589
        %2999 = vmatmul.mubr.f32.gmra.mrb[0].mxu0 %v2588
        %v3000 = vpop.f32.mrb[0].mxu0
        %v3001 = vadd.f32 %v2843, %v3000
        %v3002 = vpop.f32.mrb[0].mxu0
        %v3003 = vadd.f32 %v2847, %v3002
        %3004 = vmatprep.mubr.f32.mxu0 %v2594
        %3005 = vmatmul.mubr.f32.gmra.mrb[0].mxu0 %v2593
        %v3006 = vpop.f32.mrb[0].mxu0
        %v3007 = vadd.f32 %v2843, %v3006
        %v3008 = vpop.f32.mrb[0].mxu0
        %v3009 = vadd.f32 %v2847, %v3008
        %3010 = vmatprep.mubr.f32.mxu0 %v2599
        %3011 = vmatmul.mubr.f32.gmra.mrb[0].mxu0 %v2598
        %v3012 = vpop.f32.mrb[0].mxu0
        %v3013 = vadd.f32 %v2843, %v3012
        %v3014 = vpop.f32.mrb[0].mxu0
        %v3015 = vadd.f32 %v2847, %v3014
        %3016 = vmatprep.mubr.f32.mxu0 %v2604
        %3017 = vmatmul.mubr.f32.gmra.mrb[0].mxu0 %v2603
        %v3018 = vpop.f32.mrb[0].mxu0
        %v3019 = vadd.f32 %v2843, %v3018
        %v3020 = vpop.f32.mrb[0].mxu0
        %v3021 = vadd.f32 %v2847, %v3020
        %3022 = vmatprep.mubr.f32.mxu0 %v2609
        %3023 = vmatmul.mubr.f32.gmra.mrb[0].mxu0 %v2608
        %v3024 = vpop.f32.mrb[0].mxu0
        %v3025 = vadd.f32 %v2843, %v3024
        %v3026 = vpop.f32.mrb[0].mxu0
        %v3027 = vadd.f32 %v2847, %v3026
        %3028 = vmatprep.mubr.f32.mxu0 %v2614
        %3029 = vmatmul.mubr.f32.gmra.mrb[0].mxu0 %v2613
        %v3030 = vpop.f32.mrb[0].mxu0
        %v3031 = vadd.f32 %v2843, %v3030
        %v3032 = vpop.f32.mrb[0].mxu0
        %v3033 = vadd.f32 %v2847, %v3032
        %3034 = vmatprep.mubr.f32.mxu0 %v2619
        %3035 = vmatmul.mubr.f32.gmra.mrb[0].mxu0 %v2618
        %v3036 = vpop.f32.mrb[0].mxu0
        %v3037 = vadd.f32 %v2843, %v3036
        %v3038 = vpop.f32.mrb[0].mxu0
        %v3039 = vadd.f32 %v2847, %v3038
        %3040 = vmatprep.mubr.f32.mxu0 %v2624
        %3041 = vmatmul.mubr.f32.gmra.mrb[0].mxu0 %v2623
        %v3042 = vpop.f32.mrb[0].mxu0
        %v3043 = vadd.f32 %v2843, %v3042
        %v3044 = vpop.f32.mrb[0].mxu0
        %v3045 = vadd.f32 %v2847, %v3044
        %3046 = vmatprep.mubr.f32.mxu0 %v2629
        %3047 = vmatmul.mubr.f32.gmra.mrb[0].mxu0 %v2628
        %v3048 = vpop.f32.mrb[0].mxu0
        %v3049 = vadd.f32 %v2843, %v3048
        %v3050 = vpop.f32.mrb[0].mxu0
        %v3051 = vadd.f32 %v2847, %v3050
        %3052 = vmatprep.mubr.f32.mxu0 %v2634
        %3053 = vmatmul.mubr.f32.gmra.mrb[0].mxu0 %v2633
        %v3054 = vpop.f32.mrb[0].mxu0
        %v3055 = vadd.f32 %v2843, %v3054
        %v3056 = vpop.f32.mrb[0].mxu0
        %v3057 = vadd.f32 %v2847, %v3056
        %3058 = vmatprep.mubr.f32.mxu0 %v2639
        %3059 = vmatmul.mubr.f32.gmra.mrb[0].mxu0 %v2638
        %v3060 = vpop.f32.mrb[0].mxu0
        %v3061 = vadd.f32 %v2843, %v3060
        %v3062 = vpop.f32.mrb[0].mxu0
        %v3063 = vadd.f32 %v2847, %v3062
        %3064 = vmatprep.mubr.f32.mxu0 %v2644
        %3065 = vmatmul.mubr.f32.gmra.mrb[0].mxu0 %v2643
        %v3066 = vpop.f32.mrb[0].mxu0
        %v3067 = vadd.f32 %v2843, %v3066
        %v3068 = vpop.f32.mrb[0].mxu0
        %v3069 = vadd.f32 %v2847, %v3068
        %3070 = vmatprep.mubr.f32.mxu0 %v2649
        %3071 = vmatmul.mubr.f32.gmra.mrb[0].mxu0 %v2648
        %v3072 = vpop.f32.mrb[0].mxu0
        %v3073 = vadd.f32 %v2843, %v3072
        %v3074 = vpop.f32.mrb[0].mxu0
        %v3075 = vadd.f32 %v2847, %v3074
        %3076 = vmatprep.mubr.f32.mxu0 %v2654
        %3077 = vmatmul.mubr.f32.gmra.mrb[0].mxu0 %v2653
        %v3078 = vpop.f32.mrb[0].mxu0
        %v3079 = vadd.f32 %v2843, %v3078
        %v3080 = vpop.f32.mrb[0].mxu0
        %v3081 = vadd.f32 %v2847, %v3080
        %3082 = vmatprep.mubr.f32.mxu0 %v2659
        %3083 = vmatmul.mubr.f32.gmra.mrb[0].mxu0 %v2658
        %v3084 = vpop.f32.mrb[0].mxu0
        %v3085 = vadd.f32 %v2843, %v3084
        %v3086 = vpop.f32.mrb[0].mxu0
        %v3087 = vadd.f32 %v2847, %v3086
        %3088 = vmatprep.mubr.f32.mxu0 %v2664
        %3089 = vmatmul.mubr.f32.gmra.mrb[0].mxu0 %v2663
        %v3090 = vpop.f32.mrb[0].mxu0
        %v3091 = vadd.f32 %v2843, %v3090
        %v3092 = vpop.f32.mrb[0].mxu0
        %v3093 = vadd.f32 %v2847, %v3092
        %3094 = vmatprep.mubr.f32.mxu0 %v2669
        %3095 = vmatmul.mubr.f32.gmra.mrb[0].mxu0 %v2668
        %v3096 = vpop.f32.mrb[0].mxu0
        %v3097 = vadd.f32 %v2843, %v3096
        %v3098 = vpop.f32.mrb[0].mxu0
        %v3099 = vadd.f32 %v2847, %v3098
        %3100 = vmatprep.mubr.f32.mxu0 %v2674
        %3101 = vmatmul.mubr.f32.gmra.mrb[0].mxu0 %v2673
        %v3102 = vpop.f32.mrb[0].mxu0
        %v3103 = vadd.f32 %v2843, %v3102
        %v3104 = vpop.f32.mrb[0].mxu0
        %v3105 = vadd.f32 %v2847, %v3104
        %3106 = vdwg.mxu0
        %3107 = vmatprep.subr.mxu0 %v2743
        %3108 = vmatpush1.msra.mxu0 %v2742
        %3109 = vmatprep.subr.mxu0 %v2745
        %3110 = vmatpush1.msra.mxu0 %v2744
        %3111 = vmatprep.subr.mxu0 %v2747
        %3112 = vmatpush1.msra.mxu0 %v2746
        %3113 = vmatprep.subr.mxu0 %v2749
        %3114 = vmatpush1.msra.mxu0 %v2748
        %3115 = vmatprep.subr.mxu0 %v2751
        %3116 = vmatpush1.msra.mxu0 %v2750
        %3117 = vmatprep.subr.mxu0 %v2753
        %3118 = vmatpush1.msra.mxu0 %v2752
        %3119 = vmatprep.subr.mxu0 %v2755
        %3120 = vmatpush1.msra.mxu0 %v2754
        %3121 = vmatprep.subr.mxu0 %v2757
        %3122 = vmatpush1.msra.mxu0 %v2756
        %3123 = vmatprep.subr.mxu0 %v2759
        %3124 = vmatpush1.msra.mxu0 %v2758
        %3125 = vmatprep.subr.mxu0 %v2761
        %3126 = vmatpush1.msra.mxu0 %v2760
        %3127 = vmatprep.subr.mxu0 %v2763
        %3128 = vmatpush1.msra.mxu0 %v2762
        %3129 = vmatprep.subr.mxu0 %v2765
        %3130 = vmatpush1.msra.mxu0 %v2764
        %3131 = vmatprep.subr.mxu0 %v2767
        %3132 = vmatpush1.msra.mxu0 %v2766
        %3133 = vmatprep.subr.mxu0 %v2769
        %3134 = vmatpush1.msra.mxu0 %v2768
        %3135 = vmatprep.subr.mxu0 %v2771
        %3136 = vmatpush1.msra.mxu0 %v2770
        %3137 = vmatprep.subr.mxu0 %v2773
        %3138 = vmatpush1.msra.mxu0 %v2772
        %3139 = vmatprep.subr.mxu0 %v2775
        %3140 = vmatpush1.msra.mxu0 %v2774
        %3141 = vmatprep.subr.mxu0 %v2777
        %3142 = vmatpush1.msra.mxu0 %v2776
        %3143 = vmatprep.subr.mxu0 %v2779
        %3144 = vmatpush1.msra.mxu0 %v2778
        %3145 = vmatprep.subr.mxu0 %v2781
        %3146 = vmatpush1.msra.mxu0 %v2780
        %3147 = vmatprep.subr.mxu0 %v2783
        %3148 = vmatpush1.msra.mxu0 %v2782
        %3149 = vmatprep.subr.mxu0 %v2785
        %3150 = vmatpush1.msra.mxu0 %v2784
        %3151 = vmatprep.subr.mxu0 %v2787
        %3152 = vmatpush1.msra.mxu0 %v2786
        %3153 = vmatprep.subr.mxu0 %v2789
        %3154 = vmatpush1.msra.mxu0 %v2788
        %3155 = vmatprep.subr.mxu0 %v2791
        %3156 = vmatpush1.msra.mxu0 %v2790
        %3157 = vmatprep.subr.mxu0 %v2793
        %3158 = vmatpush1.msra.mxu0 %v2792
        %3159 = vmatprep.subr.mxu0 %v2795
        %3160 = vmatpush1.msra.mxu0 %v2794
        %3161 = vmatprep.subr.mxu0 %v2797
        %3162 = vmatpush1.msra.mxu0 %v2796
        %3163 = vmatprep.subr.mxu0 %v2799
        %3164 = vmatpush1.msra.mxu0 %v2798
        %3165 = vmatprep.subr.mxu0 %v2801
        %3166 = vmatpush1.msra.mxu0 %v2800
        %3167 = vmatprep.subr.mxu0 %v2803
        %3168 = vmatpush1.msra.mxu0 %v2802
        %3169 = vmatprep.subr.mxu0 %v2805
        %3170 = vmatpush1.msra.mxu0 %v2804
        %3171 = vmatprep.mubr.f32.mxu0 %v2521
        %3172 = vmatmul.mubr.f32.gmra.mrb[0].mxu0 %v2520
        %v3173 = vpop.f32.mrb[0].mxu0
        %v3174 = vadd.f32 %v2917, %v3173
        %v3175 = vpop.f32.mrb[0].mxu0
        %v3176 = vadd.f32 %v2919, %v3175
        %3177 = vmatprep.mubr.f32.mxu0 %v2526
        %3178 = vmatmul.mubr.f32.gmra.mrb[0].mxu0 %v2525
        %v3179 = vpop.f32.mrb[0].mxu0
        %v3180 = vadd.f32 %v2923, %v3179
        %v3181 = vpop.f32.mrb[0].mxu0
        %v3182 = vadd.f32 %v2925, %v3181
        %3183 = vmatprep.mubr.f32.mxu0 %v2531
        %3184 = vmatmul.mubr.f32.gmra.mrb[0].mxu0 %v2530
        %v3185 = vpop.f32.mrb[0].mxu0
        %v3186 = vadd.f32 %v2929, %v3185
        %v3187 = vpop.f32.mrb[0].mxu0
        %v3188 = vadd.f32 %v2931, %v3187
        %3189 = vmatprep.mubr.f32.mxu0 %v2536
        %3190 = vmatmul.mubr.f32.gmra.mrb[0].mxu0 %v2535
        %v3191 = vpop.f32.mrb[0].mxu0
        %v3192 = vadd.f32 %v2935, %v3191
        %v3193 = vpop.f32.mrb[0].mxu0
        %v3194 = vadd.f32 %v2937, %v3193
        %3195 = vmatprep.mubr.f32.mxu0 %v2541
        %3196 = vmatmul.mubr.f32.gmra.mrb[0].mxu0 %v2540
        %v3197 = vpop.f32.mrb[0].mxu0
        %v3198 = vadd.f32 %v2941, %v3197
        %v3199 = vpop.f32.mrb[0].mxu0
        %v3200 = vadd.f32 %v2943, %v3199
        %3201 = vmatprep.mubr.f32.mxu0 %v2546
        %3202 = vmatmul.mubr.f32.gmra.mrb[0].mxu0 %v2545
        %v3203 = vpop.f32.mrb[0].mxu0
        %v3204 = vadd.f32 %v2947, %v3203
        %v3205 = vpop.f32.mrb[0].mxu0
        %v3206 = vadd.f32 %v2949, %v3205
        %3207 = vmatprep.mubr.f32.mxu0 %v2551
        %3208 = vmatmul.mubr.f32.gmra.mrb[0].mxu0 %v2550
        %v3209 = vpop.f32.mrb[0].mxu0
        %v3210 = vadd.f32 %v2953, %v3209
        %v3211 = vpop.f32.mrb[0].mxu0
        %v3212 = vadd.f32 %v2955, %v3211
        %3213 = vmatprep.mubr.f32.mxu0 %v2556
        %3214 = vmatmul.mubr.f32.gmra.mrb[0].mxu0 %v2555
        %v3215 = vpop.f32.mrb[0].mxu0
        %v3216 = vadd.f32 %v2959, %v3215
        %v3217 = vpop.f32.mrb[0].mxu0
        %v3218 = vadd.f32 %v2961, %v3217
        %3219 = vmatprep.mubr.f32.mxu0 %v2561
        %3220 = vmatmul.mubr.f32.gmra.mrb[0].mxu0 %v2560
        %v3221 = vpop.f32.mrb[0].mxu0
        %v3222 = vadd.f32 %v2965, %v3221
        %v3223 = vpop.f32.mrb[0].mxu0
        %v3224 = vadd.f32 %v2967, %v3223
        %3225 = vmatprep.mubr.f32.mxu0 %v2566
        %3226 = vmatmul.mubr.f32.gmra.mrb[0].mxu0 %v2565
        %v3227 = vpop.f32.mrb[0].mxu0
        %v3228 = vadd.f32 %v2971, %v3227
        %v3229 = vpop.f32.mrb[0].mxu0
        %v3230 = vadd.f32 %v2973, %v3229
        %3231 = vmatprep.mubr.f32.mxu0 %v2571
        %3232 = vmatmul.mubr.f32.gmra.mrb[0].mxu0 %v2570
        %v3233 = vpop.f32.mrb[0].mxu0
        %v3234 = vadd.f32 %v2977, %v3233
        %v3235 = vpop.f32.mrb[0].mxu0
        %v3236 = vadd.f32 %v2979, %v3235
        %3237 = vmatprep.mubr.f32.mxu0 %v2576
        %3238 = vmatmul.mubr.f32.gmra.mrb[0].mxu0 %v2575
        %v3239 = vpop.f32.mrb[0].mxu0
        %v3240 = vadd.f32 %v2983, %v3239
        %v3241 = vpop.f32.mrb[0].mxu0
        %v3242 = vadd.f32 %v2985, %v3241
        %3243 = vmatprep.mubr.f32.mxu0 %v2581
        %3244 = vmatmul.mubr.f32.gmra.mrb[0].mxu0 %v2580
        %v3245 = vpop.f32.mrb[0].mxu0
        %v3246 = vadd.f32 %v2989, %v3245
        %v3247 = vpop.f32.mrb[0].mxu0
        %v3248 = vadd.f32 %v2991, %v3247
        %3249 = vmatprep.mubr.f32.mxu0 %v2586
        %3250 = vmatmul.mubr.f32.gmra.mrb[0].mxu0 %v2585
        %v3251 = vpop.f32.mrb[0].mxu0
        %v3252 = vadd.f32 %v2995, %v3251
        %v3253 = vpop.f32.mrb[0].mxu0
        %v3254 = vadd.f32 %v2997, %v3253
        %3255 = vmatprep.mubr.f32.mxu0 %v2591
        %3256 = vmatmul.mubr.f32.gmra.mrb[0].mxu0 %v2590
        %v3257 = vpop.f32.mrb[0].mxu0
        %v3258 = vadd.f32 %v3001, %v3257
        %v3259 = vpop.f32.mrb[0].mxu0
        %v3260 = vadd.f32 %v3003, %v3259
        %3261 = vmatprep.mubr.f32.mxu0 %v2596
        %3262 = vmatmul.mubr.f32.gmra.mrb[0].mxu0 %v2595
        %v3263 = vpop.f32.mrb[0].mxu0
        %v3264 = vadd.f32 %v3007, %v3263
        %v3265 = vpop.f32.mrb[0].mxu0
        %v3266 = vadd.f32 %v3009, %v3265
        %3267 = vmatprep.mubr.f32.mxu0 %v2601
        %3268 = vmatmul.mubr.f32.gmra.mrb[0].mxu0 %v2600
        %v3269 = vpop.f32.mrb[0].mxu0
        %v3270 = vadd.f32 %v3013, %v3269
        %v3271 = vpop.f32.mrb[0].mxu0
        %v3272 = vadd.f32 %v3015, %v3271
        %3273 = vmatprep.mubr.f32.mxu0 %v2606
        %3274 = vmatmul.mubr.f32.gmra.mrb[0].mxu0 %v2605
        %v3275 = vpop.f32.mrb[0].mxu0
        %v3276 = vadd.f32 %v3019, %v3275
        %v3277 = vpop.f32.mrb[0].mxu0
        %v3278 = vadd.f32 %v3021, %v3277
        %3279 = vmatprep.mubr.f32.mxu0 %v2611
        %3280 = vmatmul.mubr.f32.gmra.mrb[0].mxu0 %v2610
        %v3281 = vpop.f32.mrb[0].mxu0
        %v3282 = vadd.f32 %v3025, %v3281
        %v3283 = vpop.f32.mrb[0].mxu0
        %v3284 = vadd.f32 %v3027, %v3283
        %3285 = vmatprep.mubr.f32.mxu0 %v2616
        %3286 = vmatmul.mubr.f32.gmra.mrb[0].mxu0 %v2615
        %v3287 = vpop.f32.mrb[0].mxu0
        %v3288 = vadd.f32 %v3031, %v3287
        %v3289 = vpop.f32.mrb[0].mxu0
        %v3290 = vadd.f32 %v3033, %v3289
        %3291 = vmatprep.mubr.f32.mxu0 %v2621
        %3292 = vmatmul.mubr.f32.gmra.mrb[0].mxu0 %v2620
        %v3293 = vpop.f32.mrb[0].mxu0
        %v3294 = vadd.f32 %v3037, %v3293
        %v3295 = vpop.f32.mrb[0].mxu0
        %v3296 = vadd.f32 %v3039, %v3295
        %3297 = vmatprep.mubr.f32.mxu0 %v2626
        %3298 = vmatmul.mubr.f32.gmra.mrb[0].mxu0 %v2625
        %v3299 = vpop.f32.mrb[0].mxu0
        %v3300 = vadd.f32 %v3043, %v3299
        %v3301 = vpop.f32.mrb[0].mxu0
        %v3302 = vadd.f32 %v3045, %v3301
        %3303 = vmatprep.mubr.f32.mxu0 %v2631
        %3304 = vmatmul.mubr.f32.gmra.mrb[0].mxu0 %v2630
        %v3305 = vpop.f32.mrb[0].mxu0
        %v3306 = vadd.f32 %v3049, %v3305
        %v3307 = vpop.f32.mrb[0].mxu0
        %v3308 = vadd.f32 %v3051, %v3307
        %3309 = vmatprep.mubr.f32.mxu0 %v2636
        %3310 = vmatmul.mubr.f32.gmra.mrb[0].mxu0 %v2635
        %v3311 = vpop.f32.mrb[0].mxu0
        %v3312 = vadd.f32 %v3055, %v3311
        %v3313 = vpop.f32.mrb[0].mxu0
        %v3314 = vadd.f32 %v3057, %v3313
        %3315 = vmatprep.mubr.f32.mxu0 %v2641
        %3316 = vmatmul.mubr.f32.gmra.mrb[0].mxu0 %v2640
        %v3317 = vpop.f32.mrb[0].mxu0
        %v3318 = vadd.f32 %v3061, %v3317
        %v3319 = vpop.f32.mrb[0].mxu0
        %v3320 = vadd.f32 %v3063, %v3319
        %3321 = vmatprep.mubr.f32.mxu0 %v2646
        %3322 = vmatmul.mubr.f32.gmra.mrb[0].mxu0 %v2645
        %v3323 = vpop.f32.mrb[0].mxu0
        %v3324 = vadd.f32 %v3067, %v3323
        %v3325 = vpop.f32.mrb[0].mxu0
        %v3326 = vadd.f32 %v3069, %v3325
        %3327 = vmatprep.mubr.f32.mxu0 %v2651
        %3328 = vmatmul.mubr.f32.gmra.mrb[0].mxu0 %v2650
        %v3329 = vpop.f32.mrb[0].mxu0
        %v3330 = vadd.f32 %v3073, %v3329
        %v3331 = vpop.f32.mrb[0].mxu0
        %v3332 = vadd.f32 %v3075, %v3331
        %3333 = vmatprep.mubr.f32.mxu0 %v2656
        %3334 = vmatmul.mubr.f32.gmra.mrb[0].mxu0 %v2655
        %v3335 = vpop.f32.mrb[0].mxu0
        %v3336 = vadd.f32 %v3079, %v3335
        %v3337 = vpop.f32.mrb[0].mxu0
        %v3338 = vadd.f32 %v3081, %v3337
        %3339 = vmatprep.mubr.f32.mxu0 %v2661
        %3340 = vmatmul.mubr.f32.gmra.mrb[0].mxu0 %v2660
        %v3341 = vpop.f32.mrb[0].mxu0
        %v3342 = vadd.f32 %v3085, %v3341
        %v3343 = vpop.f32.mrb[0].mxu0
        %v3344 = vadd.f32 %v3087, %v3343
        %3345 = vmatprep.mubr.f32.mxu0 %v2666
        %3346 = vmatmul.mubr.f32.gmra.mrb[0].mxu0 %v2665
        %v3347 = vpop.f32.mrb[0].mxu0
        %v3348 = vadd.f32 %v3091, %v3347
        %v3349 = vpop.f32.mrb[0].mxu0
        %v3350 = vadd.f32 %v3093, %v3349
        %3351 = vmatprep.mubr.f32.mxu0 %v2671
        %3352 = vmatmul.mubr.f32.gmra.mrb[0].mxu0 %v2670
        %v3353 = vpop.f32.mrb[0].mxu0
        %v3354 = vadd.f32 %v3097, %v3353
        %v3355 = vpop.f32.mrb[0].mxu0
        %v3356 = vadd.f32 %v3099, %v3355
        %3357 = vmatprep.mubr.f32.mxu0 %v2676
        %3358 = vmatmul.mubr.f32.gmra.mrb[0].mxu0 %v2675
        %v3359 = vpop.f32.mrb[0].mxu0
        %v3360 = vadd.f32 %v3103, %v3359
        %v3361 = vpop.f32.mrb[0].mxu0
        %v3362 = vadd.f32 %v3105, %v3361
        %3363 = vdwg.mxu0
        %3364 = vmatprep.subr.mxu0 %v2807
        %3365 = vmatpush1.msra.mxu0 %v2806
        %3366 = vmatprep.subr.mxu0 %v2809
        %3367 = vmatpush1.msra.mxu0 %v2808
        %3368 = vmatprep.subr.mxu0 %v2811
        %3369 = vmatpush1.msra.mxu0 %v2810
        %3370 = vmatprep.subr.mxu0 %v2813
        %3371 = vmatpush1.msra.mxu0 %v2812
        %3372 = vmatprep.subr.mxu0 %v2815
        %3373 = vmatpush1.msra.mxu0 %v2814
        %3374 = vmatprep.subr.mxu0 %v2817
        %3375 = vmatpush1.msra.mxu0 %v2816
        %3376 = vmatprep.subr.mxu0 %v2819
        %3377 = vmatpush1.msra.mxu0 %v2818
        %3378 = vmatprep.subr.mxu0 %v2821
        %3379 = vmatpush1.msra.mxu0 %v2820
        %3380 = vmatprep.subr.mxu0 %v2823
        %3381 = vmatpush1.msra.mxu0 %v2822
        %3382 = vmatprep.subr.mxu0 %v2825
        %3383 = vmatpush1.msra.mxu0 %v2824
        %3384 = vmatprep.subr.mxu0 %v2827
        %3385 = vmatpush1.msra.mxu0 %v2826
        %3386 = vmatprep.subr.mxu0 %v2829
        %3387 = vmatpush1.msra.mxu0 %v2828
        %3388 = vmatprep.subr.mxu0 %v2831
        %3389 = vmatpush1.msra.mxu0 %v2830
        %3390 = vmatprep.subr.mxu0 %v2833
        %3391 = vmatpush1.msra.mxu0 %v2832
        %3392 = vmatprep.subr.mxu0 %v2835
        %3393 = vmatpush1.msra.mxu0 %v2834
        %3394 = vmatprep.subr.mxu0 %v2837
        %3395 = vmatpush1.msra.mxu0 %v2836
        %3396 = vmatprep.subr.mxu0 0.0
        %3397 = vmatpush1.msra.mxu0 0.0
        %3398 = vmatprep.subr.mxu0 0.0
        %3399 = vmatpush1.msra.mxu0 0.0
        %3400 = vmatprep.subr.mxu0 0.0
        %3401 = vmatpush1.msra.mxu0 0.0
        %3402 = vmatprep.subr.mxu0 0.0
        %3403 = vmatpush1.msra.mxu0 0.0
        %3404 = vmatprep.subr.mxu0 0.0
        %3405 = vmatpush1.msra.mxu0 0.0
        %3406 = vmatprep.subr.mxu0 0.0
        %3407 = vmatpush1.msra.mxu0 0.0
        %3408 = vmatprep.subr.mxu0 0.0
        %3409 = vmatpush1.msra.mxu0 0.0
        %3410 = vmatprep.subr.mxu0 0.0
        %3411 = vmatpush1.msra.mxu0 0.0
        %3412 = vmatprep.subr.mxu0 0.0
        %3413 = vmatpush1.msra.mxu0 0.0
        %3414 = vmatprep.subr.mxu0 0.0
        %3415 = vmatpush1.msra.mxu0 0.0
        %3416 = vmatprep.subr.mxu0 0.0
        %3417 = vmatpush1.msra.mxu0 0.0
        %3418 = vmatprep.subr.mxu0 0.0
        %3419 = vmatpush1.msra.mxu0 0.0
        %3420 = vmatprep.subr.mxu0 0.0
        %3421 = vmatpush1.msra.mxu0 0.0
        %3422 = vmatprep.subr.mxu0 0.0
        %3423 = vmatpush1.msra.mxu0 0.0
        %3424 = vmatprep.subr.mxu0 0.0
        %3425 = vmatpush1.msra.mxu0 0.0
        %3426 = vmatprep.subr.mxu0 0.0
        %3427 = vmatpush1.msra.mxu0 0.0
        %3428 = vmatprep.mubr.f32.mxu0 0.0
        %3429 = vmatmul.mubr.f32.gmra.mrb[0].mxu0 %v2522
        %v3430 = vpop.f32.mrb[0].mxu0
        %v3431 = vadd.f32 %v3174, %v3430
        %v3432 = vpop.f32.mrb[0].mxu0
        %v3433 = vadd.f32 %v3176, %v3432
        %3434 = vmatprep.mubr.f32.mxu0 0.0
        %3435 = vmatmul.mubr.f32.gmra.mrb[0].mxu0 %v2527
        %v3436 = vpop.f32.mrb[0].mxu0
        %v3437 = vadd.f32 %v3180, %v3436
        %v3438 = vpop.f32.mrb[0].mxu0
        %v3439 = vadd.f32 %v3182, %v3438
        %3440 = vmatprep.mubr.f32.mxu0 0.0
        %3441 = vmatmul.mubr.f32.gmra.mrb[0].mxu0 %v2532
        %v3442 = vpop.f32.mrb[0].mxu0
        %v3443 = vadd.f32 %v3186, %v3442
        %v3444 = vpop.f32.mrb[0].mxu0
        %v3445 = vadd.f32 %v3188, %v3444
        %3446 = vmatprep.mubr.f32.mxu0 0.0
        %3447 = vmatmul.mubr.f32.gmra.mrb[0].mxu0 %v2537
        %v3448 = vpop.f32.mrb[0].mxu0
        %v3449 = vadd.f32 %v3192, %v3448
        %v3450 = vpop.f32.mrb[0].mxu0
        %v3451 = vadd.f32 %v3194, %v3450
        %3452 = vmatprep.mubr.f32.mxu0 0.0
        %3453 = vmatmul.mubr.f32.gmra.mrb[0].mxu0 %v2542
        %v3454 = vpop.f32.mrb[0].mxu0
        %v3455 = vadd.f32 %v3198, %v3454
        %v3456 = vpop.f32.mrb[0].mxu0
        %v3457 = vadd.f32 %v3200, %v3456
        %3458 = vmatprep.mubr.f32.mxu0 0.0
        %3459 = vmatmul.mubr.f32.gmra.mrb[0].mxu0 %v2547
        %v3460 = vpop.f32.mrb[0].mxu0
        %v3461 = vadd.f32 %v3204, %v3460
        %v3462 = vpop.f32.mrb[0].mxu0
        %v3463 = vadd.f32 %v3206, %v3462
        %3464 = vmatprep.mubr.f32.mxu0 0.0
        %3465 = vmatmul.mubr.f32.gmra.mrb[0].mxu0 %v2552
        %v3466 = vpop.f32.mrb[0].mxu0
        %v3467 = vadd.f32 %v3210, %v3466
        %v3468 = vpop.f32.mrb[0].mxu0
        %v3469 = vadd.f32 %v3212, %v3468
        %3470 = vmatprep.mubr.f32.mxu0 0.0
        %3471 = vmatmul.mubr.f32.gmra.mrb[0].mxu0 %v2557
        %v3472 = vpop.f32.mrb[0].mxu0
        %v3473 = vadd.f32 %v3216, %v3472
        %v3474 = vpop.f32.mrb[0].mxu0
        %v3475 = vadd.f32 %v3218, %v3474
        %3476 = vmatprep.mubr.f32.mxu0 0.0
        %3477 = vmatmul.mubr.f32.gmra.mrb[0].mxu0 %v2562
        %v3478 = vpop.f32.mrb[0].mxu0
        %v3479 = vadd.f32 %v3222, %v3478
        %v3480 = vpop.f32.mrb[0].mxu0
        %v3481 = vadd.f32 %v3224, %v3480
        %3482 = vmatprep.mubr.f32.mxu0 0.0
        %3483 = vmatmul.mubr.f32.gmra.mrb[0].mxu0 %v2567
        %v3484 = vpop.f32.mrb[0].mxu0
        %v3485 = vadd.f32 %v3228, %v3484
        %v3486 = vpop.f32.mrb[0].mxu0
        %v3487 = vadd.f32 %v3230, %v3486
        %3488 = vmatprep.mubr.f32.mxu0 0.0
        %3489 = vmatmul.mubr.f32.gmra.mrb[0].mxu0 %v2572
        %v3490 = vpop.f32.mrb[0].mxu0
        %v3491 = vadd.f32 %v3234, %v3490
        %v3492 = vpop.f32.mrb[0].mxu0
        %v3493 = vadd.f32 %v3236, %v3492
        %3494 = vmatprep.mubr.f32.mxu0 0.0
        %3495 = vmatmul.mubr.f32.gmra.mrb[0].mxu0 %v2577
        %v3496 = vpop.f32.mrb[0].mxu0
        %v3497 = vadd.f32 %v3240, %v3496
        %v3498 = vpop.f32.mrb[0].mxu0
        %v3499 = vadd.f32 %v3242, %v3498
        %3500 = vmatprep.mubr.f32.mxu0 0.0
        %3501 = vmatmul.mubr.f32.gmra.mrb[0].mxu0 %v2582
        %v3502 = vpop.f32.mrb[0].mxu0
        %v3503 = vadd.f32 %v3246, %v3502
        %v3504 = vpop.f32.mrb[0].mxu0
        %v3505 = vadd.f32 %v3248, %v3504
        %3506 = vmatprep.mubr.f32.mxu0 0.0
        %3507 = vmatmul.mubr.f32.gmra.mrb[0].mxu0 %v2587
        %v3508 = vpop.f32.mrb[0].mxu0
        %v3509 = vadd.f32 %v3252, %v3508
        %v3510 = vpop.f32.mrb[0].mxu0
        %v3511 = vadd.f32 %v3254, %v3510
        %3512 = vmatprep.mubr.f32.mxu0 0.0
        %3513 = vmatmul.mubr.f32.gmra.mrb[0].mxu0 %v2592
        %v3514 = vpop.f32.mrb[0].mxu0
        %v3515 = vadd.f32 %v3258, %v3514
        %v3516 = vpop.f32.mrb[0].mxu0
        %v3517 = vadd.f32 %v3260, %v3516
        %3518 = vmatprep.mubr.f32.mxu0 0.0
        %3519 = vmatmul.mubr.f32.gmra.mrb[0].mxu0 %v2597
        %v3520 = vpop.f32.mrb[0].mxu0
        %v3521 = vadd.f32 %v3264, %v3520
        %v3522 = vpop.f32.mrb[0].mxu0
        %v3523 = vadd.f32 %v3266, %v3522
        %3524 = vmatprep.mubr.f32.mxu0 0.0
        %3525 = vmatmul.mubr.f32.gmra.mrb[0].mxu0 %v2602
        %v3526 = vpop.f32.mrb[0].mxu0
        %v3527 = vadd.f32 %v3270, %v3526
        %v3528 = vpop.f32.mrb[0].mxu0
        %v3529 = vadd.f32 %v3272, %v3528
        %3530 = vmatprep.mubr.f32.mxu0 0.0
        %3531 = vmatmul.mubr.f32.gmra.mrb[0].mxu0 %v2607
        %v3532 = vpop.f32.mrb[0].mxu0
        %v3533 = vadd.f32 %v3276, %v3532
        %v3534 = vpop.f32.mrb[0].mxu0
        %v3535 = vadd.f32 %v3278, %v3534
        %3536 = vmatprep.mubr.f32.mxu0 0.0
        %3537 = vmatmul.mubr.f32.gmra.mrb[0].mxu0 %v2612
        %v3538 = vpop.f32.mrb[0].mxu0
        %v3539 = vadd.f32 %v3282, %v3538
        %v3540 = vpop.f32.mrb[0].mxu0
        %v3541 = vadd.f32 %v3284, %v3540
        %3542 = vmatprep.mubr.f32.mxu0 0.0
        %3543 = vmatmul.mubr.f32.gmra.mrb[0].mxu0 %v2617
        %v3544 = vpop.f32.mrb[0].mxu0
        %v3545 = vadd.f32 %v3288, %v3544
        %v3546 = vpop.f32.mrb[0].mxu0
        %v3547 = vadd.f32 %v3290, %v3546
        %3548 = vmatprep.mubr.f32.mxu0 0.0
        %3549 = vmatmul.mubr.f32.gmra.mrb[0].mxu0 %v2622
        %v3550 = vpop.f32.mrb[0].mxu0
        %v3551 = vadd.f32 %v3294, %v3550
        %v3552 = vpop.f32.mrb[0].mxu0
        %v3553 = vadd.f32 %v3296, %v3552
        %3554 = vmatprep.mubr.f32.mxu0 0.0
        %3555 = vmatmul.mubr.f32.gmra.mrb[0].mxu0 %v2627
        %v3556 = vpop.f32.mrb[0].mxu0
        %v3557 = vadd.f32 %v3300, %v3556
        %v3558 = vpop.f32.mrb[0].mxu0
        %v3559 = vadd.f32 %v3302, %v3558
        %3560 = vmatprep.mubr.f32.mxu0 0.0
        %3561 = vmatmul.mubr.f32.gmra.mrb[0].mxu0 %v2632
        %v3562 = vpop.f32.mrb[0].mxu0
        %v3563 = vadd.f32 %v3306, %v3562
        %v3564 = vpop.f32.mrb[0].mxu0
        %v3565 = vadd.f32 %v3308, %v3564
        %3566 = vmatprep.mubr.f32.mxu0 0.0
        %3567 = vmatmul.mubr.f32.gmra.mrb[0].mxu0 %v2637
        %v3568 = vpop.f32.mrb[0].mxu0
        %v3569 = vadd.f32 %v3312, %v3568
        %v3570 = vpop.f32.mrb[0].mxu0
        %v3571 = vadd.f32 %v3314, %v3570
        %3572 = vmatprep.mubr.f32.mxu0 0.0
        %3573 = vmatmul.mubr.f32.gmra.mrb[0].mxu0 %v2642
        %v3574 = vpop.f32.mrb[0].mxu0
        %v3575 = vadd.f32 %v3318, %v3574
        %v3576 = vpop.f32.mrb[0].mxu0
        %v3577 = vadd.f32 %v3320, %v3576
        %3578 = vmatprep.mubr.f32.mxu0 0.0
        %3579 = vmatmul.mubr.f32.gmra.mrb[0].mxu0 %v2647
        %v3580 = vpop.f32.mrb[0].mxu0
        %v3581 = vadd.f32 %v3324, %v3580
        %v3582 = vpop.f32.mrb[0].mxu0
        %v3583 = vadd.f32 %v3326, %v3582
        %3584 = vmatprep.mubr.f32.mxu0 0.0
        %3585 = vmatmul.mubr.f32.gmra.mrb[0].mxu0 %v2652
        %v3586 = vpop.f32.mrb[0].mxu0
        %v3587 = vadd.f32 %v3330, %v3586
        %v3588 = vpop.f32.mrb[0].mxu0
        %v3589 = vadd.f32 %v3332, %v3588
        %3590 = vmatprep.mubr.f32.mxu0 0.0
        %3591 = vmatmul.mubr.f32.gmra.mrb[0].mxu0 %v2657
        %v3592 = vpop.f32.mrb[0].mxu0
        %v3593 = vadd.f32 %v3336, %v3592
        %v3594 = vpop.f32.mrb[0].mxu0
        %v3595 = vadd.f32 %v3338, %v3594
        %3596 = vmatprep.mubr.f32.mxu0 0.0
        %3597 = vmatmul.mubr.f32.gmra.mrb[0].mxu0 %v2662
        %v3598 = vpop.f32.mrb[0].mxu0
        %v3599 = vadd.f32 %v3342, %v3598
        %v3600 = vpop.f32.mrb[0].mxu0
        %v3601 = vadd.f32 %v3344, %v3600
        %3602 = vmatprep.mubr.f32.mxu0 0.0
        %3603 = vmatmul.mubr.f32.gmra.mrb[0].mxu0 %v2667
        %v3604 = vpop.f32.mrb[0].mxu0
        %v3605 = vadd.f32 %v3348, %v3604
        %v3606 = vpop.f32.mrb[0].mxu0
        %v3607 = vadd.f32 %v3350, %v3606
        %3608 = vmatprep.mubr.f32.mxu0 0.0
        %3609 = vmatmul.mubr.f32.gmra.mrb[0].mxu0 %v2672
        %v3610 = vpop.f32.mrb[0].mxu0
        %v3611 = vadd.f32 %v3354, %v3610
        %v3612 = vpop.f32.mrb[0].mxu0
        %v3613 = vadd.f32 %v3356, %v3612
        %3614 = vmatprep.mubr.f32.mxu0 0.0
        %3615 = vmatmul.mubr.f32.gmra.mrb[0].mxu0 %v2677
        %v3616 = vpop.f32.mrb[0].mxu0
        %v3617 = vadd.f32 %v3360, %v3616
        %v3618 = vpop.f32.mrb[0].mxu0
        %v3619 = vadd.f32 %v3362, %v3618
        %3620 = vdwg.mxu0
        %3621 = vst [vmem:[%s246] sm:$0xff] %v3431
        %3622 = vst [vmem:[%s246 + $0x8] sm:$0xff] %v3433
        %3623 = vst [vmem:[%s246 + $0x10] sm:$0xff] %v3437
        %3624 = vst [vmem:[%s246 + $0x18] sm:$0xff] %v3439
        %3625 = vst [vmem:[%s246 + $0x20] sm:$0xff] %v3443
        %3626 = vst [vmem:[%s246 + $0x28] sm:$0xff] %v3445
        %3627 = vst [vmem:[%s246 + $0x30] sm:$0xff] %v3449
        %3628 = vst [vmem:[%s246 + $0x38] sm:$0xff] %v3451
        %3629 = vst [vmem:[%s246 + $0x40] sm:$0xff] %v3455
        %3630 = vst [vmem:[%s246 + $0x48] sm:$0xff] %v3457
        %3631 = vst [vmem:[%s246 + $0x50] sm:$0xff] %v3461
        %3632 = vst [vmem:[%s246 + $0x58] sm:$0xff] %v3463
        %3633 = vst [vmem:[%s246 + $0x60] sm:$0xff] %v3467
        %3634 = vst [vmem:[%s246 + $0x68] sm:$0xff] %v3469
        %3635 = vst [vmem:[%s246 + $0x70] sm:$0xff] %v3473
        %3636 = vst [vmem:[%s246 + $0x78] sm:$0xff] %v3475
        %3637 = vst [vmem:[%s246 + $0x80] sm:$0xff] %v3479
        %3638 = vst [vmem:[%s246 + $0x88] sm:$0xff] %v3481
        %3639 = vst [vmem:[%s246 + $0x90] sm:$0xff] %v3485
        %3640 = vst [vmem:[%s246 + $0x98] sm:$0xff] %v3487
        %3641 = vst [vmem:[%s246 + $0xa0] sm:$0xff] %v3491
        %3642 = vst [vmem:[%s246 + $0xa8] sm:$0xff] %v3493
        %3643 = vst [vmem:[%s246 + $0xb0] sm:$0xff] %v3497
        %3644 = vst [vmem:[%s246 + $0xb8] sm:$0xff] %v3499
        %3645 = vst [vmem:[%s246 + $0xc0] sm:$0xff] %v3503
        %3646 = vst [vmem:[%s246 + $0xc8] sm:$0xff] %v3505
        %3647 = vst [vmem:[%s246 + $0xd0] sm:$0xff] %v3509
        %3648 = vst [vmem:[%s246 + $0xd8] sm:$0xff] %v3511
        %3649 = vst [vmem:[%s246 + $0xe0] sm:$0xff] %v3515
        %3650 = vst [vmem:[%s246 + $0xe8] sm:$0xff] %v3517
        %3651 = vst [vmem:[%s246 + $0xf0] sm:$0xff] %v3521
        %3652 = vst [vmem:[%s246 + $0xf8] sm:$0xff] %v3523
        %3653 = vst [vmem:[%s246 + $0x100] sm:$0xff] %v3527
        %3654 = vst [vmem:[%s246 + $0x108] sm:$0xff] %v3529
        %3655 = vst [vmem:[%s246 + $0x110] sm:$0xff] %v3533
        %3656 = vst [vmem:[%s246 + $0x118] sm:$0xff] %v3535
        %3657 = vst [vmem:[%s246 + $0x120] sm:$0xff] %v3539
        %3658 = vst [vmem:[%s246 + $0x128] sm:$0xff] %v3541
        %3659 = vst [vmem:[%s246 + $0x130] sm:$0xff] %v3545
        %3660 = vst [vmem:[%s246 + $0x138] sm:$0xff] %v3547
        %3661 = vst [vmem:[%s246 + $0x140] sm:$0xff] %v3551
        %3662 = vst [vmem:[%s246 + $0x148] sm:$0xff] %v3553
        %3663 = vst [vmem:[%s246 + $0x150] sm:$0xff] %v3557
        %3664 = vst [vmem:[%s246 + $0x158] sm:$0xff] %v3559
        %3665 = vst [vmem:[%s246 + $0x160] sm:$0xff] %v3563
        %3666 = vst [vmem:[%s246 + $0x168] sm:$0xff] %v3565
        %3667 = vst [vmem:[%s246 + $0x170] sm:$0xff] %v3569
        %3668 = vst [vmem:[%s246 + $0x178] sm:$0xff] %v3571
        %3669 = vst [vmem:[%s246 + $0x180] sm:$0xff] %v3575
        %3670 = vst [vmem:[%s246 + $0x188] sm:$0xff] %v3577
        %3671 = vst [vmem:[%s246 + $0x190] sm:$0xff] %v3581
        %3672 = vst [vmem:[%s246 + $0x198] sm:$0xff] %v3583
        %3673 = vst [vmem:[%s246 + $0x1a0] sm:$0xff] %v3587
        %3674 = vst [vmem:[%s246 + $0x1a8] sm:$0xff] %v3589
        %3675 = vst [vmem:[%s246 + $0x1b0] sm:$0xff] %v3593
        %3676 = vst [vmem:[%s246 + $0x1b8] sm:$0xff] %v3595
        %3677 = vst [vmem:[%s246 + $0x1c0] sm:$0xff] %v3599
        %3678 = vst [vmem:[%s246 + $0x1c8] sm:$0xff] %v3601
        %3679 = vst [vmem:[%s246 + $0x1d0] sm:$0xff] %v3605
        %3680 = vst [vmem:[%s246 + $0x1d8] sm:$0xff] %v3607
        %3681 = vst [vmem:[%s246 + $0x1e0] sm:$0xff] %v3611
        %3682 = vst [vmem:[%s246 + $0x1e8] sm:$0xff] %v3613
        %3683 = vst [vmem:[%s246 + $0x1f0] sm:$0xff] %v3617
        %3684 = vst [vmem:[%s246 + $0x1f8] sm:$0xff] %v3619
        %s3685 = smul.u32 32, %s17
        %p3686 = scmp.lt.s32.totalorder %s3685, 63
        %s3687 = scalar_select %p3686, %s3685, 63
        %s3688 = smul.addr %s3687, 2
        %s3689 = smul.addr %s3688, 8
        %s3690 = scalar_lea.vmem %s5, %s3689
        // Predicated region
        $region45: #{_siglip_mlp_fwd.1} parent=39 // pred_check
          %p3691 = pneg %p145
        $region46: #{_siglip_mlp_fwd.1} parent=39 // pred_check_branch
          %3693 = sbr.rel (%p3691) target = $region48
        $region47: #{_siglip_mlp_fwd.1} parent=39 // pred_region
          %s3694 = smul.u32 32, %s17
        $region48: #{_siglip_mlp_fwd.1} parent=39 // pred_fallthru
          _
      $region40: #{_siglip_mlp_fwd.1} parent=5 // pred_fallthru
        _
      %p3695 = scmp.le.s32.totalorder 2, %s12
      // Predicated region
      $region49: #{_siglip_mlp_fwd.1} parent=5 // pred_check
        %p3696 = pneg %p3695
      $region50: #{_siglip_mlp_fwd.1} parent=5 // pred_check_branch
        %3698 = sbr.rel (%p3696) target = $region52
      $region51: #{_siglip_mlp_fwd.1} parent=5 // pred_region
        %s3699 = ssub.s32 %s12, 2
        // Predicated region
        $region53: #{_siglip_mlp_fwd.1} parent=51 // pred_check
          %p3700 = pneg %p151
        $region54: #{_siglip_mlp_fwd.1} parent=51 // pred_check_branch
          %3702 = sbr.rel (%p3700) target = $region56
        $region55: #{_siglip_mlp_fwd.1} parent=51 // pred_region
          %s3703 = smul.u32 32, %s18
          %p3704 = scmp.lt.s32.totalorder %s3703, 63
          %s3705 = scalar_select %p3704, %s3703, 63
          %s3706 = smul.addr %s3705, 2
          %s3707 = smul.addr %s3706, 8
          %s3708 = scalar_lea.vmem %s5, %s3707
        $region56: #{_siglip_mlp_fwd.1} parent=51 // pred_fallthru
          _
      $region52: #{_siglip_mlp_fwd.1} parent=5 // pred_fallthru
        _
    $region6: #{_siglip_mlp_fwd.1} parent=1 // loop_footer
      %s16 = sadd.s32 1, %s12
    $region7: #{_siglip_mlp_fwd.1} parent=1 // loop_footer_branch
      %11 = sbr.rel target = $region3
    $region8: #{_siglip_mlp_fwd.1} parent=1 // loop_exit
      _
    %3709 = vsyncpa [#allocation3], 1
    %s3710 = scalar_lea.sflag [#allocation3], 1
    %3711 = vsyncpa %s3710, 1

</llo_original>
